<compile_context>
chip_gen: v7x
topology: tpu7x:2x2x1
jax: 0.10.0
libtpu: 0.0.40
codegen_flags: <defaults>
</compile_context>

<pallas_src>
import functools

import jax
import jax.numpy as jnp
from jax import lax
from jax.experimental import pallas as pl
from jax.experimental.pallas import tpu as pltpu


def _basic_block_kernel(x_ref, w1_ref, s1_ref, b1_ref, w2_ref, s2_ref, b2_ref,
                        out_ref, xpad_ref, h1pad_ref,
                        *, tile_rows, col_off, flatten_2d, unroll):
    """Nb images per grid step (batch axis marked "parallel").

    x_ref    : (Nb, H, W, Cin)            unpadded input images
    w1_ref   : (9*Cin, Cout)              conv1 weights, row = (kh*3+kw)*Cin + cin
    s1/b1    : (1, Cout)                  folded BN1 scale / bias (f32)
    w2_ref   : (9*Cout, Cout)             conv2 weights
    s2/b2    : (1, Cout)                  folded BN2 scale / bias (f32)
    out_ref  : (Nb, H, W, Cout)
    xpad_ref : (Nb, H+2, Wp, Cin)         VMEM scratch (compute dtype), padded input
    h1pad_ref: (Nb, H+2, Wp, Cout)        VMEM scratch (compute dtype), padded h1
    where Wp = W + 2*col_off and the interior lives at columns [col_off, col_off+W).
    """
    Nb, H, W, Cin = x_ref.shape
    Cout = out_ref.shape[-1]
    TR = tile_rows
    A = col_off                       # sublane-aligned interior column offset
    n_tiles = H // TR
    cdt = xpad_ref.dtype              # compute dtype (f32, or bf16 fast path)

    # --- refresh the zero halo of both padded scratches ---------------------
    # Each grid step must be self-contained ("parallel" semantics: steps may
    # run on either TensorCore, in any order), so the halo is re-zeroed every
    # step.  All writes are sublane-aligned slabs, not size-1 column stores.
    for ref in (xpad_ref, h1pad_ref):
        Cs = ref.shape[-1]
        z_col = jnp.zeros((Nb, H + 2, A, Cs), cdt)
        ref[:, :, pl.ds(0, A), :] = z_col            # left slab (covers col A-1)
        ref[:, :, pl.ds(A + W, A), :] = z_col        # right slab (covers col A+W)
        z_row = jnp.zeros((Nb, 1, W, Cs), cdt)
        ref[:, pl.ds(0, 1), pl.ds(A, W), :] = z_row      # top halo row
        ref[:, pl.ds(H + 1, 1), pl.ds(A, W), :] = z_row  # bottom halo row

    # interior of padded input <- x : one cast, one aligned dense store
    xpad_ref[:, pl.ds(1, H), pl.ds(A, W), :] = x_ref[...].astype(cdt)

    # loop-invariant loads hoisted out of the row-tile loops
    w1 = w1_ref[...]
    w2 = w2_ref[...]
    s1 = s1_ref[0].astype(jnp.float32)
    b1 = b1_ref[0].astype(jnp.float32)
    s2 = s2_ref[0].astype(jnp.float32)
    b2 = b2_ref[0].astype(jnp.float32)

    def conv_tile(src_ref, w_2d, h0):
        """3x3 'SAME' conv for output rows [h0, h0+TR) of all Nb images:
        im2col over the 9 taps -> one deep-K MXU matmul.  Returns
        (Nb, TR, W, Cout) in f32."""
        Cs = src_ref.shape[-1]
        taps = [src_ref[:, pl.ds(h0 + kh, TR), pl.ds(A - 1 + kw, W), :]
                for kh in range(3) for kw in range(3)]
        patch = jnp.concatenate(taps, axis=-1)          # (Nb, TR, W, 9*Cs), cdt
        if flatten_2d:
            p2 = patch.reshape(Nb * TR * W, 9 * Cs)
            acc = jnp.dot(p2, w_2d, preferred_element_type=jnp.float32)
            return acc.reshape(Nb, TR, W, Cout)
        # Fallback for shapes where the row flatten is not layout-friendly.
        return jnp.einsum("ntwk,kd->ntwd", patch, w_2d,
                          preferred_element_type=jnp.float32)

    # ---- conv1 -> bn1 -> relu, written into padded intermediate ------------
    def conv1_body(i, carry):
        h0 = pl.multiple_of(i * TR, TR)
        acc1 = conv_tile(xpad_ref, w1, h0)
        h1 = jnp.maximum(acc1 * s1 + b1, 0.0)          # f32 VPU epilogue
        h1pad_ref[:, pl.ds(h0 + 1, TR), pl.ds(A, W), :] = h1.astype(cdt)
        return carry

    lax.fori_loop(0, n_tiles, conv1_body, 0, unroll=unroll)

    # ---- conv2 -> bn2 -> +residual -> relu ----------------------------------
    def conv2_body(i, carry):
        h0 = pl.multiple_of(i * TR, TR)
        acc2 = conv_tile(h1pad_ref, w2, h0)
        res = x_ref[:, pl.ds(h0, TR), :, :].astype(jnp.float32)  # aligned read
        out = jnp.maximum(acc2 * s2 + b2 + res, 0.0)
        out_ref[:, pl.ds(h0, TR), :, :] = out.astype(out_ref.dtype)
        return carry

    lax.fori_loop(0, n_tiles, conv2_body, 0, unroll=unroll)


def basic_block_pallas(x_nchw, w1, bn1_scale, bn1_bias, w2, bn2_scale, bn2_bias,
                       *, compute_dtype=jnp.float32, tile_rows=None,
                       images_per_step=None):
    """x_nchw: (N, C, H, W).  Conv weights: (9, Cin, Cout), index = kh*3 + kw.

    compute_dtype: dtype of the matmul operands AND the padded VMEM scratches
    (jnp.bfloat16 recommended on all generations — the MXU is natively bf16);
    accumulation and the VPU epilogue (BatchNorm affine, residual add, ReLU)
    stay in float32.
    """
    N, C, H, W = x_nchw.shape
    Cout = w1.shape[-1]
    assert w1.shape == (9, C, Cout) and w2.shape == (9, Cout, Cout)
    assert C == Cout, "BasicBlock with downsample=None requires inplanes == planes"

    if tile_rows is None:
        tile_rows = 8 if H % 8 == 0 else H
    assert H % tile_rows == 0
    n_tiles = H // tile_rows

    cdt = jnp.dtype(compute_dtype)
    packing = 4 // cdt.itemsize
    sub_tile = 8 * packing                 # sublane tile of compute_dtype (8 f32, 16 bf16)
    A = sub_tile                           # aligned interior column offset in the scratches
    Wp = W + 2 * A                         # padded scratch width

    # Deep-K 2-D dot path: the (Nb, TR, W) -> rows flatten is layout-friendly
    # whenever tile_rows*W is a multiple of the sublane tile (true for all
    # standard ResNet widths in both f32 and bf16).
    flatten_2d = ((tile_rows * W) % sub_tile == 0)

    in_bytes = jnp.dtype(x_nchw.dtype).itemsize
    out_bytes = in_bytes
    w_bytes = (9 * C * Cout + 9 * Cout * Cout) * cdt.itemsize

    # Generation-aware VMEM capacity (v5e/v6e: 128 MiB, v7x: 64 MiB per TC).
    try:
        vmem_cap = int(pltpu.get_tpu_info().vmem_capacity_bytes)
    except Exception:
        vmem_cap = 64 * 2**20              # conservative fallback (v7x per-TC)

    def vmem_est(nb):
        return (2 * nb * H * W * C * in_bytes              # double-buffered input blocks
                + 2 * nb * H * W * Cout * out_bytes        # double-buffered output blocks
                + nb * (H + 2) * Wp * (C + Cout) * cdt.itemsize   # padded scratches
                + w_bytes                                   # single-buffered weights
                + 4 * Cout * 4)

    if images_per_step is None:
        budget = max(vmem_cap // 2, 16 * 2**20)
        images_per_step = 1
        for nb in range(1, N + 1):
            if N % nb == 0 and vmem_est(nb) <= budget:
                images_per_step = nb
    Nb = images_per_step
    assert N % Nb == 0

    unroll = True if n_tiles <= 8 else 2

    # NCHW -> NHWC (channels on the lane axis).  No HBM-side spatial padding:
    # the kernel pads into a VMEM scratch instead.
    x_nhwc = jnp.transpose(x_nchw, (0, 2, 3, 1))

    # Conv weights as a single deep-K (9*Cin, Cout) matrix, cast once.
    w1_2d = w1.reshape(9 * C, Cout).astype(compute_dtype)
    w2_2d = w2.reshape(9 * Cout, Cout).astype(compute_dtype)

    s1 = bn1_scale.reshape(1, Cout).astype(jnp.float32)
    b1 = bn1_bias.reshape(1, Cout).astype(jnp.float32)
    s2 = bn2_scale.reshape(1, Cout).astype(jnp.float32)
    b2 = bn2_bias.reshape(1, Cout).astype(jnp.float32)

    kernel = functools.partial(_basic_block_kernel, tile_rows=tile_rows,
                               col_off=A, flatten_2d=flatten_2d, unroll=unroll)

    vmem_limit = int(min(max(2 * vmem_est(Nb), 32 * 2**20), vmem_cap - 8 * 2**20))

    flops = 2 * 2 * N * H * W * 9 * C * Cout              # two 3x3 convs
    bytes_accessed = int(x_nhwc.size * in_bytes
                         + N * H * W * Cout * out_bytes
                         + w_bytes + 4 * Cout * 4)

    # Constant-across-grid operands: single-buffered (no pointless double buffer).
    wspec1 = pl.BlockSpec((9 * C, Cout), lambda n: (0, 0),
                          pipeline_mode=pl.Buffered(1))
    wspec2 = pl.BlockSpec((9 * Cout, Cout), lambda n: (0, 0),
                          pipeline_mode=pl.Buffered(1))
    sbspec = pl.BlockSpec((1, Cout), lambda n: (0, 0),
                          pipeline_mode=pl.Buffered(1))

    out_nhwc = pl.pallas_call(
        kernel,
        out_shape=jax.ShapeDtypeStruct((N, H, W, Cout), x_nchw.dtype),
        grid_spec=pltpu.PrefetchScalarGridSpec(
            num_scalar_prefetch=0,
            grid=(N // Nb,),
            in_specs=[
                pl.BlockSpec((Nb, H, W, C), lambda n: (n, 0, 0, 0)),
                wspec1, sbspec, sbspec, wspec2, sbspec, sbspec,
            ],
            out_specs=pl.BlockSpec((Nb, H, W, Cout), lambda n: (n, 0, 0, 0)),
            scratch_shapes=[
                pltpu.VMEM((Nb, H + 2, Wp, C), compute_dtype),
                pltpu.VMEM((Nb, H + 2, Wp, Cout), compute_dtype),
            ],
        ),
        compiler_params=pltpu.CompilerParams(
            dimension_semantics=("parallel",),       # independent image groups
            vmem_limit_bytes=vmem_limit),
        cost_estimate=pl.CostEstimate(
            flops=flops, transcendentals=0, bytes_accessed=bytes_accessed),
    )(x_nhwc, w1_2d, s1, b1, w2_2d, s2, b2)

    # NHWC -> NCHW
    return jnp.transpose(out_nhwc, (0, 3, 1, 2))


def _reference_basic_block(x_nchw, w1, s1, b1, w2, s2, b2):
    """Pure-JAX reference (NHWC convs) for correctness checking."""
    C = x_nchw.shape[1]
    Cout = w1.shape[-1]
    x = jnp.transpose(x_nchw, (0, 2, 3, 1))
    dn = lax.conv_dimension_numbers(x.shape, (3, 3, C, Cout),
                                    ("NHWC", "HWIO", "NHWC"))
    k1 = w1.reshape(3, 3, C, Cout)
    k2 = w2.reshape(3, 3, Cout, Cout)
    h = lax.conv_general_dilated(x, k1, (1, 1), "SAME", dimension_numbers=dn)
    h = jnp.maximum(h * s1 + b1, 0.0)
    h = lax.conv_general_dilated(h, k2, (1, 1), "SAME", dimension_numbers=dn)
    h = jnp.maximum(h * s2 + b2 + x, 0.0)
    return jnp.transpose(h, (0, 3, 1, 2))


if __name__ == "__main__":
    # Small shapes: batch=2, channels=4, spatial=16x16 (inplanes == planes == 4)
    N, C, H, W = 2, 4, 16, 16
    key = jax.random.PRNGKey(0)
    kx, kw1, kw2, kg1, kb1, km1, kv1, kg2, kb2, km2, kv2 = jax.random.split(key, 11)

    x = jax.random.normal(kx, (N, C, H, W), dtype=jnp.float32)

    # Conv weights stored as (9, Cin, Cout), index = kh*3 + kw
    w1 = jax.random.normal(kw1, (9, C, C), dtype=jnp.float32) * 0.1
    w2 = jax.random.normal(kw2, (9, C, C), dtype=jnp.float32) * 0.1

    eps = 1e-5
    # BN1 params (eval mode: fold gamma/beta/mean/var into scale/bias)
    g1 = 1.0 + 0.1 * jax.random.normal(kg1, (C,), dtype=jnp.float32)
    be1 = 0.1 * jax.random.normal(kb1, (C,), dtype=jnp.float32)
    m1 = 0.1 * jax.random.normal(km1, (C,), dtype=jnp.float32)
    v1 = jnp.abs(jax.random.normal(kv1, (C,), dtype=jnp.float32)) + 0.5
    s1 = g1 / jnp.sqrt(v1 + eps)
    b1 = be1 - m1 * s1

    # BN2 params
    g2 = 1.0 + 0.1 * jax.random.normal(kg2, (C,), dtype=jnp.float32)
    be2 = 0.1 * jax.random.normal(kb2, (C,), dtype=jnp.float32)
    m2 = 0.1 * jax.random.normal(km2, (C,), dtype=jnp.float32)
    v2 = jnp.abs(jax.random.normal(kv2, (C,), dtype=jnp.float32)) + 0.5
    s2 = g2 / jnp.sqrt(v2 + eps)
    b2 = be2 - m2 * s2

    ref = _reference_basic_block(x, w1, s1, b1, w2, s2, b2)

    # Default path: f32 matmul operands, tight tolerance.
    out = basic_block_pallas(x, w1, s1, b1, w2, s2, b2)
    out = jax.block_until_ready(out)
    assert out.shape == (N, C, H, W)
    assert jnp.allclose(out, ref, rtol=1e-3, atol=1e-3), "f32 mismatch vs reference"

    # Fast path: bf16 matmul operands + bf16 scratches, f32 accumulate/epilogue.
    out_bf16 = basic_block_pallas(x, w1, s1, b1, w2, s2, b2,
                                  compute_dtype=jnp.bfloat16)
    out_bf16 = jax.block_until_ready(out_bf16)
    assert jnp.allclose(out_bf16, ref, rtol=2e-2, atol=2e-2), "bf16 mismatch vs reference"

    print("KERNEL_OK")
</pallas_src>

<mosaic_0001>
module attributes {stable_mosaic.version = 11 : i64} {
  func.func @_basic_block_kernel(%arg0: i32, %arg1: memref<2x16x16x4xf32, #tpu.memory_space<vmem>>, %arg2: memref<36x4xf32, #tpu.memory_space<vmem>>, %arg3: memref<1x4xf32, #tpu.memory_space<vmem>>, %arg4: memref<1x4xf32, #tpu.memory_space<vmem>>, %arg5: memref<36x4xf32, #tpu.memory_space<vmem>>, %arg6: memref<1x4xf32, #tpu.memory_space<vmem>>, %arg7: memref<1x4xf32, #tpu.memory_space<vmem>>, %arg8: memref<2x16x16x4xf32, #tpu.memory_space<vmem>>, %arg9: memref<2x18x32x4xf32, #tpu.memory_space<vmem>>, %arg10: memref<2x18x32x4xf32, #tpu.memory_space<vmem>>) attributes {dimension_semantics = [#tpu.dimension_semantics<parallel>], iteration_bounds = array<i64: 1>, scalar_prefetch = 0 : i64, scratch_operands = 2 : i64, tpu.core_type = #tpu.core_type<tc>, window_params = [{transform_indices = @transform_0, window_bounds = array<i64: 2, 16, 16, 4>}, {pipeline_mode = #tpu.pipeline_mode<synchronous>, transform_indices = @transform_1, window_bounds = array<i64: 36, 4>}, {pipeline_mode = #tpu.pipeline_mode<synchronous>, transform_indices = @transform_2, window_bounds = array<i64: 1, 4>}, {pipeline_mode = #tpu.pipeline_mode<synchronous>, transform_indices = @transform_3, window_bounds = array<i64: 1, 4>}, {pipeline_mode = #tpu.pipeline_mode<synchronous>, transform_indices = @transform_4, window_bounds = array<i64: 36, 4>}, {pipeline_mode = #tpu.pipeline_mode<synchronous>, transform_indices = @transform_5, window_bounds = array<i64: 1, 4>}, {pipeline_mode = #tpu.pipeline_mode<synchronous>, transform_indices = @transform_6, window_bounds = array<i64: 1, 4>}, {transform_indices = @transform_7, window_bounds = array<i64: 2, 16, 16, 4>}]} {
    %cst = arith.constant 0.000000e+00 : f32
    %0 = vector.broadcast %cst : f32 to vector<2x18x8x4xf32>
    %c0 = arith.constant 0 : index
    %c0_0 = arith.constant 0 : index
    %c0_1 = arith.constant 0 : index
    %c0_2 = arith.constant 0 : index
    %1 = vector.load %arg9[%c0, %c0_0, %c0_1, %c0_2] : memref<2x18x32x4xf32, #tpu.memory_space<vmem>>, vector<2x18x8x4xf32>
    tpu.vector_store %arg9[%c0, %c0_0, %c0_1, %c0_2], %0 {strides = array<i32>} : memref<2x18x32x4xf32, #tpu.memory_space<vmem>>, vector<2x18x8x4xf32>,
    %c0_3 = arith.constant 0 : index
    %c0_4 = arith.constant 0 : index
    %c24 = arith.constant 24 : index
    %c0_5 = arith.constant 0 : index
    %2 = vector.load %arg9[%c0_3, %c0_4, %c24, %c0_5] : memref<2x18x32x4xf32, #tpu.memory_space<vmem>>, vector<2x18x8x4xf32>
    tpu.vector_store %arg9[%c0_3, %c0_4, %c24, %c0_5], %0 {strides = array<i32>} : memref<2x18x32x4xf32, #tpu.memory_space<vmem>>, vector<2x18x8x4xf32>,
    %cst_6 = arith.constant 0.000000e+00 : f32
    %3 = vector.broadcast %cst_6 : f32 to vector<2x1x16x4xf32>
    %c0_7 = arith.constant 0 : index
    %c0_8 = arith.constant 0 : index
    %c8 = arith.constant 8 : index
    %c0_9 = arith.constant 0 : index
    %4 = vector.load %arg9[%c0_7, %c0_8, %c8, %c0_9] : memref<2x18x32x4xf32, #tpu.memory_space<vmem>>, vector<2x1x16x4xf32>
    tpu.vector_store %arg9[%c0_7, %c0_8, %c8, %c0_9], %3 {strides = array<i32>} : memref<2x18x32x4xf32, #tpu.memory_space<vmem>>, vector<2x1x16x4xf32>,
    %c0_10 = arith.constant 0 : index
    %c17 = arith.constant 17 : index
    %c8_11 = arith.constant 8 : index
    %c0_12 = arith.constant 0 : index
    %5 = vector.load %arg9[%c0_10, %c17, %c8_11, %c0_12] : memref<2x18x32x4xf32, #tpu.memory_space<vmem>>, vector<2x1x16x4xf32>
    tpu.vector_store %arg9[%c0_10, %c17, %c8_11, %c0_12], %3 {strides = array<i32>} : memref<2x18x32x4xf32, #tpu.memory_space<vmem>>, vector<2x1x16x4xf32>,
    %cst_13 = arith.constant 0.000000e+00 : f32
    %6 = vector.broadcast %cst_13 : f32 to vector<2x18x8x4xf32>
    %c0_14 = arith.constant 0 : index
    %c0_15 = arith.constant 0 : index
    %c0_16 = arith.constant 0 : index
    %c0_17 = arith.constant 0 : index
    %7 = vector.load %arg10[%c0_14, %c0_15, %c0_16, %c0_17] : memref<2x18x32x4xf32, #tpu.memory_space<vmem>>, vector<2x18x8x4xf32>
    tpu.vector_store %arg10[%c0_14, %c0_15, %c0_16, %c0_17], %6 {strides = array<i32>} : memref<2x18x32x4xf32, #tpu.memory_space<vmem>>, vector<2x18x8x4xf32>,
    %c0_18 = arith.constant 0 : index
    %c0_19 = arith.constant 0 : index
    %c24_20 = arith.constant 24 : index
    %c0_21 = arith.constant 0 : index
    %8 = vector.load %arg10[%c0_18, %c0_19, %c24_20, %c0_21] : memref<2x18x32x4xf32, #tpu.memory_space<vmem>>, vector<2x18x8x4xf32>
    tpu.vector_store %arg10[%c0_18, %c0_19, %c24_20, %c0_21], %6 {strides = array<i32>} : memref<2x18x32x4xf32, #tpu.memory_space<vmem>>, vector<2x18x8x4xf32>,
    %cst_22 = arith.constant 0.000000e+00 : f32
    %9 = vector.broadcast %cst_22 : f32 to vector<2x1x16x4xf32>
    %c0_23 = arith.constant 0 : index
    %c0_24 = arith.constant 0 : index
    %c8_25 = arith.constant 8 : index
    %c0_26 = arith.constant 0 : index
    %10 = vector.load %arg10[%c0_23, %c0_24, %c8_25, %c0_26] : memref<2x18x32x4xf32, #tpu.memory_space<vmem>>, vector<2x1x16x4xf32>
    tpu.vector_store %arg10[%c0_23, %c0_24, %c8_25, %c0_26], %9 {strides = array<i32>} : memref<2x18x32x4xf32, #tpu.memory_space<vmem>>, vector<2x1x16x4xf32>,
    %c0_27 = arith.constant 0 : index
    %c17_28 = arith.constant 17 : index
    %c8_29 = arith.constant 8 : index
    %c0_30 = arith.constant 0 : index
    %11 = vector.load %arg10[%c0_27, %c17_28, %c8_29, %c0_30] : memref<2x18x32x4xf32, #tpu.memory_space<vmem>>, vector<2x1x16x4xf32>
    tpu.vector_store %arg10[%c0_27, %c17_28, %c8_29, %c0_30], %9 {strides = array<i32>} : memref<2x18x32x4xf32, #tpu.memory_space<vmem>>, vector<2x1x16x4xf32>,
    %c0_31 = arith.constant 0 : index
    %c0_32 = arith.constant 0 : index
    %c0_33 = arith.constant 0 : index
    %c0_34 = arith.constant 0 : index
    %12 = vector.load %arg1[%c0_31, %c0_32, %c0_33, %c0_34] : memref<2x16x16x4xf32, #tpu.memory_space<vmem>>, vector<2x16x16x4xf32>
    %c0_35 = arith.constant 0 : index
    %c1 = arith.constant 1 : index
    %c8_36 = arith.constant 8 : index
    %c0_37 = arith.constant 0 : index
    %13 = vector.load %arg9[%c0_35, %c1, %c8_36, %c0_37] : memref<2x18x32x4xf32, #tpu.memory_space<vmem>>, vector<2x16x16x4xf32>
    tpu.vector_store %arg9[%c0_35, %c1, %c8_36, %c0_37], %12 {strides = array<i32>} : memref<2x18x32x4xf32, #tpu.memory_space<vmem>>, vector<2x16x16x4xf32>,
    %c0_38 = arith.constant 0 : index
    %c0_39 = arith.constant 0 : index
    %14 = vector.load %arg2[%c0_38, %c0_39] : memref<36x4xf32, #tpu.memory_space<vmem>>, vector<36x4xf32>
    %c0_40 = arith.constant 0 : index
    %c0_41 = arith.constant 0 : index
    %15 = vector.load %arg5[%c0_40, %c0_41] : memref<36x4xf32, #tpu.memory_space<vmem>>, vector<36x4xf32>
    %c0_42 = arith.constant 0 : index
    %c0_43 = arith.constant 0 : index
    %16 = vector.load %arg3[%c0_42, %c0_43] : memref<1x4xf32, #tpu.memory_space<vmem>>, vector<1x4xf32>
    %17 = vector.shape_cast %16 : vector<1x4xf32> to vector<4xf32>
    %c0_44 = arith.constant 0 : index
    %c0_45 = arith.constant 0 : index
    %18 = vector.load %arg4[%c0_44, %c0_45] : memref<1x4xf32, #tpu.memory_space<vmem>>, vector<1x4xf32>
    %19 = vector.shape_cast %18 : vector<1x4xf32> to vector<4xf32>
    %c0_46 = arith.constant 0 : index
    %c0_47 = arith.constant 0 : index
    %20 = vector.load %arg6[%c0_46, %c0_47] : memref<1x4xf32, #tpu.memory_space<vmem>>, vector<1x4xf32>
    %21 = vector.shape_cast %20 : vector<1x4xf32> to vector<4xf32>
    %c0_48 = arith.constant 0 : index
    %c0_49 = arith.constant 0 : index
    %22 = vector.load %arg7[%c0_48, %c0_49] : memref<1x4xf32, #tpu.memory_space<vmem>>, vector<1x4xf32>
    %23 = vector.shape_cast %22 : vector<1x4xf32> to vector<4xf32>
    %c0_i32 = arith.constant 0 : i32
    %c8_i32 = arith.constant 8 : i32
    %24 = arith.muli %c0_i32, %c8_i32 : i32
    %25 = tpu.assume_multiple %24, 8 : i32
    %c0_i32_50 = arith.constant 0 : i32
    %26 = arith.addi %25, %c0_i32_50 : i32
    %c0_51 = arith.constant 0 : index
    %27 = arith.index_cast %26 : i32 to index
    %c7 = arith.constant 7 : index
    %c0_52 = arith.constant 0 : index
    %28 = vector.load %arg9[%c0_51, %27, %c7, %c0_52] : memref<2x18x32x4xf32, #tpu.memory_space<vmem>>, vector<2x8x16x4xf32>
    %c0_i32_53 = arith.constant 0 : i32
    %29 = arith.addi %25, %c0_i32_53 : i32
    %c0_54 = arith.constant 0 : index
    %30 = arith.index_cast %29 : i32 to index
    %c8_55 = arith.constant 8 : index
    %c0_56 = arith.constant 0 : index
    %31 = vector.load %arg9[%c0_54, %30, %c8_55, %c0_56] : memref<2x18x32x4xf32, #tpu.memory_space<vmem>>, vector<2x8x16x4xf32>
    %c0_i32_57 = arith.constant 0 : i32
    %32 = arith.addi %25, %c0_i32_57 : i32
    %c0_58 = arith.constant 0 : index
    %33 = arith.index_cast %32 : i32 to index
    %c9 = arith.constant 9 : index
    %c0_59 = arith.constant 0 : index
    %34 = vector.load %arg9[%c0_58, %33, %c9, %c0_59] : memref<2x18x32x4xf32, #tpu.memory_space<vmem>>, vector<2x8x16x4xf32>
    %c1_i32 = arith.constant 1 : i32
    %35 = arith.addi %25, %c1_i32 : i32
    %c0_60 = arith.constant 0 : index
    %36 = arith.index_cast %35 : i32 to index
    %c7_61 = arith.constant 7 : index
    %c0_62 = arith.constant 0 : index
    %37 = vector.load %arg9[%c0_60, %36, %c7_61, %c0_62] : memref<2x18x32x4xf32, #tpu.memory_space<vmem>>, vector<2x8x16x4xf32>
    %c1_i32_63 = arith.constant 1 : i32
    %38 = arith.addi %25, %c1_i32_63 : i32
    %c0_64 = arith.constant 0 : index
    %39 = arith.index_cast %38 : i32 to index
    %c8_65 = arith.constant 8 : index
    %c0_66 = arith.constant 0 : index
    %40 = vector.load %arg9[%c0_64, %39, %c8_65, %c0_66] : memref<2x18x32x4xf32, #tpu.memory_space<vmem>>, vector<2x8x16x4xf32>
    %c1_i32_67 = arith.constant 1 : i32
    %41 = arith.addi %25, %c1_i32_67 : i32
    %c0_68 = arith.constant 0 : index
    %42 = arith.index_cast %41 : i32 to index
    %c9_69 = arith.constant 9 : index
    %c0_70 = arith.constant 0 : index
    %43 = vector.load %arg9[%c0_68, %42, %c9_69, %c0_70] : memref<2x18x32x4xf32, #tpu.memory_space<vmem>>, vector<2x8x16x4xf32>
    %c2_i32 = arith.constant 2 : i32
    %44 = arith.addi %25, %c2_i32 : i32
    %c0_71 = arith.constant 0 : index
    %45 = arith.index_cast %44 : i32 to index
    %c7_72 = arith.constant 7 : index
    %c0_73 = arith.constant 0 : index
    %46 = vector.load %arg9[%c0_71, %45, %c7_72, %c0_73] : memref<2x18x32x4xf32, #tpu.memory_space<vmem>>, vector<2x8x16x4xf32>
    %c2_i32_74 = arith.constant 2 : i32
    %47 = arith.addi %25, %c2_i32_74 : i32
    %c0_75 = arith.constant 0 : index
    %48 = arith.index_cast %47 : i32 to index
    %c8_76 = arith.constant 8 : index
    %c0_77 = arith.constant 0 : index
    %49 = vector.load %arg9[%c0_75, %48, %c8_76, %c0_77] : memref<2x18x32x4xf32, #tpu.memory_space<vmem>>, vector<2x8x16x4xf32>
    %c2_i32_78 = arith.constant 2 : i32
    %50 = arith.addi %25, %c2_i32_78 : i32
    %c0_79 = arith.constant 0 : index
    %51 = arith.index_cast %50 : i32 to index
    %c9_80 = arith.constant 9 : index
    %c0_81 = arith.constant 0 : index
    %52 = vector.load %arg9[%c0_79, %51, %c9_80, %c0_81] : memref<2x18x32x4xf32, #tpu.memory_space<vmem>>, vector<2x8x16x4xf32>
    %53 = tpu.concatenate %28, %31, %34, %37, %40, %43, %46, %49, %52 in 3 : vector<2x8x16x4xf32>, vector<2x8x16x4xf32>, vector<2x8x16x4xf32>, vector<2x8x16x4xf32>, vector<2x8x16x4xf32>, vector<2x8x16x4xf32>, vector<2x8x16x4xf32>, vector<2x8x16x4xf32>, vector<2x8x16x4xf32> -> vector<2x8x16x36xf32>
    %54 = vector.shape_cast %53 : vector<2x8x16x36xf32> to vector<256x36xf32>
    %cst_82 = arith.constant dense<0.000000e+00> : vector<256x4xf32>
    %55 = tpu.matmul %54, %14, %cst_82 {dimension_numbers = #tpu.dot_dimension_numbers<[1], [0], [0], [1], [0, 0, 1, 1], [], []>} : vector<256x36xf32>, vector<36x4xf32>, vector<256x4xf32> -> vector<256x4xf32>
    %56 = vector.shape_cast %55 : vector<256x4xf32> to vector<2x8x16x4xf32>
    %57 = vector.shape_cast %17 : vector<4xf32> to vector<1x1x1x4xf32>
    %58 = vector.broadcast %57 : vector<1x1x1x4xf32> to vector<2x8x16x4xf32>
    %59 = arith.mulf %56, %58 : vector<2x8x16x4xf32>
    %60 = vector.shape_cast %19 : vector<4xf32> to vector<1x1x1x4xf32>
    %61 = vector.broadcast %60 : vector<1x1x1x4xf32> to vector<2x8x16x4xf32>
    %62 = arith.addf %59, %61 : vector<2x8x16x4xf32>
    %cst_83 = arith.constant 0.000000e+00 : f32
    %63 = vector.broadcast %cst_83 : f32 to vector<2x8x16x4xf32>
    %64 = arith.maximumf %62, %63 : vector<2x8x16x4xf32>
    %c1_i32_84 = arith.constant 1 : i32
    %65 = arith.addi %25, %c1_i32_84 : i32
    %c0_85 = arith.constant 0 : index
    %66 = arith.index_cast %65 : i32 to index
    %c8_86 = arith.constant 8 : index
    %c0_87 = arith.constant 0 : index
    %67 = vector.load %arg10[%c0_85, %66, %c8_86, %c0_87] : memref<2x18x32x4xf32, #tpu.memory_space<vmem>>, vector<2x8x16x4xf32>
    tpu.vector_store %arg10[%c0_85, %66, %c8_86, %c0_87], %64 {strides = array<i32>} : memref<2x18x32x4xf32, #tpu.memory_space<vmem>>, vector<2x8x16x4xf32>,
    %c1_i32_88 = arith.constant 1 : i32
    %c8_i32_89 = arith.constant 8 : i32
    %68 = arith.muli %c1_i32_88, %c8_i32_89 : i32
    %69 = tpu.assume_multiple %68, 8 : i32
    %c0_i32_90 = arith.constant 0 : i32
    %70 = arith.addi %69, %c0_i32_90 : i32
    %c0_91 = arith.constant 0 : index
    %71 = arith.index_cast %70 : i32 to index
    %c7_92 = arith.constant 7 : index
    %c0_93 = arith.constant 0 : index
    %72 = vector.load %arg9[%c0_91, %71, %c7_92, %c0_93] : memref<2x18x32x4xf32, #tpu.memory_space<vmem>>, vector<2x8x16x4xf32>
    %c0_i32_94 = arith.constant 0 : i32
    %73 = arith.addi %69, %c0_i32_94 : i32
    %c0_95 = arith.constant 0 : index
    %74 = arith.index_cast %73 : i32 to index
    %c8_96 = arith.constant 8 : index
    %c0_97 = arith.constant 0 : index
    %75 = vector.load %arg9[%c0_95, %74, %c8_96, %c0_97] : memref<2x18x32x4xf32, #tpu.memory_space<vmem>>, vector<2x8x16x4xf32>
    %c0_i32_98 = arith.constant 0 : i32
    %76 = arith.addi %69, %c0_i32_98 : i32
    %c0_99 = arith.constant 0 : index
    %77 = arith.index_cast %76 : i32 to index
    %c9_100 = arith.constant 9 : index
    %c0_101 = arith.constant 0 : index
    %78 = vector.load %arg9[%c0_99, %77, %c9_100, %c0_101] : memref<2x18x32x4xf32, #tpu.memory_space<vmem>>, vector<2x8x16x4xf32>
    %c1_i32_102 = arith.constant 1 : i32
    %79 = arith.addi %69, %c1_i32_102 : i32
    %c0_103 = arith.constant 0 : index
    %80 = arith.index_cast %79 : i32 to index
    %c7_104 = arith.constant 7 : index
    %c0_105 = arith.constant 0 : index
    %81 = vector.load %arg9[%c0_103, %80, %c7_104, %c0_105] : memref<2x18x32x4xf32, #tpu.memory_space<vmem>>, vector<2x8x16x4xf32>
    %c1_i32_106 = arith.constant 1 : i32
    %82 = arith.addi %69, %c1_i32_106 : i32
    %c0_107 = arith.constant 0 : index
    %83 = arith.index_cast %82 : i32 to index
    %c8_108 = arith.constant 8 : index
    %c0_109 = arith.constant 0 : index
    %84 = vector.load %arg9[%c0_107, %83, %c8_108, %c0_109] : memref<2x18x32x4xf32, #tpu.memory_space<vmem>>, vector<2x8x16x4xf32>
    %c1_i32_110 = arith.constant 1 : i32
    %85 = arith.addi %69, %c1_i32_110 : i32
    %c0_111 = arith.constant 0 : index
    %86 = arith.index_cast %85 : i32 to index
    %c9_112 = arith.constant 9 : index
    %c0_113 = arith.constant 0 : index
    %87 = vector.load %arg9[%c0_111, %86, %c9_112, %c0_113] : memref<2x18x32x4xf32, #tpu.memory_space<vmem>>, vector<2x8x16x4xf32>
    %c2_i32_114 = arith.constant 2 : i32
    %88 = arith.addi %69, %c2_i32_114 : i32
    %c0_115 = arith.constant 0 : index
    %89 = arith.index_cast %88 : i32 to index
    %c7_116 = arith.constant 7 : index
    %c0_117 = arith.constant 0 : index
    %90 = vector.load %arg9[%c0_115, %89, %c7_116, %c0_117] : memref<2x18x32x4xf32, #tpu.memory_space<vmem>>, vector<2x8x16x4xf32>
    %c2_i32_118 = arith.constant 2 : i32
    %91 = arith.addi %69, %c2_i32_118 : i32
    %c0_119 = arith.constant 0 : index
    %92 = arith.index_cast %91 : i32 to index
    %c8_120 = arith.constant 8 : index
    %c0_121 = arith.constant 0 : index
    %93 = vector.load %arg9[%c0_119, %92, %c8_120, %c0_121] : memref<2x18x32x4xf32, #tpu.memory_space<vmem>>, vector<2x8x16x4xf32>
    %c2_i32_122 = arith.constant 2 : i32
    %94 = arith.addi %69, %c2_i32_122 : i32
    %c0_123 = arith.constant 0 : index
    %95 = arith.index_cast %94 : i32 to index
    %c9_124 = arith.constant 9 : index
    %c0_125 = arith.constant 0 : index
    %96 = vector.load %arg9[%c0_123, %95, %c9_124, %c0_125] : memref<2x18x32x4xf32, #tpu.memory_space<vmem>>, vector<2x8x16x4xf32>
    %97 = tpu.concatenate %72, %75, %78, %81, %84, %87, %90, %93, %96 in 3 : vector<2x8x16x4xf32>, vector<2x8x16x4xf32>, vector<2x8x16x4xf32>, vector<2x8x16x4xf32>, vector<2x8x16x4xf32>, vector<2x8x16x4xf32>, vector<2x8x16x4xf32>, vector<2x8x16x4xf32>, vector<2x8x16x4xf32> -> vector<2x8x16x36xf32>
    %98 = vector.shape_cast %97 : vector<2x8x16x36xf32> to vector<256x36xf32>
    %cst_126 = arith.constant dense<0.000000e+00> : vector<256x4xf32>
    %99 = tpu.matmul %98, %14, %cst_126 {dimension_numbers = #tpu.dot_dimension_numbers<[1], [0], [0], [1], [0, 0, 1, 1], [], []>} : vector<256x36xf32>, vector<36x4xf32>, vector<256x4xf32> -> vector<256x4xf32>
    %100 = vector.shape_cast %99 : vector<256x4xf32> to vector<2x8x16x4xf32>
    %101 = vector.shape_cast %17 : vector<4xf32> to vector<1x1x1x4xf32>
    %102 = vector.broadcast %101 : vector<1x1x1x4xf32> to vector<2x8x16x4xf32>
    %103 = arith.mulf %100, %102 : vector<2x8x16x4xf32>
    %104 = vector.shape_cast %19 : vector<4xf32> to vector<1x1x1x4xf32>
    %105 = vector.broadcast %104 : vector<1x1x1x4xf32> to vector<2x8x16x4xf32>
    %106 = arith.addf %103, %105 : vector<2x8x16x4xf32>
    %cst_127 = arith.constant 0.000000e+00 : f32
    %107 = vector.broadcast %cst_127 : f32 to vector<2x8x16x4xf32>
    %108 = arith.maximumf %106, %107 : vector<2x8x16x4xf32>
    %c1_i32_128 = arith.constant 1 : i32
    %109 = arith.addi %69, %c1_i32_128 : i32
    %c0_129 = arith.constant 0 : index
    %110 = arith.index_cast %109 : i32 to index
    %c8_130 = arith.constant 8 : index
    %c0_131 = arith.constant 0 : index
    %111 = vector.load %arg10[%c0_129, %110, %c8_130, %c0_131] : memref<2x18x32x4xf32, #tpu.memory_space<vmem>>, vector<2x8x16x4xf32>
    tpu.vector_store %arg10[%c0_129, %110, %c8_130, %c0_131], %108 {strides = array<i32>} : memref<2x18x32x4xf32, #tpu.memory_space<vmem>>, vector<2x8x16x4xf32>,
    %c2_i32_132 = arith.constant 2 : i32
    %c0_i32_133 = arith.constant 0 : i32
    %c8_i32_134 = arith.constant 8 : i32
    %112 = arith.muli %c0_i32_133, %c8_i32_134 : i32
    %113 = tpu.assume_multiple %112, 8 : i32
    %c0_i32_135 = arith.constant 0 : i32
    %114 = arith.addi %113, %c0_i32_135 : i32
    %c0_136 = arith.constant 0 : index
    %115 = arith.index_cast %114 : i32 to index
    %c7_137 = arith.constant 7 : index
    %c0_138 = arith.constant 0 : index
    %116 = vector.load %arg10[%c0_136, %115, %c7_137, %c0_138] : memref<2x18x32x4xf32, #tpu.memory_space<vmem>>, vector<2x8x16x4xf32>
    %c0_i32_139 = arith.constant 0 : i32
    %117 = arith.addi %113, %c0_i32_139 : i32
    %c0_140 = arith.constant 0 : index
    %118 = arith.index_cast %117 : i32 to index
    %c8_141 = arith.constant 8 : index
    %c0_142 = arith.constant 0 : index
    %119 = vector.load %arg10[%c0_140, %118, %c8_141, %c0_142] : memref<2x18x32x4xf32, #tpu.memory_space<vmem>>, vector<2x8x16x4xf32>
    %c0_i32_143 = arith.constant 0 : i32
    %120 = arith.addi %113, %c0_i32_143 : i32
    %c0_144 = arith.constant 0 : index
    %121 = arith.index_cast %120 : i32 to index
    %c9_145 = arith.constant 9 : index
    %c0_146 = arith.constant 0 : index
    %122 = vector.load %arg10[%c0_144, %121, %c9_145, %c0_146] : memref<2x18x32x4xf32, #tpu.memory_space<vmem>>, vector<2x8x16x4xf32>
    %c1_i32_147 = arith.constant 1 : i32
    %123 = arith.addi %113, %c1_i32_147 : i32
    %c0_148 = arith.constant 0 : index
    %124 = arith.index_cast %123 : i32 to index
    %c7_149 = arith.constant 7 : index
    %c0_150 = arith.constant 0 : index
    %125 = vector.load %arg10[%c0_148, %124, %c7_149, %c0_150] : memref<2x18x32x4xf32, #tpu.memory_space<vmem>>, vector<2x8x16x4xf32>
    %c1_i32_151 = arith.constant 1 : i32
    %126 = arith.addi %113, %c1_i32_151 : i32
    %c0_152 = arith.constant 0 : index
    %127 = arith.index_cast %126 : i32 to index
    %c8_153 = arith.constant 8 : index
    %c0_154 = arith.constant 0 : index
    %128 = vector.load %arg10[%c0_152, %127, %c8_153, %c0_154] : memref<2x18x32x4xf32, #tpu.memory_space<vmem>>, vector<2x8x16x4xf32>
    %c1_i32_155 = arith.constant 1 : i32
    %129 = arith.addi %113, %c1_i32_155 : i32
    %c0_156 = arith.constant 0 : index
    %130 = arith.index_cast %129 : i32 to index
    %c9_157 = arith.constant 9 : index
    %c0_158 = arith.constant 0 : index
    %131 = vector.load %arg10[%c0_156, %130, %c9_157, %c0_158] : memref<2x18x32x4xf32, #tpu.memory_space<vmem>>, vector<2x8x16x4xf32>
    %c2_i32_159 = arith.constant 2 : i32
    %132 = arith.addi %113, %c2_i32_159 : i32
    %c0_160 = arith.constant 0 : index
    %133 = arith.index_cast %132 : i32 to index
    %c7_161 = arith.constant 7 : index
    %c0_162 = arith.constant 0 : index
    %134 = vector.load %arg10[%c0_160, %133, %c7_161, %c0_162] : memref<2x18x32x4xf32, #tpu.memory_space<vmem>>, vector<2x8x16x4xf32>
    %c2_i32_163 = arith.constant 2 : i32
    %135 = arith.addi %113, %c2_i32_163 : i32
    %c0_164 = arith.constant 0 : index
    %136 = arith.index_cast %135 : i32 to index
    %c8_165 = arith.constant 8 : index
    %c0_166 = arith.constant 0 : index
    %137 = vector.load %arg10[%c0_164, %136, %c8_165, %c0_166] : memref<2x18x32x4xf32, #tpu.memory_space<vmem>>, vector<2x8x16x4xf32>
    %c2_i32_167 = arith.constant 2 : i32
    %138 = arith.addi %113, %c2_i32_167 : i32
    %c0_168 = arith.constant 0 : index
    %139 = arith.index_cast %138 : i32 to index
    %c9_169 = arith.constant 9 : index
    %c0_170 = arith.constant 0 : index
    %140 = vector.load %arg10[%c0_168, %139, %c9_169, %c0_170] : memref<2x18x32x4xf32, #tpu.memory_space<vmem>>, vector<2x8x16x4xf32>
    %141 = tpu.concatenate %116, %119, %122, %125, %128, %131, %134, %137, %140 in 3 : vector<2x8x16x4xf32>, vector<2x8x16x4xf32>, vector<2x8x16x4xf32>, vector<2x8x16x4xf32>, vector<2x8x16x4xf32>, vector<2x8x16x4xf32>, vector<2x8x16x4xf32>, vector<2x8x16x4xf32>, vector<2x8x16x4xf32> -> vector<2x8x16x36xf32>
    %142 = vector.shape_cast %141 : vector<2x8x16x36xf32> to vector<256x36xf32>
    %cst_171 = arith.constant dense<0.000000e+00> : vector<256x4xf32>
    %143 = tpu.matmul %142, %15, %cst_171 {dimension_numbers = #tpu.dot_dimension_numbers<[1], [0], [0], [1], [0, 0, 1, 1], [], []>} : vector<256x36xf32>, vector<36x4xf32>, vector<256x4xf32> -> vector<256x4xf32>
    %144 = vector.shape_cast %143 : vector<256x4xf32> to vector<2x8x16x4xf32>
    %c0_172 = arith.constant 0 : index
    %145 = arith.index_cast %113 : i32 to index
    %c0_173 = arith.constant 0 : index
    %c0_174 = arith.constant 0 : index
    %146 = vector.load %arg1[%c0_172, %145, %c0_173, %c0_174] : memref<2x16x16x4xf32, #tpu.memory_space<vmem>>, vector<2x8x16x4xf32>
    %147 = vector.shape_cast %21 : vector<4xf32> to vector<1x1x1x4xf32>
    %148 = vector.broadcast %147 : vector<1x1x1x4xf32> to vector<2x8x16x4xf32>
    %149 = arith.mulf %144, %148 : vector<2x8x16x4xf32>
    %150 = vector.shape_cast %23 : vector<4xf32> to vector<1x1x1x4xf32>
    %151 = vector.broadcast %150 : vector<1x1x1x4xf32> to vector<2x8x16x4xf32>
    %152 = arith.addf %149, %151 : vector<2x8x16x4xf32>
    %153 = arith.addf %152, %146 : vector<2x8x16x4xf32>
    %cst_175 = arith.constant 0.000000e+00 : f32
    %154 = vector.broadcast %cst_175 : f32 to vector<2x8x16x4xf32>
    %155 = arith.maximumf %153, %154 : vector<2x8x16x4xf32>
    %c0_176 = arith.constant 0 : index
    %156 = arith.index_cast %113 : i32 to index
    %c0_177 = arith.constant 0 : index
    %c0_178 = arith.constant 0 : index
    %157 = vector.load %arg8[%c0_176, %156, %c0_177, %c0_178] : memref<2x16x16x4xf32, #tpu.memory_space<vmem>>, vector<2x8x16x4xf32>
    tpu.vector_store %arg8[%c0_176, %156, %c0_177, %c0_178], %155 {strides = array<i32>} : memref<2x16x16x4xf32, #tpu.memory_space<vmem>>, vector<2x8x16x4xf32>,
    %c1_i32_179 = arith.constant 1 : i32
    %c8_i32_180 = arith.constant 8 : i32
    %158 = arith.muli %c1_i32_179, %c8_i32_180 : i32
    %159 = tpu.assume_multiple %158, 8 : i32
    %c0_i32_181 = arith.constant 0 : i32
    %160 = arith.addi %159, %c0_i32_181 : i32
    %c0_182 = arith.constant 0 : index
    %161 = arith.index_cast %160 : i32 to index
    %c7_183 = arith.constant 7 : index
    %c0_184 = arith.constant 0 : index
    %162 = vector.load %arg10[%c0_182, %161, %c7_183, %c0_184] : memref<2x18x32x4xf32, #tpu.memory_space<vmem>>, vector<2x8x16x4xf32>
    %c0_i32_185 = arith.constant 0 : i32
    %163 = arith.addi %159, %c0_i32_185 : i32
    %c0_186 = arith.constant 0 : index
    %164 = arith.index_cast %163 : i32 to index
    %c8_187 = arith.constant 8 : index
    %c0_188 = arith.constant 0 : index
    %165 = vector.load %arg10[%c0_186, %164, %c8_187, %c0_188] : memref<2x18x32x4xf32, #tpu.memory_space<vmem>>, vector<2x8x16x4xf32>
    %c0_i32_189 = arith.constant 0 : i32
    %166 = arith.addi %159, %c0_i32_189 : i32
    %c0_190 = arith.constant 0 : index
    %167 = arith.index_cast %166 : i32 to index
    %c9_191 = arith.constant 9 : index
    %c0_192 = arith.constant 0 : index
    %168 = vector.load %arg10[%c0_190, %167, %c9_191, %c0_192] : memref<2x18x32x4xf32, #tpu.memory_space<vmem>>, vector<2x8x16x4xf32>
    %c1_i32_193 = arith.constant 1 : i32
    %169 = arith.addi %159, %c1_i32_193 : i32
    %c0_194 = arith.constant 0 : index
    %170 = arith.index_cast %169 : i32 to index
    %c7_195 = arith.constant 7 : index
    %c0_196 = arith.constant 0 : index
    %171 = vector.load %arg10[%c0_194, %170, %c7_195, %c0_196] : memref<2x18x32x4xf32, #tpu.memory_space<vmem>>, vector<2x8x16x4xf32>
    %c1_i32_197 = arith.constant 1 : i32
    %172 = arith.addi %159, %c1_i32_197 : i32
    %c0_198 = arith.constant 0 : index
    %173 = arith.index_cast %172 : i32 to index
    %c8_199 = arith.constant 8 : index
    %c0_200 = arith.constant 0 : index
    %174 = vector.load %arg10[%c0_198, %173, %c8_199, %c0_200] : memref<2x18x32x4xf32, #tpu.memory_space<vmem>>, vector<2x8x16x4xf32>
    %c1_i32_201 = arith.constant 1 : i32
    %175 = arith.addi %159, %c1_i32_201 : i32
    %c0_202 = arith.constant 0 : index
    %176 = arith.index_cast %175 : i32 to index
    %c9_203 = arith.constant 9 : index
    %c0_204 = arith.constant 0 : index
    %177 = vector.load %arg10[%c0_202, %176, %c9_203, %c0_204] : memref<2x18x32x4xf32, #tpu.memory_space<vmem>>, vector<2x8x16x4xf32>
    %c2_i32_205 = arith.constant 2 : i32
    %178 = arith.addi %159, %c2_i32_205 : i32
    %c0_206 = arith.constant 0 : index
    %179 = arith.index_cast %178 : i32 to index
    %c7_207 = arith.constant 7 : index
    %c0_208 = arith.constant 0 : index
    %180 = vector.load %arg10[%c0_206, %179, %c7_207, %c0_208] : memref<2x18x32x4xf32, #tpu.memory_space<vmem>>, vector<2x8x16x4xf32>
    %c2_i32_209 = arith.constant 2 : i32
    %181 = arith.addi %159, %c2_i32_209 : i32
    %c0_210 = arith.constant 0 : index
    %182 = arith.index_cast %181 : i32 to index
    %c8_211 = arith.constant 8 : index
    %c0_212 = arith.constant 0 : index
    %183 = vector.load %arg10[%c0_210, %182, %c8_211, %c0_212] : memref<2x18x32x4xf32, #tpu.memory_space<vmem>>, vector<2x8x16x4xf32>
    %c2_i32_213 = arith.constant 2 : i32
    %184 = arith.addi %159, %c2_i32_213 : i32
    %c0_214 = arith.constant 0 : index
    %185 = arith.index_cast %184 : i32 to index
    %c9_215 = arith.constant 9 : index
    %c0_216 = arith.constant 0 : index
    %186 = vector.load %arg10[%c0_214, %185, %c9_215, %c0_216] : memref<2x18x32x4xf32, #tpu.memory_space<vmem>>, vector<2x8x16x4xf32>
    %187 = tpu.concatenate %162, %165, %168, %171, %174, %177, %180, %183, %186 in 3 : vector<2x8x16x4xf32>, vector<2x8x16x4xf32>, vector<2x8x16x4xf32>, vector<2x8x16x4xf32>, vector<2x8x16x4xf32>, vector<2x8x16x4xf32>, vector<2x8x16x4xf32>, vector<2x8x16x4xf32>, vector<2x8x16x4xf32> -> vector<2x8x16x36xf32>
    %188 = vector.shape_cast %187 : vector<2x8x16x36xf32> to vector<256x36xf32>
    %cst_217 = arith.constant dense<0.000000e+00> : vector<256x4xf32>
    %189 = tpu.matmul %188, %15, %cst_217 {dimension_numbers = #tpu.dot_dimension_numbers<[1], [0], [0], [1], [0, 0, 1, 1], [], []>} : vector<256x36xf32>, vector<36x4xf32>, vector<256x4xf32> -> vector<256x4xf32>
    %190 = vector.shape_cast %189 : vector<256x4xf32> to vector<2x8x16x4xf32>
    %c0_218 = arith.constant 0 : index
    %191 = arith.index_cast %159 : i32 to index
    %c0_219 = arith.constant 0 : index
    %c0_220 = arith.constant 0 : index
    %192 = vector.load %arg1[%c0_218, %191, %c0_219, %c0_220] : memref<2x16x16x4xf32, #tpu.memory_space<vmem>>, vector<2x8x16x4xf32>
    %193 = vector.shape_cast %21 : vector<4xf32> to vector<1x1x1x4xf32>
    %194 = vector.broadcast %193 : vector<1x1x1x4xf32> to vector<2x8x16x4xf32>
    %195 = arith.mulf %190, %194 : vector<2x8x16x4xf32>
    %196 = vector.shape_cast %23 : vector<4xf32> to vector<1x1x1x4xf32>
    %197 = vector.broadcast %196 : vector<1x1x1x4xf32> to vector<2x8x16x4xf32>
    %198 = arith.addf %195, %197 : vector<2x8x16x4xf32>
    %199 = arith.addf %198, %192 : vector<2x8x16x4xf32>
    %cst_221 = arith.constant 0.000000e+00 : f32
    %200 = vector.broadcast %cst_221 : f32 to vector<2x8x16x4xf32>
    %201 = arith.maximumf %199, %200 : vector<2x8x16x4xf32>
    %c0_222 = arith.constant 0 : index
    %202 = arith.index_cast %159 : i32 to index
    %c0_223 = arith.constant 0 : index
    %c0_224 = arith.constant 0 : index
    %203 = vector.load %arg8[%c0_222, %202, %c0_223, %c0_224] : memref<2x16x16x4xf32, #tpu.memory_space<vmem>>, vector<2x8x16x4xf32>
    tpu.vector_store %arg8[%c0_222, %202, %c0_223, %c0_224], %201 {strides = array<i32>} : memref<2x16x16x4xf32, #tpu.memory_space<vmem>>, vector<2x8x16x4xf32>,
    %c2_i32_225 = arith.constant 2 : i32
    return
  }
  func.func @transform_0(%arg0: i32) -> (i32, i32, i32, i32) {
    %c0_i32 = arith.constant 0 : i32
    %c0_i32_0 = arith.constant 0 : i32
    %c0_i32_1 = arith.constant 0 : i32
    %c0_i32_2 = arith.constant 0 : i32
    return %arg0, %c0_i32, %c0_i32_0, %c0_i32_1 : i32, i32, i32, i32
  }
  func.func @transform_1(%arg0: i32) -> (i32, i32) {
    %c0_i32 = arith.constant 0 : i32
    %c0_i32_0 = arith.constant 0 : i32
    %c0_i32_1 = arith.constant 0 : i32
    return %c0_i32, %c0_i32_0 : i32, i32
  }
  func.func @transform_2(%arg0: i32) -> (i32, i32) {
    %c0_i32 = arith.constant 0 : i32
    %c0_i32_0 = arith.constant 0 : i32
    %c0_i32_1 = arith.constant 0 : i32
    return %c0_i32, %c0_i32_0 : i32, i32
  }
  func.func @transform_3(%arg0: i32) -> (i32, i32) {
    %c0_i32 = arith.constant 0 : i32
    %c0_i32_0 = arith.constant 0 : i32
    %c0_i32_1 = arith.constant 0 : i32
    return %c0_i32, %c0_i32_0 : i32, i32
  }
  func.func @transform_4(%arg0: i32) -> (i32, i32) {
    %c0_i32 = arith.constant 0 : i32
    %c0_i32_0 = arith.constant 0 : i32
    %c0_i32_1 = arith.constant 0 : i32
    return %c0_i32, %c0_i32_0 : i32, i32
  }
  func.func @transform_5(%arg0: i32) -> (i32, i32) {
    %c0_i32 = arith.constant 0 : i32
    %c0_i32_0 = arith.constant 0 : i32
    %c0_i32_1 = arith.constant 0 : i32
    return %c0_i32, %c0_i32_0 : i32, i32
  }
  func.func @transform_6(%arg0: i32) -> (i32, i32) {
    %c0_i32 = arith.constant 0 : i32
    %c0_i32_0 = arith.constant 0 : i32
    %c0_i32_1 = arith.constant 0 : i32
    return %c0_i32, %c0_i32_0 : i32, i32
  }
  func.func @transform_7(%arg0: i32) -> (i32, i32, i32, i32) {
    %c0_i32 = arith.constant 0 : i32
    %c0_i32_0 = arith.constant 0 : i32
    %c0_i32_1 = arith.constant 0 : i32
    %c0_i32_2 = arith.constant 0 : i32
    return %arg0, %c0_i32, %c0_i32_0, %c0_i32_1 : i32, i32, i32, i32
  }
}

</mosaic_0001>

<llo_original>
// kernel: tpu_custom_call.1
$region0: #{tpu_custom_call.1}
  #allocation0 [shape = 'u32[]', space=smem, size = 0x4, offset = 0x4, fixed_abs, tag = 'smem constant byte address 0x4 - core index']
  #allocation1 [shape = 'u32[144,128]{1,0:T(1,128)}', space=vmem, size = 0x12000, scoped, tag = 'internal scratch']
  #allocation2 [shape = 'f32[2,18,32,4]{3,2,1,0:T(8,128)}', space=vmem, size = 0x90000, scoped, tag = 'scratch operand']
  #allocation3 [shape = 'f32[2,18,32,4]{3,2,1,0:T(8,128)}', space=vmem, size = 0x90000, scoped, tag = 'scratch operand']
  %s0 = inlined_call_operand.vmem [shape: f32[2,16,16,4], index: 0, kind: input, shape index: {}]
  %s1 = inlined_call_operand.vmem [shape: f32[36,4], index: 1, kind: input, shape index: {}]
  %s2 = inlined_call_operand.vmem [shape: f32[1,4], index: 2, kind: input, shape index: {}]
  %s3 = inlined_call_operand.vmem [shape: f32[1,4], index: 3, kind: input, shape index: {}]
  %s4 = inlined_call_operand.vmem [shape: f32[36,4], index: 4, kind: input, shape index: {}]
  %s5 = inlined_call_operand.vmem [shape: f32[1,4], index: 5, kind: input, shape index: {}]
  %s6 = inlined_call_operand.vmem [shape: f32[1,4], index: 6, kind: input, shape index: {}]
  %s7 = inlined_call_operand.vmem [shape: f32[2,16,16,4], index: 7, kind: output, shape index: {}]
  %s8 = sld [smem:[#allocation0]]
  $region38: #{tpu_custom_call.1} parent=0
    _
  %s10 = ssub.s32 1, %s8
  %s11 = scalar_select 0, %s10, %s8
  // Predicated region
  $region2: #{tpu_custom_call.1} parent=0 // pred_check
    _
  $region3: #{tpu_custom_call.1} parent=0 // pred_check_branch
    %13 = sbr.rel (0) target = $region5
  $region4: #{tpu_custom_call.1} parent=0 // pred_region
    _
  $region5: #{tpu_custom_call.1} parent=0 // pred_fallthru
    _
  // Predicated region
  $region6: #{tpu_custom_call.1} parent=0 // pred_check
    _
  $region7: #{tpu_custom_call.1} parent=0 // pred_check_branch
    %15 = sbr.rel (0) target = $region9
  $region8: #{tpu_custom_call.1} parent=0 // pred_region
    _
  $region9: #{tpu_custom_call.1} parent=0 // pred_fallthru
    _
  // Predicated region
  $region10: #{tpu_custom_call.1} parent=0 // pred_check
    _
  $region11: #{tpu_custom_call.1} parent=0 // pred_check_branch
    %17 = sbr.rel (0) target = $region13
  $region12: #{tpu_custom_call.1} parent=0 // pred_region
    _
  $region13: #{tpu_custom_call.1} parent=0 // pred_fallthru
    _
  // Predicated region
  $region14: #{tpu_custom_call.1} parent=0 // pred_check
    _
  $region15: #{tpu_custom_call.1} parent=0 // pred_check_branch
    %19 = sbr.rel (0) target = $region17
  $region16: #{tpu_custom_call.1} parent=0 // pred_region
    _
  $region17: #{tpu_custom_call.1} parent=0 // pred_fallthru
    _
  // Predicated region
  $region18: #{tpu_custom_call.1} parent=0 // pred_check
    _
  $region19: #{tpu_custom_call.1} parent=0 // pred_check_branch
    %21 = sbr.rel (0) target = $region21
  $region20: #{tpu_custom_call.1} parent=0 // pred_region
    _
  $region21: #{tpu_custom_call.1} parent=0 // pred_fallthru
    _
  // Predicated region
  $region22: #{tpu_custom_call.1} parent=0 // pred_check
    _
  $region23: #{tpu_custom_call.1} parent=0 // pred_check_branch
    %23 = sbr.rel (0) target = $region25
  $region24: #{tpu_custom_call.1} parent=0 // pred_region
    _
  $region25: #{tpu_custom_call.1} parent=0 // pred_fallthru
    _
  // Predicated region
  $region26: #{tpu_custom_call.1} parent=0 // pred_check
    _
  $region27: #{tpu_custom_call.1} parent=0 // pred_check_branch
    %25 = sbr.rel (0) target = $region29
  $region28: #{tpu_custom_call.1} parent=0 // pred_region
    _
  $region29: #{tpu_custom_call.1} parent=0 // pred_fallthru
    _
  %vm26 = vcmask 31744
  %27 = vst.msk [vmem:[#allocation2] sm:$0xff] %vm26, 0.0
  %28 = vst.msk [vmem:[#allocation2 + $0x20] sm:$0xff] %vm26, 0.0
  %29 = vst.msk [vmem:[#allocation2 + $0x40] sm:$0xff] %vm26, 0.0
  %30 = vst.msk [vmem:[#allocation2 + $0x60] sm:$0xff] %vm26, 0.0
  %31 = vst.msk [vmem:[#allocation2 + $0x80] sm:$0xff] %vm26, 0.0
  %32 = vst.msk [vmem:[#allocation2 + $0xa0] sm:$0xff] %vm26, 0.0
  %33 = vst.msk [vmem:[#allocation2 + $0xc0] sm:$0xff] %vm26, 0.0
  %34 = vst.msk [vmem:[#allocation2 + $0xe0] sm:$0xff] %vm26, 0.0
  %35 = vst.msk [vmem:[#allocation2 + $0x100] sm:$0xff] %vm26, 0.0
  %36 = vst.msk [vmem:[#allocation2 + $0x120] sm:$0xff] %vm26, 0.0
  %37 = vst.msk [vmem:[#allocation2 + $0x140] sm:$0xff] %vm26, 0.0
  %38 = vst.msk [vmem:[#allocation2 + $0x160] sm:$0xff] %vm26, 0.0
  %39 = vst.msk [vmem:[#allocation2 + $0x180] sm:$0xff] %vm26, 0.0
  %40 = vst.msk [vmem:[#allocation2 + $0x1a0] sm:$0xff] %vm26, 0.0
  %41 = vst.msk [vmem:[#allocation2 + $0x1c0] sm:$0xff] %vm26, 0.0
  %42 = vst.msk [vmem:[#allocation2 + $0x1e0] sm:$0xff] %vm26, 0.0
  %43 = vst.msk [vmem:[#allocation2 + $0x200] sm:$0xff] %vm26, 0.0
  %44 = vst.msk [vmem:[#allocation2 + $0x220] sm:$0xff] %vm26, 0.0
  %45 = vst.msk [vmem:[#allocation2 + $0x240] sm:$0xff] %vm26, 0.0
  %46 = vst.msk [vmem:[#allocation2 + $0x260] sm:$0xff] %vm26, 0.0
  %47 = vst.msk [vmem:[#allocation2 + $0x280] sm:$0xff] %vm26, 0.0
  %48 = vst.msk [vmem:[#allocation2 + $0x2a0] sm:$0xff] %vm26, 0.0
  %49 = vst.msk [vmem:[#allocation2 + $0x2c0] sm:$0xff] %vm26, 0.0
  %50 = vst.msk [vmem:[#allocation2 + $0x2e0] sm:$0xff] %vm26, 0.0
  %51 = vst.msk [vmem:[#allocation2 + $0x300] sm:$0xff] %vm26, 0.0
  %52 = vst.msk [vmem:[#allocation2 + $0x320] sm:$0xff] %vm26, 0.0
  %53 = vst.msk [vmem:[#allocation2 + $0x340] sm:$0xff] %vm26, 0.0
  %54 = vst.msk [vmem:[#allocation2 + $0x360] sm:$0xff] %vm26, 0.0
  %55 = vst.msk [vmem:[#allocation2 + $0x380] sm:$0xff] %vm26, 0.0
  %56 = vst.msk [vmem:[#allocation2 + $0x3a0] sm:$0xff] %vm26, 0.0
  %57 = vst.msk [vmem:[#allocation2 + $0x3c0] sm:$0xff] %vm26, 0.0
  %58 = vst.msk [vmem:[#allocation2 + $0x3e0] sm:$0xff] %vm26, 0.0
  %59 = vst.msk [vmem:[#allocation2 + $0x400] sm:$0xff] %vm26, 0.0
  %60 = vst.msk [vmem:[#allocation2 + $0x420] sm:$0xff] %vm26, 0.0
  %61 = vst.msk [vmem:[#allocation2 + $0x440] sm:$0xff] %vm26, 0.0
  %62 = vst.msk [vmem:[#allocation2 + $0x460] sm:$0xff] %vm26, 0.0
  %63 = vst.msk [vmem:[#allocation2 + $0x18] sm:$0xff] %vm26, 0.0
  %64 = vst.msk [vmem:[#allocation2 + $0x38] sm:$0xff] %vm26, 0.0
  %65 = vst.msk [vmem:[#allocation2 + $0x58] sm:$0xff] %vm26, 0.0
  %66 = vst.msk [vmem:[#allocation2 + $0x78] sm:$0xff] %vm26, 0.0
  %67 = vst.msk [vmem:[#allocation2 + $0x98] sm:$0xff] %vm26, 0.0
  %68 = vst.msk [vmem:[#allocation2 + $0xb8] sm:$0xff] %vm26, 0.0
  %69 = vst.msk [vmem:[#allocation2 + $0xd8] sm:$0xff] %vm26, 0.0
  %70 = vst.msk [vmem:[#allocation2 + $0xf8] sm:$0xff] %vm26, 0.0
  %71 = vst.msk [vmem:[#allocation2 + $0x118] sm:$0xff] %vm26, 0.0
  %72 = vst.msk [vmem:[#allocation2 + $0x138] sm:$0xff] %vm26, 0.0
  %73 = vst.msk [vmem:[#allocation2 + $0x158] sm:$0xff] %vm26, 0.0
  %74 = vst.msk [vmem:[#allocation2 + $0x178] sm:$0xff] %vm26, 0.0
  %75 = vst.msk [vmem:[#allocation2 + $0x198] sm:$0xff] %vm26, 0.0
  %76 = vst.msk [vmem:[#allocation2 + $0x1b8] sm:$0xff] %vm26, 0.0
  %77 = vst.msk [vmem:[#allocation2 + $0x1d8] sm:$0xff] %vm26, 0.0
  %78 = vst.msk [vmem:[#allocation2 + $0x1f8] sm:$0xff] %vm26, 0.0
  %79 = vst.msk [vmem:[#allocation2 + $0x218] sm:$0xff] %vm26, 0.0
  %80 = vst.msk [vmem:[#allocation2 + $0x238] sm:$0xff] %vm26, 0.0
  %81 = vst.msk [vmem:[#allocation2 + $0x258] sm:$0xff] %vm26, 0.0
  %82 = vst.msk [vmem:[#allocation2 + $0x278] sm:$0xff] %vm26, 0.0
  %83 = vst.msk [vmem:[#allocation2 + $0x298] sm:$0xff] %vm26, 0.0
  %84 = vst.msk [vmem:[#allocation2 + $0x2b8] sm:$0xff] %vm26, 0.0
  %85 = vst.msk [vmem:[#allocation2 + $0x2d8] sm:$0xff] %vm26, 0.0
  %86 = vst.msk [vmem:[#allocation2 + $0x2f8] sm:$0xff] %vm26, 0.0
  %87 = vst.msk [vmem:[#allocation2 + $0x318] sm:$0xff] %vm26, 0.0
  %88 = vst.msk [vmem:[#allocation2 + $0x338] sm:$0xff] %vm26, 0.0
  %89 = vst.msk [vmem:[#allocation2 + $0x358] sm:$0xff] %vm26, 0.0
  %90 = vst.msk [vmem:[#allocation2 + $0x378] sm:$0xff] %vm26, 0.0
  %91 = vst.msk [vmem:[#allocation2 + $0x398] sm:$0xff] %vm26, 0.0
  %92 = vst.msk [vmem:[#allocation2 + $0x3b8] sm:$0xff] %vm26, 0.0
  %93 = vst.msk [vmem:[#allocation2 + $0x3d8] sm:$0xff] %vm26, 0.0
  %94 = vst.msk [vmem:[#allocation2 + $0x3f8] sm:$0xff] %vm26, 0.0
  %95 = vst.msk [vmem:[#allocation2 + $0x418] sm:$0xff] %vm26, 0.0
  %96 = vst.msk [vmem:[#allocation2 + $0x438] sm:$0xff] %vm26, 0.0
  %97 = vst.msk [vmem:[#allocation2 + $0x458] sm:$0xff] %vm26, 0.0
  %98 = vst.msk [vmem:[#allocation2 + $0x478] sm:$0xff] %vm26, 0.0
  %99 = vst.msk [vmem:[#allocation2 + $0x8] sm:$0xff] %vm26, 0.0
  %100 = vst.msk [vmem:[#allocation2 + $0x10] sm:$0xff] %vm26, 0.0
  %101 = vst.msk [vmem:[#allocation2 + $0x248] sm:$0xff] %vm26, 0.0
  %102 = vst.msk [vmem:[#allocation2 + $0x250] sm:$0xff] %vm26, 0.0
  %s103 = scalar_lea.vmem [#allocation2], 544
  %104 = vst.msk [vmem:[%s103 + $0x8] sm:$0xff] %vm26, 0.0
  %105 = vst.msk [vmem:[%s103 + $0x10] sm:$0xff] %vm26, 0.0
  %106 = vst.msk [vmem:[%s103 + $0x248] sm:$0xff] %vm26, 0.0
  %107 = vst.msk [vmem:[%s103 + $0x250] sm:$0xff] %vm26, 0.0
  %108 = vst.msk [vmem:[#allocation3] sm:$0xff] %vm26, 0.0
  %109 = vst.msk [vmem:[#allocation3 + $0x20] sm:$0xff] %vm26, 0.0
  %110 = vst.msk [vmem:[#allocation3 + $0x40] sm:$0xff] %vm26, 0.0
  %111 = vst.msk [vmem:[#allocation3 + $0x60] sm:$0xff] %vm26, 0.0
  %112 = vst.msk [vmem:[#allocation3 + $0x80] sm:$0xff] %vm26, 0.0
  %113 = vst.msk [vmem:[#allocation3 + $0xa0] sm:$0xff] %vm26, 0.0
  %114 = vst.msk [vmem:[#allocation3 + $0xc0] sm:$0xff] %vm26, 0.0
  %115 = vst.msk [vmem:[#allocation3 + $0xe0] sm:$0xff] %vm26, 0.0
  %116 = vst.msk [vmem:[#allocation3 + $0x100] sm:$0xff] %vm26, 0.0
  %117 = vst.msk [vmem:[#allocation3 + $0x120] sm:$0xff] %vm26, 0.0
  %118 = vst.msk [vmem:[#allocation3 + $0x140] sm:$0xff] %vm26, 0.0
  %119 = vst.msk [vmem:[#allocation3 + $0x160] sm:$0xff] %vm26, 0.0
  %120 = vst.msk [vmem:[#allocation3 + $0x180] sm:$0xff] %vm26, 0.0
  %121 = vst.msk [vmem:[#allocation3 + $0x1a0] sm:$0xff] %vm26, 0.0
  %122 = vst.msk [vmem:[#allocation3 + $0x1c0] sm:$0xff] %vm26, 0.0
  %123 = vst.msk [vmem:[#allocation3 + $0x1e0] sm:$0xff] %vm26, 0.0
  %124 = vst.msk [vmem:[#allocation3 + $0x200] sm:$0xff] %vm26, 0.0
  %125 = vst.msk [vmem:[#allocation3 + $0x220] sm:$0xff] %vm26, 0.0
  %126 = vst.msk [vmem:[#allocation3 + $0x240] sm:$0xff] %vm26, 0.0
  %127 = vst.msk [vmem:[#allocation3 + $0x260] sm:$0xff] %vm26, 0.0
  %128 = vst.msk [vmem:[#allocation3 + $0x280] sm:$0xff] %vm26, 0.0
  %129 = vst.msk [vmem:[#allocation3 + $0x2a0] sm:$0xff] %vm26, 0.0
  %130 = vst.msk [vmem:[#allocation3 + $0x2c0] sm:$0xff] %vm26, 0.0
  %131 = vst.msk [vmem:[#allocation3 + $0x2e0] sm:$0xff] %vm26, 0.0
  %132 = vst.msk [vmem:[#allocation3 + $0x300] sm:$0xff] %vm26, 0.0
  %133 = vst.msk [vmem:[#allocation3 + $0x320] sm:$0xff] %vm26, 0.0
  %134 = vst.msk [vmem:[#allocation3 + $0x340] sm:$0xff] %vm26, 0.0
  %135 = vst.msk [vmem:[#allocation3 + $0x360] sm:$0xff] %vm26, 0.0
  %136 = vst.msk [vmem:[#allocation3 + $0x380] sm:$0xff] %vm26, 0.0
  %137 = vst.msk [vmem:[#allocation3 + $0x3a0] sm:$0xff] %vm26, 0.0
  %138 = vst.msk [vmem:[#allocation3 + $0x3c0] sm:$0xff] %vm26, 0.0
  %139 = vst.msk [vmem:[#allocation3 + $0x3e0] sm:$0xff] %vm26, 0.0
  %140 = vst.msk [vmem:[#allocation3 + $0x400] sm:$0xff] %vm26, 0.0
  %141 = vst.msk [vmem:[#allocation3 + $0x420] sm:$0xff] %vm26, 0.0
  %142 = vst.msk [vmem:[#allocation3 + $0x440] sm:$0xff] %vm26, 0.0
  %143 = vst.msk [vmem:[#allocation3 + $0x460] sm:$0xff] %vm26, 0.0
  %144 = vst.msk [vmem:[#allocation3 + $0x18] sm:$0xff] %vm26, 0.0
  %145 = vst.msk [vmem:[#allocation3 + $0x38] sm:$0xff] %vm26, 0.0
  %146 = vst.msk [vmem:[#allocation3 + $0x58] sm:$0xff] %vm26, 0.0
  %147 = vst.msk [vmem:[#allocation3 + $0x78] sm:$0xff] %vm26, 0.0
  %148 = vst.msk [vmem:[#allocation3 + $0x98] sm:$0xff] %vm26, 0.0
  %149 = vst.msk [vmem:[#allocation3 + $0xb8] sm:$0xff] %vm26, 0.0
  %150 = vst.msk [vmem:[#allocation3 + $0xd8] sm:$0xff] %vm26, 0.0
  %151 = vst.msk [vmem:[#allocation3 + $0xf8] sm:$0xff] %vm26, 0.0
  %152 = vst.msk [vmem:[#allocation3 + $0x118] sm:$0xff] %vm26, 0.0
  %153 = vst.msk [vmem:[#allocation3 + $0x138] sm:$0xff] %vm26, 0.0
  %154 = vst.msk [vmem:[#allocation3 + $0x158] sm:$0xff] %vm26, 0.0
  %155 = vst.msk [vmem:[#allocation3 + $0x178] sm:$0xff] %vm26, 0.0
  %156 = vst.msk [vmem:[#allocation3 + $0x198] sm:$0xff] %vm26, 0.0
  %157 = vst.msk [vmem:[#allocation3 + $0x1b8] sm:$0xff] %vm26, 0.0
  %158 = vst.msk [vmem:[#allocation3 + $0x1d8] sm:$0xff] %vm26, 0.0
  %159 = vst.msk [vmem:[#allocation3 + $0x1f8] sm:$0xff] %vm26, 0.0
  %160 = vst.msk [vmem:[#allocation3 + $0x218] sm:$0xff] %vm26, 0.0
  %161 = vst.msk [vmem:[#allocation3 + $0x238] sm:$0xff] %vm26, 0.0
  %162 = vst.msk [vmem:[#allocation3 + $0x258] sm:$0xff] %vm26, 0.0
  %163 = vst.msk [vmem:[#allocation3 + $0x278] sm:$0xff] %vm26, 0.0
  %164 = vst.msk [vmem:[#allocation3 + $0x298] sm:$0xff] %vm26, 0.0
  %165 = vst.msk [vmem:[#allocation3 + $0x2b8] sm:$0xff] %vm26, 0.0
  %166 = vst.msk [vmem:[#allocation3 + $0x2d8] sm:$0xff] %vm26, 0.0
  %167 = vst.msk [vmem:[#allocation3 + $0x2f8] sm:$0xff] %vm26, 0.0
  %168 = vst.msk [vmem:[#allocation3 + $0x318] sm:$0xff] %vm26, 0.0
  %169 = vst.msk [vmem:[#allocation3 + $0x338] sm:$0xff] %vm26, 0.0
  %170 = vst.msk [vmem:[#allocation3 + $0x358] sm:$0xff] %vm26, 0.0
  %171 = vst.msk [vmem:[#allocation3 + $0x378] sm:$0xff] %vm26, 0.0
  %172 = vst.msk [vmem:[#allocation3 + $0x398] sm:$0xff] %vm26, 0.0
  %173 = vst.msk [vmem:[#allocation3 + $0x3b8] sm:$0xff] %vm26, 0.0
  %174 = vst.msk [vmem:[#allocation3 + $0x3d8] sm:$0xff] %vm26, 0.0
  %175 = vst.msk [vmem:[#allocation3 + $0x3f8] sm:$0xff] %vm26, 0.0
  %176 = vst.msk [vmem:[#allocation3 + $0x418] sm:$0xff] %vm26, 0.0
  %177 = vst.msk [vmem:[#allocation3 + $0x438] sm:$0xff] %vm26, 0.0
  %178 = vst.msk [vmem:[#allocation3 + $0x458] sm:$0xff] %vm26, 0.0
  %179 = vst.msk [vmem:[#allocation3 + $0x478] sm:$0xff] %vm26, 0.0
  %180 = vst.msk [vmem:[#allocation3 + $0x8] sm:$0xff] %vm26, 0.0
  %181 = vst.msk [vmem:[#allocation3 + $0x10] sm:$0xff] %vm26, 0.0
  %182 = vst.msk [vmem:[#allocation3 + $0x248] sm:$0xff] %vm26, 0.0
  %183 = vst.msk [vmem:[#allocation3 + $0x250] sm:$0xff] %vm26, 0.0
  %s184 = scalar_lea.vmem [#allocation3], 544
  %185 = vst.msk [vmem:[%s184 + $0x8] sm:$0xff] %vm26, 0.0
  %186 = vst.msk [vmem:[%s184 + $0x10] sm:$0xff] %vm26, 0.0
  %187 = vst.msk [vmem:[%s184 + $0x248] sm:$0xff] %vm26, 0.0
  %188 = vst.msk [vmem:[%s184 + $0x250] sm:$0xff] %vm26, 0.0
  %v189 = vld [vmem:[%s0] sm:$0xff]
  %v190 = vld [vmem:[%s0 + $0x8] sm:$0xff]
  %v191 = vld [vmem:[%s0 + $0x10] sm:$0xff]
  %v192 = vld [vmem:[%s0 + $0x18] sm:$0xff]
  %v193 = vld [vmem:[%s0 + $0x20] sm:$0xff]
  %v194 = vld [vmem:[%s0 + $0x28] sm:$0xff]
  %v195 = vld [vmem:[%s0 + $0x30] sm:$0xff]
  %v196 = vld [vmem:[%s0 + $0x38] sm:$0xff]
  %v197 = vld [vmem:[%s0 + $0x40] sm:$0xff]
  %v198 = vld [vmem:[%s0 + $0x48] sm:$0xff]
  %v199 = vld [vmem:[%s0 + $0x50] sm:$0xff]
  %v200 = vld [vmem:[%s0 + $0x58] sm:$0xff]
  %v201 = vld [vmem:[%s0 + $0x60] sm:$0xff]
  %v202 = vld [vmem:[%s0 + $0x68] sm:$0xff]
  %v203 = vld [vmem:[%s0 + $0x70] sm:$0xff]
  %v204 = vld [vmem:[%s0 + $0x78] sm:$0xff]
  %v205 = vld [vmem:[%s0 + $0x80] sm:$0xff]
  %v206 = vld [vmem:[%s0 + $0x88] sm:$0xff]
  %v207 = vld [vmem:[%s0 + $0x90] sm:$0xff]
  %v208 = vld [vmem:[%s0 + $0x98] sm:$0xff]
  %v209 = vld [vmem:[%s0 + $0xa0] sm:$0xff]
  %v210 = vld [vmem:[%s0 + $0xa8] sm:$0xff]
  %v211 = vld [vmem:[%s0 + $0xb0] sm:$0xff]
  %v212 = vld [vmem:[%s0 + $0xb8] sm:$0xff]
  %v213 = vld [vmem:[%s0 + $0xc0] sm:$0xff]
  %v214 = vld [vmem:[%s0 + $0xc8] sm:$0xff]
  %v215 = vld [vmem:[%s0 + $0xd0] sm:$0xff]
  %v216 = vld [vmem:[%s0 + $0xd8] sm:$0xff]
  %v217 = vld [vmem:[%s0 + $0xe0] sm:$0xff]
  %v218 = vld [vmem:[%s0 + $0xe8] sm:$0xff]
  %v219 = vld [vmem:[%s0 + $0xf0] sm:$0xff]
  %v220 = vld [vmem:[%s0 + $0xf8] sm:$0xff]
  %v221 = vld [vmem:[%s0 + $0x100] sm:$0xff]
  %v222 = vld [vmem:[%s0 + $0x108] sm:$0xff]
  %v223 = vld [vmem:[%s0 + $0x110] sm:$0xff]
  %v224 = vld [vmem:[%s0 + $0x118] sm:$0xff]
  %v225 = vld [vmem:[%s0 + $0x120] sm:$0xff]
  %v226 = vld [vmem:[%s0 + $0x128] sm:$0xff]
  %v227 = vld [vmem:[%s0 + $0x130] sm:$0xff]
  %v228 = vld [vmem:[%s0 + $0x138] sm:$0xff]
  %v229 = vld [vmem:[%s0 + $0x140] sm:$0xff]
  %v230 = vld [vmem:[%s0 + $0x148] sm:$0xff]
  %v231 = vld [vmem:[%s0 + $0x150] sm:$0xff]
  %v232 = vld [vmem:[%s0 + $0x158] sm:$0xff]
  %v233 = vld [vmem:[%s0 + $0x160] sm:$0xff]
  %v234 = vld [vmem:[%s0 + $0x168] sm:$0xff]
  %v235 = vld [vmem:[%s0 + $0x170] sm:$0xff]
  %v236 = vld [vmem:[%s0 + $0x178] sm:$0xff]
  %v237 = vld [vmem:[%s0 + $0x180] sm:$0xff]
  %v238 = vld [vmem:[%s0 + $0x188] sm:$0xff]
  %v239 = vld [vmem:[%s0 + $0x190] sm:$0xff]
  %v240 = vld [vmem:[%s0 + $0x198] sm:$0xff]
  %v241 = vld [vmem:[%s0 + $0x1a0] sm:$0xff]
  %v242 = vld [vmem:[%s0 + $0x1a8] sm:$0xff]
  %v243 = vld [vmem:[%s0 + $0x1b0] sm:$0xff]
  %v244 = vld [vmem:[%s0 + $0x1b8] sm:$0xff]
  %v245 = vld [vmem:[%s0 + $0x1c0] sm:$0xff]
  %v246 = vld [vmem:[%s0 + $0x1c8] sm:$0xff]
  %v247 = vld [vmem:[%s0 + $0x1d0] sm:$0xff]
  %v248 = vld [vmem:[%s0 + $0x1d8] sm:$0xff]
  %v249 = vld [vmem:[%s0 + $0x1e0] sm:$0xff]
  %v250 = vld [vmem:[%s0 + $0x1e8] sm:$0xff]
  %v251 = vld [vmem:[%s0 + $0x1f0] sm:$0xff]
  %v252 = vld [vmem:[%s0 + $0x1f8] sm:$0xff]
  %s253 = scalar_lea.vmem [#allocation2], 32
  %254 = vst.msk [vmem:[%s253 + $0x8] sm:$0xff] %vm26, %v189
  %255 = vst.msk [vmem:[%s253 + $0x10] sm:$0xff] %vm26, %v190
  %256 = vst.msk [vmem:[%s253 + $0x28] sm:$0xff] %vm26, %v191
  %257 = vst.msk [vmem:[%s253 + $0x30] sm:$0xff] %vm26, %v192
  %258 = vst.msk [vmem:[%s253 + $0x48] sm:$0xff] %vm26, %v193
  %259 = vst.msk [vmem:[%s253 + $0x50] sm:$0xff] %vm26, %v194
  %260 = vst.msk [vmem:[%s253 + $0x68] sm:$0xff] %vm26, %v195
  %261 = vst.msk [vmem:[%s253 + $0x70] sm:$0xff] %vm26, %v196
  %262 = vst.msk [vmem:[%s253 + $0x88] sm:$0xff] %vm26, %v197
  %263 = vst.msk [vmem:[%s253 + $0x90] sm:$0xff] %vm26, %v198
  %264 = vst.msk [vmem:[%s253 + $0xa8] sm:$0xff] %vm26, %v199
  %265 = vst.msk [vmem:[%s253 + $0xb0] sm:$0xff] %vm26, %v200
  %266 = vst.msk [vmem:[%s253 + $0xc8] sm:$0xff] %vm26, %v201
  %267 = vst.msk [vmem:[%s253 + $0xd0] sm:$0xff] %vm26, %v202
  %268 = vst.msk [vmem:[%s253 + $0xe8] sm:$0xff] %vm26, %v203
  %269 = vst.msk [vmem:[%s253 + $0xf0] sm:$0xff] %vm26, %v204
  %270 = vst.msk [vmem:[%s253 + $0x108] sm:$0xff] %vm26, %v205
  %271 = vst.msk [vmem:[%s253 + $0x110] sm:$0xff] %vm26, %v206
  %272 = vst.msk [vmem:[%s253 + $0x128] sm:$0xff] %vm26, %v207
  %273 = vst.msk [vmem:[%s253 + $0x130] sm:$0xff] %vm26, %v208
  %274 = vst.msk [vmem:[%s253 + $0x148] sm:$0xff] %vm26, %v209
  %275 = vst.msk [vmem:[%s253 + $0x150] sm:$0xff] %vm26, %v210
  %276 = vst.msk [vmem:[%s253 + $0x168] sm:$0xff] %vm26, %v211
  %277 = vst.msk [vmem:[%s253 + $0x170] sm:$0xff] %vm26, %v212
  %278 = vst.msk [vmem:[%s253 + $0x188] sm:$0xff] %vm26, %v213
  %279 = vst.msk [vmem:[%s253 + $0x190] sm:$0xff] %vm26, %v214
  %280 = vst.msk [vmem:[%s253 + $0x1a8] sm:$0xff] %vm26, %v215
  %281 = vst.msk [vmem:[%s253 + $0x1b0] sm:$0xff] %vm26, %v216
  %282 = vst.msk [vmem:[%s253 + $0x1c8] sm:$0xff] %vm26, %v217
  %283 = vst.msk [vmem:[%s253 + $0x1d0] sm:$0xff] %vm26, %v218
  %284 = vst.msk [vmem:[%s253 + $0x1e8] sm:$0xff] %vm26, %v219
  %285 = vst.msk [vmem:[%s253 + $0x1f0] sm:$0xff] %vm26, %v220
  %286 = vst.msk [vmem:[%s253 + $0x248] sm:$0xff] %vm26, %v221
  %287 = vst.msk [vmem:[%s253 + $0x250] sm:$0xff] %vm26, %v222
  %288 = vst.msk [vmem:[%s253 + $0x268] sm:$0xff] %vm26, %v223
  %289 = vst.msk [vmem:[%s253 + $0x270] sm:$0xff] %vm26, %v224
  %290 = vst.msk [vmem:[%s253 + $0x288] sm:$0xff] %vm26, %v225
  %291 = vst.msk [vmem:[%s253 + $0x290] sm:$0xff] %vm26, %v226
  %292 = vst.msk [vmem:[%s253 + $0x2a8] sm:$0xff] %vm26, %v227
  %293 = vst.msk [vmem:[%s253 + $0x2b0] sm:$0xff] %vm26, %v228
  %294 = vst.msk [vmem:[%s253 + $0x2c8] sm:$0xff] %vm26, %v229
  %295 = vst.msk [vmem:[%s253 + $0x2d0] sm:$0xff] %vm26, %v230
  %296 = vst.msk [vmem:[%s253 + $0x2e8] sm:$0xff] %vm26, %v231
  %297 = vst.msk [vmem:[%s253 + $0x2f0] sm:$0xff] %vm26, %v232
  %298 = vst.msk [vmem:[%s253 + $0x308] sm:$0xff] %vm26, %v233
  %299 = vst.msk [vmem:[%s253 + $0x310] sm:$0xff] %vm26, %v234
  %300 = vst.msk [vmem:[%s253 + $0x328] sm:$0xff] %vm26, %v235
  %301 = vst.msk [vmem:[%s253 + $0x330] sm:$0xff] %vm26, %v236
  %302 = vst.msk [vmem:[%s253 + $0x348] sm:$0xff] %vm26, %v237
  %303 = vst.msk [vmem:[%s253 + $0x350] sm:$0xff] %vm26, %v238
  %304 = vst.msk [vmem:[%s253 + $0x368] sm:$0xff] %vm26, %v239
  %305 = vst.msk [vmem:[%s253 + $0x370] sm:$0xff] %vm26, %v240
  %306 = vst.msk [vmem:[%s253 + $0x388] sm:$0xff] %vm26, %v241
  %307 = vst.msk [vmem:[%s253 + $0x390] sm:$0xff] %vm26, %v242
  %308 = vst.msk [vmem:[%s253 + $0x3a8] sm:$0xff] %vm26, %v243
  %309 = vst.msk [vmem:[%s253 + $0x3b0] sm:$0xff] %vm26, %v244
  %310 = vst.msk [vmem:[%s253 + $0x3c8] sm:$0xff] %vm26, %v245
  %311 = vst.msk [vmem:[%s253 + $0x3d0] sm:$0xff] %vm26, %v246
  %312 = vst.msk [vmem:[%s253 + $0x3e8] sm:$0xff] %vm26, %v247
  %313 = vst.msk [vmem:[%s253 + $0x3f0] sm:$0xff] %vm26, %v248
  %314 = vst.msk [vmem:[%s253 + $0x408] sm:$0xff] %vm26, %v249
  %315 = vst.msk [vmem:[%s253 + $0x410] sm:$0xff] %vm26, %v250
  %316 = vst.msk [vmem:[%s253 + $0x428] sm:$0xff] %vm26, %v251
  %317 = vst.msk [vmem:[%s253 + $0x430] sm:$0xff] %vm26, %v252
  %v318 = vld [vmem:[%s1] sm:$0xff]
  %v319 = vld [vmem:[%s1 + $0x8] sm:$0xff]
  %v320 = vld [vmem:[%s1 + $0x10] sm:$0xff]
  %v321 = vld [vmem:[%s1 + $0x18] sm:$0xff]
  %v322 = vld [vmem:[%s1 + $0x20] sm:$0xf]
  %v323 = vld [vmem:[%s4] sm:$0xff]
  %v324 = vld [vmem:[%s4 + $0x8] sm:$0xff]
  %v325 = vld [vmem:[%s4 + $0x10] sm:$0xff]
  %v326 = vld [vmem:[%s4 + $0x18] sm:$0xff]
  %v327 = vld [vmem:[%s4 + $0x20] sm:$0xf]
  %v328 = vld [vmem:[%s2] sm:$0x1]
  %v329 = vld [vmem:[%s3] sm:$0x1]
  %v330 = vld [vmem:[%s5] sm:$0x1]
  %v331 = vld [vmem:[%s6] sm:$0x1]
  %s332 = smul.u32 0, 32
  %s333 = scalar_lea.vmem [#allocation2], %s332
  %v334 = vld [vmem:[%s333 + $0x7] sm:$0xff]
  %v335 = vld [vmem:[%s333 + $0xf] sm:$0xff]
  %v336 = vld [vmem:[%s333 + $0x27] sm:$0xff]
  %v337 = vld [vmem:[%s333 + $0x2f] sm:$0xff]
  %v338 = vld [vmem:[%s333 + $0x47] sm:$0xff]
  %v339 = vld [vmem:[%s333 + $0x4f] sm:$0xff]
  %v340 = vld [vmem:[%s333 + $0x67] sm:$0xff]
  %v341 = vld [vmem:[%s333 + $0x6f] sm:$0xff]
  %v342 = vld [vmem:[%s333 + $0x87] sm:$0xff]
  %v343 = vld [vmem:[%s333 + $0x8f] sm:$0xff]
  %v344 = vld [vmem:[%s333 + $0xa7] sm:$0xff]
  %v345 = vld [vmem:[%s333 + $0xaf] sm:$0xff]
  %v346 = vld [vmem:[%s333 + $0xc7] sm:$0xff]
  %v347 = vld [vmem:[%s333 + $0xcf] sm:$0xff]
  %v348 = vld [vmem:[%s333 + $0xe7] sm:$0xff]
  %v349 = vld [vmem:[%s333 + $0xef] sm:$0xff]
  %v350 = vld [vmem:[%s333 + $0x247] sm:$0xff]
  %v351 = vld [vmem:[%s333 + $0x24f] sm:$0xff]
  %v352 = vld [vmem:[%s333 + $0x267] sm:$0xff]
  %v353 = vld [vmem:[%s333 + $0x26f] sm:$0xff]
  %v354 = vld [vmem:[%s333 + $0x287] sm:$0xff]
  %v355 = vld [vmem:[%s333 + $0x28f] sm:$0xff]
  %v356 = vld [vmem:[%s333 + $0x2a7] sm:$0xff]
  %v357 = vld [vmem:[%s333 + $0x2af] sm:$0xff]
  %v358 = vld [vmem:[%s333 + $0x2c7] sm:$0xff]
  %v359 = vld [vmem:[%s333 + $0x2cf] sm:$0xff]
  %v360 = vld [vmem:[%s333 + $0x2e7] sm:$0xff]
  %v361 = vld [vmem:[%s333 + $0x2ef] sm:$0xff]
  %v362 = vld [vmem:[%s333 + $0x307] sm:$0xff]
  %v363 = vld [vmem:[%s333 + $0x30f] sm:$0xff]
  %v364 = vld [vmem:[%s333 + $0x327] sm:$0xff]
  %v365 = vld [vmem:[%s333 + $0x32f] sm:$0xff]
  %v366 = vld [vmem:[%s333 + $0x8] sm:$0xff]
  %v367 = vld [vmem:[%s333 + $0x10] sm:$0xff]
  %v368 = vld [vmem:[%s333 + $0x28] sm:$0xff]
  %v369 = vld [vmem:[%s333 + $0x30] sm:$0xff]
  %v370 = vld [vmem:[%s333 + $0x48] sm:$0xff]
  %v371 = vld [vmem:[%s333 + $0x50] sm:$0xff]
  %v372 = vld [vmem:[%s333 + $0x68] sm:$0xff]
  %v373 = vld [vmem:[%s333 + $0x70] sm:$0xff]
  %v374 = vld [vmem:[%s333 + $0x88] sm:$0xff]
  %v375 = vld [vmem:[%s333 + $0x90] sm:$0xff]
  %v376 = vld [vmem:[%s333 + $0xa8] sm:$0xff]
  %v377 = vld [vmem:[%s333 + $0xb0] sm:$0xff]
  %v378 = vld [vmem:[%s333 + $0xc8] sm:$0xff]
  %v379 = vld [vmem:[%s333 + $0xd0] sm:$0xff]
  %v380 = vld [vmem:[%s333 + $0xe8] sm:$0xff]
  %v381 = vld [vmem:[%s333 + $0xf0] sm:$0xff]
  %v382 = vld [vmem:[%s333 + $0x248] sm:$0xff]
  %v383 = vld [vmem:[%s333 + $0x250] sm:$0xff]
  %v384 = vld [vmem:[%s333 + $0x268] sm:$0xff]
  %v385 = vld [vmem:[%s333 + $0x270] sm:$0xff]
  %v386 = vld [vmem:[%s333 + $0x288] sm:$0xff]
  %v387 = vld [vmem:[%s333 + $0x290] sm:$0xff]
  %v388 = vld [vmem:[%s333 + $0x2a8] sm:$0xff]
  %v389 = vld [vmem:[%s333 + $0x2b0] sm:$0xff]
  %v390 = vld [vmem:[%s333 + $0x2c8] sm:$0xff]
  %v391 = vld [vmem:[%s333 + $0x2d0] sm:$0xff]
  %v392 = vld [vmem:[%s333 + $0x2e8] sm:$0xff]
  %v393 = vld [vmem:[%s333 + $0x2f0] sm:$0xff]
  %v394 = vld [vmem:[%s333 + $0x308] sm:$0xff]
  %v395 = vld [vmem:[%s333 + $0x310] sm:$0xff]
  %v396 = vld [vmem:[%s333 + $0x328] sm:$0xff]
  %v397 = vld [vmem:[%s333 + $0x330] sm:$0xff]
  %v398 = vld [vmem:[%s333 + $0x9] sm:$0xff]
  %v399 = vld [vmem:[%s333 + $0x11] sm:$0xff]
  %v400 = vld [vmem:[%s333 + $0x29] sm:$0xff]
  %v401 = vld [vmem:[%s333 + $0x31] sm:$0xff]
  %v402 = vld [vmem:[%s333 + $0x49] sm:$0xff]
  %v403 = vld [vmem:[%s333 + $0x51] sm:$0xff]
  %v404 = vld [vmem:[%s333 + $0x69] sm:$0xff]
  %v405 = vld [vmem:[%s333 + $0x71] sm:$0xff]
  %v406 = vld [vmem:[%s333 + $0x89] sm:$0xff]
  %v407 = vld [vmem:[%s333 + $0x91] sm:$0xff]
  %v408 = vld [vmem:[%s333 + $0xa9] sm:$0xff]
  %v409 = vld [vmem:[%s333 + $0xb1] sm:$0xff]
  %v410 = vld [vmem:[%s333 + $0xc9] sm:$0xff]
  %v411 = vld [vmem:[%s333 + $0xd1] sm:$0xff]
  %v412 = vld [vmem:[%s333 + $0xe9] sm:$0xff]
  %v413 = vld [vmem:[%s333 + $0xf1] sm:$0xff]
  %v414 = vld [vmem:[%s333 + $0x249] sm:$0xff]
  %v415 = vld [vmem:[%s333 + $0x251] sm:$0xff]
  %v416 = vld [vmem:[%s333 + $0x269] sm:$0xff]
  %v417 = vld [vmem:[%s333 + $0x271] sm:$0xff]
  %v418 = vld [vmem:[%s333 + $0x289] sm:$0xff]
  %v419 = vld [vmem:[%s333 + $0x291] sm:$0xff]
  %v420 = vld [vmem:[%s333 + $0x2a9] sm:$0xff]
  %v421 = vld [vmem:[%s333 + $0x2b1] sm:$0xff]
  %v422 = vld [vmem:[%s333 + $0x2c9] sm:$0xff]
  %v423 = vld [vmem:[%s333 + $0x2d1] sm:$0xff]
  %v424 = vld [vmem:[%s333 + $0x2e9] sm:$0xff]
  %v425 = vld [vmem:[%s333 + $0x2f1] sm:$0xff]
  %v426 = vld [vmem:[%s333 + $0x309] sm:$0xff]
  %v427 = vld [vmem:[%s333 + $0x311] sm:$0xff]
  %v428 = vld [vmem:[%s333 + $0x329] sm:$0xff]
  %v429 = vld [vmem:[%s333 + $0x331] sm:$0xff]
  %s430 = sadd.s32 0, 1
  %s431 = smul.u32 %s430, 32
  %s432 = scalar_lea.vmem [#allocation2], %s431
  %v433 = vld [vmem:[%s432 + $0x7] sm:$0xff]
  %v434 = vld [vmem:[%s432 + $0xf] sm:$0xff]
  %v435 = vld [vmem:[%s432 + $0x27] sm:$0xff]
  %v436 = vld [vmem:[%s432 + $0x2f] sm:$0xff]
  %v437 = vld [vmem:[%s432 + $0x47] sm:$0xff]
  %v438 = vld [vmem:[%s432 + $0x4f] sm:$0xff]
  %v439 = vld [vmem:[%s432 + $0x67] sm:$0xff]
  %v440 = vld [vmem:[%s432 + $0x6f] sm:$0xff]
  %v441 = vld [vmem:[%s432 + $0x87] sm:$0xff]
  %v442 = vld [vmem:[%s432 + $0x8f] sm:$0xff]
  %v443 = vld [vmem:[%s432 + $0xa7] sm:$0xff]
  %v444 = vld [vmem:[%s432 + $0xaf] sm:$0xff]
  %v445 = vld [vmem:[%s432 + $0xc7] sm:$0xff]
  %v446 = vld [vmem:[%s432 + $0xcf] sm:$0xff]
  %v447 = vld [vmem:[%s432 + $0xe7] sm:$0xff]
  %v448 = vld [vmem:[%s432 + $0xef] sm:$0xff]
  %v449 = vld [vmem:[%s432 + $0x247] sm:$0xff]
  %v450 = vld [vmem:[%s432 + $0x24f] sm:$0xff]
  %v451 = vld [vmem:[%s432 + $0x267] sm:$0xff]
  %v452 = vld [vmem:[%s432 + $0x26f] sm:$0xff]
  %v453 = vld [vmem:[%s432 + $0x287] sm:$0xff]
  %v454 = vld [vmem:[%s432 + $0x28f] sm:$0xff]
  %v455 = vld [vmem:[%s432 + $0x2a7] sm:$0xff]
  %v456 = vld [vmem:[%s432 + $0x2af] sm:$0xff]
  %v457 = vld [vmem:[%s432 + $0x2c7] sm:$0xff]
  %v458 = vld [vmem:[%s432 + $0x2cf] sm:$0xff]
  %v459 = vld [vmem:[%s432 + $0x2e7] sm:$0xff]
  %v460 = vld [vmem:[%s432 + $0x2ef] sm:$0xff]
  %v461 = vld [vmem:[%s432 + $0x307] sm:$0xff]
  %v462 = vld [vmem:[%s432 + $0x30f] sm:$0xff]
  %v463 = vld [vmem:[%s432 + $0x327] sm:$0xff]
  %v464 = vld [vmem:[%s432 + $0x32f] sm:$0xff]
  %v465 = vld [vmem:[%s432 + $0x8] sm:$0xff]
  %v466 = vld [vmem:[%s432 + $0x10] sm:$0xff]
  %v467 = vld [vmem:[%s432 + $0x28] sm:$0xff]
  %v468 = vld [vmem:[%s432 + $0x30] sm:$0xff]
  %v469 = vld [vmem:[%s432 + $0x48] sm:$0xff]
  %v470 = vld [vmem:[%s432 + $0x50] sm:$0xff]
  %v471 = vld [vmem:[%s432 + $0x68] sm:$0xff]
  %v472 = vld [vmem:[%s432 + $0x70] sm:$0xff]
  %v473 = vld [vmem:[%s432 + $0x88] sm:$0xff]
  %v474 = vld [vmem:[%s432 + $0x90] sm:$0xff]
  %v475 = vld [vmem:[%s432 + $0xa8] sm:$0xff]
  %v476 = vld [vmem:[%s432 + $0xb0] sm:$0xff]
  %v477 = vld [vmem:[%s432 + $0xc8] sm:$0xff]
  %v478 = vld [vmem:[%s432 + $0xd0] sm:$0xff]
  %v479 = vld [vmem:[%s432 + $0xe8] sm:$0xff]
  %v480 = vld [vmem:[%s432 + $0xf0] sm:$0xff]
  %v481 = vld [vmem:[%s432 + $0x248] sm:$0xff]
  %v482 = vld [vmem:[%s432 + $0x250] sm:$0xff]
  %v483 = vld [vmem:[%s432 + $0x268] sm:$0xff]
  %v484 = vld [vmem:[%s432 + $0x270] sm:$0xff]
  %v485 = vld [vmem:[%s432 + $0x288] sm:$0xff]
  %v486 = vld [vmem:[%s432 + $0x290] sm:$0xff]
  %v487 = vld [vmem:[%s432 + $0x2a8] sm:$0xff]
  %v488 = vld [vmem:[%s432 + $0x2b0] sm:$0xff]
  %v489 = vld [vmem:[%s432 + $0x2c8] sm:$0xff]
  %v490 = vld [vmem:[%s432 + $0x2d0] sm:$0xff]
  %v491 = vld [vmem:[%s432 + $0x2e8] sm:$0xff]
  %v492 = vld [vmem:[%s432 + $0x2f0] sm:$0xff]
  %v493 = vld [vmem:[%s432 + $0x308] sm:$0xff]
  %v494 = vld [vmem:[%s432 + $0x310] sm:$0xff]
  %v495 = vld [vmem:[%s432 + $0x328] sm:$0xff]
  %v496 = vld [vmem:[%s432 + $0x330] sm:$0xff]
  %v497 = vld [vmem:[%s432 + $0x9] sm:$0xff]
  %v498 = vld [vmem:[%s432 + $0x11] sm:$0xff]
  %v499 = vld [vmem:[%s432 + $0x29] sm:$0xff]
  %v500 = vld [vmem:[%s432 + $0x31] sm:$0xff]
  %v501 = vld [vmem:[%s432 + $0x49] sm:$0xff]
  %v502 = vld [vmem:[%s432 + $0x51] sm:$0xff]
  %v503 = vld [vmem:[%s432 + $0x69] sm:$0xff]
  %v504 = vld [vmem:[%s432 + $0x71] sm:$0xff]
  %v505 = vld [vmem:[%s432 + $0x89] sm:$0xff]
  %v506 = vld [vmem:[%s432 + $0x91] sm:$0xff]
  %v507 = vld [vmem:[%s432 + $0xa9] sm:$0xff]
  %v508 = vld [vmem:[%s432 + $0xb1] sm:$0xff]
  %v509 = vld [vmem:[%s432 + $0xc9] sm:$0xff]
  %v510 = vld [vmem:[%s432 + $0xd1] sm:$0xff]
  %v511 = vld [vmem:[%s432 + $0xe9] sm:$0xff]
  %v512 = vld [vmem:[%s432 + $0xf1] sm:$0xff]
  %v513 = vld [vmem:[%s432 + $0x249] sm:$0xff]
  %v514 = vld [vmem:[%s432 + $0x251] sm:$0xff]
  %v515 = vld [vmem:[%s432 + $0x269] sm:$0xff]
  %v516 = vld [vmem:[%s432 + $0x271] sm:$0xff]
  %v517 = vld [vmem:[%s432 + $0x289] sm:$0xff]
  %v518 = vld [vmem:[%s432 + $0x291] sm:$0xff]
  %v519 = vld [vmem:[%s432 + $0x2a9] sm:$0xff]
  %v520 = vld [vmem:[%s432 + $0x2b1] sm:$0xff]
  %v521 = vld [vmem:[%s432 + $0x2c9] sm:$0xff]
  %v522 = vld [vmem:[%s432 + $0x2d1] sm:$0xff]
  %v523 = vld [vmem:[%s432 + $0x2e9] sm:$0xff]
  %v524 = vld [vmem:[%s432 + $0x2f1] sm:$0xff]
  %v525 = vld [vmem:[%s432 + $0x309] sm:$0xff]
  %v526 = vld [vmem:[%s432 + $0x311] sm:$0xff]
  %v527 = vld [vmem:[%s432 + $0x329] sm:$0xff]
  %v528 = vld [vmem:[%s432 + $0x331] sm:$0xff]
  %s529 = sadd.s32 0, 2
  %s530 = smul.u32 %s529, 32
  %s531 = scalar_lea.vmem [#allocation2], %s530
  %v532 = vld [vmem:[%s531 + $0x7] sm:$0xff]
  %v533 = vld [vmem:[%s531 + $0xf] sm:$0xff]
  %v534 = vld [vmem:[%s531 + $0x27] sm:$0xff]
  %v535 = vld [vmem:[%s531 + $0x2f] sm:$0xff]
  %v536 = vld [vmem:[%s531 + $0x47] sm:$0xff]
  %v537 = vld [vmem:[%s531 + $0x4f] sm:$0xff]
  %v538 = vld [vmem:[%s531 + $0x67] sm:$0xff]
  %v539 = vld [vmem:[%s531 + $0x6f] sm:$0xff]
  %v540 = vld [vmem:[%s531 + $0x87] sm:$0xff]
  %v541 = vld [vmem:[%s531 + $0x8f] sm:$0xff]
  %v542 = vld [vmem:[%s531 + $0xa7] sm:$0xff]
  %v543 = vld [vmem:[%s531 + $0xaf] sm:$0xff]
  %v544 = vld [vmem:[%s531 + $0xc7] sm:$0xff]
  %v545 = vld [vmem:[%s531 + $0xcf] sm:$0xff]
  %v546 = vld [vmem:[%s531 + $0xe7] sm:$0xff]
  %v547 = vld [vmem:[%s531 + $0xef] sm:$0xff]
  %v548 = vld [vmem:[%s531 + $0x247] sm:$0xff]
  %v549 = vld [vmem:[%s531 + $0x24f] sm:$0xff]
  %v550 = vld [vmem:[%s531 + $0x267] sm:$0xff]
  %v551 = vld [vmem:[%s531 + $0x26f] sm:$0xff]
  %v552 = vld [vmem:[%s531 + $0x287] sm:$0xff]
  %v553 = vld [vmem:[%s531 + $0x28f] sm:$0xff]
  %v554 = vld [vmem:[%s531 + $0x2a7] sm:$0xff]
  %v555 = vld [vmem:[%s531 + $0x2af] sm:$0xff]
  %v556 = vld [vmem:[%s531 + $0x2c7] sm:$0xff]
  %v557 = vld [vmem:[%s531 + $0x2cf] sm:$0xff]
  %v558 = vld [vmem:[%s531 + $0x2e7] sm:$0xff]
  %v559 = vld [vmem:[%s531 + $0x2ef] sm:$0xff]
  %v560 = vld [vmem:[%s531 + $0x307] sm:$0xff]
  %v561 = vld [vmem:[%s531 + $0x30f] sm:$0xff]
  %v562 = vld [vmem:[%s531 + $0x327] sm:$0xff]
  %v563 = vld [vmem:[%s531 + $0x32f] sm:$0xff]
  %v564 = vld [vmem:[%s531 + $0x8] sm:$0xff]
  %v565 = vld [vmem:[%s531 + $0x10] sm:$0xff]
  %v566 = vld [vmem:[%s531 + $0x28] sm:$0xff]
  %v567 = vld [vmem:[%s531 + $0x30] sm:$0xff]
  %v568 = vld [vmem:[%s531 + $0x48] sm:$0xff]
  %v569 = vld [vmem:[%s531 + $0x50] sm:$0xff]
  %v570 = vld [vmem:[%s531 + $0x68] sm:$0xff]
  %v571 = vld [vmem:[%s531 + $0x70] sm:$0xff]
  %v572 = vld [vmem:[%s531 + $0x88] sm:$0xff]
  %v573 = vld [vmem:[%s531 + $0x90] sm:$0xff]
  %v574 = vld [vmem:[%s531 + $0xa8] sm:$0xff]
  %v575 = vld [vmem:[%s531 + $0xb0] sm:$0xff]
  %v576 = vld [vmem:[%s531 + $0xc8] sm:$0xff]
  %v577 = vld [vmem:[%s531 + $0xd0] sm:$0xff]
  %v578 = vld [vmem:[%s531 + $0xe8] sm:$0xff]
  %v579 = vld [vmem:[%s531 + $0xf0] sm:$0xff]
  %v580 = vld [vmem:[%s531 + $0x248] sm:$0xff]
  %v581 = vld [vmem:[%s531 + $0x250] sm:$0xff]
  %v582 = vld [vmem:[%s531 + $0x268] sm:$0xff]
  %v583 = vld [vmem:[%s531 + $0x270] sm:$0xff]
  %v584 = vld [vmem:[%s531 + $0x288] sm:$0xff]
  %v585 = vld [vmem:[%s531 + $0x290] sm:$0xff]
  %v586 = vld [vmem:[%s531 + $0x2a8] sm:$0xff]
  %v587 = vld [vmem:[%s531 + $0x2b0] sm:$0xff]
  %v588 = vld [vmem:[%s531 + $0x2c8] sm:$0xff]
  %v589 = vld [vmem:[%s531 + $0x2d0] sm:$0xff]
  %v590 = vld [vmem:[%s531 + $0x2e8] sm:$0xff]
  %v591 = vld [vmem:[%s531 + $0x2f0] sm:$0xff]
  %v592 = vld [vmem:[%s531 + $0x308] sm:$0xff]
  %v593 = vld [vmem:[%s531 + $0x310] sm:$0xff]
  %v594 = vld [vmem:[%s531 + $0x328] sm:$0xff]
  %v595 = vld [vmem:[%s531 + $0x330] sm:$0xff]
  %v596 = vld [vmem:[%s531 + $0x9] sm:$0xff]
  %v597 = vld [vmem:[%s531 + $0x11] sm:$0xff]
  %v598 = vld [vmem:[%s531 + $0x29] sm:$0xff]
  %v599 = vld [vmem:[%s531 + $0x31] sm:$0xff]
  %v600 = vld [vmem:[%s531 + $0x49] sm:$0xff]
  %v601 = vld [vmem:[%s531 + $0x51] sm:$0xff]
  %v602 = vld [vmem:[%s531 + $0x69] sm:$0xff]
  %v603 = vld [vmem:[%s531 + $0x71] sm:$0xff]
  %v604 = vld [vmem:[%s531 + $0x89] sm:$0xff]
  %v605 = vld [vmem:[%s531 + $0x91] sm:$0xff]
  %v606 = vld [vmem:[%s531 + $0xa9] sm:$0xff]
  %v607 = vld [vmem:[%s531 + $0xb1] sm:$0xff]
  %v608 = vld [vmem:[%s531 + $0xc9] sm:$0xff]
  %v609 = vld [vmem:[%s531 + $0xd1] sm:$0xff]
  %v610 = vld [vmem:[%s531 + $0xe9] sm:$0xff]
  %v611 = vld [vmem:[%s531 + $0xf1] sm:$0xff]
  %v612 = vld [vmem:[%s531 + $0x249] sm:$0xff]
  %v613 = vld [vmem:[%s531 + $0x251] sm:$0xff]
  %v614 = vld [vmem:[%s531 + $0x269] sm:$0xff]
  %v615 = vld [vmem:[%s531 + $0x271] sm:$0xff]
  %v616 = vld [vmem:[%s531 + $0x289] sm:$0xff]
  %v617 = vld [vmem:[%s531 + $0x291] sm:$0xff]
  %v618 = vld [vmem:[%s531 + $0x2a9] sm:$0xff]
  %v619 = vld [vmem:[%s531 + $0x2b1] sm:$0xff]
  %v620 = vld [vmem:[%s531 + $0x2c9] sm:$0xff]
  %v621 = vld [vmem:[%s531 + $0x2d1] sm:$0xff]
  %v622 = vld [vmem:[%s531 + $0x2e9] sm:$0xff]
  %v623 = vld [vmem:[%s531 + $0x2f1] sm:$0xff]
  %v624 = vld [vmem:[%s531 + $0x309] sm:$0xff]
  %v625 = vld [vmem:[%s531 + $0x311] sm:$0xff]
  %v626 = vld [vmem:[%s531 + $0x329] sm:$0xff]
  %v627 = vld [vmem:[%s531 + $0x331] sm:$0xff]
  %660 = vrot.lane.b32.xlu0 %v366, 4
  %v661 = vpop.permute.xlu0 %660
  %662 = vrot.lane.b32.xlu0 %v367, 4
  %v663 = vpop.permute.xlu0 %662
  %664 = vrot.lane.b32.xlu0 %v368, 4
  %v665 = vpop.permute.xlu0 %664
  %666 = vrot.lane.b32.xlu0 %v369, 4
  %v667 = vpop.permute.xlu0 %666
  %668 = vrot.lane.b32.xlu0 %v370, 4
  %v669 = vpop.permute.xlu0 %668
  %670 = vrot.lane.b32.xlu0 %v371, 4
  %v671 = vpop.permute.xlu0 %670
  %672 = vrot.lane.b32.xlu0 %v372, 4
  %v673 = vpop.permute.xlu0 %672
  %674 = vrot.lane.b32.xlu0 %v373, 4
  %v675 = vpop.permute.xlu0 %674
  %676 = vrot.lane.b32.xlu0 %v374, 4
  %v677 = vpop.permute.xlu0 %676
  %678 = vrot.lane.b32.xlu0 %v375, 4
  %v679 = vpop.permute.xlu0 %678
  %680 = vrot.lane.b32.xlu0 %v376, 4
  %v681 = vpop.permute.xlu0 %680
  %682 = vrot.lane.b32.xlu0 %v377, 4
  %v683 = vpop.permute.xlu0 %682
  %684 = vrot.lane.b32.xlu0 %v378, 4
  %v685 = vpop.permute.xlu0 %684
  %686 = vrot.lane.b32.xlu0 %v379, 4
  %v687 = vpop.permute.xlu0 %686
  %688 = vrot.lane.b32.xlu0 %v380, 4
  %v689 = vpop.permute.xlu0 %688
  %690 = vrot.lane.b32.xlu0 %v381, 4
  %v691 = vpop.permute.xlu0 %690
  %692 = vrot.lane.b32.xlu0 %v382, 4
  %v693 = vpop.permute.xlu0 %692
  %694 = vrot.lane.b32.xlu0 %v383, 4
  %v695 = vpop.permute.xlu0 %694
  %696 = vrot.lane.b32.xlu0 %v384, 4
  %v697 = vpop.permute.xlu0 %696
  %698 = vrot.lane.b32.xlu0 %v385, 4
  %v699 = vpop.permute.xlu0 %698
  %700 = vrot.lane.b32.xlu0 %v386, 4
  %v701 = vpop.permute.xlu0 %700
  %702 = vrot.lane.b32.xlu0 %v387, 4
  %v703 = vpop.permute.xlu0 %702
  %704 = vrot.lane.b32.xlu0 %v388, 4
  %v705 = vpop.permute.xlu0 %704
  %706 = vrot.lane.b32.xlu0 %v389, 4
  %v707 = vpop.permute.xlu0 %706
  %708 = vrot.lane.b32.xlu0 %v390, 4
  %v709 = vpop.permute.xlu0 %708
  %710 = vrot.lane.b32.xlu0 %v391, 4
  %v711 = vpop.permute.xlu0 %710
  %712 = vrot.lane.b32.xlu0 %v392, 4
  %v713 = vpop.permute.xlu0 %712
  %714 = vrot.lane.b32.xlu0 %v393, 4
  %v715 = vpop.permute.xlu0 %714
  %716 = vrot.lane.b32.xlu0 %v394, 4
  %v717 = vpop.permute.xlu0 %716
  %718 = vrot.lane.b32.xlu0 %v395, 4
  %v719 = vpop.permute.xlu0 %718
  %720 = vrot.lane.b32.xlu0 %v396, 4
  %v721 = vpop.permute.xlu0 %720
  %722 = vrot.lane.b32.xlu0 %v397, 4
  %v723 = vpop.permute.xlu0 %722
  %788 = vrot.lane.b32.xlu0 %v398, 8
  %v789 = vpop.permute.xlu0 %788
  %790 = vrot.lane.b32.xlu0 %v399, 8
  %v791 = vpop.permute.xlu0 %790
  %792 = vrot.lane.b32.xlu0 %v400, 8
  %v793 = vpop.permute.xlu0 %792
  %794 = vrot.lane.b32.xlu0 %v401, 8
  %v795 = vpop.permute.xlu0 %794
  %796 = vrot.lane.b32.xlu0 %v402, 8
  %v797 = vpop.permute.xlu0 %796
  %798 = vrot.lane.b32.xlu0 %v403, 8
  %v799 = vpop.permute.xlu0 %798
  %800 = vrot.lane.b32.xlu0 %v404, 8
  %v801 = vpop.permute.xlu0 %800
  %802 = vrot.lane.b32.xlu0 %v405, 8
  %v803 = vpop.permute.xlu0 %802
  %804 = vrot.lane.b32.xlu0 %v406, 8
  %v805 = vpop.permute.xlu0 %804
  %806 = vrot.lane.b32.xlu0 %v407, 8
  %v807 = vpop.permute.xlu0 %806
  %808 = vrot.lane.b32.xlu0 %v408, 8
  %v809 = vpop.permute.xlu0 %808
  %810 = vrot.lane.b32.xlu0 %v409, 8
  %v811 = vpop.permute.xlu0 %810
  %812 = vrot.lane.b32.xlu0 %v410, 8
  %v813 = vpop.permute.xlu0 %812
  %814 = vrot.lane.b32.xlu0 %v411, 8
  %v815 = vpop.permute.xlu0 %814
  %816 = vrot.lane.b32.xlu0 %v412, 8
  %v817 = vpop.permute.xlu0 %816
  %818 = vrot.lane.b32.xlu0 %v413, 8
  %v819 = vpop.permute.xlu0 %818
  %820 = vrot.lane.b32.xlu0 %v414, 8
  %v821 = vpop.permute.xlu0 %820
  %822 = vrot.lane.b32.xlu0 %v415, 8
  %v823 = vpop.permute.xlu0 %822
  %824 = vrot.lane.b32.xlu0 %v416, 8
  %v825 = vpop.permute.xlu0 %824
  %826 = vrot.lane.b32.xlu0 %v417, 8
  %v827 = vpop.permute.xlu0 %826
  %828 = vrot.lane.b32.xlu0 %v418, 8
  %v829 = vpop.permute.xlu0 %828
  %830 = vrot.lane.b32.xlu0 %v419, 8
  %v831 = vpop.permute.xlu0 %830
  %832 = vrot.lane.b32.xlu0 %v420, 8
  %v833 = vpop.permute.xlu0 %832
  %834 = vrot.lane.b32.xlu0 %v421, 8
  %v835 = vpop.permute.xlu0 %834
  %836 = vrot.lane.b32.xlu0 %v422, 8
  %v837 = vpop.permute.xlu0 %836
  %838 = vrot.lane.b32.xlu0 %v423, 8
  %v839 = vpop.permute.xlu0 %838
  %840 = vrot.lane.b32.xlu0 %v424, 8
  %v841 = vpop.permute.xlu0 %840
  %842 = vrot.lane.b32.xlu0 %v425, 8
  %v843 = vpop.permute.xlu0 %842
  %844 = vrot.lane.b32.xlu0 %v426, 8
  %v845 = vpop.permute.xlu0 %844
  %846 = vrot.lane.b32.xlu0 %v427, 8
  %v847 = vpop.permute.xlu0 %846
  %848 = vrot.lane.b32.xlu0 %v428, 8
  %v849 = vpop.permute.xlu0 %848
  %850 = vrot.lane.b32.xlu0 %v429, 8
  %v851 = vpop.permute.xlu0 %850
  %916 = vrot.lane.b32.xlu0 %v433, 12
  %v917 = vpop.permute.xlu0 %916
  %918 = vrot.lane.b32.xlu0 %v434, 12
  %v919 = vpop.permute.xlu0 %918
  %920 = vrot.lane.b32.xlu0 %v435, 12
  %v921 = vpop.permute.xlu0 %920
  %922 = vrot.lane.b32.xlu0 %v436, 12
  %v923 = vpop.permute.xlu0 %922
  %924 = vrot.lane.b32.xlu0 %v437, 12
  %v925 = vpop.permute.xlu0 %924
  %926 = vrot.lane.b32.xlu0 %v438, 12
  %v927 = vpop.permute.xlu0 %926
  %928 = vrot.lane.b32.xlu0 %v439, 12
  %v929 = vpop.permute.xlu0 %928
  %930 = vrot.lane.b32.xlu0 %v440, 12
  %v931 = vpop.permute.xlu0 %930
  %932 = vrot.lane.b32.xlu0 %v441, 12
  %v933 = vpop.permute.xlu0 %932
  %934 = vrot.lane.b32.xlu0 %v442, 12
  %v935 = vpop.permute.xlu0 %934
  %936 = vrot.lane.b32.xlu0 %v443, 12
  %v937 = vpop.permute.xlu0 %936
  %938 = vrot.lane.b32.xlu0 %v444, 12
  %v939 = vpop.permute.xlu0 %938
  %940 = vrot.lane.b32.xlu0 %v445, 12
  %v941 = vpop.permute.xlu0 %940
  %942 = vrot.lane.b32.xlu0 %v446, 12
  %v943 = vpop.permute.xlu0 %942
  %944 = vrot.lane.b32.xlu0 %v447, 12
  %v945 = vpop.permute.xlu0 %944
  %946 = vrot.lane.b32.xlu0 %v448, 12
  %v947 = vpop.permute.xlu0 %946
  %948 = vrot.lane.b32.xlu0 %v449, 12
  %v949 = vpop.permute.xlu0 %948
  %950 = vrot.lane.b32.xlu0 %v450, 12
  %v951 = vpop.permute.xlu0 %950
  %952 = vrot.lane.b32.xlu0 %v451, 12
  %v953 = vpop.permute.xlu0 %952
  %954 = vrot.lane.b32.xlu0 %v452, 12
  %v955 = vpop.permute.xlu0 %954
  %956 = vrot.lane.b32.xlu0 %v453, 12
  %v957 = vpop.permute.xlu0 %956
  %958 = vrot.lane.b32.xlu0 %v454, 12
  %v959 = vpop.permute.xlu0 %958
  %960 = vrot.lane.b32.xlu0 %v455, 12
  %v961 = vpop.permute.xlu0 %960
  %962 = vrot.lane.b32.xlu0 %v456, 12
  %v963 = vpop.permute.xlu0 %962
  %964 = vrot.lane.b32.xlu0 %v457, 12
  %v965 = vpop.permute.xlu0 %964
  %966 = vrot.lane.b32.xlu0 %v458, 12
  %v967 = vpop.permute.xlu0 %966
  %968 = vrot.lane.b32.xlu0 %v459, 12
  %v969 = vpop.permute.xlu0 %968
  %970 = vrot.lane.b32.xlu0 %v460, 12
  %v971 = vpop.permute.xlu0 %970
  %972 = vrot.lane.b32.xlu0 %v461, 12
  %v973 = vpop.permute.xlu0 %972
  %974 = vrot.lane.b32.xlu0 %v462, 12
  %v975 = vpop.permute.xlu0 %974
  %976 = vrot.lane.b32.xlu0 %v463, 12
  %v977 = vpop.permute.xlu0 %976
  %978 = vrot.lane.b32.xlu0 %v464, 12
  %v979 = vpop.permute.xlu0 %978
  %1044 = vrot.lane.b32.xlu0 %v465, 16
  %v1045 = vpop.permute.xlu0 %1044
  %1046 = vrot.lane.b32.xlu0 %v466, 16
  %v1047 = vpop.permute.xlu0 %1046
  %1048 = vrot.lane.b32.xlu0 %v467, 16
  %v1049 = vpop.permute.xlu0 %1048
  %1050 = vrot.lane.b32.xlu0 %v468, 16
  %v1051 = vpop.permute.xlu0 %1050
  %1052 = vrot.lane.b32.xlu0 %v469, 16
  %v1053 = vpop.permute.xlu0 %1052
  %1054 = vrot.lane.b32.xlu0 %v470, 16
  %v1055 = vpop.permute.xlu0 %1054
  %1056 = vrot.lane.b32.xlu0 %v471, 16
  %v1057 = vpop.permute.xlu0 %1056
  %1058 = vrot.lane.b32.xlu0 %v472, 16
  %v1059 = vpop.permute.xlu0 %1058
  %1060 = vrot.lane.b32.xlu0 %v473, 16
  %v1061 = vpop.permute.xlu0 %1060
  %1062 = vrot.lane.b32.xlu0 %v474, 16
  %v1063 = vpop.permute.xlu0 %1062
  %1064 = vrot.lane.b32.xlu0 %v475, 16
  %v1065 = vpop.permute.xlu0 %1064
  %1066 = vrot.lane.b32.xlu0 %v476, 16
  %v1067 = vpop.permute.xlu0 %1066
  %1068 = vrot.lane.b32.xlu0 %v477, 16
  %v1069 = vpop.permute.xlu0 %1068
  %1070 = vrot.lane.b32.xlu0 %v478, 16
  %v1071 = vpop.permute.xlu0 %1070
  %1072 = vrot.lane.b32.xlu0 %v479, 16
  %v1073 = vpop.permute.xlu0 %1072
  %1074 = vrot.lane.b32.xlu0 %v480, 16
  %v1075 = vpop.permute.xlu0 %1074
  %1076 = vrot.lane.b32.xlu0 %v481, 16
  %v1077 = vpop.permute.xlu0 %1076
  %1078 = vrot.lane.b32.xlu0 %v482, 16
  %v1079 = vpop.permute.xlu0 %1078
  %1080 = vrot.lane.b32.xlu0 %v483, 16
  %v1081 = vpop.permute.xlu0 %1080
  %1082 = vrot.lane.b32.xlu0 %v484, 16
  %v1083 = vpop.permute.xlu0 %1082
  %1084 = vrot.lane.b32.xlu0 %v485, 16
  %v1085 = vpop.permute.xlu0 %1084
  %1086 = vrot.lane.b32.xlu0 %v486, 16
  %v1087 = vpop.permute.xlu0 %1086
  %1088 = vrot.lane.b32.xlu0 %v487, 16
  %v1089 = vpop.permute.xlu0 %1088
  %1090 = vrot.lane.b32.xlu0 %v488, 16
  %v1091 = vpop.permute.xlu0 %1090
  %1092 = vrot.lane.b32.xlu0 %v489, 16
  %v1093 = vpop.permute.xlu0 %1092
  %1094 = vrot.lane.b32.xlu0 %v490, 16
  %v1095 = vpop.permute.xlu0 %1094
  %1096 = vrot.lane.b32.xlu0 %v491, 16
  %v1097 = vpop.permute.xlu0 %1096
  %1098 = vrot.lane.b32.xlu0 %v492, 16
  %v1099 = vpop.permute.xlu0 %1098
  %1100 = vrot.lane.b32.xlu0 %v493, 16
  %v1101 = vpop.permute.xlu0 %1100
  %1102 = vrot.lane.b32.xlu0 %v494, 16
  %v1103 = vpop.permute.xlu0 %1102
  %1104 = vrot.lane.b32.xlu0 %v495, 16
  %v1105 = vpop.permute.xlu0 %1104
  %1106 = vrot.lane.b32.xlu0 %v496, 16
  %v1107 = vpop.permute.xlu0 %1106
  %1172 = vrot.lane.b32.xlu0 %v497, 20
  %v1173 = vpop.permute.xlu0 %1172
  %1174 = vrot.lane.b32.xlu0 %v498, 20
  %v1175 = vpop.permute.xlu0 %1174
  %1176 = vrot.lane.b32.xlu0 %v499, 20
  %v1177 = vpop.permute.xlu0 %1176
  %1178 = vrot.lane.b32.xlu0 %v500, 20
  %v1179 = vpop.permute.xlu0 %1178
  %1180 = vrot.lane.b32.xlu0 %v501, 20
  %v1181 = vpop.permute.xlu0 %1180
  %1182 = vrot.lane.b32.xlu0 %v502, 20
  %v1183 = vpop.permute.xlu0 %1182
  %1184 = vrot.lane.b32.xlu0 %v503, 20
  %v1185 = vpop.permute.xlu0 %1184
  %1186 = vrot.lane.b32.xlu0 %v504, 20
  %v1187 = vpop.permute.xlu0 %1186
  %1188 = vrot.lane.b32.xlu0 %v505, 20
  %v1189 = vpop.permute.xlu0 %1188
  %1190 = vrot.lane.b32.xlu0 %v506, 20
  %v1191 = vpop.permute.xlu0 %1190
  %1192 = vrot.lane.b32.xlu0 %v507, 20
  %v1193 = vpop.permute.xlu0 %1192
  %1194 = vrot.lane.b32.xlu0 %v508, 20
  %v1195 = vpop.permute.xlu0 %1194
  %1196 = vrot.lane.b32.xlu0 %v509, 20
  %v1197 = vpop.permute.xlu0 %1196
  %1198 = vrot.lane.b32.xlu0 %v510, 20
  %v1199 = vpop.permute.xlu0 %1198
  %1200 = vrot.lane.b32.xlu0 %v511, 20
  %v1201 = vpop.permute.xlu0 %1200
  %1202 = vrot.lane.b32.xlu0 %v512, 20
  %v1203 = vpop.permute.xlu0 %1202
  %1204 = vrot.lane.b32.xlu0 %v513, 20
  %v1205 = vpop.permute.xlu0 %1204
  %1206 = vrot.lane.b32.xlu0 %v514, 20
  %v1207 = vpop.permute.xlu0 %1206
  %1208 = vrot.lane.b32.xlu0 %v515, 20
  %v1209 = vpop.permute.xlu0 %1208
  %1210 = vrot.lane.b32.xlu0 %v516, 20
  %v1211 = vpop.permute.xlu0 %1210
  %1212 = vrot.lane.b32.xlu0 %v517, 20
  %v1213 = vpop.permute.xlu0 %1212
  %1214 = vrot.lane.b32.xlu0 %v518, 20
  %v1215 = vpop.permute.xlu0 %1214
  %1216 = vrot.lane.b32.xlu0 %v519, 20
  %v1217 = vpop.permute.xlu0 %1216
  %1218 = vrot.lane.b32.xlu0 %v520, 20
  %v1219 = vpop.permute.xlu0 %1218
  %1220 = vrot.lane.b32.xlu0 %v521, 20
  %v1221 = vpop.permute.xlu0 %1220
  %1222 = vrot.lane.b32.xlu0 %v522, 20
  %v1223 = vpop.permute.xlu0 %1222
  %1224 = vrot.lane.b32.xlu0 %v523, 20
  %v1225 = vpop.permute.xlu0 %1224
  %1226 = vrot.lane.b32.xlu0 %v524, 20
  %v1227 = vpop.permute.xlu0 %1226
  %1228 = vrot.lane.b32.xlu0 %v525, 20
  %v1229 = vpop.permute.xlu0 %1228
  %1230 = vrot.lane.b32.xlu0 %v526, 20
  %v1231 = vpop.permute.xlu0 %1230
  %1232 = vrot.lane.b32.xlu0 %v527, 20
  %v1233 = vpop.permute.xlu0 %1232
  %1234 = vrot.lane.b32.xlu0 %v528, 20
  %v1235 = vpop.permute.xlu0 %1234
  %1300 = vrot.lane.b32.xlu0 %v532, 24
  %v1301 = vpop.permute.xlu0 %1300
  %1302 = vrot.lane.b32.xlu0 %v533, 24
  %v1303 = vpop.permute.xlu0 %1302
  %1304 = vrot.lane.b32.xlu0 %v534, 24
  %v1305 = vpop.permute.xlu0 %1304
  %1306 = vrot.lane.b32.xlu0 %v535, 24
  %v1307 = vpop.permute.xlu0 %1306
  %1308 = vrot.lane.b32.xlu0 %v536, 24
  %v1309 = vpop.permute.xlu0 %1308
  %1310 = vrot.lane.b32.xlu0 %v537, 24
  %v1311 = vpop.permute.xlu0 %1310
  %1312 = vrot.lane.b32.xlu0 %v538, 24
  %v1313 = vpop.permute.xlu0 %1312
  %1314 = vrot.lane.b32.xlu0 %v539, 24
  %v1315 = vpop.permute.xlu0 %1314
  %1316 = vrot.lane.b32.xlu0 %v540, 24
  %v1317 = vpop.permute.xlu0 %1316
  %1318 = vrot.lane.b32.xlu0 %v541, 24
  %v1319 = vpop.permute.xlu0 %1318
  %1320 = vrot.lane.b32.xlu0 %v542, 24
  %v1321 = vpop.permute.xlu0 %1320
  %1322 = vrot.lane.b32.xlu0 %v543, 24
  %v1323 = vpop.permute.xlu0 %1322
  %1324 = vrot.lane.b32.xlu0 %v544, 24
  %v1325 = vpop.permute.xlu0 %1324
  %1326 = vrot.lane.b32.xlu0 %v545, 24
  %v1327 = vpop.permute.xlu0 %1326
  %1328 = vrot.lane.b32.xlu0 %v546, 24
  %v1329 = vpop.permute.xlu0 %1328
  %1330 = vrot.lane.b32.xlu0 %v547, 24
  %v1331 = vpop.permute.xlu0 %1330
  %1332 = vrot.lane.b32.xlu0 %v548, 24
  %v1333 = vpop.permute.xlu0 %1332
  %1334 = vrot.lane.b32.xlu0 %v549, 24
  %v1335 = vpop.permute.xlu0 %1334
  %1336 = vrot.lane.b32.xlu0 %v550, 24
  %v1337 = vpop.permute.xlu0 %1336
  %1338 = vrot.lane.b32.xlu0 %v551, 24
  %v1339 = vpop.permute.xlu0 %1338
  %1340 = vrot.lane.b32.xlu0 %v552, 24
  %v1341 = vpop.permute.xlu0 %1340
  %1342 = vrot.lane.b32.xlu0 %v553, 24
  %v1343 = vpop.permute.xlu0 %1342
  %1344 = vrot.lane.b32.xlu0 %v554, 24
  %v1345 = vpop.permute.xlu0 %1344
  %1346 = vrot.lane.b32.xlu0 %v555, 24
  %v1347 = vpop.permute.xlu0 %1346
  %1348 = vrot.lane.b32.xlu0 %v556, 24
  %v1349 = vpop.permute.xlu0 %1348
  %1350 = vrot.lane.b32.xlu0 %v557, 24
  %v1351 = vpop.permute.xlu0 %1350
  %1352 = vrot.lane.b32.xlu0 %v558, 24
  %v1353 = vpop.permute.xlu0 %1352
  %1354 = vrot.lane.b32.xlu0 %v559, 24
  %v1355 = vpop.permute.xlu0 %1354
  %1356 = vrot.lane.b32.xlu0 %v560, 24
  %v1357 = vpop.permute.xlu0 %1356
  %1358 = vrot.lane.b32.xlu0 %v561, 24
  %v1359 = vpop.permute.xlu0 %1358
  %1360 = vrot.lane.b32.xlu0 %v562, 24
  %v1361 = vpop.permute.xlu0 %1360
  %1362 = vrot.lane.b32.xlu0 %v563, 24
  %v1363 = vpop.permute.xlu0 %1362
  %1428 = vrot.lane.b32.xlu0 %v564, 28
  %v1429 = vpop.permute.xlu0 %1428
  %1430 = vrot.lane.b32.xlu0 %v565, 28
  %v1431 = vpop.permute.xlu0 %1430
  %1432 = vrot.lane.b32.xlu0 %v566, 28
  %v1433 = vpop.permute.xlu0 %1432
  %1434 = vrot.lane.b32.xlu0 %v567, 28
  %v1435 = vpop.permute.xlu0 %1434
  %1436 = vrot.lane.b32.xlu0 %v568, 28
  %v1437 = vpop.permute.xlu0 %1436
  %1438 = vrot.lane.b32.xlu0 %v569, 28
  %v1439 = vpop.permute.xlu0 %1438
  %1440 = vrot.lane.b32.xlu0 %v570, 28
  %v1441 = vpop.permute.xlu0 %1440
  %1442 = vrot.lane.b32.xlu0 %v571, 28
  %v1443 = vpop.permute.xlu0 %1442
  %1444 = vrot.lane.b32.xlu0 %v572, 28
  %v1445 = vpop.permute.xlu0 %1444
  %1446 = vrot.lane.b32.xlu0 %v573, 28
  %v1447 = vpop.permute.xlu0 %1446
  %1448 = vrot.lane.b32.xlu0 %v574, 28
  %v1449 = vpop.permute.xlu0 %1448
  %1450 = vrot.lane.b32.xlu0 %v575, 28
  %v1451 = vpop.permute.xlu0 %1450
  %1452 = vrot.lane.b32.xlu0 %v576, 28
  %v1453 = vpop.permute.xlu0 %1452
  %1454 = vrot.lane.b32.xlu0 %v577, 28
  %v1455 = vpop.permute.xlu0 %1454
  %1456 = vrot.lane.b32.xlu0 %v578, 28
  %v1457 = vpop.permute.xlu0 %1456
  %1458 = vrot.lane.b32.xlu0 %v579, 28
  %v1459 = vpop.permute.xlu0 %1458
  %1460 = vrot.lane.b32.xlu0 %v580, 28
  %v1461 = vpop.permute.xlu0 %1460
  %1462 = vrot.lane.b32.xlu0 %v581, 28
  %v1463 = vpop.permute.xlu0 %1462
  %1464 = vrot.lane.b32.xlu0 %v582, 28
  %v1465 = vpop.permute.xlu0 %1464
  %1466 = vrot.lane.b32.xlu0 %v583, 28
  %v1467 = vpop.permute.xlu0 %1466
  %1468 = vrot.lane.b32.xlu0 %v584, 28
  %v1469 = vpop.permute.xlu0 %1468
  %1470 = vrot.lane.b32.xlu0 %v585, 28
  %v1471 = vpop.permute.xlu0 %1470
  %1472 = vrot.lane.b32.xlu0 %v586, 28
  %v1473 = vpop.permute.xlu0 %1472
  %1474 = vrot.lane.b32.xlu0 %v587, 28
  %v1475 = vpop.permute.xlu0 %1474
  %1476 = vrot.lane.b32.xlu0 %v588, 28
  %v1477 = vpop.permute.xlu0 %1476
  %1478 = vrot.lane.b32.xlu0 %v589, 28
  %v1479 = vpop.permute.xlu0 %1478
  %1480 = vrot.lane.b32.xlu0 %v590, 28
  %v1481 = vpop.permute.xlu0 %1480
  %1482 = vrot.lane.b32.xlu0 %v591, 28
  %v1483 = vpop.permute.xlu0 %1482
  %1484 = vrot.lane.b32.xlu0 %v592, 28
  %v1485 = vpop.permute.xlu0 %1484
  %1486 = vrot.lane.b32.xlu0 %v593, 28
  %v1487 = vpop.permute.xlu0 %1486
  %1488 = vrot.lane.b32.xlu0 %v594, 28
  %v1489 = vpop.permute.xlu0 %1488
  %1490 = vrot.lane.b32.xlu0 %v595, 28
  %v1491 = vpop.permute.xlu0 %1490
  %1556 = vrot.lane.b32.xlu0 %v596, 32
  %v1557 = vpop.permute.xlu0 %1556
  %1558 = vrot.lane.b32.xlu0 %v597, 32
  %v1559 = vpop.permute.xlu0 %1558
  %1560 = vrot.lane.b32.xlu0 %v598, 32
  %v1561 = vpop.permute.xlu0 %1560
  %1562 = vrot.lane.b32.xlu0 %v599, 32
  %v1563 = vpop.permute.xlu0 %1562
  %1564 = vrot.lane.b32.xlu0 %v600, 32
  %v1565 = vpop.permute.xlu0 %1564
  %1566 = vrot.lane.b32.xlu0 %v601, 32
  %v1567 = vpop.permute.xlu0 %1566
  %1568 = vrot.lane.b32.xlu0 %v602, 32
  %v1569 = vpop.permute.xlu0 %1568
  %1570 = vrot.lane.b32.xlu0 %v603, 32
  %v1571 = vpop.permute.xlu0 %1570
  %1572 = vrot.lane.b32.xlu0 %v604, 32
  %v1573 = vpop.permute.xlu0 %1572
  %1574 = vrot.lane.b32.xlu0 %v605, 32
  %v1575 = vpop.permute.xlu0 %1574
  %1576 = vrot.lane.b32.xlu0 %v606, 32
  %v1577 = vpop.permute.xlu0 %1576
  %1578 = vrot.lane.b32.xlu0 %v607, 32
  %v1579 = vpop.permute.xlu0 %1578
  %1580 = vrot.lane.b32.xlu0 %v608, 32
  %v1581 = vpop.permute.xlu0 %1580
  %1582 = vrot.lane.b32.xlu0 %v609, 32
  %v1583 = vpop.permute.xlu0 %1582
  %1584 = vrot.lane.b32.xlu0 %v610, 32
  %v1585 = vpop.permute.xlu0 %1584
  %1586 = vrot.lane.b32.xlu0 %v611, 32
  %v1587 = vpop.permute.xlu0 %1586
  %1588 = vrot.lane.b32.xlu0 %v612, 32
  %v1589 = vpop.permute.xlu0 %1588
  %1590 = vrot.lane.b32.xlu0 %v613, 32
  %v1591 = vpop.permute.xlu0 %1590
  %1592 = vrot.lane.b32.xlu0 %v614, 32
  %v1593 = vpop.permute.xlu0 %1592
  %1594 = vrot.lane.b32.xlu0 %v615, 32
  %v1595 = vpop.permute.xlu0 %1594
  %1596 = vrot.lane.b32.xlu0 %v616, 32
  %v1597 = vpop.permute.xlu0 %1596
  %1598 = vrot.lane.b32.xlu0 %v617, 32
  %v1599 = vpop.permute.xlu0 %1598
  %1600 = vrot.lane.b32.xlu0 %v618, 32
  %v1601 = vpop.permute.xlu0 %1600
  %1602 = vrot.lane.b32.xlu0 %v619, 32
  %v1603 = vpop.permute.xlu0 %1602
  %1604 = vrot.lane.b32.xlu0 %v620, 32
  %v1605 = vpop.permute.xlu0 %1604
  %1606 = vrot.lane.b32.xlu0 %v621, 32
  %v1607 = vpop.permute.xlu0 %1606
  %1608 = vrot.lane.b32.xlu0 %v622, 32
  %v1609 = vpop.permute.xlu0 %1608
  %1610 = vrot.lane.b32.xlu0 %v623, 32
  %v1611 = vpop.permute.xlu0 %1610
  %1612 = vrot.lane.b32.xlu0 %v624, 32
  %v1613 = vpop.permute.xlu0 %1612
  %1614 = vrot.lane.b32.xlu0 %v625, 32
  %v1615 = vpop.permute.xlu0 %1614
  %1616 = vrot.lane.b32.xlu0 %v626, 32
  %v1617 = vpop.permute.xlu0 %1616
  %1618 = vrot.lane.b32.xlu0 %v627, 32
  %v1619 = vpop.permute.xlu0 %1618
  %v1652 = vsel %vm26, %v334, %v661
  %v1653 = vsel %vm26, %v335, %v663
  %v1654 = vsel %vm26, %v336, %v665
  %v1655 = vsel %vm26, %v337, %v667
  %v1656 = vsel %vm26, %v338, %v669
  %v1657 = vsel %vm26, %v339, %v671
  %v1658 = vsel %vm26, %v340, %v673
  %v1659 = vsel %vm26, %v341, %v675
  %v1660 = vsel %vm26, %v342, %v677
  %v1661 = vsel %vm26, %v343, %v679
  %v1662 = vsel %vm26, %v344, %v681
  %v1663 = vsel %vm26, %v345, %v683
  %v1664 = vsel %vm26, %v346, %v685
  %v1665 = vsel %vm26, %v347, %v687
  %v1666 = vsel %vm26, %v348, %v689
  %v1667 = vsel %vm26, %v349, %v691
  %v1668 = vsel %vm26, %v350, %v693
  %v1669 = vsel %vm26, %v351, %v695
  %v1670 = vsel %vm26, %v352, %v697
  %v1671 = vsel %vm26, %v353, %v699
  %v1672 = vsel %vm26, %v354, %v701
  %v1673 = vsel %vm26, %v355, %v703
  %v1674 = vsel %vm26, %v356, %v705
  %v1675 = vsel %vm26, %v357, %v707
  %v1676 = vsel %vm26, %v358, %v709
  %v1677 = vsel %vm26, %v359, %v711
  %v1678 = vsel %vm26, %v360, %v713
  %v1679 = vsel %vm26, %v361, %v715
  %v1680 = vsel %vm26, %v362, %v717
  %v1681 = vsel %vm26, %v363, %v719
  %v1682 = vsel %vm26, %v364, %v721
  %v1683 = vsel %vm26, %v365, %v723
  %vm1684 = vcmask 64512
  %v1685 = vsel %vm1684, %v1652, %v789
  %v1686 = vsel %vm1684, %v1653, %v791
  %v1687 = vsel %vm1684, %v1654, %v793
  %v1688 = vsel %vm1684, %v1655, %v795
  %v1689 = vsel %vm1684, %v1656, %v797
  %v1690 = vsel %vm1684, %v1657, %v799
  %v1691 = vsel %vm1684, %v1658, %v801
  %v1692 = vsel %vm1684, %v1659, %v803
  %v1693 = vsel %vm1684, %v1660, %v805
  %v1694 = vsel %vm1684, %v1661, %v807
  %v1695 = vsel %vm1684, %v1662, %v809
  %v1696 = vsel %vm1684, %v1663, %v811
  %v1697 = vsel %vm1684, %v1664, %v813
  %v1698 = vsel %vm1684, %v1665, %v815
  %v1699 = vsel %vm1684, %v1666, %v817
  %v1700 = vsel %vm1684, %v1667, %v819
  %v1701 = vsel %vm1684, %v1668, %v821
  %v1702 = vsel %vm1684, %v1669, %v823
  %v1703 = vsel %vm1684, %v1670, %v825
  %v1704 = vsel %vm1684, %v1671, %v827
  %v1705 = vsel %vm1684, %v1672, %v829
  %v1706 = vsel %vm1684, %v1673, %v831
  %v1707 = vsel %vm1684, %v1674, %v833
  %v1708 = vsel %vm1684, %v1675, %v835
  %v1709 = vsel %vm1684, %v1676, %v837
  %v1710 = vsel %vm1684, %v1677, %v839
  %v1711 = vsel %vm1684, %v1678, %v841
  %v1712 = vsel %vm1684, %v1679, %v843
  %v1713 = vsel %vm1684, %v1680, %v845
  %v1714 = vsel %vm1684, %v1681, %v847
  %v1715 = vsel %vm1684, %v1682, %v849
  %v1716 = vsel %vm1684, %v1683, %v851
  %vm1717 = vcmask 97280
  %v1718 = vsel %vm1717, %v1685, %v917
  %v1719 = vsel %vm1717, %v1686, %v919
  %v1720 = vsel %vm1717, %v1687, %v921
  %v1721 = vsel %vm1717, %v1688, %v923
  %v1722 = vsel %vm1717, %v1689, %v925
  %v1723 = vsel %vm1717, %v1690, %v927
  %v1724 = vsel %vm1717, %v1691, %v929
  %v1725 = vsel %vm1717, %v1692, %v931
  %v1726 = vsel %vm1717, %v1693, %v933
  %v1727 = vsel %vm1717, %v1694, %v935
  %v1728 = vsel %vm1717, %v1695, %v937
  %v1729 = vsel %vm1717, %v1696, %v939
  %v1730 = vsel %vm1717, %v1697, %v941
  %v1731 = vsel %vm1717, %v1698, %v943
  %v1732 = vsel %vm1717, %v1699, %v945
  %v1733 = vsel %vm1717, %v1700, %v947
  %v1734 = vsel %vm1717, %v1701, %v949
  %v1735 = vsel %vm1717, %v1702, %v951
  %v1736 = vsel %vm1717, %v1703, %v953
  %v1737 = vsel %vm1717, %v1704, %v955
  %v1738 = vsel %vm1717, %v1705, %v957
  %v1739 = vsel %vm1717, %v1706, %v959
  %v1740 = vsel %vm1717, %v1707, %v961
  %v1741 = vsel %vm1717, %v1708, %v963
  %v1742 = vsel %vm1717, %v1709, %v965
  %v1743 = vsel %vm1717, %v1710, %v967
  %v1744 = vsel %vm1717, %v1711, %v969
  %v1745 = vsel %vm1717, %v1712, %v971
  %v1746 = vsel %vm1717, %v1713, %v973
  %v1747 = vsel %vm1717, %v1714, %v975
  %v1748 = vsel %vm1717, %v1715, %v977
  %v1749 = vsel %vm1717, %v1716, %v979
  %vm1750 = vcmask 130048
  %v1751 = vsel %vm1750, %v1718, %v1045
  %v1752 = vsel %vm1750, %v1719, %v1047
  %v1753 = vsel %vm1750, %v1720, %v1049
  %v1754 = vsel %vm1750, %v1721, %v1051
  %v1755 = vsel %vm1750, %v1722, %v1053
  %v1756 = vsel %vm1750, %v1723, %v1055
  %v1757 = vsel %vm1750, %v1724, %v1057
  %v1758 = vsel %vm1750, %v1725, %v1059
  %v1759 = vsel %vm1750, %v1726, %v1061
  %v1760 = vsel %vm1750, %v1727, %v1063
  %v1761 = vsel %vm1750, %v1728, %v1065
  %v1762 = vsel %vm1750, %v1729, %v1067
  %v1763 = vsel %vm1750, %v1730, %v1069
  %v1764 = vsel %vm1750, %v1731, %v1071
  %v1765 = vsel %vm1750, %v1732, %v1073
  %v1766 = vsel %vm1750, %v1733, %v1075
  %v1767 = vsel %vm1750, %v1734, %v1077
  %v1768 = vsel %vm1750, %v1735, %v1079
  %v1769 = vsel %vm1750, %v1736, %v1081
  %v1770 = vsel %vm1750, %v1737, %v1083
  %v1771 = vsel %vm1750, %v1738, %v1085
  %v1772 = vsel %vm1750, %v1739, %v1087
  %v1773 = vsel %vm1750, %v1740, %v1089
  %v1774 = vsel %vm1750, %v1741, %v1091
  %v1775 = vsel %vm1750, %v1742, %v1093
  %v1776 = vsel %vm1750, %v1743, %v1095
  %v1777 = vsel %vm1750, %v1744, %v1097
  %v1778 = vsel %vm1750, %v1745, %v1099
  %v1779 = vsel %vm1750, %v1746, %v1101
  %v1780 = vsel %vm1750, %v1747, %v1103
  %v1781 = vsel %vm1750, %v1748, %v1105
  %v1782 = vsel %vm1750, %v1749, %v1107
  %vm1783 = vcmask 162816
  %v1784 = vsel %vm1783, %v1751, %v1173
  %v1785 = vsel %vm1783, %v1752, %v1175
  %v1786 = vsel %vm1783, %v1753, %v1177
  %v1787 = vsel %vm1783, %v1754, %v1179
  %v1788 = vsel %vm1783, %v1755, %v1181
  %v1789 = vsel %vm1783, %v1756, %v1183
  %v1790 = vsel %vm1783, %v1757, %v1185
  %v1791 = vsel %vm1783, %v1758, %v1187
  %v1792 = vsel %vm1783, %v1759, %v1189
  %v1793 = vsel %vm1783, %v1760, %v1191
  %v1794 = vsel %vm1783, %v1761, %v1193
  %v1795 = vsel %vm1783, %v1762, %v1195
  %v1796 = vsel %vm1783, %v1763, %v1197
  %v1797 = vsel %vm1783, %v1764, %v1199
  %v1798 = vsel %vm1783, %v1765, %v1201
  %v1799 = vsel %vm1783, %v1766, %v1203
  %v1800 = vsel %vm1783, %v1767, %v1205
  %v1801 = vsel %vm1783, %v1768, %v1207
  %v1802 = vsel %vm1783, %v1769, %v1209
  %v1803 = vsel %vm1783, %v1770, %v1211
  %v1804 = vsel %vm1783, %v1771, %v1213
  %v1805 = vsel %vm1783, %v1772, %v1215
  %v1806 = vsel %vm1783, %v1773, %v1217
  %v1807 = vsel %vm1783, %v1774, %v1219
  %v1808 = vsel %vm1783, %v1775, %v1221
  %v1809 = vsel %vm1783, %v1776, %v1223
  %v1810 = vsel %vm1783, %v1777, %v1225
  %v1811 = vsel %vm1783, %v1778, %v1227
  %v1812 = vsel %vm1783, %v1779, %v1229
  %v1813 = vsel %vm1783, %v1780, %v1231
  %v1814 = vsel %vm1783, %v1781, %v1233
  %v1815 = vsel %vm1783, %v1782, %v1235
  %vm1816 = vcmask 195584
  %v1817 = vsel %vm1816, %v1784, %v1301
  %v1818 = vsel %vm1816, %v1785, %v1303
  %v1819 = vsel %vm1816, %v1786, %v1305
  %v1820 = vsel %vm1816, %v1787, %v1307
  %v1821 = vsel %vm1816, %v1788, %v1309
  %v1822 = vsel %vm1816, %v1789, %v1311
  %v1823 = vsel %vm1816, %v1790, %v1313
  %v1824 = vsel %vm1816, %v1791, %v1315
  %v1825 = vsel %vm1816, %v1792, %v1317
  %v1826 = vsel %vm1816, %v1793, %v1319
  %v1827 = vsel %vm1816, %v1794, %v1321
  %v1828 = vsel %vm1816, %v1795, %v1323
  %v1829 = vsel %vm1816, %v1796, %v1325
  %v1830 = vsel %vm1816, %v1797, %v1327
  %v1831 = vsel %vm1816, %v1798, %v1329
  %v1832 = vsel %vm1816, %v1799, %v1331
  %v1833 = vsel %vm1816, %v1800, %v1333
  %v1834 = vsel %vm1816, %v1801, %v1335
  %v1835 = vsel %vm1816, %v1802, %v1337
  %v1836 = vsel %vm1816, %v1803, %v1339
  %v1837 = vsel %vm1816, %v1804, %v1341
  %v1838 = vsel %vm1816, %v1805, %v1343
  %v1839 = vsel %vm1816, %v1806, %v1345
  %v1840 = vsel %vm1816, %v1807, %v1347
  %v1841 = vsel %vm1816, %v1808, %v1349
  %v1842 = vsel %vm1816, %v1809, %v1351
  %v1843 = vsel %vm1816, %v1810, %v1353
  %v1844 = vsel %vm1816, %v1811, %v1355
  %v1845 = vsel %vm1816, %v1812, %v1357
  %v1846 = vsel %vm1816, %v1813, %v1359
  %v1847 = vsel %vm1816, %v1814, %v1361
  %v1848 = vsel %vm1816, %v1815, %v1363
  %vm1849 = vcmask 228352
  %v1850 = vsel %vm1849, %v1817, %v1429
  %v1851 = vsel %vm1849, %v1818, %v1431
  %v1852 = vsel %vm1849, %v1819, %v1433
  %v1853 = vsel %vm1849, %v1820, %v1435
  %v1854 = vsel %vm1849, %v1821, %v1437
  %v1855 = vsel %vm1849, %v1822, %v1439
  %v1856 = vsel %vm1849, %v1823, %v1441
  %v1857 = vsel %vm1849, %v1824, %v1443
  %v1858 = vsel %vm1849, %v1825, %v1445
  %v1859 = vsel %vm1849, %v1826, %v1447
  %v1860 = vsel %vm1849, %v1827, %v1449
  %v1861 = vsel %vm1849, %v1828, %v1451
  %v1862 = vsel %vm1849, %v1829, %v1453
  %v1863 = vsel %vm1849, %v1830, %v1455
  %v1864 = vsel %vm1849, %v1831, %v1457
  %v1865 = vsel %vm1849, %v1832, %v1459
  %v1866 = vsel %vm1849, %v1833, %v1461
  %v1867 = vsel %vm1849, %v1834, %v1463
  %v1868 = vsel %vm1849, %v1835, %v1465
  %v1869 = vsel %vm1849, %v1836, %v1467
  %v1870 = vsel %vm1849, %v1837, %v1469
  %v1871 = vsel %vm1849, %v1838, %v1471
  %v1872 = vsel %vm1849, %v1839, %v1473
  %v1873 = vsel %vm1849, %v1840, %v1475
  %v1874 = vsel %vm1849, %v1841, %v1477
  %v1875 = vsel %vm1849, %v1842, %v1479
  %v1876 = vsel %vm1849, %v1843, %v1481
  %v1877 = vsel %vm1849, %v1844, %v1483
  %v1878 = vsel %vm1849, %v1845, %v1485
  %v1879 = vsel %vm1849, %v1846, %v1487
  %v1880 = vsel %vm1849, %v1847, %v1489
  %v1881 = vsel %vm1849, %v1848, %v1491
  %vm1882 = vcmask 261120
  %v1883 = vsel %vm1882, %v1850, %v1557
  %v1884 = vsel %vm1882, %v1851, %v1559
  %v1885 = vsel %vm1882, %v1852, %v1561
  %v1886 = vsel %vm1882, %v1853, %v1563
  %v1887 = vsel %vm1882, %v1854, %v1565
  %v1888 = vsel %vm1882, %v1855, %v1567
  %v1889 = vsel %vm1882, %v1856, %v1569
  %v1890 = vsel %vm1882, %v1857, %v1571
  %v1891 = vsel %vm1882, %v1858, %v1573
  %v1892 = vsel %vm1882, %v1859, %v1575
  %v1893 = vsel %vm1882, %v1860, %v1577
  %v1894 = vsel %vm1882, %v1861, %v1579
  %v1895 = vsel %vm1882, %v1862, %v1581
  %v1896 = vsel %vm1882, %v1863, %v1583
  %v1897 = vsel %vm1882, %v1864, %v1585
  %v1898 = vsel %vm1882, %v1865, %v1587
  %v1899 = vsel %vm1882, %v1866, %v1589
  %v1900 = vsel %vm1882, %v1867, %v1591
  %v1901 = vsel %vm1882, %v1868, %v1593
  %v1902 = vsel %vm1882, %v1869, %v1595
  %v1903 = vsel %vm1882, %v1870, %v1597
  %v1904 = vsel %vm1882, %v1871, %v1599
  %v1905 = vsel %vm1882, %v1872, %v1601
  %v1906 = vsel %vm1882, %v1873, %v1603
  %v1907 = vsel %vm1882, %v1874, %v1605
  %v1908 = vsel %vm1882, %v1875, %v1607
  %v1909 = vsel %vm1882, %v1876, %v1609
  %v1910 = vsel %vm1882, %v1877, %v1611
  %v1911 = vsel %vm1882, %v1878, %v1613
  %v1912 = vsel %vm1882, %v1879, %v1615
  %v1913 = vsel %vm1882, %v1880, %v1617
  %v1914 = vsel %vm1882, %v1881, %v1619
  %vm1915 = vcmask 293888
  %v1917 = vsel %vm1915, %v1883, 0
  %v1920 = vsel %vm1915, %v1884, 0
  %v1923 = vsel %vm1915, %v1885, 0
  %v1926 = vsel %vm1915, %v1886, 0
  %v1929 = vsel %vm1915, %v1887, 0
  %v1932 = vsel %vm1915, %v1888, 0
  %v1935 = vsel %vm1915, %v1889, 0
  %v1938 = vsel %vm1915, %v1890, 0
  %v1941 = vsel %vm1915, %v1891, 0
  %v1944 = vsel %vm1915, %v1892, 0
  %v1947 = vsel %vm1915, %v1893, 0
  %v1950 = vsel %vm1915, %v1894, 0
  %v1953 = vsel %vm1915, %v1895, 0
  %v1956 = vsel %vm1915, %v1896, 0
  %v1959 = vsel %vm1915, %v1897, 0
  %v1962 = vsel %vm1915, %v1898, 0
  %v1965 = vsel %vm1915, %v1899, 0
  %v1968 = vsel %vm1915, %v1900, 0
  %v1971 = vsel %vm1915, %v1901, 0
  %v1974 = vsel %vm1915, %v1902, 0
  %v1977 = vsel %vm1915, %v1903, 0
  %v1980 = vsel %vm1915, %v1904, 0
  %v1983 = vsel %vm1915, %v1905, 0
  %v1986 = vsel %vm1915, %v1906, 0
  %v1989 = vsel %vm1915, %v1907, 0
  %v1992 = vsel %vm1915, %v1908, 0
  %v1995 = vsel %vm1915, %v1909, 0
  %v1998 = vsel %vm1915, %v1910, 0
  %v2001 = vsel %vm1915, %v1911, 0
  %v2004 = vsel %vm1915, %v1912, 0
  %v2007 = vsel %vm1915, %v1913, 0
  %v2010 = vsel %vm1915, %v1914, 0
  %vm2012 = vcmask 1043456
  %v2014 = vsel %vm2012, %v322, 0
  %2016 = vmatprep.subr.mxu0 0.0
  %2017 = vmatpush1.msra.mxu0 %v318
  %2018 = vmatprep.subr.mxu0 0.0
  %2019 = vmatpush1.msra.mxu0 %v319
  %2020 = vmatprep.subr.mxu0 0.0
  %2021 = vmatpush1.msra.mxu0 %v320
  %2022 = vmatprep.subr.mxu0 0.0
  %2023 = vmatpush1.msra.mxu0 %v321
  %2024 = vmatprep.subr.mxu0 0.0
  %2025 = vmatpush1.msra.mxu0 %v2014
  %2026 = vmatprep.subr.mxu0 0.0
  %2027 = vmatpush1.msra.mxu0 0.0
  %2028 = vmatprep.subr.mxu0 0.0
  %2029 = vmatpush1.msra.mxu0 0.0
  %2030 = vmatprep.subr.mxu0 0.0
  %2031 = vmatpush1.msra.mxu0 0.0
  %2032 = vmatprep.subr.mxu0 0.0
  %2033 = vmatpush1.msra.mxu0 0.0
  %2034 = vmatprep.subr.mxu0 0.0
  %2035 = vmatpush1.msra.mxu0 0.0
  %2036 = vmatprep.subr.mxu0 0.0
  %2037 = vmatpush1.msra.mxu0 0.0
  %2038 = vmatprep.subr.mxu0 0.0
  %2039 = vmatpush1.msra.mxu0 0.0
  %2040 = vmatprep.subr.mxu0 0.0
  %2041 = vmatpush1.msra.mxu0 0.0
  %2042 = vmatprep.subr.mxu0 0.0
  %2043 = vmatpush1.msra.mxu0 0.0
  %2044 = vmatprep.subr.mxu0 0.0
  %2045 = vmatpush1.msra.mxu0 0.0
  %2046 = vmatprep.subr.mxu0 0.0
  %2047 = vmatpush1.msra.mxu0 0.0
  %2048 = vmatprep.subr.mxu0 0.0
  %2049 = vmatpush1.msra.mxu0 0.0
  %2050 = vmatprep.subr.mxu0 0.0
  %2051 = vmatpush1.msra.mxu0 0.0
  %2052 = vmatprep.subr.mxu0 0.0
  %2053 = vmatpush1.msra.mxu0 0.0
  %2054 = vmatprep.subr.mxu0 0.0
  %2055 = vmatpush1.msra.mxu0 0.0
  %2056 = vmatprep.subr.mxu0 0.0
  %2057 = vmatpush1.msra.mxu0 0.0
  %2058 = vmatprep.subr.mxu0 0.0
  %2059 = vmatpush1.msra.mxu0 0.0
  %2060 = vmatprep.subr.mxu0 0.0
  %2061 = vmatpush1.msra.mxu0 0.0
  %2062 = vmatprep.subr.mxu0 0.0
  %2063 = vmatpush1.msra.mxu0 0.0
  %2064 = vmatprep.subr.mxu0 0.0
  %2065 = vmatpush1.msra.mxu0 0.0
  %2066 = vmatprep.subr.mxu0 0.0
  %2067 = vmatpush1.msra.mxu0 0.0
  %2068 = vmatprep.subr.mxu0 0.0
  %2069 = vmatpush1.msra.mxu0 0.0
  %2070 = vmatprep.subr.mxu0 0.0
  %2071 = vmatpush1.msra.mxu0 0.0
  %2072 = vmatprep.subr.mxu0 0.0
  %2073 = vmatpush1.msra.mxu0 0.0
  %2074 = vmatprep.subr.mxu0 0.0
  %2075 = vmatpush1.msra.mxu0 0.0
  %2076 = vmatprep.subr.mxu0 0.0
  %2077 = vmatpush1.msra.mxu0 0.0
  %2078 = vmatprep.subr.mxu0 0.0
  %2079 = vmatpush1.msra.mxu0 0.0
  %2080 = vmatprep.mubr.f32.mxu0 0.0
  %2081 = vmatmul.mubr.f32.gmra.mrb[0].mxu0 %v1917
  %v2082 = vpop.f32.mrb[0].mxu0
  %v2083 = vadd.f32 0.0, %v2082
  %v2084 = vpop.f32.mrb[0].mxu0
  %2085 = vmatprep.mubr.f32.mxu0 0.0
  %2086 = vmatmul.mubr.f32.gmra.mrb[0].mxu0 %v1920
  %v2087 = vpop.f32.mrb[0].mxu0
  %v2088 = vadd.f32 0.0, %v2087
  %v2089 = vpop.f32.mrb[0].mxu0
  %2090 = vmatprep.mubr.f32.mxu0 0.0
  %2091 = vmatmul.mubr.f32.gmra.mrb[0].mxu0 %v1923
  %v2092 = vpop.f32.mrb[0].mxu0
  %v2093 = vadd.f32 0.0, %v2092
  %v2094 = vpop.f32.mrb[0].mxu0
  %2095 = vmatprep.mubr.f32.mxu0 0.0
  %2096 = vmatmul.mubr.f32.gmra.mrb[0].mxu0 %v1926
  %v2097 = vpop.f32.mrb[0].mxu0
  %v2098 = vadd.f32 0.0, %v2097
  %v2099 = vpop.f32.mrb[0].mxu0
  %2100 = vmatprep.mubr.f32.mxu0 0.0
  %2101 = vmatmul.mubr.f32.gmra.mrb[0].mxu0 %v1929
  %v2102 = vpop.f32.mrb[0].mxu0
  %v2103 = vadd.f32 0.0, %v2102
  %v2104 = vpop.f32.mrb[0].mxu0
  %2105 = vmatprep.mubr.f32.mxu0 0.0
  %2106 = vmatmul.mubr.f32.gmra.mrb[0].mxu0 %v1932
  %v2107 = vpop.f32.mrb[0].mxu0
  %v2108 = vadd.f32 0.0, %v2107
  %v2109 = vpop.f32.mrb[0].mxu0
  %2110 = vmatprep.mubr.f32.mxu0 0.0
  %2111 = vmatmul.mubr.f32.gmra.mrb[0].mxu0 %v1935
  %v2112 = vpop.f32.mrb[0].mxu0
  %v2113 = vadd.f32 0.0, %v2112
  %v2114 = vpop.f32.mrb[0].mxu0
  %2115 = vmatprep.mubr.f32.mxu0 0.0
  %2116 = vmatmul.mubr.f32.gmra.mrb[0].mxu0 %v1938
  %v2117 = vpop.f32.mrb[0].mxu0
  %v2118 = vadd.f32 0.0, %v2117
  %v2119 = vpop.f32.mrb[0].mxu0
  %2120 = vmatprep.mubr.f32.mxu0 0.0
  %2121 = vmatmul.mubr.f32.gmra.mrb[0].mxu0 %v1941
  %v2122 = vpop.f32.mrb[0].mxu0
  %v2123 = vadd.f32 0.0, %v2122
  %v2124 = vpop.f32.mrb[0].mxu0
  %2125 = vmatprep.mubr.f32.mxu0 0.0
  %2126 = vmatmul.mubr.f32.gmra.mrb[0].mxu0 %v1944
  %v2127 = vpop.f32.mrb[0].mxu0
  %v2128 = vadd.f32 0.0, %v2127
  %v2129 = vpop.f32.mrb[0].mxu0
  %2130 = vmatprep.mubr.f32.mxu0 0.0
  %2131 = vmatmul.mubr.f32.gmra.mrb[0].mxu0 %v1947
  %v2132 = vpop.f32.mrb[0].mxu0
  %v2133 = vadd.f32 0.0, %v2132
  %v2134 = vpop.f32.mrb[0].mxu0
  %2135 = vmatprep.mubr.f32.mxu0 0.0
  %2136 = vmatmul.mubr.f32.gmra.mrb[0].mxu0 %v1950
  %v2137 = vpop.f32.mrb[0].mxu0
  %v2138 = vadd.f32 0.0, %v2137
  %v2139 = vpop.f32.mrb[0].mxu0
  %2140 = vmatprep.mubr.f32.mxu0 0.0
  %2141 = vmatmul.mubr.f32.gmra.mrb[0].mxu0 %v1953
  %v2142 = vpop.f32.mrb[0].mxu0
  %v2143 = vadd.f32 0.0, %v2142
  %v2144 = vpop.f32.mrb[0].mxu0
  %2145 = vmatprep.mubr.f32.mxu0 0.0
  %2146 = vmatmul.mubr.f32.gmra.mrb[0].mxu0 %v1956
  %v2147 = vpop.f32.mrb[0].mxu0
  %v2148 = vadd.f32 0.0, %v2147
  %v2149 = vpop.f32.mrb[0].mxu0
  %2150 = vmatprep.mubr.f32.mxu0 0.0
  %2151 = vmatmul.mubr.f32.gmra.mrb[0].mxu0 %v1959
  %v2152 = vpop.f32.mrb[0].mxu0
  %v2153 = vadd.f32 0.0, %v2152
  %v2154 = vpop.f32.mrb[0].mxu0
  %2155 = vmatprep.mubr.f32.mxu0 0.0
  %2156 = vmatmul.mubr.f32.gmra.mrb[0].mxu0 %v1962
  %v2157 = vpop.f32.mrb[0].mxu0
  %v2158 = vadd.f32 0.0, %v2157
  %v2159 = vpop.f32.mrb[0].mxu0
  %2160 = vmatprep.mubr.f32.mxu0 0.0
  %2161 = vmatmul.mubr.f32.gmra.mrb[0].mxu0 %v1965
  %v2162 = vpop.f32.mrb[0].mxu0
  %v2163 = vadd.f32 0.0, %v2162
  %v2164 = vpop.f32.mrb[0].mxu0
  %2165 = vmatprep.mubr.f32.mxu0 0.0
  %2166 = vmatmul.mubr.f32.gmra.mrb[0].mxu0 %v1968
  %v2167 = vpop.f32.mrb[0].mxu0
  %v2168 = vadd.f32 0.0, %v2167
  %v2169 = vpop.f32.mrb[0].mxu0
  %2170 = vmatprep.mubr.f32.mxu0 0.0
  %2171 = vmatmul.mubr.f32.gmra.mrb[0].mxu0 %v1971
  %v2172 = vpop.f32.mrb[0].mxu0
  %v2173 = vadd.f32 0.0, %v2172
  %v2174 = vpop.f32.mrb[0].mxu0
  %2175 = vmatprep.mubr.f32.mxu0 0.0
  %2176 = vmatmul.mubr.f32.gmra.mrb[0].mxu0 %v1974
  %v2177 = vpop.f32.mrb[0].mxu0
  %v2178 = vadd.f32 0.0, %v2177
  %v2179 = vpop.f32.mrb[0].mxu0
  %2180 = vmatprep.mubr.f32.mxu0 0.0
  %2181 = vmatmul.mubr.f32.gmra.mrb[0].mxu0 %v1977
  %v2182 = vpop.f32.mrb[0].mxu0
  %v2183 = vadd.f32 0.0, %v2182
  %v2184 = vpop.f32.mrb[0].mxu0
  %2185 = vmatprep.mubr.f32.mxu0 0.0
  %2186 = vmatmul.mubr.f32.gmra.mrb[0].mxu0 %v1980
  %v2187 = vpop.f32.mrb[0].mxu0
  %v2188 = vadd.f32 0.0, %v2187
  %v2189 = vpop.f32.mrb[0].mxu0
  %2190 = vmatprep.mubr.f32.mxu0 0.0
  %2191 = vmatmul.mubr.f32.gmra.mrb[0].mxu0 %v1983
  %v2192 = vpop.f32.mrb[0].mxu0
  %v2193 = vadd.f32 0.0, %v2192
  %v2194 = vpop.f32.mrb[0].mxu0
  %2195 = vmatprep.mubr.f32.mxu0 0.0
  %2196 = vmatmul.mubr.f32.gmra.mrb[0].mxu0 %v1986
  %v2197 = vpop.f32.mrb[0].mxu0
  %v2198 = vadd.f32 0.0, %v2197
  %v2199 = vpop.f32.mrb[0].mxu0
  %2200 = vmatprep.mubr.f32.mxu0 0.0
  %2201 = vmatmul.mubr.f32.gmra.mrb[0].mxu0 %v1989
  %v2202 = vpop.f32.mrb[0].mxu0
  %v2203 = vadd.f32 0.0, %v2202
  %v2204 = vpop.f32.mrb[0].mxu0
  %2205 = vmatprep.mubr.f32.mxu0 0.0
  %2206 = vmatmul.mubr.f32.gmra.mrb[0].mxu0 %v1992
  %v2207 = vpop.f32.mrb[0].mxu0
  %v2208 = vadd.f32 0.0, %v2207
  %v2209 = vpop.f32.mrb[0].mxu0
  %2210 = vmatprep.mubr.f32.mxu0 0.0
  %2211 = vmatmul.mubr.f32.gmra.mrb[0].mxu0 %v1995
  %v2212 = vpop.f32.mrb[0].mxu0
  %v2213 = vadd.f32 0.0, %v2212
  %v2214 = vpop.f32.mrb[0].mxu0
  %2215 = vmatprep.mubr.f32.mxu0 0.0
  %2216 = vmatmul.mubr.f32.gmra.mrb[0].mxu0 %v1998
  %v2217 = vpop.f32.mrb[0].mxu0
  %v2218 = vadd.f32 0.0, %v2217
  %v2219 = vpop.f32.mrb[0].mxu0
  %2220 = vmatprep.mubr.f32.mxu0 0.0
  %2221 = vmatmul.mubr.f32.gmra.mrb[0].mxu0 %v2001
  %v2222 = vpop.f32.mrb[0].mxu0
  %v2223 = vadd.f32 0.0, %v2222
  %v2224 = vpop.f32.mrb[0].mxu0
  %2225 = vmatprep.mubr.f32.mxu0 0.0
  %2226 = vmatmul.mubr.f32.gmra.mrb[0].mxu0 %v2004
  %v2227 = vpop.f32.mrb[0].mxu0
  %v2228 = vadd.f32 0.0, %v2227
  %v2229 = vpop.f32.mrb[0].mxu0
  %2230 = vmatprep.mubr.f32.mxu0 0.0
  %2231 = vmatmul.mubr.f32.gmra.mrb[0].mxu0 %v2007
  %v2232 = vpop.f32.mrb[0].mxu0
  %v2233 = vadd.f32 0.0, %v2232
  %v2234 = vpop.f32.mrb[0].mxu0
  %2235 = vmatprep.mubr.f32.mxu0 0.0
  %2236 = vmatmul.mubr.f32.gmra.mrb[0].mxu0 %v2010
  %v2237 = vpop.f32.mrb[0].mxu0
  %v2238 = vadd.f32 0.0, %v2237
  %v2239 = vpop.f32.mrb[0].mxu0
  %2240 = vdwg.mxu0
  %v2242 = vlaneseq
  %v2243 = vshrl.u32 %v2242, 7
  %v2244 = vsub.s32 0, %v2243
  %v2245 = vrot.slane %v328, %v2244
  %v2247 = vmul.f32 %v2083, %v2245
  %v2248 = vmul.f32 %v2088, %v2245
  %v2249 = vmul.f32 %v2093, %v2245
  %v2250 = vmul.f32 %v2098, %v2245
  %v2251 = vmul.f32 %v2103, %v2245
  %v2252 = vmul.f32 %v2108, %v2245
  %v2253 = vmul.f32 %v2113, %v2245
  %v2254 = vmul.f32 %v2118, %v2245
  %v2255 = vmul.f32 %v2123, %v2245
  %v2256 = vmul.f32 %v2128, %v2245
  %v2257 = vmul.f32 %v2133, %v2245
  %v2258 = vmul.f32 %v2138, %v2245
  %v2259 = vmul.f32 %v2143, %v2245
  %v2260 = vmul.f32 %v2148, %v2245
  %v2261 = vmul.f32 %v2153, %v2245
  %v2262 = vmul.f32 %v2158, %v2245
  %v2263 = vmul.f32 %v2163, %v2245
  %v2264 = vmul.f32 %v2168, %v2245
  %v2265 = vmul.f32 %v2173, %v2245
  %v2266 = vmul.f32 %v2178, %v2245
  %v2267 = vmul.f32 %v2183, %v2245
  %v2268 = vmul.f32 %v2188, %v2245
  %v2269 = vmul.f32 %v2193, %v2245
  %v2270 = vmul.f32 %v2198, %v2245
  %v2271 = vmul.f32 %v2203, %v2245
  %v2272 = vmul.f32 %v2208, %v2245
  %v2273 = vmul.f32 %v2213, %v2245
  %v2274 = vmul.f32 %v2218, %v2245
  %v2275 = vmul.f32 %v2223, %v2245
  %v2276 = vmul.f32 %v2228, %v2245
  %v2277 = vmul.f32 %v2233, %v2245
  %v2278 = vmul.f32 %v2238, %v2245
  %v2280 = vlaneseq
  %v2281 = vshrl.u32 %v2280, 7
  %v2282 = vsub.s32 0, %v2281
  %v2283 = vrot.slane %v329, %v2282
  %v2285 = vadd.f32 %v2247, %v2283
  %v2286 = vadd.f32 %v2248, %v2283
  %v2287 = vadd.f32 %v2249, %v2283
  %v2288 = vadd.f32 %v2250, %v2283
  %v2289 = vadd.f32 %v2251, %v2283
  %v2290 = vadd.f32 %v2252, %v2283
  %v2291 = vadd.f32 %v2253, %v2283
  %v2292 = vadd.f32 %v2254, %v2283
  %v2293 = vadd.f32 %v2255, %v2283
  %v2294 = vadd.f32 %v2256, %v2283
  %v2295 = vadd.f32 %v2257, %v2283
  %v2296 = vadd.f32 %v2258, %v2283
  %v2297 = vadd.f32 %v2259, %v2283
  %v2298 = vadd.f32 %v2260, %v2283
  %v2299 = vadd.f32 %v2261, %v2283
  %v2300 = vadd.f32 %v2262, %v2283
  %v2301 = vadd.f32 %v2263, %v2283
  %v2302 = vadd.f32 %v2264, %v2283
  %v2303 = vadd.f32 %v2265, %v2283
  %v2304 = vadd.f32 %v2266, %v2283
  %v2305 = vadd.f32 %v2267, %v2283
  %v2306 = vadd.f32 %v2268, %v2283
  %v2307 = vadd.f32 %v2269, %v2283
  %v2308 = vadd.f32 %v2270, %v2283
  %v2309 = vadd.f32 %v2271, %v2283
  %v2310 = vadd.f32 %v2272, %v2283
  %v2311 = vadd.f32 %v2273, %v2283
  %v2312 = vadd.f32 %v2274, %v2283
  %v2313 = vadd.f32 %v2275, %v2283
  %v2314 = vadd.f32 %v2276, %v2283
  %v2315 = vadd.f32 %v2277, %v2283
  %v2316 = vadd.f32 %v2278, %v2283
  %v2317 = vmax.f32 %v2285, 0.0
  %v2318 = vmax.f32 %v2286, 0.0
  %v2319 = vmax.f32 %v2287, 0.0
  %v2320 = vmax.f32 %v2288, 0.0
  %v2321 = vmax.f32 %v2289, 0.0
  %v2322 = vmax.f32 %v2290, 0.0
  %v2323 = vmax.f32 %v2291, 0.0
  %v2324 = vmax.f32 %v2292, 0.0
  %v2325 = vmax.f32 %v2293, 0.0
  %v2326 = vmax.f32 %v2294, 0.0
  %v2327 = vmax.f32 %v2295, 0.0
  %v2328 = vmax.f32 %v2296, 0.0
  %v2329 = vmax.f32 %v2297, 0.0
  %v2330 = vmax.f32 %v2298, 0.0
  %v2331 = vmax.f32 %v2299, 0.0
  %v2332 = vmax.f32 %v2300, 0.0
  %v2333 = vmax.f32 %v2301, 0.0
  %v2334 = vmax.f32 %v2302, 0.0
  %v2335 = vmax.f32 %v2303, 0.0
  %v2336 = vmax.f32 %v2304, 0.0
  %v2337 = vmax.f32 %v2305, 0.0
  %v2338 = vmax.f32 %v2306, 0.0
  %v2339 = vmax.f32 %v2307, 0.0
  %v2340 = vmax.f32 %v2308, 0.0
  %v2341 = vmax.f32 %v2309, 0.0
  %v2342 = vmax.f32 %v2310, 0.0
  %v2343 = vmax.f32 %v2311, 0.0
  %v2344 = vmax.f32 %v2312, 0.0
  %v2345 = vmax.f32 %v2313, 0.0
  %v2346 = vmax.f32 %v2314, 0.0
  %v2347 = vmax.f32 %v2315, 0.0
  %v2348 = vmax.f32 %v2316, 0.0
  %s2349 = scalar_lea.vmem [#allocation3], %s431
  %2350 = vst.msk [vmem:[%s2349 + $0x8] sm:$0xff] %vm26, %v2317
  %2351 = vst.msk [vmem:[%s2349 + $0x10] sm:$0xff] %vm26, %v2318
  %2352 = vst.msk [vmem:[%s2349 + $0x28] sm:$0xff] %vm26, %v2319
  %2353 = vst.msk [vmem:[%s2349 + $0x30] sm:$0xff] %vm26, %v2320
  %2354 = vst.msk [vmem:[%s2349 + $0x48] sm:$0xff] %vm26, %v2321
  %2355 = vst.msk [vmem:[%s2349 + $0x50] sm:$0xff] %vm26, %v2322
  %2356 = vst.msk [vmem:[%s2349 + $0x68] sm:$0xff] %vm26, %v2323
  %2357 = vst.msk [vmem:[%s2349 + $0x70] sm:$0xff] %vm26, %v2324
  %2358 = vst.msk [vmem:[%s2349 + $0x88] sm:$0xff] %vm26, %v2325
  %2359 = vst.msk [vmem:[%s2349 + $0x90] sm:$0xff] %vm26, %v2326
  %2360 = vst.msk [vmem:[%s2349 + $0xa8] sm:$0xff] %vm26, %v2327
  %2361 = vst.msk [vmem:[%s2349 + $0xb0] sm:$0xff] %vm26, %v2328
  %2362 = vst.msk [vmem:[%s2349 + $0xc8] sm:$0xff] %vm26, %v2329
  %2363 = vst.msk [vmem:[%s2349 + $0xd0] sm:$0xff] %vm26, %v2330
  %2364 = vst.msk [vmem:[%s2349 + $0xe8] sm:$0xff] %vm26, %v2331
  %2365 = vst.msk [vmem:[%s2349 + $0xf0] sm:$0xff] %vm26, %v2332
  %2366 = vst.msk [vmem:[%s2349 + $0x248] sm:$0xff] %vm26, %v2333
  %2367 = vst.msk [vmem:[%s2349 + $0x250] sm:$0xff] %vm26, %v2334
  %2368 = vst.msk [vmem:[%s2349 + $0x268] sm:$0xff] %vm26, %v2335
  %2369 = vst.msk [vmem:[%s2349 + $0x270] sm:$0xff] %vm26, %v2336
  %2370 = vst.msk [vmem:[%s2349 + $0x288] sm:$0xff] %vm26, %v2337
  %2371 = vst.msk [vmem:[%s2349 + $0x290] sm:$0xff] %vm26, %v2338
  %2372 = vst.msk [vmem:[%s2349 + $0x2a8] sm:$0xff] %vm26, %v2339
  %2373 = vst.msk [vmem:[%s2349 + $0x2b0] sm:$0xff] %vm26, %v2340
  %2374 = vst.msk [vmem:[%s2349 + $0x2c8] sm:$0xff] %vm26, %v2341
  %2375 = vst.msk [vmem:[%s2349 + $0x2d0] sm:$0xff] %vm26, %v2342
  %2376 = vst.msk [vmem:[%s2349 + $0x2e8] sm:$0xff] %vm26, %v2343
  %2377 = vst.msk [vmem:[%s2349 + $0x2f0] sm:$0xff] %vm26, %v2344
  %2378 = vst.msk [vmem:[%s2349 + $0x308] sm:$0xff] %vm26, %v2345
  %2379 = vst.msk [vmem:[%s2349 + $0x310] sm:$0xff] %vm26, %v2346
  %2380 = vst.msk [vmem:[%s2349 + $0x328] sm:$0xff] %vm26, %v2347
  %2381 = vst.msk [vmem:[%s2349 + $0x330] sm:$0xff] %vm26, %v2348
  %s2382 = smul.u32 8, 32
  %s2383 = scalar_lea.vmem [#allocation2], %s2382
  %v2384 = vld [vmem:[%s2383 + $0x7] sm:$0xff]
  %v2385 = vld [vmem:[%s2383 + $0xf] sm:$0xff]
  %v2386 = vld [vmem:[%s2383 + $0x27] sm:$0xff]
  %v2387 = vld [vmem:[%s2383 + $0x2f] sm:$0xff]
  %v2388 = vld [vmem:[%s2383 + $0x47] sm:$0xff]
  %v2389 = vld [vmem:[%s2383 + $0x4f] sm:$0xff]
  %v2390 = vld [vmem:[%s2383 + $0x67] sm:$0xff]
  %v2391 = vld [vmem:[%s2383 + $0x6f] sm:$0xff]
  %v2392 = vld [vmem:[%s2383 + $0x87] sm:$0xff]
  %v2393 = vld [vmem:[%s2383 + $0x8f] sm:$0xff]
  %v2394 = vld [vmem:[%s2383 + $0xa7] sm:$0xff]
  %v2395 = vld [vmem:[%s2383 + $0xaf] sm:$0xff]
  %v2396 = vld [vmem:[%s2383 + $0xc7] sm:$0xff]
  %v2397 = vld [vmem:[%s2383 + $0xcf] sm:$0xff]
  %v2398 = vld [vmem:[%s2383 + $0xe7] sm:$0xff]
  %v2399 = vld [vmem:[%s2383 + $0xef] sm:$0xff]
  %v2400 = vld [vmem:[%s2383 + $0x247] sm:$0xff]
  %v2401 = vld [vmem:[%s2383 + $0x24f] sm:$0xff]
  %v2402 = vld [vmem:[%s2383 + $0x267] sm:$0xff]
  %v2403 = vld [vmem:[%s2383 + $0x26f] sm:$0xff]
  %v2404 = vld [vmem:[%s2383 + $0x287] sm:$0xff]
  %v2405 = vld [vmem:[%s2383 + $0x28f] sm:$0xff]
  %v2406 = vld [vmem:[%s2383 + $0x2a7] sm:$0xff]
  %v2407 = vld [vmem:[%s2383 + $0x2af] sm:$0xff]
  %v2408 = vld [vmem:[%s2383 + $0x2c7] sm:$0xff]
  %v2409 = vld [vmem:[%s2383 + $0x2cf] sm:$0xff]
  %v2410 = vld [vmem:[%s2383 + $0x2e7] sm:$0xff]
  %v2411 = vld [vmem:[%s2383 + $0x2ef] sm:$0xff]
  %v2412 = vld [vmem:[%s2383 + $0x307] sm:$0xff]
  %v2413 = vld [vmem:[%s2383 + $0x30f] sm:$0xff]
  %v2414 = vld [vmem:[%s2383 + $0x327] sm:$0xff]
  %v2415 = vld [vmem:[%s2383 + $0x32f] sm:$0xff]
  %v2416 = vld [vmem:[%s2383 + $0x8] sm:$0xff]
  %v2417 = vld [vmem:[%s2383 + $0x10] sm:$0xff]
  %v2418 = vld [vmem:[%s2383 + $0x28] sm:$0xff]
  %v2419 = vld [vmem:[%s2383 + $0x30] sm:$0xff]
  %v2420 = vld [vmem:[%s2383 + $0x48] sm:$0xff]
  %v2421 = vld [vmem:[%s2383 + $0x50] sm:$0xff]
  %v2422 = vld [vmem:[%s2383 + $0x68] sm:$0xff]
  %v2423 = vld [vmem:[%s2383 + $0x70] sm:$0xff]
  %v2424 = vld [vmem:[%s2383 + $0x88] sm:$0xff]
  %v2425 = vld [vmem:[%s2383 + $0x90] sm:$0xff]
  %v2426 = vld [vmem:[%s2383 + $0xa8] sm:$0xff]
  %v2427 = vld [vmem:[%s2383 + $0xb0] sm:$0xff]
  %v2428 = vld [vmem:[%s2383 + $0xc8] sm:$0xff]
  %v2429 = vld [vmem:[%s2383 + $0xd0] sm:$0xff]
  %v2430 = vld [vmem:[%s2383 + $0xe8] sm:$0xff]
  %v2431 = vld [vmem:[%s2383 + $0xf0] sm:$0xff]
  %v2432 = vld [vmem:[%s2383 + $0x248] sm:$0xff]
  %v2433 = vld [vmem:[%s2383 + $0x250] sm:$0xff]
  %v2434 = vld [vmem:[%s2383 + $0x268] sm:$0xff]
  %v2435 = vld [vmem:[%s2383 + $0x270] sm:$0xff]
  %v2436 = vld [vmem:[%s2383 + $0x288] sm:$0xff]
  %v2437 = vld [vmem:[%s2383 + $0x290] sm:$0xff]
  %v2438 = vld [vmem:[%s2383 + $0x2a8] sm:$0xff]
  %v2439 = vld [vmem:[%s2383 + $0x2b0] sm:$0xff]
  %v2440 = vld [vmem:[%s2383 + $0x2c8] sm:$0xff]
  %v2441 = vld [vmem:[%s2383 + $0x2d0] sm:$0xff]
  %v2442 = vld [vmem:[%s2383 + $0x2e8] sm:$0xff]
  %v2443 = vld [vmem:[%s2383 + $0x2f0] sm:$0xff]
  %v2444 = vld [vmem:[%s2383 + $0x308] sm:$0xff]
  %v2445 = vld [vmem:[%s2383 + $0x310] sm:$0xff]
  %v2446 = vld [vmem:[%s2383 + $0x328] sm:$0xff]
  %v2447 = vld [vmem:[%s2383 + $0x330] sm:$0xff]
  %v2448 = vld [vmem:[%s2383 + $0x9] sm:$0xff]
  %v2449 = vld [vmem:[%s2383 + $0x11] sm:$0xff]
  %v2450 = vld [vmem:[%s2383 + $0x29] sm:$0xff]
  %v2451 = vld [vmem:[%s2383 + $0x31] sm:$0xff]
  %v2452 = vld [vmem:[%s2383 + $0x49] sm:$0xff]
  %v2453 = vld [vmem:[%s2383 + $0x51] sm:$0xff]
  %v2454 = vld [vmem:[%s2383 + $0x69] sm:$0xff]
  %v2455 = vld [vmem:[%s2383 + $0x71] sm:$0xff]
  %v2456 = vld [vmem:[%s2383 + $0x89] sm:$0xff]
  %v2457 = vld [vmem:[%s2383 + $0x91] sm:$0xff]
  %v2458 = vld [vmem:[%s2383 + $0xa9] sm:$0xff]
  %v2459 = vld [vmem:[%s2383 + $0xb1] sm:$0xff]
  %v2460 = vld [vmem:[%s2383 + $0xc9] sm:$0xff]
  %v2461 = vld [vmem:[%s2383 + $0xd1] sm:$0xff]
  %v2462 = vld [vmem:[%s2383 + $0xe9] sm:$0xff]
  %v2463 = vld [vmem:[%s2383 + $0xf1] sm:$0xff]
  %v2464 = vld [vmem:[%s2383 + $0x249] sm:$0xff]
  %v2465 = vld [vmem:[%s2383 + $0x251] sm:$0xff]
  %v2466 = vld [vmem:[%s2383 + $0x269] sm:$0xff]
  %v2467 = vld [vmem:[%s2383 + $0x271] sm:$0xff]
  %v2468 = vld [vmem:[%s2383 + $0x289] sm:$0xff]
  %v2469 = vld [vmem:[%s2383 + $0x291] sm:$0xff]
  %v2470 = vld [vmem:[%s2383 + $0x2a9] sm:$0xff]
  %v2471 = vld [vmem:[%s2383 + $0x2b1] sm:$0xff]
  %v2472 = vld [vmem:[%s2383 + $0x2c9] sm:$0xff]
  %v2473 = vld [vmem:[%s2383 + $0x2d1] sm:$0xff]
  %v2474 = vld [vmem:[%s2383 + $0x2e9] sm:$0xff]
  %v2475 = vld [vmem:[%s2383 + $0x2f1] sm:$0xff]
  %v2476 = vld [vmem:[%s2383 + $0x309] sm:$0xff]
  %v2477 = vld [vmem:[%s2383 + $0x311] sm:$0xff]
  %v2478 = vld [vmem:[%s2383 + $0x329] sm:$0xff]
  %v2479 = vld [vmem:[%s2383 + $0x331] sm:$0xff]
  %s2480 = sadd.s32 8, 1
  %s2481 = smul.u32 %s2480, 32
  %s2482 = scalar_lea.vmem [#allocation2], %s2481
  %v2483 = vld [vmem:[%s2482 + $0x7] sm:$0xff]
  %v2484 = vld [vmem:[%s2482 + $0xf] sm:$0xff]
  %v2485 = vld [vmem:[%s2482 + $0x27] sm:$0xff]
  %v2486 = vld [vmem:[%s2482 + $0x2f] sm:$0xff]
  %v2487 = vld [vmem:[%s2482 + $0x47] sm:$0xff]
  %v2488 = vld [vmem:[%s2482 + $0x4f] sm:$0xff]
  %v2489 = vld [vmem:[%s2482 + $0x67] sm:$0xff]
  %v2490 = vld [vmem:[%s2482 + $0x6f] sm:$0xff]
  %v2491 = vld [vmem:[%s2482 + $0x87] sm:$0xff]
  %v2492 = vld [vmem:[%s2482 + $0x8f] sm:$0xff]
  %v2493 = vld [vmem:[%s2482 + $0xa7] sm:$0xff]
  %v2494 = vld [vmem:[%s2482 + $0xaf] sm:$0xff]
  %v2495 = vld [vmem:[%s2482 + $0xc7] sm:$0xff]
  %v2496 = vld [vmem:[%s2482 + $0xcf] sm:$0xff]
  %v2497 = vld [vmem:[%s2482 + $0xe7] sm:$0xff]
  %v2498 = vld [vmem:[%s2482 + $0xef] sm:$0xff]
  %v2499 = vld [vmem:[%s2482 + $0x247] sm:$0xff]
  %v2500 = vld [vmem:[%s2482 + $0x24f] sm:$0xff]
  %v2501 = vld [vmem:[%s2482 + $0x267] sm:$0xff]
  %v2502 = vld [vmem:[%s2482 + $0x26f] sm:$0xff]
  %v2503 = vld [vmem:[%s2482 + $0x287] sm:$0xff]
  %v2504 = vld [vmem:[%s2482 + $0x28f] sm:$0xff]
  %v2505 = vld [vmem:[%s2482 + $0x2a7] sm:$0xff]
  %v2506 = vld [vmem:[%s2482 + $0x2af] sm:$0xff]
  %v2507 = vld [vmem:[%s2482 + $0x2c7] sm:$0xff]
  %v2508 = vld [vmem:[%s2482 + $0x2cf] sm:$0xff]
  %v2509 = vld [vmem:[%s2482 + $0x2e7] sm:$0xff]
  %v2510 = vld [vmem:[%s2482 + $0x2ef] sm:$0xff]
  %v2511 = vld [vmem:[%s2482 + $0x307] sm:$0xff]
  %v2512 = vld [vmem:[%s2482 + $0x30f] sm:$0xff]
  %v2513 = vld [vmem:[%s2482 + $0x327] sm:$0xff]
  %v2514 = vld [vmem:[%s2482 + $0x32f] sm:$0xff]
  %v2515 = vld [vmem:[%s2482 + $0x8] sm:$0xff]
  %v2516 = vld [vmem:[%s2482 + $0x10] sm:$0xff]
  %v2517 = vld [vmem:[%s2482 + $0x28] sm:$0xff]
  %v2518 = vld [vmem:[%s2482 + $0x30] sm:$0xff]
  %v2519 = vld [vmem:[%s2482 + $0x48] sm:$0xff]
  %v2520 = vld [vmem:[%s2482 + $0x50] sm:$0xff]
  %v2521 = vld [vmem:[%s2482 + $0x68] sm:$0xff]
  %v2522 = vld [vmem:[%s2482 + $0x70] sm:$0xff]
  %v2523 = vld [vmem:[%s2482 + $0x88] sm:$0xff]
  %v2524 = vld [vmem:[%s2482 + $0x90] sm:$0xff]
  %v2525 = vld [vmem:[%s2482 + $0xa8] sm:$0xff]
  %v2526 = vld [vmem:[%s2482 + $0xb0] sm:$0xff]
  %v2527 = vld [vmem:[%s2482 + $0xc8] sm:$0xff]
  %v2528 = vld [vmem:[%s2482 + $0xd0] sm:$0xff]
  %v2529 = vld [vmem:[%s2482 + $0xe8] sm:$0xff]
  %v2530 = vld [vmem:[%s2482 + $0xf0] sm:$0xff]
  %v2531 = vld [vmem:[%s2482 + $0x248] sm:$0xff]
  %v2532 = vld [vmem:[%s2482 + $0x250] sm:$0xff]
  %v2533 = vld [vmem:[%s2482 + $0x268] sm:$0xff]
  %v2534 = vld [vmem:[%s2482 + $0x270] sm:$0xff]
  %v2535 = vld [vmem:[%s2482 + $0x288] sm:$0xff]
  %v2536 = vld [vmem:[%s2482 + $0x290] sm:$0xff]
  %v2537 = vld [vmem:[%s2482 + $0x2a8] sm:$0xff]
  %v2538 = vld [vmem:[%s2482 + $0x2b0] sm:$0xff]
  %v2539 = vld [vmem:[%s2482 + $0x2c8] sm:$0xff]
  %v2540 = vld [vmem:[%s2482 + $0x2d0] sm:$0xff]
  %v2541 = vld [vmem:[%s2482 + $0x2e8] sm:$0xff]
  %v2542 = vld [vmem:[%s2482 + $0x2f0] sm:$0xff]
  %v2543 = vld [vmem:[%s2482 + $0x308] sm:$0xff]
  %v2544 = vld [vmem:[%s2482 + $0x310] sm:$0xff]
  %v2545 = vld [vmem:[%s2482 + $0x328] sm:$0xff]
  %v2546 = vld [vmem:[%s2482 + $0x330] sm:$0xff]
  %v2547 = vld [vmem:[%s2482 + $0x9] sm:$0xff]
  %v2548 = vld [vmem:[%s2482 + $0x11] sm:$0xff]
  %v2549 = vld [vmem:[%s2482 + $0x29] sm:$0xff]
  %v2550 = vld [vmem:[%s2482 + $0x31] sm:$0xff]
  %v2551 = vld [vmem:[%s2482 + $0x49] sm:$0xff]
  %v2552 = vld [vmem:[%s2482 + $0x51] sm:$0xff]
  %v2553 = vld [vmem:[%s2482 + $0x69] sm:$0xff]
  %v2554 = vld [vmem:[%s2482 + $0x71] sm:$0xff]
  %v2555 = vld [vmem:[%s2482 + $0x89] sm:$0xff]
  %v2556 = vld [vmem:[%s2482 + $0x91] sm:$0xff]
  %v2557 = vld [vmem:[%s2482 + $0xa9] sm:$0xff]
  %v2558 = vld [vmem:[%s2482 + $0xb1] sm:$0xff]
  %v2559 = vld [vmem:[%s2482 + $0xc9] sm:$0xff]
  %v2560 = vld [vmem:[%s2482 + $0xd1] sm:$0xff]
  %v2561 = vld [vmem:[%s2482 + $0xe9] sm:$0xff]
  %v2562 = vld [vmem:[%s2482 + $0xf1] sm:$0xff]
  %v2563 = vld [vmem:[%s2482 + $0x249] sm:$0xff]
  %v2564 = vld [vmem:[%s2482 + $0x251] sm:$0xff]
  %v2565 = vld [vmem:[%s2482 + $0x269] sm:$0xff]
  %v2566 = vld [vmem:[%s2482 + $0x271] sm:$0xff]
  %v2567 = vld [vmem:[%s2482 + $0x289] sm:$0xff]
  %v2568 = vld [vmem:[%s2482 + $0x291] sm:$0xff]
  %v2569 = vld [vmem:[%s2482 + $0x2a9] sm:$0xff]
  %v2570 = vld [vmem:[%s2482 + $0x2b1] sm:$0xff]
  %v2571 = vld [vmem:[%s2482 + $0x2c9] sm:$0xff]
  %v2572 = vld [vmem:[%s2482 + $0x2d1] sm:$0xff]
  %v2573 = vld [vmem:[%s2482 + $0x2e9] sm:$0xff]
  %v2574 = vld [vmem:[%s2482 + $0x2f1] sm:$0xff]
  %v2575 = vld [vmem:[%s2482 + $0x309] sm:$0xff]
  %v2576 = vld [vmem:[%s2482 + $0x311] sm:$0xff]
  %v2577 = vld [vmem:[%s2482 + $0x329] sm:$0xff]
  %v2578 = vld [vmem:[%s2482 + $0x331] sm:$0xff]
  %s2579 = sadd.s32 8, 2
  %s2580 = smul.u32 %s2579, 32
  %s2581 = scalar_lea.vmem [#allocation2], %s2580
  %v2582 = vld [vmem:[%s2581 + $0x7] sm:$0xff]
  %v2583 = vld [vmem:[%s2581 + $0xf] sm:$0xff]
  %v2584 = vld [vmem:[%s2581 + $0x27] sm:$0xff]
  %v2585 = vld [vmem:[%s2581 + $0x2f] sm:$0xff]
  %v2586 = vld [vmem:[%s2581 + $0x47] sm:$0xff]
  %v2587 = vld [vmem:[%s2581 + $0x4f] sm:$0xff]
  %v2588 = vld [vmem:[%s2581 + $0x67] sm:$0xff]
  %v2589 = vld [vmem:[%s2581 + $0x6f] sm:$0xff]
  %v2590 = vld [vmem:[%s2581 + $0x87] sm:$0xff]
  %v2591 = vld [vmem:[%s2581 + $0x8f] sm:$0xff]
  %v2592 = vld [vmem:[%s2581 + $0xa7] sm:$0xff]
  %v2593 = vld [vmem:[%s2581 + $0xaf] sm:$0xff]
  %v2594 = vld [vmem:[%s2581 + $0xc7] sm:$0xff]
  %v2595 = vld [vmem:[%s2581 + $0xcf] sm:$0xff]
  %v2596 = vld [vmem:[%s2581 + $0xe7] sm:$0xff]
  %v2597 = vld [vmem:[%s2581 + $0xef] sm:$0xff]
  %v2598 = vld [vmem:[%s2581 + $0x247] sm:$0xff]
  %v2599 = vld [vmem:[%s2581 + $0x24f] sm:$0xff]
  %v2600 = vld [vmem:[%s2581 + $0x267] sm:$0xff]
  %v2601 = vld [vmem:[%s2581 + $0x26f] sm:$0xff]
  %v2602 = vld [vmem:[%s2581 + $0x287] sm:$0xff]
  %v2603 = vld [vmem:[%s2581 + $0x28f] sm:$0xff]
  %v2604 = vld [vmem:[%s2581 + $0x2a7] sm:$0xff]
  %v2605 = vld [vmem:[%s2581 + $0x2af] sm:$0xff]
  %v2606 = vld [vmem:[%s2581 + $0x2c7] sm:$0xff]
  %v2607 = vld [vmem:[%s2581 + $0x2cf] sm:$0xff]
  %v2608 = vld [vmem:[%s2581 + $0x2e7] sm:$0xff]
  %v2609 = vld [vmem:[%s2581 + $0x2ef] sm:$0xff]
  %v2610 = vld [vmem:[%s2581 + $0x307] sm:$0xff]
  %v2611 = vld [vmem:[%s2581 + $0x30f] sm:$0xff]
  %v2612 = vld [vmem:[%s2581 + $0x327] sm:$0xff]
  %v2613 = vld [vmem:[%s2581 + $0x32f] sm:$0xff]
  %v2614 = vld [vmem:[%s2581 + $0x8] sm:$0xff]
  %v2615 = vld [vmem:[%s2581 + $0x10] sm:$0xff]
  %v2616 = vld [vmem:[%s2581 + $0x28] sm:$0xff]
  %v2617 = vld [vmem:[%s2581 + $0x30] sm:$0xff]
  %v2618 = vld [vmem:[%s2581 + $0x48] sm:$0xff]
  %v2619 = vld [vmem:[%s2581 + $0x50] sm:$0xff]
  %v2620 = vld [vmem:[%s2581 + $0x68] sm:$0xff]
  %v2621 = vld [vmem:[%s2581 + $0x70] sm:$0xff]
  %v2622 = vld [vmem:[%s2581 + $0x88] sm:$0xff]
  %v2623 = vld [vmem:[%s2581 + $0x90] sm:$0xff]
  %v2624 = vld [vmem:[%s2581 + $0xa8] sm:$0xff]
  %v2625 = vld [vmem:[%s2581 + $0xb0] sm:$0xff]
  %v2626 = vld [vmem:[%s2581 + $0xc8] sm:$0xff]
  %v2627 = vld [vmem:[%s2581 + $0xd0] sm:$0xff]
  %v2628 = vld [vmem:[%s2581 + $0xe8] sm:$0xff]
  %v2629 = vld [vmem:[%s2581 + $0xf0] sm:$0xff]
  %v2630 = vld [vmem:[%s2581 + $0x248] sm:$0xff]
  %v2631 = vld [vmem:[%s2581 + $0x250] sm:$0xff]
  %v2632 = vld [vmem:[%s2581 + $0x268] sm:$0xff]
  %v2633 = vld [vmem:[%s2581 + $0x270] sm:$0xff]
  %v2634 = vld [vmem:[%s2581 + $0x288] sm:$0xff]
  %v2635 = vld [vmem:[%s2581 + $0x290] sm:$0xff]
  %v2636 = vld [vmem:[%s2581 + $0x2a8] sm:$0xff]
  %v2637 = vld [vmem:[%s2581 + $0x2b0] sm:$0xff]
  %v2638 = vld [vmem:[%s2581 + $0x2c8] sm:$0xff]
  %v2639 = vld [vmem:[%s2581 + $0x2d0] sm:$0xff]
  %v2640 = vld [vmem:[%s2581 + $0x2e8] sm:$0xff]
  %v2641 = vld [vmem:[%s2581 + $0x2f0] sm:$0xff]
  %v2642 = vld [vmem:[%s2581 + $0x308] sm:$0xff]
  %v2643 = vld [vmem:[%s2581 + $0x310] sm:$0xff]
  %v2644 = vld [vmem:[%s2581 + $0x328] sm:$0xff]
  %v2645 = vld [vmem:[%s2581 + $0x330] sm:$0xff]
  %v2646 = vld [vmem:[%s2581 + $0x9] sm:$0xff]
  %v2647 = vld [vmem:[%s2581 + $0x11] sm:$0xff]
  %v2648 = vld [vmem:[%s2581 + $0x29] sm:$0xff]
  %v2649 = vld [vmem:[%s2581 + $0x31] sm:$0xff]
  %v2650 = vld [vmem:[%s2581 + $0x49] sm:$0xff]
  %v2651 = vld [vmem:[%s2581 + $0x51] sm:$0xff]
  %v2652 = vld [vmem:[%s2581 + $0x69] sm:$0xff]
  %v2653 = vld [vmem:[%s2581 + $0x71] sm:$0xff]
  %v2654 = vld [vmem:[%s2581 + $0x89] sm:$0xff]
  %v2655 = vld [vmem:[%s2581 + $0x91] sm:$0xff]
  %v2656 = vld [vmem:[%s2581 + $0xa9] sm:$0xff]
  %v2657 = vld [vmem:[%s2581 + $0xb1] sm:$0xff]
  %v2658 = vld [vmem:[%s2581 + $0xc9] sm:$0xff]
  %v2659 = vld [vmem:[%s2581 + $0xd1] sm:$0xff]
  %v2660 = vld [vmem:[%s2581 + $0xe9] sm:$0xff]
  %v2661 = vld [vmem:[%s2581 + $0xf1] sm:$0xff]
  %v2662 = vld [vmem:[%s2581 + $0x249] sm:$0xff]
  %v2663 = vld [vmem:[%s2581 + $0x251] sm:$0xff]
  %v2664 = vld [vmem:[%s2581 + $0x269] sm:$0xff]
  %v2665 = vld [vmem:[%s2581 + $0x271] sm:$0xff]
  %v2666 = vld [vmem:[%s2581 + $0x289] sm:$0xff]
  %v2667 = vld [vmem:[%s2581 + $0x291] sm:$0xff]
  %v2668 = vld [vmem:[%s2581 + $0x2a9] sm:$0xff]
  %v2669 = vld [vmem:[%s2581 + $0x2b1] sm:$0xff]
  %v2670 = vld [vmem:[%s2581 + $0x2c9] sm:$0xff]
  %v2671 = vld [vmem:[%s2581 + $0x2d1] sm:$0xff]
  %v2672 = vld [vmem:[%s2581 + $0x2e9] sm:$0xff]
  %v2673 = vld [vmem:[%s2581 + $0x2f1] sm:$0xff]
  %v2674 = vld [vmem:[%s2581 + $0x309] sm:$0xff]
  %v2675 = vld [vmem:[%s2581 + $0x311] sm:$0xff]
  %v2676 = vld [vmem:[%s2581 + $0x329] sm:$0xff]
  %v2677 = vld [vmem:[%s2581 + $0x331] sm:$0xff]
  %2710 = vrot.lane.b32.xlu0 %v2416, 4
  %v2711 = vpop.permute.xlu0 %2710
  %2712 = vrot.lane.b32.xlu0 %v2417, 4
  %v2713 = vpop.permute.xlu0 %2712
  %2714 = vrot.lane.b32.xlu0 %v2418, 4
  %v2715 = vpop.permute.xlu0 %2714
  %2716 = vrot.lane.b32.xlu0 %v2419, 4
  %v2717 = vpop.permute.xlu0 %2716
  %2718 = vrot.lane.b32.xlu0 %v2420, 4
  %v2719 = vpop.permute.xlu0 %2718
  %2720 = vrot.lane.b32.xlu0 %v2421, 4
  %v2721 = vpop.permute.xlu0 %2720
  %2722 = vrot.lane.b32.xlu0 %v2422, 4
  %v2723 = vpop.permute.xlu0 %2722
  %2724 = vrot.lane.b32.xlu0 %v2423, 4
  %v2725 = vpop.permute.xlu0 %2724
  %2726 = vrot.lane.b32.xlu0 %v2424, 4
  %v2727 = vpop.permute.xlu0 %2726
  %2728 = vrot.lane.b32.xlu0 %v2425, 4
  %v2729 = vpop.permute.xlu0 %2728
  %2730 = vrot.lane.b32.xlu0 %v2426, 4
  %v2731 = vpop.permute.xlu0 %2730
  %2732 = vrot.lane.b32.xlu0 %v2427, 4
  %v2733 = vpop.permute.xlu0 %2732
  %2734 = vrot.lane.b32.xlu0 %v2428, 4
  %v2735 = vpop.permute.xlu0 %2734
  %2736 = vrot.lane.b32.xlu0 %v2429, 4
  %v2737 = vpop.permute.xlu0 %2736
  %2738 = vrot.lane.b32.xlu0 %v2430, 4
  %v2739 = vpop.permute.xlu0 %2738
  %2740 = vrot.lane.b32.xlu0 %v2431, 4
  %v2741 = vpop.permute.xlu0 %2740
  %2742 = vrot.lane.b32.xlu0 %v2432, 4
  %v2743 = vpop.permute.xlu0 %2742
  %2744 = vrot.lane.b32.xlu0 %v2433, 4
  %v2745 = vpop.permute.xlu0 %2744
  %2746 = vrot.lane.b32.xlu0 %v2434, 4
  %v2747 = vpop.permute.xlu0 %2746
  %2748 = vrot.lane.b32.xlu0 %v2435, 4
  %v2749 = vpop.permute.xlu0 %2748
  %2750 = vrot.lane.b32.xlu0 %v2436, 4
  %v2751 = vpop.permute.xlu0 %2750
  %2752 = vrot.lane.b32.xlu0 %v2437, 4
  %v2753 = vpop.permute.xlu0 %2752
  %2754 = vrot.lane.b32.xlu0 %v2438, 4
  %v2755 = vpop.permute.xlu0 %2754
  %2756 = vrot.lane.b32.xlu0 %v2439, 4
  %v2757 = vpop.permute.xlu0 %2756
  %2758 = vrot.lane.b32.xlu0 %v2440, 4
  %v2759 = vpop.permute.xlu0 %2758
  %2760 = vrot.lane.b32.xlu0 %v2441, 4
  %v2761 = vpop.permute.xlu0 %2760
  %2762 = vrot.lane.b32.xlu0 %v2442, 4
  %v2763 = vpop.permute.xlu0 %2762
  %2764 = vrot.lane.b32.xlu0 %v2443, 4
  %v2765 = vpop.permute.xlu0 %2764
  %2766 = vrot.lane.b32.xlu0 %v2444, 4
  %v2767 = vpop.permute.xlu0 %2766
  %2768 = vrot.lane.b32.xlu0 %v2445, 4
  %v2769 = vpop.permute.xlu0 %2768
  %2770 = vrot.lane.b32.xlu0 %v2446, 4
  %v2771 = vpop.permute.xlu0 %2770
  %2772 = vrot.lane.b32.xlu0 %v2447, 4
  %v2773 = vpop.permute.xlu0 %2772
  %2838 = vrot.lane.b32.xlu0 %v2448, 8
  %v2839 = vpop.permute.xlu0 %2838
  %2840 = vrot.lane.b32.xlu0 %v2449, 8
  %v2841 = vpop.permute.xlu0 %2840
  %2842 = vrot.lane.b32.xlu0 %v2450, 8
  %v2843 = vpop.permute.xlu0 %2842
  %2844 = vrot.lane.b32.xlu0 %v2451, 8
  %v2845 = vpop.permute.xlu0 %2844
  %2846 = vrot.lane.b32.xlu0 %v2452, 8
  %v2847 = vpop.permute.xlu0 %2846
  %2848 = vrot.lane.b32.xlu0 %v2453, 8
  %v2849 = vpop.permute.xlu0 %2848
  %2850 = vrot.lane.b32.xlu0 %v2454, 8
  %v2851 = vpop.permute.xlu0 %2850
  %2852 = vrot.lane.b32.xlu0 %v2455, 8
  %v2853 = vpop.permute.xlu0 %2852
  %2854 = vrot.lane.b32.xlu0 %v2456, 8
  %v2855 = vpop.permute.xlu0 %2854
  %2856 = vrot.lane.b32.xlu0 %v2457, 8
  %v2857 = vpop.permute.xlu0 %2856
  %2858 = vrot.lane.b32.xlu0 %v2458, 8
  %v2859 = vpop.permute.xlu0 %2858
  %2860 = vrot.lane.b32.xlu0 %v2459, 8
  %v2861 = vpop.permute.xlu0 %2860
  %2862 = vrot.lane.b32.xlu0 %v2460, 8
  %v2863 = vpop.permute.xlu0 %2862
  %2864 = vrot.lane.b32.xlu0 %v2461, 8
  %v2865 = vpop.permute.xlu0 %2864
  %2866 = vrot.lane.b32.xlu0 %v2462, 8
  %v2867 = vpop.permute.xlu0 %2866
  %2868 = vrot.lane.b32.xlu0 %v2463, 8
  %v2869 = vpop.permute.xlu0 %2868
  %2870 = vrot.lane.b32.xlu0 %v2464, 8
  %v2871 = vpop.permute.xlu0 %2870
  %2872 = vrot.lane.b32.xlu0 %v2465, 8
  %v2873 = vpop.permute.xlu0 %2872
  %2874 = vrot.lane.b32.xlu0 %v2466, 8
  %v2875 = vpop.permute.xlu0 %2874
  %2876 = vrot.lane.b32.xlu0 %v2467, 8
  %v2877 = vpop.permute.xlu0 %2876
  %2878 = vrot.lane.b32.xlu0 %v2468, 8
  %v2879 = vpop.permute.xlu0 %2878
  %2880 = vrot.lane.b32.xlu0 %v2469, 8
  %v2881 = vpop.permute.xlu0 %2880
  %2882 = vrot.lane.b32.xlu0 %v2470, 8
  %v2883 = vpop.permute.xlu0 %2882
  %2884 = vrot.lane.b32.xlu0 %v2471, 8
  %v2885 = vpop.permute.xlu0 %2884
  %2886 = vrot.lane.b32.xlu0 %v2472, 8
  %v2887 = vpop.permute.xlu0 %2886
  %2888 = vrot.lane.b32.xlu0 %v2473, 8
  %v2889 = vpop.permute.xlu0 %2888
  %2890 = vrot.lane.b32.xlu0 %v2474, 8
  %v2891 = vpop.permute.xlu0 %2890
  %2892 = vrot.lane.b32.xlu0 %v2475, 8
  %v2893 = vpop.permute.xlu0 %2892
  %2894 = vrot.lane.b32.xlu0 %v2476, 8
  %v2895 = vpop.permute.xlu0 %2894
  %2896 = vrot.lane.b32.xlu0 %v2477, 8
  %v2897 = vpop.permute.xlu0 %2896
  %2898 = vrot.lane.b32.xlu0 %v2478, 8
  %v2899 = vpop.permute.xlu0 %2898
  %2900 = vrot.lane.b32.xlu0 %v2479, 8
  %v2901 = vpop.permute.xlu0 %2900
  %2966 = vrot.lane.b32.xlu0 %v2483, 12
  %v2967 = vpop.permute.xlu0 %2966
  %2968 = vrot.lane.b32.xlu0 %v2484, 12
  %v2969 = vpop.permute.xlu0 %2968
  %2970 = vrot.lane.b32.xlu0 %v2485, 12
  %v2971 = vpop.permute.xlu0 %2970
  %2972 = vrot.lane.b32.xlu0 %v2486, 12
  %v2973 = vpop.permute.xlu0 %2972
  %2974 = vrot.lane.b32.xlu0 %v2487, 12
  %v2975 = vpop.permute.xlu0 %2974
  %2976 = vrot.lane.b32.xlu0 %v2488, 12
  %v2977 = vpop.permute.xlu0 %2976
  %2978 = vrot.lane.b32.xlu0 %v2489, 12
  %v2979 = vpop.permute.xlu0 %2978
  %2980 = vrot.lane.b32.xlu0 %v2490, 12
  %v2981 = vpop.permute.xlu0 %2980
  %2982 = vrot.lane.b32.xlu0 %v2491, 12
  %v2983 = vpop.permute.xlu0 %2982
  %2984 = vrot.lane.b32.xlu0 %v2492, 12
  %v2985 = vpop.permute.xlu0 %2984
  %2986 = vrot.lane.b32.xlu0 %v2493, 12
  %v2987 = vpop.permute.xlu0 %2986
  %2988 = vrot.lane.b32.xlu0 %v2494, 12
  %v2989 = vpop.permute.xlu0 %2988
  %2990 = vrot.lane.b32.xlu0 %v2495, 12
  %v2991 = vpop.permute.xlu0 %2990
  %2992 = vrot.lane.b32.xlu0 %v2496, 12
  %v2993 = vpop.permute.xlu0 %2992
  %2994 = vrot.lane.b32.xlu0 %v2497, 12
  %v2995 = vpop.permute.xlu0 %2994
  %2996 = vrot.lane.b32.xlu0 %v2498, 12
  %v2997 = vpop.permute.xlu0 %2996
  %2998 = vrot.lane.b32.xlu0 %v2499, 12
  %v2999 = vpop.permute.xlu0 %2998
  %3000 = vrot.lane.b32.xlu0 %v2500, 12
  %v3001 = vpop.permute.xlu0 %3000
  %3002 = vrot.lane.b32.xlu0 %v2501, 12
  %v3003 = vpop.permute.xlu0 %3002
  %3004 = vrot.lane.b32.xlu0 %v2502, 12
  %v3005 = vpop.permute.xlu0 %3004
  %3006 = vrot.lane.b32.xlu0 %v2503, 12
  %v3007 = vpop.permute.xlu0 %3006
  %3008 = vrot.lane.b32.xlu0 %v2504, 12
  %v3009 = vpop.permute.xlu0 %3008
  %3010 = vrot.lane.b32.xlu0 %v2505, 12
  %v3011 = vpop.permute.xlu0 %3010
  %3012 = vrot.lane.b32.xlu0 %v2506, 12
  %v3013 = vpop.permute.xlu0 %3012
  %3014 = vrot.lane.b32.xlu0 %v2507, 12
  %v3015 = vpop.permute.xlu0 %3014
  %3016 = vrot.lane.b32.xlu0 %v2508, 12
  %v3017 = vpop.permute.xlu0 %3016
  %3018 = vrot.lane.b32.xlu0 %v2509, 12
  %v3019 = vpop.permute.xlu0 %3018
  %3020 = vrot.lane.b32.xlu0 %v2510, 12
  %v3021 = vpop.permute.xlu0 %3020
  %3022 = vrot.lane.b32.xlu0 %v2511, 12
  %v3023 = vpop.permute.xlu0 %3022
  %3024 = vrot.lane.b32.xlu0 %v2512, 12
  %v3025 = vpop.permute.xlu0 %3024
  %3026 = vrot.lane.b32.xlu0 %v2513, 12
  %v3027 = vpop.permute.xlu0 %3026
  %3028 = vrot.lane.b32.xlu0 %v2514, 12
  %v3029 = vpop.permute.xlu0 %3028
  %3094 = vrot.lane.b32.xlu0 %v2515, 16
  %v3095 = vpop.permute.xlu0 %3094
  %3096 = vrot.lane.b32.xlu0 %v2516, 16
  %v3097 = vpop.permute.xlu0 %3096
  %3098 = vrot.lane.b32.xlu0 %v2517, 16
  %v3099 = vpop.permute.xlu0 %3098
  %3100 = vrot.lane.b32.xlu0 %v2518, 16
  %v3101 = vpop.permute.xlu0 %3100
  %3102 = vrot.lane.b32.xlu0 %v2519, 16
  %v3103 = vpop.permute.xlu0 %3102
  %3104 = vrot.lane.b32.xlu0 %v2520, 16
  %v3105 = vpop.permute.xlu0 %3104
  %3106 = vrot.lane.b32.xlu0 %v2521, 16
  %v3107 = vpop.permute.xlu0 %3106
  %3108 = vrot.lane.b32.xlu0 %v2522, 16
  %v3109 = vpop.permute.xlu0 %3108
  %3110 = vrot.lane.b32.xlu0 %v2523, 16
  %v3111 = vpop.permute.xlu0 %3110
  %3112 = vrot.lane.b32.xlu0 %v2524, 16
  %v3113 = vpop.permute.xlu0 %3112
  %3114 = vrot.lane.b32.xlu0 %v2525, 16
  %v3115 = vpop.permute.xlu0 %3114
  %3116 = vrot.lane.b32.xlu0 %v2526, 16
  %v3117 = vpop.permute.xlu0 %3116
  %3118 = vrot.lane.b32.xlu0 %v2527, 16
  %v3119 = vpop.permute.xlu0 %3118
  %3120 = vrot.lane.b32.xlu0 %v2528, 16
  %v3121 = vpop.permute.xlu0 %3120
  %3122 = vrot.lane.b32.xlu0 %v2529, 16
  %v3123 = vpop.permute.xlu0 %3122
  %3124 = vrot.lane.b32.xlu0 %v2530, 16
  %v3125 = vpop.permute.xlu0 %3124
  %3126 = vrot.lane.b32.xlu0 %v2531, 16
  %v3127 = vpop.permute.xlu0 %3126
  %3128 = vrot.lane.b32.xlu0 %v2532, 16
  %v3129 = vpop.permute.xlu0 %3128
  %3130 = vrot.lane.b32.xlu0 %v2533, 16
  %v3131 = vpop.permute.xlu0 %3130
  %3132 = vrot.lane.b32.xlu0 %v2534, 16
  %v3133 = vpop.permute.xlu0 %3132
  %3134 = vrot.lane.b32.xlu0 %v2535, 16
  %v3135 = vpop.permute.xlu0 %3134
  %3136 = vrot.lane.b32.xlu0 %v2536, 16
  %v3137 = vpop.permute.xlu0 %3136
  %3138 = vrot.lane.b32.xlu0 %v2537, 16
  %v3139 = vpop.permute.xlu0 %3138
  %3140 = vrot.lane.b32.xlu0 %v2538, 16
  %v3141 = vpop.permute.xlu0 %3140
  %3142 = vrot.lane.b32.xlu0 %v2539, 16
  %v3143 = vpop.permute.xlu0 %3142
  %3144 = vrot.lane.b32.xlu0 %v2540, 16
  %v3145 = vpop.permute.xlu0 %3144
  %3146 = vrot.lane.b32.xlu0 %v2541, 16
  %v3147 = vpop.permute.xlu0 %3146
  %3148 = vrot.lane.b32.xlu0 %v2542, 16
  %v3149 = vpop.permute.xlu0 %3148
  %3150 = vrot.lane.b32.xlu0 %v2543, 16
  %v3151 = vpop.permute.xlu0 %3150
  %3152 = vrot.lane.b32.xlu0 %v2544, 16
  %v3153 = vpop.permute.xlu0 %3152
  %3154 = vrot.lane.b32.xlu0 %v2545, 16
  %v3155 = vpop.permute.xlu0 %3154
  %3156 = vrot.lane.b32.xlu0 %v2546, 16
  %v3157 = vpop.permute.xlu0 %3156
  %3222 = vrot.lane.b32.xlu0 %v2547, 20
  %v3223 = vpop.permute.xlu0 %3222
  %3224 = vrot.lane.b32.xlu0 %v2548, 20
  %v3225 = vpop.permute.xlu0 %3224
  %3226 = vrot.lane.b32.xlu0 %v2549, 20
  %v3227 = vpop.permute.xlu0 %3226
  %3228 = vrot.lane.b32.xlu0 %v2550, 20
  %v3229 = vpop.permute.xlu0 %3228
  %3230 = vrot.lane.b32.xlu0 %v2551, 20
  %v3231 = vpop.permute.xlu0 %3230
  %3232 = vrot.lane.b32.xlu0 %v2552, 20
  %v3233 = vpop.permute.xlu0 %3232
  %3234 = vrot.lane.b32.xlu0 %v2553, 20
  %v3235 = vpop.permute.xlu0 %3234
  %3236 = vrot.lane.b32.xlu0 %v2554, 20
  %v3237 = vpop.permute.xlu0 %3236
  %3238 = vrot.lane.b32.xlu0 %v2555, 20
  %v3239 = vpop.permute.xlu0 %3238
  %3240 = vrot.lane.b32.xlu0 %v2556, 20
  %v3241 = vpop.permute.xlu0 %3240
  %3242 = vrot.lane.b32.xlu0 %v2557, 20
  %v3243 = vpop.permute.xlu0 %3242
  %3244 = vrot.lane.b32.xlu0 %v2558, 20
  %v3245 = vpop.permute.xlu0 %3244
  %3246 = vrot.lane.b32.xlu0 %v2559, 20
  %v3247 = vpop.permute.xlu0 %3246
  %3248 = vrot.lane.b32.xlu0 %v2560, 20
  %v3249 = vpop.permute.xlu0 %3248
  %3250 = vrot.lane.b32.xlu0 %v2561, 20
  %v3251 = vpop.permute.xlu0 %3250
  %3252 = vrot.lane.b32.xlu0 %v2562, 20
  %v3253 = vpop.permute.xlu0 %3252
  %3254 = vrot.lane.b32.xlu0 %v2563, 20
  %v3255 = vpop.permute.xlu0 %3254
  %3256 = vrot.lane.b32.xlu0 %v2564, 20
  %v3257 = vpop.permute.xlu0 %3256
  %3258 = vrot.lane.b32.xlu0 %v2565, 20
  %v3259 = vpop.permute.xlu0 %3258
  %3260 = vrot.lane.b32.xlu0 %v2566, 20
  %v3261 = vpop.permute.xlu0 %3260
  %3262 = vrot.lane.b32.xlu0 %v2567, 20
  %v3263 = vpop.permute.xlu0 %3262
  %3264 = vrot.lane.b32.xlu0 %v2568, 20
  %v3265 = vpop.permute.xlu0 %3264
  %3266 = vrot.lane.b32.xlu0 %v2569, 20
  %v3267 = vpop.permute.xlu0 %3266
  %3268 = vrot.lane.b32.xlu0 %v2570, 20
  %v3269 = vpop.permute.xlu0 %3268
  %3270 = vrot.lane.b32.xlu0 %v2571, 20
  %v3271 = vpop.permute.xlu0 %3270
  %3272 = vrot.lane.b32.xlu0 %v2572, 20
  %v3273 = vpop.permute.xlu0 %3272
  %3274 = vrot.lane.b32.xlu0 %v2573, 20
  %v3275 = vpop.permute.xlu0 %3274
  %3276 = vrot.lane.b32.xlu0 %v2574, 20
  %v3277 = vpop.permute.xlu0 %3276
  %3278 = vrot.lane.b32.xlu0 %v2575, 20
  %v3279 = vpop.permute.xlu0 %3278
  %3280 = vrot.lane.b32.xlu0 %v2576, 20
  %v3281 = vpop.permute.xlu0 %3280
  %3282 = vrot.lane.b32.xlu0 %v2577, 20
  %v3283 = vpop.permute.xlu0 %3282
  %3284 = vrot.lane.b32.xlu0 %v2578, 20
  %v3285 = vpop.permute.xlu0 %3284
  %3350 = vrot.lane.b32.xlu0 %v2582, 24
  %v3351 = vpop.permute.xlu0 %3350
  %3352 = vrot.lane.b32.xlu0 %v2583, 24
  %v3353 = vpop.permute.xlu0 %3352
  %3354 = vrot.lane.b32.xlu0 %v2584, 24
  %v3355 = vpop.permute.xlu0 %3354
  %3356 = vrot.lane.b32.xlu0 %v2585, 24
  %v3357 = vpop.permute.xlu0 %3356
  %3358 = vrot.lane.b32.xlu0 %v2586, 24
  %v3359 = vpop.permute.xlu0 %3358
  %3360 = vrot.lane.b32.xlu0 %v2587, 24
  %v3361 = vpop.permute.xlu0 %3360
  %3362 = vrot.lane.b32.xlu0 %v2588, 24
  %v3363 = vpop.permute.xlu0 %3362
  %3364 = vrot.lane.b32.xlu0 %v2589, 24
  %v3365 = vpop.permute.xlu0 %3364
  %3366 = vrot.lane.b32.xlu0 %v2590, 24
  %v3367 = vpop.permute.xlu0 %3366
  %3368 = vrot.lane.b32.xlu0 %v2591, 24
  %v3369 = vpop.permute.xlu0 %3368
  %3370 = vrot.lane.b32.xlu0 %v2592, 24
  %v3371 = vpop.permute.xlu0 %3370
  %3372 = vrot.lane.b32.xlu0 %v2593, 24
  %v3373 = vpop.permute.xlu0 %3372
  %3374 = vrot.lane.b32.xlu0 %v2594, 24
  %v3375 = vpop.permute.xlu0 %3374
  %3376 = vrot.lane.b32.xlu0 %v2595, 24
  %v3377 = vpop.permute.xlu0 %3376
  %3378 = vrot.lane.b32.xlu0 %v2596, 24
  %v3379 = vpop.permute.xlu0 %3378
  %3380 = vrot.lane.b32.xlu0 %v2597, 24
  %v3381 = vpop.permute.xlu0 %3380
  %3382 = vrot.lane.b32.xlu0 %v2598, 24
  %v3383 = vpop.permute.xlu0 %3382
  %3384 = vrot.lane.b32.xlu0 %v2599, 24
  %v3385 = vpop.permute.xlu0 %3384
  %3386 = vrot.lane.b32.xlu0 %v2600, 24
  %v3387 = vpop.permute.xlu0 %3386
  %3388 = vrot.lane.b32.xlu0 %v2601, 24
  %v3389 = vpop.permute.xlu0 %3388
  %3390 = vrot.lane.b32.xlu0 %v2602, 24
  %v3391 = vpop.permute.xlu0 %3390
  %3392 = vrot.lane.b32.xlu0 %v2603, 24
  %v3393 = vpop.permute.xlu0 %3392
  %3394 = vrot.lane.b32.xlu0 %v2604, 24
  %v3395 = vpop.permute.xlu0 %3394
  %3396 = vrot.lane.b32.xlu0 %v2605, 24
  %v3397 = vpop.permute.xlu0 %3396
  %3398 = vrot.lane.b32.xlu0 %v2606, 24
  %v3399 = vpop.permute.xlu0 %3398
  %3400 = vrot.lane.b32.xlu0 %v2607, 24
  %v3401 = vpop.permute.xlu0 %3400
  %3402 = vrot.lane.b32.xlu0 %v2608, 24
  %v3403 = vpop.permute.xlu0 %3402
  %3404 = vrot.lane.b32.xlu0 %v2609, 24
  %v3405 = vpop.permute.xlu0 %3404
  %3406 = vrot.lane.b32.xlu0 %v2610, 24
  %v3407 = vpop.permute.xlu0 %3406
  %3408 = vrot.lane.b32.xlu0 %v2611, 24
  %v3409 = vpop.permute.xlu0 %3408
  %3410 = vrot.lane.b32.xlu0 %v2612, 24
  %v3411 = vpop.permute.xlu0 %3410
  %3412 = vrot.lane.b32.xlu0 %v2613, 24
  %v3413 = vpop.permute.xlu0 %3412
  %3478 = vrot.lane.b32.xlu0 %v2614, 28
  %v3479 = vpop.permute.xlu0 %3478
  %3480 = vrot.lane.b32.xlu0 %v2615, 28
  %v3481 = vpop.permute.xlu0 %3480
  %3482 = vrot.lane.b32.xlu0 %v2616, 28
  %v3483 = vpop.permute.xlu0 %3482
  %3484 = vrot.lane.b32.xlu0 %v2617, 28
  %v3485 = vpop.permute.xlu0 %3484
  %3486 = vrot.lane.b32.xlu0 %v2618, 28
  %v3487 = vpop.permute.xlu0 %3486
  %3488 = vrot.lane.b32.xlu0 %v2619, 28
  %v3489 = vpop.permute.xlu0 %3488
  %3490 = vrot.lane.b32.xlu0 %v2620, 28
  %v3491 = vpop.permute.xlu0 %3490
  %3492 = vrot.lane.b32.xlu0 %v2621, 28
  %v3493 = vpop.permute.xlu0 %3492
  %3494 = vrot.lane.b32.xlu0 %v2622, 28
  %v3495 = vpop.permute.xlu0 %3494
  %3496 = vrot.lane.b32.xlu0 %v2623, 28
  %v3497 = vpop.permute.xlu0 %3496
  %3498 = vrot.lane.b32.xlu0 %v2624, 28
  %v3499 = vpop.permute.xlu0 %3498
  %3500 = vrot.lane.b32.xlu0 %v2625, 28
  %v3501 = vpop.permute.xlu0 %3500
  %3502 = vrot.lane.b32.xlu0 %v2626, 28
  %v3503 = vpop.permute.xlu0 %3502
  %3504 = vrot.lane.b32.xlu0 %v2627, 28
  %v3505 = vpop.permute.xlu0 %3504
  %3506 = vrot.lane.b32.xlu0 %v2628, 28
  %v3507 = vpop.permute.xlu0 %3506
  %3508 = vrot.lane.b32.xlu0 %v2629, 28
  %v3509 = vpop.permute.xlu0 %3508
  %3510 = vrot.lane.b32.xlu0 %v2630, 28
  %v3511 = vpop.permute.xlu0 %3510
  %3512 = vrot.lane.b32.xlu0 %v2631, 28
  %v3513 = vpop.permute.xlu0 %3512
  %3514 = vrot.lane.b32.xlu0 %v2632, 28
  %v3515 = vpop.permute.xlu0 %3514
  %3516 = vrot.lane.b32.xlu0 %v2633, 28
  %v3517 = vpop.permute.xlu0 %3516
  %3518 = vrot.lane.b32.xlu0 %v2634, 28
  %v3519 = vpop.permute.xlu0 %3518
  %3520 = vrot.lane.b32.xlu0 %v2635, 28
  %v3521 = vpop.permute.xlu0 %3520
  %3522 = vrot.lane.b32.xlu0 %v2636, 28
  %v3523 = vpop.permute.xlu0 %3522
  %3524 = vrot.lane.b32.xlu0 %v2637, 28
  %v3525 = vpop.permute.xlu0 %3524
  %3526 = vrot.lane.b32.xlu0 %v2638, 28
  %v3527 = vpop.permute.xlu0 %3526
  %3528 = vrot.lane.b32.xlu0 %v2639, 28
  %v3529 = vpop.permute.xlu0 %3528
  %3530 = vrot.lane.b32.xlu0 %v2640, 28
  %v3531 = vpop.permute.xlu0 %3530
  %3532 = vrot.lane.b32.xlu0 %v2641, 28
  %v3533 = vpop.permute.xlu0 %3532
  %3534 = vrot.lane.b32.xlu0 %v2642, 28
  %v3535 = vpop.permute.xlu0 %3534
  %3536 = vrot.lane.b32.xlu0 %v2643, 28
  %v3537 = vpop.permute.xlu0 %3536
  %3538 = vrot.lane.b32.xlu0 %v2644, 28
  %v3539 = vpop.permute.xlu0 %3538
  %3540 = vrot.lane.b32.xlu0 %v2645, 28
  %v3541 = vpop.permute.xlu0 %3540
  %3606 = vrot.lane.b32.xlu0 %v2646, 32
  %v3607 = vpop.permute.xlu0 %3606
  %3608 = vrot.lane.b32.xlu0 %v2647, 32
  %v3609 = vpop.permute.xlu0 %3608
  %3610 = vrot.lane.b32.xlu0 %v2648, 32
  %v3611 = vpop.permute.xlu0 %3610
  %3612 = vrot.lane.b32.xlu0 %v2649, 32
  %v3613 = vpop.permute.xlu0 %3612
  %3614 = vrot.lane.b32.xlu0 %v2650, 32
  %v3615 = vpop.permute.xlu0 %3614
  %3616 = vrot.lane.b32.xlu0 %v2651, 32
  %v3617 = vpop.permute.xlu0 %3616
  %3618 = vrot.lane.b32.xlu0 %v2652, 32
  %v3619 = vpop.permute.xlu0 %3618
  %3620 = vrot.lane.b32.xlu0 %v2653, 32
  %v3621 = vpop.permute.xlu0 %3620
  %3622 = vrot.lane.b32.xlu0 %v2654, 32
  %v3623 = vpop.permute.xlu0 %3622
  %3624 = vrot.lane.b32.xlu0 %v2655, 32
  %v3625 = vpop.permute.xlu0 %3624
  %3626 = vrot.lane.b32.xlu0 %v2656, 32
  %v3627 = vpop.permute.xlu0 %3626
  %3628 = vrot.lane.b32.xlu0 %v2657, 32
  %v3629 = vpop.permute.xlu0 %3628
  %3630 = vrot.lane.b32.xlu0 %v2658, 32
  %v3631 = vpop.permute.xlu0 %3630
  %3632 = vrot.lane.b32.xlu0 %v2659, 32
  %v3633 = vpop.permute.xlu0 %3632
  %3634 = vrot.lane.b32.xlu0 %v2660, 32
  %v3635 = vpop.permute.xlu0 %3634
  %3636 = vrot.lane.b32.xlu0 %v2661, 32
  %v3637 = vpop.permute.xlu0 %3636
  %3638 = vrot.lane.b32.xlu0 %v2662, 32
  %v3639 = vpop.permute.xlu0 %3638
  %3640 = vrot.lane.b32.xlu0 %v2663, 32
  %v3641 = vpop.permute.xlu0 %3640
  %3642 = vrot.lane.b32.xlu0 %v2664, 32
  %v3643 = vpop.permute.xlu0 %3642
  %3644 = vrot.lane.b32.xlu0 %v2665, 32
  %v3645 = vpop.permute.xlu0 %3644
  %3646 = vrot.lane.b32.xlu0 %v2666, 32
  %v3647 = vpop.permute.xlu0 %3646
  %3648 = vrot.lane.b32.xlu0 %v2667, 32
  %v3649 = vpop.permute.xlu0 %3648
  %3650 = vrot.lane.b32.xlu0 %v2668, 32
  %v3651 = vpop.permute.xlu0 %3650
  %3652 = vrot.lane.b32.xlu0 %v2669, 32
  %v3653 = vpop.permute.xlu0 %3652
  %3654 = vrot.lane.b32.xlu0 %v2670, 32
  %v3655 = vpop.permute.xlu0 %3654
  %3656 = vrot.lane.b32.xlu0 %v2671, 32
  %v3657 = vpop.permute.xlu0 %3656
  %3658 = vrot.lane.b32.xlu0 %v2672, 32
  %v3659 = vpop.permute.xlu0 %3658
  %3660 = vrot.lane.b32.xlu0 %v2673, 32
  %v3661 = vpop.permute.xlu0 %3660
  %3662 = vrot.lane.b32.xlu0 %v2674, 32
  %v3663 = vpop.permute.xlu0 %3662
  %3664 = vrot.lane.b32.xlu0 %v2675, 32
  %v3665 = vpop.permute.xlu0 %3664
  %3666 = vrot.lane.b32.xlu0 %v2676, 32
  %v3667 = vpop.permute.xlu0 %3666
  %3668 = vrot.lane.b32.xlu0 %v2677, 32
  %v3669 = vpop.permute.xlu0 %3668
  %v3702 = vsel %vm26, %v2384, %v2711
  %v3703 = vsel %vm26, %v2385, %v2713
  %v3704 = vsel %vm26, %v2386, %v2715
  %v3705 = vsel %vm26, %v2387, %v2717
  %v3706 = vsel %vm26, %v2388, %v2719
  %v3707 = vsel %vm26, %v2389, %v2721
  %v3708 = vsel %vm26, %v2390, %v2723
  %v3709 = vsel %vm26, %v2391, %v2725
  %v3710 = vsel %vm26, %v2392, %v2727
  %v3711 = vsel %vm26, %v2393, %v2729
  %v3712 = vsel %vm26, %v2394, %v2731
  %v3713 = vsel %vm26, %v2395, %v2733
  %v3714 = vsel %vm26, %v2396, %v2735
  %v3715 = vsel %vm26, %v2397, %v2737
  %v3716 = vsel %vm26, %v2398, %v2739
  %v3717 = vsel %vm26, %v2399, %v2741
  %v3718 = vsel %vm26, %v2400, %v2743
  %v3719 = vsel %vm26, %v2401, %v2745
  %v3720 = vsel %vm26, %v2402, %v2747
  %v3721 = vsel %vm26, %v2403, %v2749
  %v3722 = vsel %vm26, %v2404, %v2751
  %v3723 = vsel %vm26, %v2405, %v2753
  %v3724 = vsel %vm26, %v2406, %v2755
  %v3725 = vsel %vm26, %v2407, %v2757
  %v3726 = vsel %vm26, %v2408, %v2759
  %v3727 = vsel %vm26, %v2409, %v2761
  %v3728 = vsel %vm26, %v2410, %v2763
  %v3729 = vsel %vm26, %v2411, %v2765
  %v3730 = vsel %vm26, %v2412, %v2767
  %v3731 = vsel %vm26, %v2413, %v2769
  %v3732 = vsel %vm26, %v2414, %v2771
  %v3733 = vsel %vm26, %v2415, %v2773
  %v3734 = vsel %vm1684, %v3702, %v2839
  %v3735 = vsel %vm1684, %v3703, %v2841
  %v3736 = vsel %vm1684, %v3704, %v2843
  %v3737 = vsel %vm1684, %v3705, %v2845
  %v3738 = vsel %vm1684, %v3706, %v2847
  %v3739 = vsel %vm1684, %v3707, %v2849
  %v3740 = vsel %vm1684, %v3708, %v2851
  %v3741 = vsel %vm1684, %v3709, %v2853
  %v3742 = vsel %vm1684, %v3710, %v2855
  %v3743 = vsel %vm1684, %v3711, %v2857
  %v3744 = vsel %vm1684, %v3712, %v2859
  %v3745 = vsel %vm1684, %v3713, %v2861
  %v3746 = vsel %vm1684, %v3714, %v2863
  %v3747 = vsel %vm1684, %v3715, %v2865
  %v3748 = vsel %vm1684, %v3716, %v2867
  %v3749 = vsel %vm1684, %v3717, %v2869
  %v3750 = vsel %vm1684, %v3718, %v2871
  %v3751 = vsel %vm1684, %v3719, %v2873
  %v3752 = vsel %vm1684, %v3720, %v2875
  %v3753 = vsel %vm1684, %v3721, %v2877
  %v3754 = vsel %vm1684, %v3722, %v2879
  %v3755 = vsel %vm1684, %v3723, %v2881
  %v3756 = vsel %vm1684, %v3724, %v2883
  %v3757 = vsel %vm1684, %v3725, %v2885
  %v3758 = vsel %vm1684, %v3726, %v2887
  %v3759 = vsel %vm1684, %v3727, %v2889
  %v3760 = vsel %vm1684, %v3728, %v2891
  %v3761 = vsel %vm1684, %v3729, %v2893
  %v3762 = vsel %vm1684, %v3730, %v2895
  %v3763 = vsel %vm1684, %v3731, %v2897
  %v3764 = vsel %vm1684, %v3732, %v2899
  %v3765 = vsel %vm1684, %v3733, %v2901
  %v3766 = vsel %vm1717, %v3734, %v2967
  %v3767 = vsel %vm1717, %v3735, %v2969
  %v3768 = vsel %vm1717, %v3736, %v2971
  %v3769 = vsel %vm1717, %v3737, %v2973
  %v3770 = vsel %vm1717, %v3738, %v2975
  %v3771 = vsel %vm1717, %v3739, %v2977
  %v3772 = vsel %vm1717, %v3740, %v2979
  %v3773 = vsel %vm1717, %v3741, %v2981
  %v3774 = vsel %vm1717, %v3742, %v2983
  %v3775 = vsel %vm1717, %v3743, %v2985
  %v3776 = vsel %vm1717, %v3744, %v2987
  %v3777 = vsel %vm1717, %v3745, %v2989
  %v3778 = vsel %vm1717, %v3746, %v2991
  %v3779 = vsel %vm1717, %v3747, %v2993
  %v3780 = vsel %vm1717, %v3748, %v2995
  %v3781 = vsel %vm1717, %v3749, %v2997
  %v3782 = vsel %vm1717, %v3750, %v2999
  %v3783 = vsel %vm1717, %v3751, %v3001
  %v3784 = vsel %vm1717, %v3752, %v3003
  %v3785 = vsel %vm1717, %v3753, %v3005
  %v3786 = vsel %vm1717, %v3754, %v3007
  %v3787 = vsel %vm1717, %v3755, %v3009
  %v3788 = vsel %vm1717, %v3756, %v3011
  %v3789 = vsel %vm1717, %v3757, %v3013
  %v3790 = vsel %vm1717, %v3758, %v3015
  %v3791 = vsel %vm1717, %v3759, %v3017
  %v3792 = vsel %vm1717, %v3760, %v3019
  %v3793 = vsel %vm1717, %v3761, %v3021
  %v3794 = vsel %vm1717, %v3762, %v3023
  %v3795 = vsel %vm1717, %v3763, %v3025
  %v3796 = vsel %vm1717, %v3764, %v3027
  %v3797 = vsel %vm1717, %v3765, %v3029
  %v3798 = vsel %vm1750, %v3766, %v3095
  %v3799 = vsel %vm1750, %v3767, %v3097
  %v3800 = vsel %vm1750, %v3768, %v3099
  %v3801 = vsel %vm1750, %v3769, %v3101
  %v3802 = vsel %vm1750, %v3770, %v3103
  %v3803 = vsel %vm1750, %v3771, %v3105
  %v3804 = vsel %vm1750, %v3772, %v3107
  %v3805 = vsel %vm1750, %v3773, %v3109
  %v3806 = vsel %vm1750, %v3774, %v3111
  %v3807 = vsel %vm1750, %v3775, %v3113
  %v3808 = vsel %vm1750, %v3776, %v3115
  %v3809 = vsel %vm1750, %v3777, %v3117
  %v3810 = vsel %vm1750, %v3778, %v3119
  %v3811 = vsel %vm1750, %v3779, %v3121
  %v3812 = vsel %vm1750, %v3780, %v3123
  %v3813 = vsel %vm1750, %v3781, %v3125
  %v3814 = vsel %vm1750, %v3782, %v3127
  %v3815 = vsel %vm1750, %v3783, %v3129
  %v3816 = vsel %vm1750, %v3784, %v3131
  %v3817 = vsel %vm1750, %v3785, %v3133
  %v3818 = vsel %vm1750, %v3786, %v3135
  %v3819 = vsel %vm1750, %v3787, %v3137
  %v3820 = vsel %vm1750, %v3788, %v3139
  %v3821 = vsel %vm1750, %v3789, %v3141
  %v3822 = vsel %vm1750, %v3790, %v3143
  %v3823 = vsel %vm1750, %v3791, %v3145
  %v3824 = vsel %vm1750, %v3792, %v3147
  %v3825 = vsel %vm1750, %v3793, %v3149
  %v3826 = vsel %vm1750, %v3794, %v3151
  %v3827 = vsel %vm1750, %v3795, %v3153
  %v3828 = vsel %vm1750, %v3796, %v3155
  %v3829 = vsel %vm1750, %v3797, %v3157
  %v3830 = vsel %vm1783, %v3798, %v3223
  %v3831 = vsel %vm1783, %v3799, %v3225
  %v3832 = vsel %vm1783, %v3800, %v3227
  %v3833 = vsel %vm1783, %v3801, %v3229
  %v3834 = vsel %vm1783, %v3802, %v3231
  %v3835 = vsel %vm1783, %v3803, %v3233
  %v3836 = vsel %vm1783, %v3804, %v3235
  %v3837 = vsel %vm1783, %v3805, %v3237
  %v3838 = vsel %vm1783, %v3806, %v3239
  %v3839 = vsel %vm1783, %v3807, %v3241
  %v3840 = vsel %vm1783, %v3808, %v3243
  %v3841 = vsel %vm1783, %v3809, %v3245
  %v3842 = vsel %vm1783, %v3810, %v3247
  %v3843 = vsel %vm1783, %v3811, %v3249
  %v3844 = vsel %vm1783, %v3812, %v3251
  %v3845 = vsel %vm1783, %v3813, %v3253
  %v3846 = vsel %vm1783, %v3814, %v3255
  %v3847 = vsel %vm1783, %v3815, %v3257
  %v3848 = vsel %vm1783, %v3816, %v3259
  %v3849 = vsel %vm1783, %v3817, %v3261
  %v3850 = vsel %vm1783, %v3818, %v3263
  %v3851 = vsel %vm1783, %v3819, %v3265
  %v3852 = vsel %vm1783, %v3820, %v3267
  %v3853 = vsel %vm1783, %v3821, %v3269
  %v3854 = vsel %vm1783, %v3822, %v3271
  %v3855 = vsel %vm1783, %v3823, %v3273
  %v3856 = vsel %vm1783, %v3824, %v3275
  %v3857 = vsel %vm1783, %v3825, %v3277
  %v3858 = vsel %vm1783, %v3826, %v3279
  %v3859 = vsel %vm1783, %v3827, %v3281
  %v3860 = vsel %vm1783, %v3828, %v3283
  %v3861 = vsel %vm1783, %v3829, %v3285
  %v3862 = vsel %vm1816, %v3830, %v3351
  %v3863 = vsel %vm1816, %v3831, %v3353
  %v3864 = vsel %vm1816, %v3832, %v3355
  %v3865 = vsel %vm1816, %v3833, %v3357
  %v3866 = vsel %vm1816, %v3834, %v3359
  %v3867 = vsel %vm1816, %v3835, %v3361
  %v3868 = vsel %vm1816, %v3836, %v3363
  %v3869 = vsel %vm1816, %v3837, %v3365
  %v3870 = vsel %vm1816, %v3838, %v3367
  %v3871 = vsel %vm1816, %v3839, %v3369
  %v3872 = vsel %vm1816, %v3840, %v3371
  %v3873 = vsel %vm1816, %v3841, %v3373
  %v3874 = vsel %vm1816, %v3842, %v3375
  %v3875 = vsel %vm1816, %v3843, %v3377
  %v3876 = vsel %vm1816, %v3844, %v3379
  %v3877 = vsel %vm1816, %v3845, %v3381
  %v3878 = vsel %vm1816, %v3846, %v3383
  %v3879 = vsel %vm1816, %v3847, %v3385
  %v3880 = vsel %vm1816, %v3848, %v3387
  %v3881 = vsel %vm1816, %v3849, %v3389
  %v3882 = vsel %vm1816, %v3850, %v3391
  %v3883 = vsel %vm1816, %v3851, %v3393
  %v3884 = vsel %vm1816, %v3852, %v3395
  %v3885 = vsel %vm1816, %v3853, %v3397
  %v3886 = vsel %vm1816, %v3854, %v3399
  %v3887 = vsel %vm1816, %v3855, %v3401
  %v3888 = vsel %vm1816, %v3856, %v3403
  %v3889 = vsel %vm1816, %v3857, %v3405
  %v3890 = vsel %vm1816, %v3858, %v3407
  %v3891 = vsel %vm1816, %v3859, %v3409
  %v3892 = vsel %vm1816, %v3860, %v3411
  %v3893 = vsel %vm1816, %v3861, %v3413
  %v3894 = vsel %vm1849, %v3862, %v3479
  %v3895 = vsel %vm1849, %v3863, %v3481
  %v3896 = vsel %vm1849, %v3864, %v3483
  %v3897 = vsel %vm1849, %v3865, %v3485
  %v3898 = vsel %vm1849, %v3866, %v3487
  %v3899 = vsel %vm1849, %v3867, %v3489
  %v3900 = vsel %vm1849, %v3868, %v3491
  %v3901 = vsel %vm1849, %v3869, %v3493
  %v3902 = vsel %vm1849, %v3870, %v3495
  %v3903 = vsel %vm1849, %v3871, %v3497
  %v3904 = vsel %vm1849, %v3872, %v3499
  %v3905 = vsel %vm1849, %v3873, %v3501
  %v3906 = vsel %vm1849, %v3874, %v3503
  %v3907 = vsel %vm1849, %v3875, %v3505
  %v3908 = vsel %vm1849, %v3876, %v3507
  %v3909 = vsel %vm1849, %v3877, %v3509
  %v3910 = vsel %vm1849, %v3878, %v3511
  %v3911 = vsel %vm1849, %v3879, %v3513
  %v3912 = vsel %vm1849, %v3880, %v3515
  %v3913 = vsel %vm1849, %v3881, %v3517
  %v3914 = vsel %vm1849, %v3882, %v3519
  %v3915 = vsel %vm1849, %v3883, %v3521
  %v3916 = vsel %vm1849, %v3884, %v3523
  %v3917 = vsel %vm1849, %v3885, %v3525
  %v3918 = vsel %vm1849, %v3886, %v3527
  %v3919 = vsel %vm1849, %v3887, %v3529
  %v3920 = vsel %vm1849, %v3888, %v3531
  %v3921 = vsel %vm1849, %v3889, %v3533
  %v3922 = vsel %vm1849, %v3890, %v3535
  %v3923 = vsel %vm1849, %v3891, %v3537
  %v3924 = vsel %vm1849, %v3892, %v3539
  %v3925 = vsel %vm1849, %v3893, %v3541
  %v3926 = vsel %vm1882, %v3894, %v3607
  %v3927 = vsel %vm1882, %v3895, %v3609
  %v3928 = vsel %vm1882, %v3896, %v3611
  %v3929 = vsel %vm1882, %v3897, %v3613
  %v3930 = vsel %vm1882, %v3898, %v3615
  %v3931 = vsel %vm1882, %v3899, %v3617
  %v3932 = vsel %vm1882, %v3900, %v3619
  %v3933 = vsel %vm1882, %v3901, %v3621
  %v3934 = vsel %vm1882, %v3902, %v3623
  %v3935 = vsel %vm1882, %v3903, %v3625
  %v3936 = vsel %vm1882, %v3904, %v3627
  %v3937 = vsel %vm1882, %v3905, %v3629
  %v3938 = vsel %vm1882, %v3906, %v3631
  %v3939 = vsel %vm1882, %v3907, %v3633
  %v3940 = vsel %vm1882, %v3908, %v3635
  %v3941 = vsel %vm1882, %v3909, %v3637
  %v3942 = vsel %vm1882, %v3910, %v3639
  %v3943 = vsel %vm1882, %v3911, %v3641
  %v3944 = vsel %vm1882, %v3912, %v3643
  %v3945 = vsel %vm1882, %v3913, %v3645
  %v3946 = vsel %vm1882, %v3914, %v3647
  %v3947 = vsel %vm1882, %v3915, %v3649
  %v3948 = vsel %vm1882, %v3916, %v3651
  %v3949 = vsel %vm1882, %v3917, %v3653
  %v3950 = vsel %vm1882, %v3918, %v3655
  %v3951 = vsel %vm1882, %v3919, %v3657
  %v3952 = vsel %vm1882, %v3920, %v3659
  %v3953 = vsel %vm1882, %v3921, %v3661
  %v3954 = vsel %vm1882, %v3922, %v3663
  %v3955 = vsel %vm1882, %v3923, %v3665
  %v3956 = vsel %vm1882, %v3924, %v3667
  %v3957 = vsel %vm1882, %v3925, %v3669
  %v3959 = vsel %vm1915, %v3926, 0
  %v3962 = vsel %vm1915, %v3927, 0
  %v3965 = vsel %vm1915, %v3928, 0
  %v3968 = vsel %vm1915, %v3929, 0
  %v3971 = vsel %vm1915, %v3930, 0
  %v3974 = vsel %vm1915, %v3931, 0
  %v3977 = vsel %vm1915, %v3932, 0
  %v3980 = vsel %vm1915, %v3933, 0
  %v3983 = vsel %vm1915, %v3934, 0
  %v3986 = vsel %vm1915, %v3935, 0
  %v3989 = vsel %vm1915, %v3936, 0
  %v3992 = vsel %vm1915, %v3937, 0
  %v3995 = vsel %vm1915, %v3938, 0
  %v3998 = vsel %vm1915, %v3939, 0
  %v4001 = vsel %vm1915, %v3940, 0
  %v4004 = vsel %vm1915, %v3941, 0
  %v4007 = vsel %vm1915, %v3942, 0
  %v4010 = vsel %vm1915, %v3943, 0
  %v4013 = vsel %vm1915, %v3944, 0
  %v4016 = vsel %vm1915, %v3945, 0
  %v4019 = vsel %vm1915, %v3946, 0
  %v4022 = vsel %vm1915, %v3947, 0
  %v4025 = vsel %vm1915, %v3948, 0
  %v4028 = vsel %vm1915, %v3949, 0
  %v4031 = vsel %vm1915, %v3950, 0
  %v4034 = vsel %vm1915, %v3951, 0
  %v4037 = vsel %vm1915, %v3952, 0
  %v4040 = vsel %vm1915, %v3953, 0
  %v4043 = vsel %vm1915, %v3954, 0
  %v4046 = vsel %vm1915, %v3955, 0
  %v4049 = vsel %vm1915, %v3956, 0
  %v4052 = vsel %vm1915, %v3957, 0
  %4054 = vmatprep.subr.mxu0 0.0
  %4055 = vmatpush1.msra.mxu0 %v318
  %4056 = vmatprep.subr.mxu0 0.0
  %4057 = vmatpush1.msra.mxu0 %v319
  %4058 = vmatprep.subr.mxu0 0.0
  %4059 = vmatpush1.msra.mxu0 %v320
  %4060 = vmatprep.subr.mxu0 0.0
  %4061 = vmatpush1.msra.mxu0 %v321
  %4062 = vmatprep.subr.mxu0 0.0
  %4063 = vmatpush1.msra.mxu0 %v2014
  %4064 = vmatprep.subr.mxu0 0.0
  %4065 = vmatpush1.msra.mxu0 0.0
  %4066 = vmatprep.subr.mxu0 0.0
  %4067 = vmatpush1.msra.mxu0 0.0
  %4068 = vmatprep.subr.mxu0 0.0
  %4069 = vmatpush1.msra.mxu0 0.0
  %4070 = vmatprep.subr.mxu0 0.0
  %4071 = vmatpush1.msra.mxu0 0.0
  %4072 = vmatprep.subr.mxu0 0.0
  %4073 = vmatpush1.msra.mxu0 0.0
  %4074 = vmatprep.subr.mxu0 0.0
  %4075 = vmatpush1.msra.mxu0 0.0
  %4076 = vmatprep.subr.mxu0 0.0
  %4077 = vmatpush1.msra.mxu0 0.0
  %4078 = vmatprep.subr.mxu0 0.0
  %4079 = vmatpush1.msra.mxu0 0.0
  %4080 = vmatprep.subr.mxu0 0.0
  %4081 = vmatpush1.msra.mxu0 0.0
  %4082 = vmatprep.subr.mxu0 0.0
  %4083 = vmatpush1.msra.mxu0 0.0
  %4084 = vmatprep.subr.mxu0 0.0
  %4085 = vmatpush1.msra.mxu0 0.0
  %4086 = vmatprep.subr.mxu0 0.0
  %4087 = vmatpush1.msra.mxu0 0.0
  %4088 = vmatprep.subr.mxu0 0.0
  %4089 = vmatpush1.msra.mxu0 0.0
  %4090 = vmatprep.subr.mxu0 0.0
  %4091 = vmatpush1.msra.mxu0 0.0
  %4092 = vmatprep.subr.mxu0 0.0
  %4093 = vmatpush1.msra.mxu0 0.0
  %4094 = vmatprep.subr.mxu0 0.0
  %4095 = vmatpush1.msra.mxu0 0.0
  %4096 = vmatprep.subr.mxu0 0.0
  %4097 = vmatpush1.msra.mxu0 0.0
  %4098 = vmatprep.subr.mxu0 0.0
  %4099 = vmatpush1.msra.mxu0 0.0
  %4100 = vmatprep.subr.mxu0 0.0
  %4101 = vmatpush1.msra.mxu0 0.0
  %4102 = vmatprep.subr.mxu0 0.0
  %4103 = vmatpush1.msra.mxu0 0.0
  %4104 = vmatprep.subr.mxu0 0.0
  %4105 = vmatpush1.msra.mxu0 0.0
  %4106 = vmatprep.subr.mxu0 0.0
  %4107 = vmatpush1.msra.mxu0 0.0
  %4108 = vmatprep.subr.mxu0 0.0
  %4109 = vmatpush1.msra.mxu0 0.0
  %4110 = vmatprep.subr.mxu0 0.0
  %4111 = vmatpush1.msra.mxu0 0.0
  %4112 = vmatprep.subr.mxu0 0.0
  %4113 = vmatpush1.msra.mxu0 0.0
  %4114 = vmatprep.subr.mxu0 0.0
  %4115 = vmatpush1.msra.mxu0 0.0
  %4116 = vmatprep.subr.mxu0 0.0
  %4117 = vmatpush1.msra.mxu0 0.0
  %4118 = vmatprep.mubr.f32.mxu0 0.0
  %4119 = vmatmul.mubr.f32.gmra.mrb[0].mxu0 %v3959
  %v4120 = vpop.f32.mrb[0].mxu0
  %v4121 = vadd.f32 0.0, %v4120
  %v4122 = vpop.f32.mrb[0].mxu0
  %4123 = vmatprep.mubr.f32.mxu0 0.0
  %4124 = vmatmul.mubr.f32.gmra.mrb[0].mxu0 %v3962
  %v4125 = vpop.f32.mrb[0].mxu0
  %v4126 = vadd.f32 0.0, %v4125
  %v4127 = vpop.f32.mrb[0].mxu0
  %4128 = vmatprep.mubr.f32.mxu0 0.0
  %4129 = vmatmul.mubr.f32.gmra.mrb[0].mxu0 %v3965
  %v4130 = vpop.f32.mrb[0].mxu0
  %v4131 = vadd.f32 0.0, %v4130
  %v4132 = vpop.f32.mrb[0].mxu0
  %4133 = vmatprep.mubr.f32.mxu0 0.0
  %4134 = vmatmul.mubr.f32.gmra.mrb[0].mxu0 %v3968
  %v4135 = vpop.f32.mrb[0].mxu0
  %v4136 = vadd.f32 0.0, %v4135
  %v4137 = vpop.f32.mrb[0].mxu0
  %4138 = vmatprep.mubr.f32.mxu0 0.0
  %4139 = vmatmul.mubr.f32.gmra.mrb[0].mxu0 %v3971
  %v4140 = vpop.f32.mrb[0].mxu0
  %v4141 = vadd.f32 0.0, %v4140
  %v4142 = vpop.f32.mrb[0].mxu0
  %4143 = vmatprep.mubr.f32.mxu0 0.0
  %4144 = vmatmul.mubr.f32.gmra.mrb[0].mxu0 %v3974
  %v4145 = vpop.f32.mrb[0].mxu0
  %v4146 = vadd.f32 0.0, %v4145
  %v4147 = vpop.f32.mrb[0].mxu0
  %4148 = vmatprep.mubr.f32.mxu0 0.0
  %4149 = vmatmul.mubr.f32.gmra.mrb[0].mxu0 %v3977
  %v4150 = vpop.f32.mrb[0].mxu0
  %v4151 = vadd.f32 0.0, %v4150
  %v4152 = vpop.f32.mrb[0].mxu0
  %4153 = vmatprep.mubr.f32.mxu0 0.0
  %4154 = vmatmul.mubr.f32.gmra.mrb[0].mxu0 %v3980
  %v4155 = vpop.f32.mrb[0].mxu0
  %v4156 = vadd.f32 0.0, %v4155
  %v4157 = vpop.f32.mrb[0].mxu0
  %4158 = vmatprep.mubr.f32.mxu0 0.0
  %4159 = vmatmul.mubr.f32.gmra.mrb[0].mxu0 %v3983
  %v4160 = vpop.f32.mrb[0].mxu0
  %v4161 = vadd.f32 0.0, %v4160
  %v4162 = vpop.f32.mrb[0].mxu0
  %4163 = vmatprep.mubr.f32.mxu0 0.0
  %4164 = vmatmul.mubr.f32.gmra.mrb[0].mxu0 %v3986
  %v4165 = vpop.f32.mrb[0].mxu0
  %v4166 = vadd.f32 0.0, %v4165
  %v4167 = vpop.f32.mrb[0].mxu0
  %4168 = vmatprep.mubr.f32.mxu0 0.0
  %4169 = vmatmul.mubr.f32.gmra.mrb[0].mxu0 %v3989
  %v4170 = vpop.f32.mrb[0].mxu0
  %v4171 = vadd.f32 0.0, %v4170
  %v4172 = vpop.f32.mrb[0].mxu0
  %4173 = vmatprep.mubr.f32.mxu0 0.0
  %4174 = vmatmul.mubr.f32.gmra.mrb[0].mxu0 %v3992
  %v4175 = vpop.f32.mrb[0].mxu0
  %v4176 = vadd.f32 0.0, %v4175
  %v4177 = vpop.f32.mrb[0].mxu0
  %4178 = vmatprep.mubr.f32.mxu0 0.0
  %4179 = vmatmul.mubr.f32.gmra.mrb[0].mxu0 %v3995
  %v4180 = vpop.f32.mrb[0].mxu0
  %v4181 = vadd.f32 0.0, %v4180
  %v4182 = vpop.f32.mrb[0].mxu0
  %4183 = vmatprep.mubr.f32.mxu0 0.0
  %4184 = vmatmul.mubr.f32.gmra.mrb[0].mxu0 %v3998
  %v4185 = vpop.f32.mrb[0].mxu0
  %v4186 = vadd.f32 0.0, %v4185
  %v4187 = vpop.f32.mrb[0].mxu0
  %4188 = vmatprep.mubr.f32.mxu0 0.0
  %4189 = vmatmul.mubr.f32.gmra.mrb[0].mxu0 %v4001
  %v4190 = vpop.f32.mrb[0].mxu0
  %v4191 = vadd.f32 0.0, %v4190
  %v4192 = vpop.f32.mrb[0].mxu0
  %4193 = vmatprep.mubr.f32.mxu0 0.0
  %4194 = vmatmul.mubr.f32.gmra.mrb[0].mxu0 %v4004
  %v4195 = vpop.f32.mrb[0].mxu0
  %v4196 = vadd.f32 0.0, %v4195
  %v4197 = vpop.f32.mrb[0].mxu0
  %4198 = vmatprep.mubr.f32.mxu0 0.0
  %4199 = vmatmul.mubr.f32.gmra.mrb[0].mxu0 %v4007
  %v4200 = vpop.f32.mrb[0].mxu0
  %v4201 = vadd.f32 0.0, %v4200
  %v4202 = vpop.f32.mrb[0].mxu0
  %4203 = vmatprep.mubr.f32.mxu0 0.0
  %4204 = vmatmul.mubr.f32.gmra.mrb[0].mxu0 %v4010
  %v4205 = vpop.f32.mrb[0].mxu0
  %v4206 = vadd.f32 0.0, %v4205
  %v4207 = vpop.f32.mrb[0].mxu0
  %4208 = vmatprep.mubr.f32.mxu0 0.0
  %4209 = vmatmul.mubr.f32.gmra.mrb[0].mxu0 %v4013
  %v4210 = vpop.f32.mrb[0].mxu0
  %v4211 = vadd.f32 0.0, %v4210
  %v4212 = vpop.f32.mrb[0].mxu0
  %4213 = vmatprep.mubr.f32.mxu0 0.0
  %4214 = vmatmul.mubr.f32.gmra.mrb[0].mxu0 %v4016
  %v4215 = vpop.f32.mrb[0].mxu0
  %v4216 = vadd.f32 0.0, %v4215
  %v4217 = vpop.f32.mrb[0].mxu0
  %4218 = vmatprep.mubr.f32.mxu0 0.0
  %4219 = vmatmul.mubr.f32.gmra.mrb[0].mxu0 %v4019
  %v4220 = vpop.f32.mrb[0].mxu0
  %v4221 = vadd.f32 0.0, %v4220
  %v4222 = vpop.f32.mrb[0].mxu0
  %4223 = vmatprep.mubr.f32.mxu0 0.0
  %4224 = vmatmul.mubr.f32.gmra.mrb[0].mxu0 %v4022
  %v4225 = vpop.f32.mrb[0].mxu0
  %v4226 = vadd.f32 0.0, %v4225
  %v4227 = vpop.f32.mrb[0].mxu0
  %4228 = vmatprep.mubr.f32.mxu0 0.0
  %4229 = vmatmul.mubr.f32.gmra.mrb[0].mxu0 %v4025
  %v4230 = vpop.f32.mrb[0].mxu0
  %v4231 = vadd.f32 0.0, %v4230
  %v4232 = vpop.f32.mrb[0].mxu0
  %4233 = vmatprep.mubr.f32.mxu0 0.0
  %4234 = vmatmul.mubr.f32.gmra.mrb[0].mxu0 %v4028
  %v4235 = vpop.f32.mrb[0].mxu0
  %v4236 = vadd.f32 0.0, %v4235
  %v4237 = vpop.f32.mrb[0].mxu0
  %4238 = vmatprep.mubr.f32.mxu0 0.0
  %4239 = vmatmul.mubr.f32.gmra.mrb[0].mxu0 %v4031
  %v4240 = vpop.f32.mrb[0].mxu0
  %v4241 = vadd.f32 0.0, %v4240
  %v4242 = vpop.f32.mrb[0].mxu0
  %4243 = vmatprep.mubr.f32.mxu0 0.0
  %4244 = vmatmul.mubr.f32.gmra.mrb[0].mxu0 %v4034
  %v4245 = vpop.f32.mrb[0].mxu0
  %v4246 = vadd.f32 0.0, %v4245
  %v4247 = vpop.f32.mrb[0].mxu0
  %4248 = vmatprep.mubr.f32.mxu0 0.0
  %4249 = vmatmul.mubr.f32.gmra.mrb[0].mxu0 %v4037
  %v4250 = vpop.f32.mrb[0].mxu0
  %v4251 = vadd.f32 0.0, %v4250
  %v4252 = vpop.f32.mrb[0].mxu0
  %4253 = vmatprep.mubr.f32.mxu0 0.0
  %4254 = vmatmul.mubr.f32.gmra.mrb[0].mxu0 %v4040
  %v4255 = vpop.f32.mrb[0].mxu0
  %v4256 = vadd.f32 0.0, %v4255
  %v4257 = vpop.f32.mrb[0].mxu0
  %4258 = vmatprep.mubr.f32.mxu0 0.0
  %4259 = vmatmul.mubr.f32.gmra.mrb[0].mxu0 %v4043
  %v4260 = vpop.f32.mrb[0].mxu0
  %v4261 = vadd.f32 0.0, %v4260
  %v4262 = vpop.f32.mrb[0].mxu0
  %4263 = vmatprep.mubr.f32.mxu0 0.0
  %4264 = vmatmul.mubr.f32.gmra.mrb[0].mxu0 %v4046
  %v4265 = vpop.f32.mrb[0].mxu0
  %v4266 = vadd.f32 0.0, %v4265
  %v4267 = vpop.f32.mrb[0].mxu0
  %4268 = vmatprep.mubr.f32.mxu0 0.0
  %4269 = vmatmul.mubr.f32.gmra.mrb[0].mxu0 %v4049
  %v4270 = vpop.f32.mrb[0].mxu0
  %v4271 = vadd.f32 0.0, %v4270
  %v4272 = vpop.f32.mrb[0].mxu0
  %4273 = vmatprep.mubr.f32.mxu0 0.0
  %4274 = vmatmul.mubr.f32.gmra.mrb[0].mxu0 %v4052
  %v4275 = vpop.f32.mrb[0].mxu0
  %v4276 = vadd.f32 0.0, %v4275
  %v4277 = vpop.f32.mrb[0].mxu0
  %4278 = vdwg.mxu0
  %v4279 = vmul.f32 %v4121, %v2245
  %v4280 = vmul.f32 %v4126, %v2245
  %v4281 = vmul.f32 %v4131, %v2245
  %v4282 = vmul.f32 %v4136, %v2245
  %v4283 = vmul.f32 %v4141, %v2245
  %v4284 = vmul.f32 %v4146, %v2245
  %v4285 = vmul.f32 %v4151, %v2245
  %v4286 = vmul.f32 %v4156, %v2245
  %v4287 = vmul.f32 %v4161, %v2245
  %v4288 = vmul.f32 %v4166, %v2245
  %v4289 = vmul.f32 %v4171, %v2245
  %v4290 = vmul.f32 %v4176, %v2245
  %v4291 = vmul.f32 %v4181, %v2245
  %v4292 = vmul.f32 %v4186, %v2245
  %v4293 = vmul.f32 %v4191, %v2245
  %v4294 = vmul.f32 %v4196, %v2245
  %v4295 = vmul.f32 %v4201, %v2245
  %v4296 = vmul.f32 %v4206, %v2245
  %v4297 = vmul.f32 %v4211, %v2245
  %v4298 = vmul.f32 %v4216, %v2245
  %v4299 = vmul.f32 %v4221, %v2245
  %v4300 = vmul.f32 %v4226, %v2245
  %v4301 = vmul.f32 %v4231, %v2245
  %v4302 = vmul.f32 %v4236, %v2245
  %v4303 = vmul.f32 %v4241, %v2245
  %v4304 = vmul.f32 %v4246, %v2245
  %v4305 = vmul.f32 %v4251, %v2245
  %v4306 = vmul.f32 %v4256, %v2245
  %v4307 = vmul.f32 %v4261, %v2245
  %v4308 = vmul.f32 %v4266, %v2245
  %v4309 = vmul.f32 %v4271, %v2245
  %v4310 = vmul.f32 %v4276, %v2245
  %v4311 = vadd.f32 %v4279, %v2283
  %v4312 = vadd.f32 %v4280, %v2283
  %v4313 = vadd.f32 %v4281, %v2283
  %v4314 = vadd.f32 %v4282, %v2283
  %v4315 = vadd.f32 %v4283, %v2283
  %v4316 = vadd.f32 %v4284, %v2283
  %v4317 = vadd.f32 %v4285, %v2283
  %v4318 = vadd.f32 %v4286, %v2283
  %v4319 = vadd.f32 %v4287, %v2283
  %v4320 = vadd.f32 %v4288, %v2283
  %v4321 = vadd.f32 %v4289, %v2283
  %v4322 = vadd.f32 %v4290, %v2283
  %v4323 = vadd.f32 %v4291, %v2283
  %v4324 = vadd.f32 %v4292, %v2283
  %v4325 = vadd.f32 %v4293, %v2283
  %v4326 = vadd.f32 %v4294, %v2283
  %v4327 = vadd.f32 %v4295, %v2283
  %v4328 = vadd.f32 %v4296, %v2283
  %v4329 = vadd.f32 %v4297, %v2283
  %v4330 = vadd.f32 %v4298, %v2283
  %v4331 = vadd.f32 %v4299, %v2283
  %v4332 = vadd.f32 %v4300, %v2283
  %v4333 = vadd.f32 %v4301, %v2283
  %v4334 = vadd.f32 %v4302, %v2283
  %v4335 = vadd.f32 %v4303, %v2283
  %v4336 = vadd.f32 %v4304, %v2283
  %v4337 = vadd.f32 %v4305, %v2283
  %v4338 = vadd.f32 %v4306, %v2283
  %v4339 = vadd.f32 %v4307, %v2283
  %v4340 = vadd.f32 %v4308, %v2283
  %v4341 = vadd.f32 %v4309, %v2283
  %v4342 = vadd.f32 %v4310, %v2283
  %v4343 = vmax.f32 %v4311, 0.0
  %v4344 = vmax.f32 %v4312, 0.0
  %v4345 = vmax.f32 %v4313, 0.0
  %v4346 = vmax.f32 %v4314, 0.0
  %v4347 = vmax.f32 %v4315, 0.0
  %v4348 = vmax.f32 %v4316, 0.0
  %v4349 = vmax.f32 %v4317, 0.0
  %v4350 = vmax.f32 %v4318, 0.0
  %v4351 = vmax.f32 %v4319, 0.0
  %v4352 = vmax.f32 %v4320, 0.0
  %v4353 = vmax.f32 %v4321, 0.0
  %v4354 = vmax.f32 %v4322, 0.0
  %v4355 = vmax.f32 %v4323, 0.0
  %v4356 = vmax.f32 %v4324, 0.0
  %v4357 = vmax.f32 %v4325, 0.0
  %v4358 = vmax.f32 %v4326, 0.0
  %v4359 = vmax.f32 %v4327, 0.0
  %v4360 = vmax.f32 %v4328, 0.0
  %v4361 = vmax.f32 %v4329, 0.0
  %v4362 = vmax.f32 %v4330, 0.0
  %v4363 = vmax.f32 %v4331, 0.0
  %v4364 = vmax.f32 %v4332, 0.0
  %v4365 = vmax.f32 %v4333, 0.0
  %v4366 = vmax.f32 %v4334, 0.0
  %v4367 = vmax.f32 %v4335, 0.0
  %v4368 = vmax.f32 %v4336, 0.0
  %v4369 = vmax.f32 %v4337, 0.0
  %v4370 = vmax.f32 %v4338, 0.0
  %v4371 = vmax.f32 %v4339, 0.0
  %v4372 = vmax.f32 %v4340, 0.0
  %v4373 = vmax.f32 %v4341, 0.0
  %v4374 = vmax.f32 %v4342, 0.0
  %s4375 = scalar_lea.vmem [#allocation3], %s2481
  %4376 = vst.msk [vmem:[%s4375 + $0x8] sm:$0xff] %vm26, %v4343
  %4377 = vst.msk [vmem:[%s4375 + $0x10] sm:$0xff] %vm26, %v4344
  %4378 = vst.msk [vmem:[%s4375 + $0x28] sm:$0xff] %vm26, %v4345
  %4379 = vst.msk [vmem:[%s4375 + $0x30] sm:$0xff] %vm26, %v4346
  %4380 = vst.msk [vmem:[%s4375 + $0x48] sm:$0xff] %vm26, %v4347
  %4381 = vst.msk [vmem:[%s4375 + $0x50] sm:$0xff] %vm26, %v4348
  %4382 = vst.msk [vmem:[%s4375 + $0x68] sm:$0xff] %vm26, %v4349
  %4383 = vst.msk [vmem:[%s4375 + $0x70] sm:$0xff] %vm26, %v4350
  %4384 = vst.msk [vmem:[%s4375 + $0x88] sm:$0xff] %vm26, %v4351
  %4385 = vst.msk [vmem:[%s4375 + $0x90] sm:$0xff] %vm26, %v4352
  %4386 = vst.msk [vmem:[%s4375 + $0xa8] sm:$0xff] %vm26, %v4353
  %4387 = vst.msk [vmem:[%s4375 + $0xb0] sm:$0xff] %vm26, %v4354
  %4388 = vst.msk [vmem:[%s4375 + $0xc8] sm:$0xff] %vm26, %v4355
  %4389 = vst.msk [vmem:[%s4375 + $0xd0] sm:$0xff] %vm26, %v4356
  %4390 = vst.msk [vmem:[%s4375 + $0xe8] sm:$0xff] %vm26, %v4357
  %4391 = vst.msk [vmem:[%s4375 + $0xf0] sm:$0xff] %vm26, %v4358
  %4392 = vst.msk [vmem:[%s4375 + $0x248] sm:$0xff] %vm26, %v4359
  %4393 = vst.msk [vmem:[%s4375 + $0x250] sm:$0xff] %vm26, %v4360
  %4394 = vst.msk [vmem:[%s4375 + $0x268] sm:$0xff] %vm26, %v4361
  %4395 = vst.msk [vmem:[%s4375 + $0x270] sm:$0xff] %vm26, %v4362
  %4396 = vst.msk [vmem:[%s4375 + $0x288] sm:$0xff] %vm26, %v4363
  %4397 = vst.msk [vmem:[%s4375 + $0x290] sm:$0xff] %vm26, %v4364
  %4398 = vst.msk [vmem:[%s4375 + $0x2a8] sm:$0xff] %vm26, %v4365
  %4399 = vst.msk [vmem:[%s4375 + $0x2b0] sm:$0xff] %vm26, %v4366
  %4400 = vst.msk [vmem:[%s4375 + $0x2c8] sm:$0xff] %vm26, %v4367
  %4401 = vst.msk [vmem:[%s4375 + $0x2d0] sm:$0xff] %vm26, %v4368
  %4402 = vst.msk [vmem:[%s4375 + $0x2e8] sm:$0xff] %vm26, %v4369
  %4403 = vst.msk [vmem:[%s4375 + $0x2f0] sm:$0xff] %vm26, %v4370
  %4404 = vst.msk [vmem:[%s4375 + $0x308] sm:$0xff] %vm26, %v4371
  %4405 = vst.msk [vmem:[%s4375 + $0x310] sm:$0xff] %vm26, %v4372
  %4406 = vst.msk [vmem:[%s4375 + $0x328] sm:$0xff] %vm26, %v4373
  %4407 = vst.msk [vmem:[%s4375 + $0x330] sm:$0xff] %vm26, %v4374
  %s4408 = scalar_lea.vmem [#allocation3], %s332
  %v4409 = vld [vmem:[%s4408 + $0x7] sm:$0xff]
  %v4410 = vld [vmem:[%s4408 + $0xf] sm:$0xff]
  %v4411 = vld [vmem:[%s4408 + $0x27] sm:$0xff]
  %v4412 = vld [vmem:[%s4408 + $0x2f] sm:$0xff]
  %v4413 = vld [vmem:[%s4408 + $0x47] sm:$0xff]
  %v4414 = vld [vmem:[%s4408 + $0x4f] sm:$0xff]
  %v4415 = vld [vmem:[%s4408 + $0x67] sm:$0xff]
  %v4416 = vld [vmem:[%s4408 + $0x6f] sm:$0xff]
  %v4417 = vld [vmem:[%s4408 + $0x87] sm:$0xff]
  %v4418 = vld [vmem:[%s4408 + $0x8f] sm:$0xff]
  %v4419 = vld [vmem:[%s4408 + $0xa7] sm:$0xff]
  %v4420 = vld [vmem:[%s4408 + $0xaf] sm:$0xff]
  %v4421 = vld [vmem:[%s4408 + $0xc7] sm:$0xff]
  %v4422 = vld [vmem:[%s4408 + $0xcf] sm:$0xff]
  %v4423 = vld [vmem:[%s4408 + $0xe7] sm:$0xff]
  %v4424 = vld [vmem:[%s4408 + $0xef] sm:$0xff]
  %v4425 = vld [vmem:[%s4408 + $0x247] sm:$0xff]
  %v4426 = vld [vmem:[%s4408 + $0x24f] sm:$0xff]
  %v4427 = vld [vmem:[%s4408 + $0x267] sm:$0xff]
  %v4428 = vld [vmem:[%s4408 + $0x26f] sm:$0xff]
  %v4429 = vld [vmem:[%s4408 + $0x287] sm:$0xff]
  %v4430 = vld [vmem:[%s4408 + $0x28f] sm:$0xff]
  %v4431 = vld [vmem:[%s4408 + $0x2a7] sm:$0xff]
  %v4432 = vld [vmem:[%s4408 + $0x2af] sm:$0xff]
  %v4433 = vld [vmem:[%s4408 + $0x2c7] sm:$0xff]
  %v4434 = vld [vmem:[%s4408 + $0x2cf] sm:$0xff]
  %v4435 = vld [vmem:[%s4408 + $0x2e7] sm:$0xff]
  %v4436 = vld [vmem:[%s4408 + $0x2ef] sm:$0xff]
  %v4437 = vld [vmem:[%s4408 + $0x307] sm:$0xff]
  %v4438 = vld [vmem:[%s4408 + $0x30f] sm:$0xff]
  %v4439 = vld [vmem:[%s4408 + $0x327] sm:$0xff]
  %v4440 = vld [vmem:[%s4408 + $0x32f] sm:$0xff]
  %v4441 = vld [vmem:[%s4408 + $0x8] sm:$0xff]
  %v4442 = vld [vmem:[%s4408 + $0x10] sm:$0xff]
  %v4443 = vld [vmem:[%s4408 + $0x28] sm:$0xff]
  %v4444 = vld [vmem:[%s4408 + $0x30] sm:$0xff]
  %v4445 = vld [vmem:[%s4408 + $0x48] sm:$0xff]
  %v4446 = vld [vmem:[%s4408 + $0x50] sm:$0xff]
  %v4447 = vld [vmem:[%s4408 + $0x68] sm:$0xff]
  %v4448 = vld [vmem:[%s4408 + $0x70] sm:$0xff]
  %v4449 = vld [vmem:[%s4408 + $0x88] sm:$0xff]
  %v4450 = vld [vmem:[%s4408 + $0x90] sm:$0xff]
  %v4451 = vld [vmem:[%s4408 + $0xa8] sm:$0xff]
  %v4452 = vld [vmem:[%s4408 + $0xb0] sm:$0xff]
  %v4453 = vld [vmem:[%s4408 + $0xc8] sm:$0xff]
  %v4454 = vld [vmem:[%s4408 + $0xd0] sm:$0xff]
  %v4455 = vld [vmem:[%s4408 + $0xe8] sm:$0xff]
  %v4456 = vld [vmem:[%s4408 + $0xf0] sm:$0xff]
  %v4457 = vld [vmem:[%s4408 + $0x248] sm:$0xff]
  %v4458 = vld [vmem:[%s4408 + $0x250] sm:$0xff]
  %v4459 = vld [vmem:[%s4408 + $0x268] sm:$0xff]
  %v4460 = vld [vmem:[%s4408 + $0x270] sm:$0xff]
  %v4461 = vld [vmem:[%s4408 + $0x288] sm:$0xff]
  %v4462 = vld [vmem:[%s4408 + $0x290] sm:$0xff]
  %v4463 = vld [vmem:[%s4408 + $0x2a8] sm:$0xff]
  %v4464 = vld [vmem:[%s4408 + $0x2b0] sm:$0xff]
  %v4465 = vld [vmem:[%s4408 + $0x2c8] sm:$0xff]
  %v4466 = vld [vmem:[%s4408 + $0x2d0] sm:$0xff]
  %v4467 = vld [vmem:[%s4408 + $0x2e8] sm:$0xff]
  %v4468 = vld [vmem:[%s4408 + $0x2f0] sm:$0xff]
  %v4469 = vld [vmem:[%s4408 + $0x308] sm:$0xff]
  %v4470 = vld [vmem:[%s4408 + $0x310] sm:$0xff]
  %v4471 = vld [vmem:[%s4408 + $0x328] sm:$0xff]
  %v4472 = vld [vmem:[%s4408 + $0x330] sm:$0xff]
  %v4473 = vld [vmem:[%s4408 + $0x9] sm:$0xff]
  %v4474 = vld [vmem:[%s4408 + $0x11] sm:$0xff]
  %v4475 = vld [vmem:[%s4408 + $0x29] sm:$0xff]
  %v4476 = vld [vmem:[%s4408 + $0x31] sm:$0xff]
  %v4477 = vld [vmem:[%s4408 + $0x49] sm:$0xff]
  %v4478 = vld [vmem:[%s4408 + $0x51] sm:$0xff]
  %v4479 = vld [vmem:[%s4408 + $0x69] sm:$0xff]
  %v4480 = vld [vmem:[%s4408 + $0x71] sm:$0xff]
  %v4481 = vld [vmem:[%s4408 + $0x89] sm:$0xff]
  %v4482 = vld [vmem:[%s4408 + $0x91] sm:$0xff]
  %v4483 = vld [vmem:[%s4408 + $0xa9] sm:$0xff]
  %v4484 = vld [vmem:[%s4408 + $0xb1] sm:$0xff]
  %v4485 = vld [vmem:[%s4408 + $0xc9] sm:$0xff]
  %v4486 = vld [vmem:[%s4408 + $0xd1] sm:$0xff]
  %v4487 = vld [vmem:[%s4408 + $0xe9] sm:$0xff]
  %v4488 = vld [vmem:[%s4408 + $0xf1] sm:$0xff]
  %v4489 = vld [vmem:[%s4408 + $0x249] sm:$0xff]
  %v4490 = vld [vmem:[%s4408 + $0x251] sm:$0xff]
  %v4491 = vld [vmem:[%s4408 + $0x269] sm:$0xff]
  %v4492 = vld [vmem:[%s4408 + $0x271] sm:$0xff]
  %v4493 = vld [vmem:[%s4408 + $0x289] sm:$0xff]
  %v4494 = vld [vmem:[%s4408 + $0x291] sm:$0xff]
  %v4495 = vld [vmem:[%s4408 + $0x2a9] sm:$0xff]
  %v4496 = vld [vmem:[%s4408 + $0x2b1] sm:$0xff]
  %v4497 = vld [vmem:[%s4408 + $0x2c9] sm:$0xff]
  %v4498 = vld [vmem:[%s4408 + $0x2d1] sm:$0xff]
  %v4499 = vld [vmem:[%s4408 + $0x2e9] sm:$0xff]
  %v4500 = vld [vmem:[%s4408 + $0x2f1] sm:$0xff]
  %v4501 = vld [vmem:[%s4408 + $0x309] sm:$0xff]
  %v4502 = vld [vmem:[%s4408 + $0x311] sm:$0xff]
  %v4503 = vld [vmem:[%s4408 + $0x329] sm:$0xff]
  %v4504 = vld [vmem:[%s4408 + $0x331] sm:$0xff]
  %v4505 = vld [vmem:[%s2349 + $0x7] sm:$0xff]
  %v4506 = vld [vmem:[%s2349 + $0xf] sm:$0xff]
  %v4507 = vld [vmem:[%s2349 + $0x27] sm:$0xff]
  %v4508 = vld [vmem:[%s2349 + $0x2f] sm:$0xff]
  %v4509 = vld [vmem:[%s2349 + $0x47] sm:$0xff]
  %v4510 = vld [vmem:[%s2349 + $0x4f] sm:$0xff]
  %v4511 = vld [vmem:[%s2349 + $0x67] sm:$0xff]
  %v4512 = vld [vmem:[%s2349 + $0x6f] sm:$0xff]
  %v4513 = vld [vmem:[%s2349 + $0x87] sm:$0xff]
  %v4514 = vld [vmem:[%s2349 + $0x8f] sm:$0xff]
  %v4515 = vld [vmem:[%s2349 + $0xa7] sm:$0xff]
  %v4516 = vld [vmem:[%s2349 + $0xaf] sm:$0xff]
  %v4517 = vld [vmem:[%s2349 + $0xc7] sm:$0xff]
  %v4518 = vld [vmem:[%s2349 + $0xcf] sm:$0xff]
  %v4519 = vld [vmem:[%s2349 + $0xe7] sm:$0xff]
  %v4520 = vld [vmem:[%s2349 + $0xef] sm:$0xff]
  %v4521 = vld [vmem:[%s2349 + $0x247] sm:$0xff]
  %v4522 = vld [vmem:[%s2349 + $0x24f] sm:$0xff]
  %v4523 = vld [vmem:[%s2349 + $0x267] sm:$0xff]
  %v4524 = vld [vmem:[%s2349 + $0x26f] sm:$0xff]
  %v4525 = vld [vmem:[%s2349 + $0x287] sm:$0xff]
  %v4526 = vld [vmem:[%s2349 + $0x28f] sm:$0xff]
  %v4527 = vld [vmem:[%s2349 + $0x2a7] sm:$0xff]
  %v4528 = vld [vmem:[%s2349 + $0x2af] sm:$0xff]
  %v4529 = vld [vmem:[%s2349 + $0x2c7] sm:$0xff]
  %v4530 = vld [vmem:[%s2349 + $0x2cf] sm:$0xff]
  %v4531 = vld [vmem:[%s2349 + $0x2e7] sm:$0xff]
  %v4532 = vld [vmem:[%s2349 + $0x2ef] sm:$0xff]
  %v4533 = vld [vmem:[%s2349 + $0x307] sm:$0xff]
  %v4534 = vld [vmem:[%s2349 + $0x30f] sm:$0xff]
  %v4535 = vld [vmem:[%s2349 + $0x327] sm:$0xff]
  %v4536 = vld [vmem:[%s2349 + $0x32f] sm:$0xff]
  %v4537 = vld [vmem:[%s2349 + $0x8] sm:$0xff]
  %v4538 = vld [vmem:[%s2349 + $0x10] sm:$0xff]
  %v4539 = vld [vmem:[%s2349 + $0x28] sm:$0xff]
  %v4540 = vld [vmem:[%s2349 + $0x30] sm:$0xff]
  %v4541 = vld [vmem:[%s2349 + $0x48] sm:$0xff]
  %v4542 = vld [vmem:[%s2349 + $0x50] sm:$0xff]
  %v4543 = vld [vmem:[%s2349 + $0x68] sm:$0xff]
  %v4544 = vld [vmem:[%s2349 + $0x70] sm:$0xff]
  %v4545 = vld [vmem:[%s2349 + $0x88] sm:$0xff]
  %v4546 = vld [vmem:[%s2349 + $0x90] sm:$0xff]
  %v4547 = vld [vmem:[%s2349 + $0xa8] sm:$0xff]
  %v4548 = vld [vmem:[%s2349 + $0xb0] sm:$0xff]
  %v4549 = vld [vmem:[%s2349 + $0xc8] sm:$0xff]
  %v4550 = vld [vmem:[%s2349 + $0xd0] sm:$0xff]
  %v4551 = vld [vmem:[%s2349 + $0xe8] sm:$0xff]
  %v4552 = vld [vmem:[%s2349 + $0xf0] sm:$0xff]
  %v4553 = vld [vmem:[%s2349 + $0x248] sm:$0xff]
  %v4554 = vld [vmem:[%s2349 + $0x250] sm:$0xff]
  %v4555 = vld [vmem:[%s2349 + $0x268] sm:$0xff]
  %v4556 = vld [vmem:[%s2349 + $0x270] sm:$0xff]
  %v4557 = vld [vmem:[%s2349 + $0x288] sm:$0xff]
  %v4558 = vld [vmem:[%s2349 + $0x290] sm:$0xff]
  %v4559 = vld [vmem:[%s2349 + $0x2a8] sm:$0xff]
  %v4560 = vld [vmem:[%s2349 + $0x2b0] sm:$0xff]
  %v4561 = vld [vmem:[%s2349 + $0x2c8] sm:$0xff]
  %v4562 = vld [vmem:[%s2349 + $0x2d0] sm:$0xff]
  %v4563 = vld [vmem:[%s2349 + $0x2e8] sm:$0xff]
  %v4564 = vld [vmem:[%s2349 + $0x2f0] sm:$0xff]
  %v4565 = vld [vmem:[%s2349 + $0x308] sm:$0xff]
  %v4566 = vld [vmem:[%s2349 + $0x310] sm:$0xff]
  %v4567 = vld [vmem:[%s2349 + $0x328] sm:$0xff]
  %v4568 = vld [vmem:[%s2349 + $0x330] sm:$0xff]
  %v4569 = vld [vmem:[%s2349 + $0x9] sm:$0xff]
  %v4570 = vld [vmem:[%s2349 + $0x11] sm:$0xff]
  %v4571 = vld [vmem:[%s2349 + $0x29] sm:$0xff]
  %v4572 = vld [vmem:[%s2349 + $0x31] sm:$0xff]
  %v4573 = vld [vmem:[%s2349 + $0x49] sm:$0xff]
  %v4574 = vld [vmem:[%s2349 + $0x51] sm:$0xff]
  %v4575 = vld [vmem:[%s2349 + $0x69] sm:$0xff]
  %v4576 = vld [vmem:[%s2349 + $0x71] sm:$0xff]
  %v4577 = vld [vmem:[%s2349 + $0x89] sm:$0xff]
  %v4578 = vld [vmem:[%s2349 + $0x91] sm:$0xff]
  %v4579 = vld [vmem:[%s2349 + $0xa9] sm:$0xff]
  %v4580 = vld [vmem:[%s2349 + $0xb1] sm:$0xff]
  %v4581 = vld [vmem:[%s2349 + $0xc9] sm:$0xff]
  %v4582 = vld [vmem:[%s2349 + $0xd1] sm:$0xff]
  %v4583 = vld [vmem:[%s2349 + $0xe9] sm:$0xff]
  %v4584 = vld [vmem:[%s2349 + $0xf1] sm:$0xff]
  %v4585 = vld [vmem:[%s2349 + $0x249] sm:$0xff]
  %v4586 = vld [vmem:[%s2349 + $0x251] sm:$0xff]
  %v4587 = vld [vmem:[%s2349 + $0x269] sm:$0xff]
  %v4588 = vld [vmem:[%s2349 + $0x271] sm:$0xff]
  %v4589 = vld [vmem:[%s2349 + $0x289] sm:$0xff]
  %v4590 = vld [vmem:[%s2349 + $0x291] sm:$0xff]
  %v4591 = vld [vmem:[%s2349 + $0x2a9] sm:$0xff]
  %v4592 = vld [vmem:[%s2349 + $0x2b1] sm:$0xff]
  %v4593 = vld [vmem:[%s2349 + $0x2c9] sm:$0xff]
  %v4594 = vld [vmem:[%s2349 + $0x2d1] sm:$0xff]
  %v4595 = vld [vmem:[%s2349 + $0x2e9] sm:$0xff]
  %v4596 = vld [vmem:[%s2349 + $0x2f1] sm:$0xff]
  %v4597 = vld [vmem:[%s2349 + $0x309] sm:$0xff]
  %v4598 = vld [vmem:[%s2349 + $0x311] sm:$0xff]
  %v4599 = vld [vmem:[%s2349 + $0x329] sm:$0xff]
  %v4600 = vld [vmem:[%s2349 + $0x331] sm:$0xff]
  %s4601 = scalar_lea.vmem [#allocation3], %s530
  %v4602 = vld [vmem:[%s4601 + $0x7] sm:$0xff]
  %v4603 = vld [vmem:[%s4601 + $0xf] sm:$0xff]
  %v4604 = vld [vmem:[%s4601 + $0x27] sm:$0xff]
  %v4605 = vld [vmem:[%s4601 + $0x2f] sm:$0xff]
  %v4606 = vld [vmem:[%s4601 + $0x47] sm:$0xff]
  %v4607 = vld [vmem:[%s4601 + $0x4f] sm:$0xff]
  %v4608 = vld [vmem:[%s4601 + $0x67] sm:$0xff]
  %v4609 = vld [vmem:[%s4601 + $0x6f] sm:$0xff]
  %v4610 = vld [vmem:[%s4601 + $0x87] sm:$0xff]
  %v4611 = vld [vmem:[%s4601 + $0x8f] sm:$0xff]
  %v4612 = vld [vmem:[%s4601 + $0xa7] sm:$0xff]
  %v4613 = vld [vmem:[%s4601 + $0xaf] sm:$0xff]
  %v4614 = vld [vmem:[%s4601 + $0xc7] sm:$0xff]
  %v4615 = vld [vmem:[%s4601 + $0xcf] sm:$0xff]
  %v4616 = vld [vmem:[%s4601 + $0xe7] sm:$0xff]
  %v4617 = vld [vmem:[%s4601 + $0xef] sm:$0xff]
  %v4618 = vld [vmem:[%s4601 + $0x247] sm:$0xff]
  %v4619 = vld [vmem:[%s4601 + $0x24f] sm:$0xff]
  %v4620 = vld [vmem:[%s4601 + $0x267] sm:$0xff]
  %v4621 = vld [vmem:[%s4601 + $0x26f] sm:$0xff]
  %v4622 = vld [vmem:[%s4601 + $0x287] sm:$0xff]
  %v4623 = vld [vmem:[%s4601 + $0x28f] sm:$0xff]
  %v4624 = vld [vmem:[%s4601 + $0x2a7] sm:$0xff]
  %v4625 = vld [vmem:[%s4601 + $0x2af] sm:$0xff]
  %v4626 = vld [vmem:[%s4601 + $0x2c7] sm:$0xff]
  %v4627 = vld [vmem:[%s4601 + $0x2cf] sm:$0xff]
  %v4628 = vld [vmem:[%s4601 + $0x2e7] sm:$0xff]
  %v4629 = vld [vmem:[%s4601 + $0x2ef] sm:$0xff]
  %v4630 = vld [vmem:[%s4601 + $0x307] sm:$0xff]
  %v4631 = vld [vmem:[%s4601 + $0x30f] sm:$0xff]
  %v4632 = vld [vmem:[%s4601 + $0x327] sm:$0xff]
  %v4633 = vld [vmem:[%s4601 + $0x32f] sm:$0xff]
  %v4634 = vld [vmem:[%s4601 + $0x8] sm:$0xff]
  %v4635 = vld [vmem:[%s4601 + $0x10] sm:$0xff]
  %v4636 = vld [vmem:[%s4601 + $0x28] sm:$0xff]
  %v4637 = vld [vmem:[%s4601 + $0x30] sm:$0xff]
  %v4638 = vld [vmem:[%s4601 + $0x48] sm:$0xff]
  %v4639 = vld [vmem:[%s4601 + $0x50] sm:$0xff]
  %v4640 = vld [vmem:[%s4601 + $0x68] sm:$0xff]
  %v4641 = vld [vmem:[%s4601 + $0x70] sm:$0xff]
  %v4642 = vld [vmem:[%s4601 + $0x88] sm:$0xff]
  %v4643 = vld [vmem:[%s4601 + $0x90] sm:$0xff]
  %v4644 = vld [vmem:[%s4601 + $0xa8] sm:$0xff]
  %v4645 = vld [vmem:[%s4601 + $0xb0] sm:$0xff]
  %v4646 = vld [vmem:[%s4601 + $0xc8] sm:$0xff]
  %v4647 = vld [vmem:[%s4601 + $0xd0] sm:$0xff]
  %v4648 = vld [vmem:[%s4601 + $0xe8] sm:$0xff]
  %v4649 = vld [vmem:[%s4601 + $0xf0] sm:$0xff]
  %v4650 = vld [vmem:[%s4601 + $0x248] sm:$0xff]
  %v4651 = vld [vmem:[%s4601 + $0x250] sm:$0xff]
  %v4652 = vld [vmem:[%s4601 + $0x268] sm:$0xff]
  %v4653 = vld [vmem:[%s4601 + $0x270] sm:$0xff]
  %v4654 = vld [vmem:[%s4601 + $0x288] sm:$0xff]
  %v4655 = vld [vmem:[%s4601 + $0x290] sm:$0xff]
  %v4656 = vld [vmem:[%s4601 + $0x2a8] sm:$0xff]
  %v4657 = vld [vmem:[%s4601 + $0x2b0] sm:$0xff]
  %v4658 = vld [vmem:[%s4601 + $0x2c8] sm:$0xff]
  %v4659 = vld [vmem:[%s4601 + $0x2d0] sm:$0xff]
  %v4660 = vld [vmem:[%s4601 + $0x2e8] sm:$0xff]
  %v4661 = vld [vmem:[%s4601 + $0x2f0] sm:$0xff]
  %v4662 = vld [vmem:[%s4601 + $0x308] sm:$0xff]
  %v4663 = vld [vmem:[%s4601 + $0x310] sm:$0xff]
  %v4664 = vld [vmem:[%s4601 + $0x328] sm:$0xff]
  %v4665 = vld [vmem:[%s4601 + $0x330] sm:$0xff]
  %v4666 = vld [vmem:[%s4601 + $0x9] sm:$0xff]
  %v4667 = vld [vmem:[%s4601 + $0x11] sm:$0xff]
  %v4668 = vld [vmem:[%s4601 + $0x29] sm:$0xff]
  %v4669 = vld [vmem:[%s4601 + $0x31] sm:$0xff]
  %v4670 = vld [vmem:[%s4601 + $0x49] sm:$0xff]
  %v4671 = vld [vmem:[%s4601 + $0x51] sm:$0xff]
  %v4672 = vld [vmem:[%s4601 + $0x69] sm:$0xff]
  %v4673 = vld [vmem:[%s4601 + $0x71] sm:$0xff]
  %v4674 = vld [vmem:[%s4601 + $0x89] sm:$0xff]
  %v4675 = vld [vmem:[%s4601 + $0x91] sm:$0xff]
  %v4676 = vld [vmem:[%s4601 + $0xa9] sm:$0xff]
  %v4677 = vld [vmem:[%s4601 + $0xb1] sm:$0xff]
  %v4678 = vld [vmem:[%s4601 + $0xc9] sm:$0xff]
  %v4679 = vld [vmem:[%s4601 + $0xd1] sm:$0xff]
  %v4680 = vld [vmem:[%s4601 + $0xe9] sm:$0xff]
  %v4681 = vld [vmem:[%s4601 + $0xf1] sm:$0xff]
  %v4682 = vld [vmem:[%s4601 + $0x249] sm:$0xff]
  %v4683 = vld [vmem:[%s4601 + $0x251] sm:$0xff]
  %v4684 = vld [vmem:[%s4601 + $0x269] sm:$0xff]
  %v4685 = vld [vmem:[%s4601 + $0x271] sm:$0xff]
  %v4686 = vld [vmem:[%s4601 + $0x289] sm:$0xff]
  %v4687 = vld [vmem:[%s4601 + $0x291] sm:$0xff]
  %v4688 = vld [vmem:[%s4601 + $0x2a9] sm:$0xff]
  %v4689 = vld [vmem:[%s4601 + $0x2b1] sm:$0xff]
  %v4690 = vld [vmem:[%s4601 + $0x2c9] sm:$0xff]
  %v4691 = vld [vmem:[%s4601 + $0x2d1] sm:$0xff]
  %v4692 = vld [vmem:[%s4601 + $0x2e9] sm:$0xff]
  %v4693 = vld [vmem:[%s4601 + $0x2f1] sm:$0xff]
  %v4694 = vld [vmem:[%s4601 + $0x309] sm:$0xff]
  %v4695 = vld [vmem:[%s4601 + $0x311] sm:$0xff]
  %v4696 = vld [vmem:[%s4601 + $0x329] sm:$0xff]
  %v4697 = vld [vmem:[%s4601 + $0x331] sm:$0xff]
  %4730 = vrot.lane.b32.xlu0 %v4441, 4
  %v4731 = vpop.permute.xlu0 %4730
  %4732 = vrot.lane.b32.xlu0 %v4442, 4
  %v4733 = vpop.permute.xlu0 %4732
  %4734 = vrot.lane.b32.xlu0 %v4443, 4
  %v4735 = vpop.permute.xlu0 %4734
  %4736 = vrot.lane.b32.xlu0 %v4444, 4
  %v4737 = vpop.permute.xlu0 %4736
  %4738 = vrot.lane.b32.xlu0 %v4445, 4
  %v4739 = vpop.permute.xlu0 %4738
  %4740 = vrot.lane.b32.xlu0 %v4446, 4
  %v4741 = vpop.permute.xlu0 %4740
  %4742 = vrot.lane.b32.xlu0 %v4447, 4
  %v4743 = vpop.permute.xlu0 %4742
  %4744 = vrot.lane.b32.xlu0 %v4448, 4
  %v4745 = vpop.permute.xlu0 %4744
  %4746 = vrot.lane.b32.xlu0 %v4449, 4
  %v4747 = vpop.permute.xlu0 %4746
  %4748 = vrot.lane.b32.xlu0 %v4450, 4
  %v4749 = vpop.permute.xlu0 %4748
  %4750 = vrot.lane.b32.xlu0 %v4451, 4
  %v4751 = vpop.permute.xlu0 %4750
  %4752 = vrot.lane.b32.xlu0 %v4452, 4
  %v4753 = vpop.permute.xlu0 %4752
  %4754 = vrot.lane.b32.xlu0 %v4453, 4
  %v4755 = vpop.permute.xlu0 %4754
  %4756 = vrot.lane.b32.xlu0 %v4454, 4
  %v4757 = vpop.permute.xlu0 %4756
  %4758 = vrot.lane.b32.xlu0 %v4455, 4
  %v4759 = vpop.permute.xlu0 %4758
  %4760 = vrot.lane.b32.xlu0 %v4456, 4
  %v4761 = vpop.permute.xlu0 %4760
  %4762 = vrot.lane.b32.xlu0 %v4457, 4
  %v4763 = vpop.permute.xlu0 %4762
  %4764 = vrot.lane.b32.xlu0 %v4458, 4
  %v4765 = vpop.permute.xlu0 %4764
  %4766 = vrot.lane.b32.xlu0 %v4459, 4
  %v4767 = vpop.permute.xlu0 %4766
  %4768 = vrot.lane.b32.xlu0 %v4460, 4
  %v4769 = vpop.permute.xlu0 %4768
  %4770 = vrot.lane.b32.xlu0 %v4461, 4
  %v4771 = vpop.permute.xlu0 %4770
  %4772 = vrot.lane.b32.xlu0 %v4462, 4
  %v4773 = vpop.permute.xlu0 %4772
  %4774 = vrot.lane.b32.xlu0 %v4463, 4
  %v4775 = vpop.permute.xlu0 %4774
  %4776 = vrot.lane.b32.xlu0 %v4464, 4
  %v4777 = vpop.permute.xlu0 %4776
  %4778 = vrot.lane.b32.xlu0 %v4465, 4
  %v4779 = vpop.permute.xlu0 %4778
  %4780 = vrot.lane.b32.xlu0 %v4466, 4
  %v4781 = vpop.permute.xlu0 %4780
  %4782 = vrot.lane.b32.xlu0 %v4467, 4
  %v4783 = vpop.permute.xlu0 %4782
  %4784 = vrot.lane.b32.xlu0 %v4468, 4
  %v4785 = vpop.permute.xlu0 %4784
  %4786 = vrot.lane.b32.xlu0 %v4469, 4
  %v4787 = vpop.permute.xlu0 %4786
  %4788 = vrot.lane.b32.xlu0 %v4470, 4
  %v4789 = vpop.permute.xlu0 %4788
  %4790 = vrot.lane.b32.xlu0 %v4471, 4
  %v4791 = vpop.permute.xlu0 %4790
  %4792 = vrot.lane.b32.xlu0 %v4472, 4
  %v4793 = vpop.permute.xlu0 %4792
  %4858 = vrot.lane.b32.xlu0 %v4473, 8
  %v4859 = vpop.permute.xlu0 %4858
  %4860 = vrot.lane.b32.xlu0 %v4474, 8
  %v4861 = vpop.permute.xlu0 %4860
  %4862 = vrot.lane.b32.xlu0 %v4475, 8
  %v4863 = vpop.permute.xlu0 %4862
  %4864 = vrot.lane.b32.xlu0 %v4476, 8
  %v4865 = vpop.permute.xlu0 %4864
  %4866 = vrot.lane.b32.xlu0 %v4477, 8
  %v4867 = vpop.permute.xlu0 %4866
  %4868 = vrot.lane.b32.xlu0 %v4478, 8
  %v4869 = vpop.permute.xlu0 %4868
  %4870 = vrot.lane.b32.xlu0 %v4479, 8
  %v4871 = vpop.permute.xlu0 %4870
  %4872 = vrot.lane.b32.xlu0 %v4480, 8
  %v4873 = vpop.permute.xlu0 %4872
  %4874 = vrot.lane.b32.xlu0 %v4481, 8
  %v4875 = vpop.permute.xlu0 %4874
  %4876 = vrot.lane.b32.xlu0 %v4482, 8
  %v4877 = vpop.permute.xlu0 %4876
  %4878 = vrot.lane.b32.xlu0 %v4483, 8
  %v4879 = vpop.permute.xlu0 %4878
  %4880 = vrot.lane.b32.xlu0 %v4484, 8
  %v4881 = vpop.permute.xlu0 %4880
  %4882 = vrot.lane.b32.xlu0 %v4485, 8
  %v4883 = vpop.permute.xlu0 %4882
  %4884 = vrot.lane.b32.xlu0 %v4486, 8
  %v4885 = vpop.permute.xlu0 %4884
  %4886 = vrot.lane.b32.xlu0 %v4487, 8
  %v4887 = vpop.permute.xlu0 %4886
  %4888 = vrot.lane.b32.xlu0 %v4488, 8
  %v4889 = vpop.permute.xlu0 %4888
  %4890 = vrot.lane.b32.xlu0 %v4489, 8
  %v4891 = vpop.permute.xlu0 %4890
  %4892 = vrot.lane.b32.xlu0 %v4490, 8
  %v4893 = vpop.permute.xlu0 %4892
  %4894 = vrot.lane.b32.xlu0 %v4491, 8
  %v4895 = vpop.permute.xlu0 %4894
  %4896 = vrot.lane.b32.xlu0 %v4492, 8
  %v4897 = vpop.permute.xlu0 %4896
  %4898 = vrot.lane.b32.xlu0 %v4493, 8
  %v4899 = vpop.permute.xlu0 %4898
  %4900 = vrot.lane.b32.xlu0 %v4494, 8
  %v4901 = vpop.permute.xlu0 %4900
  %4902 = vrot.lane.b32.xlu0 %v4495, 8
  %v4903 = vpop.permute.xlu0 %4902
  %4904 = vrot.lane.b32.xlu0 %v4496, 8
  %v4905 = vpop.permute.xlu0 %4904
  %4906 = vrot.lane.b32.xlu0 %v4497, 8
  %v4907 = vpop.permute.xlu0 %4906
  %4908 = vrot.lane.b32.xlu0 %v4498, 8
  %v4909 = vpop.permute.xlu0 %4908
  %4910 = vrot.lane.b32.xlu0 %v4499, 8
  %v4911 = vpop.permute.xlu0 %4910
  %4912 = vrot.lane.b32.xlu0 %v4500, 8
  %v4913 = vpop.permute.xlu0 %4912
  %4914 = vrot.lane.b32.xlu0 %v4501, 8
  %v4915 = vpop.permute.xlu0 %4914
  %4916 = vrot.lane.b32.xlu0 %v4502, 8
  %v4917 = vpop.permute.xlu0 %4916
  %4918 = vrot.lane.b32.xlu0 %v4503, 8
  %v4919 = vpop.permute.xlu0 %4918
  %4920 = vrot.lane.b32.xlu0 %v4504, 8
  %v4921 = vpop.permute.xlu0 %4920
  %4986 = vrot.lane.b32.xlu0 %v4505, 12
  %v4987 = vpop.permute.xlu0 %4986
  %4988 = vrot.lane.b32.xlu0 %v4506, 12
  %v4989 = vpop.permute.xlu0 %4988
  %4990 = vrot.lane.b32.xlu0 %v4507, 12
  %v4991 = vpop.permute.xlu0 %4990
  %4992 = vrot.lane.b32.xlu0 %v4508, 12
  %v4993 = vpop.permute.xlu0 %4992
  %4994 = vrot.lane.b32.xlu0 %v4509, 12
  %v4995 = vpop.permute.xlu0 %4994
  %4996 = vrot.lane.b32.xlu0 %v4510, 12
  %v4997 = vpop.permute.xlu0 %4996
  %4998 = vrot.lane.b32.xlu0 %v4511, 12
  %v4999 = vpop.permute.xlu0 %4998
  %5000 = vrot.lane.b32.xlu0 %v4512, 12
  %v5001 = vpop.permute.xlu0 %5000
  %5002 = vrot.lane.b32.xlu0 %v4513, 12
  %v5003 = vpop.permute.xlu0 %5002
  %5004 = vrot.lane.b32.xlu0 %v4514, 12
  %v5005 = vpop.permute.xlu0 %5004
  %5006 = vrot.lane.b32.xlu0 %v4515, 12
  %v5007 = vpop.permute.xlu0 %5006
  %5008 = vrot.lane.b32.xlu0 %v4516, 12
  %v5009 = vpop.permute.xlu0 %5008
  %5010 = vrot.lane.b32.xlu0 %v4517, 12
  %v5011 = vpop.permute.xlu0 %5010
  %5012 = vrot.lane.b32.xlu0 %v4518, 12
  %v5013 = vpop.permute.xlu0 %5012
  %5014 = vrot.lane.b32.xlu0 %v4519, 12
  %v5015 = vpop.permute.xlu0 %5014
  %5016 = vrot.lane.b32.xlu0 %v4520, 12
  %v5017 = vpop.permute.xlu0 %5016
  %5018 = vrot.lane.b32.xlu0 %v4521, 12
  %v5019 = vpop.permute.xlu0 %5018
  %5020 = vrot.lane.b32.xlu0 %v4522, 12
  %v5021 = vpop.permute.xlu0 %5020
  %5022 = vrot.lane.b32.xlu0 %v4523, 12
  %v5023 = vpop.permute.xlu0 %5022
  %5024 = vrot.lane.b32.xlu0 %v4524, 12
  %v5025 = vpop.permute.xlu0 %5024
  %5026 = vrot.lane.b32.xlu0 %v4525, 12
  %v5027 = vpop.permute.xlu0 %5026
  %5028 = vrot.lane.b32.xlu0 %v4526, 12
  %v5029 = vpop.permute.xlu0 %5028
  %5030 = vrot.lane.b32.xlu0 %v4527, 12
  %v5031 = vpop.permute.xlu0 %5030
  %5032 = vrot.lane.b32.xlu0 %v4528, 12
  %v5033 = vpop.permute.xlu0 %5032
  %5034 = vrot.lane.b32.xlu0 %v4529, 12
  %v5035 = vpop.permute.xlu0 %5034
  %5036 = vrot.lane.b32.xlu0 %v4530, 12
  %v5037 = vpop.permute.xlu0 %5036
  %5038 = vrot.lane.b32.xlu0 %v4531, 12
  %v5039 = vpop.permute.xlu0 %5038
  %5040 = vrot.lane.b32.xlu0 %v4532, 12
  %v5041 = vpop.permute.xlu0 %5040
  %5042 = vrot.lane.b32.xlu0 %v4533, 12
  %v5043 = vpop.permute.xlu0 %5042
  %5044 = vrot.lane.b32.xlu0 %v4534, 12
  %v5045 = vpop.permute.xlu0 %5044
  %5046 = vrot.lane.b32.xlu0 %v4535, 12
  %v5047 = vpop.permute.xlu0 %5046
  %5048 = vrot.lane.b32.xlu0 %v4536, 12
  %v5049 = vpop.permute.xlu0 %5048
  %5114 = vrot.lane.b32.xlu0 %v4537, 16
  %v5115 = vpop.permute.xlu0 %5114
  %5116 = vrot.lane.b32.xlu0 %v4538, 16
  %v5117 = vpop.permute.xlu0 %5116
  %5118 = vrot.lane.b32.xlu0 %v4539, 16
  %v5119 = vpop.permute.xlu0 %5118
  %5120 = vrot.lane.b32.xlu0 %v4540, 16
  %v5121 = vpop.permute.xlu0 %5120
  %5122 = vrot.lane.b32.xlu0 %v4541, 16
  %v5123 = vpop.permute.xlu0 %5122
  %5124 = vrot.lane.b32.xlu0 %v4542, 16
  %v5125 = vpop.permute.xlu0 %5124
  %5126 = vrot.lane.b32.xlu0 %v4543, 16
  %v5127 = vpop.permute.xlu0 %5126
  %5128 = vrot.lane.b32.xlu0 %v4544, 16
  %v5129 = vpop.permute.xlu0 %5128
  %5130 = vrot.lane.b32.xlu0 %v4545, 16
  %v5131 = vpop.permute.xlu0 %5130
  %5132 = vrot.lane.b32.xlu0 %v4546, 16
  %v5133 = vpop.permute.xlu0 %5132
  %5134 = vrot.lane.b32.xlu0 %v4547, 16
  %v5135 = vpop.permute.xlu0 %5134
  %5136 = vrot.lane.b32.xlu0 %v4548, 16
  %v5137 = vpop.permute.xlu0 %5136
  %5138 = vrot.lane.b32.xlu0 %v4549, 16
  %v5139 = vpop.permute.xlu0 %5138
  %5140 = vrot.lane.b32.xlu0 %v4550, 16
  %v5141 = vpop.permute.xlu0 %5140
  %5142 = vrot.lane.b32.xlu0 %v4551, 16
  %v5143 = vpop.permute.xlu0 %5142
  %5144 = vrot.lane.b32.xlu0 %v4552, 16
  %v5145 = vpop.permute.xlu0 %5144
  %5146 = vrot.lane.b32.xlu0 %v4553, 16
  %v5147 = vpop.permute.xlu0 %5146
  %5148 = vrot.lane.b32.xlu0 %v4554, 16
  %v5149 = vpop.permute.xlu0 %5148
  %5150 = vrot.lane.b32.xlu0 %v4555, 16
  %v5151 = vpop.permute.xlu0 %5150
  %5152 = vrot.lane.b32.xlu0 %v4556, 16
  %v5153 = vpop.permute.xlu0 %5152
  %5154 = vrot.lane.b32.xlu0 %v4557, 16
  %v5155 = vpop.permute.xlu0 %5154
  %5156 = vrot.lane.b32.xlu0 %v4558, 16
  %v5157 = vpop.permute.xlu0 %5156
  %5158 = vrot.lane.b32.xlu0 %v4559, 16
  %v5159 = vpop.permute.xlu0 %5158
  %5160 = vrot.lane.b32.xlu0 %v4560, 16
  %v5161 = vpop.permute.xlu0 %5160
  %5162 = vrot.lane.b32.xlu0 %v4561, 16
  %v5163 = vpop.permute.xlu0 %5162
  %5164 = vrot.lane.b32.xlu0 %v4562, 16
  %v5165 = vpop.permute.xlu0 %5164
  %5166 = vrot.lane.b32.xlu0 %v4563, 16
  %v5167 = vpop.permute.xlu0 %5166
  %5168 = vrot.lane.b32.xlu0 %v4564, 16
  %v5169 = vpop.permute.xlu0 %5168
  %5170 = vrot.lane.b32.xlu0 %v4565, 16
  %v5171 = vpop.permute.xlu0 %5170
  %5172 = vrot.lane.b32.xlu0 %v4566, 16
  %v5173 = vpop.permute.xlu0 %5172
  %5174 = vrot.lane.b32.xlu0 %v4567, 16
  %v5175 = vpop.permute.xlu0 %5174
  %5176 = vrot.lane.b32.xlu0 %v4568, 16
  %v5177 = vpop.permute.xlu0 %5176
  %5242 = vrot.lane.b32.xlu0 %v4569, 20
  %v5243 = vpop.permute.xlu0 %5242
  %5244 = vrot.lane.b32.xlu0 %v4570, 20
  %v5245 = vpop.permute.xlu0 %5244
  %5246 = vrot.lane.b32.xlu0 %v4571, 20
  %v5247 = vpop.permute.xlu0 %5246
  %5248 = vrot.lane.b32.xlu0 %v4572, 20
  %v5249 = vpop.permute.xlu0 %5248
  %5250 = vrot.lane.b32.xlu0 %v4573, 20
  %v5251 = vpop.permute.xlu0 %5250
  %5252 = vrot.lane.b32.xlu0 %v4574, 20
  %v5253 = vpop.permute.xlu0 %5252
  %5254 = vrot.lane.b32.xlu0 %v4575, 20
  %v5255 = vpop.permute.xlu0 %5254
  %5256 = vrot.lane.b32.xlu0 %v4576, 20
  %v5257 = vpop.permute.xlu0 %5256
  %5258 = vrot.lane.b32.xlu0 %v4577, 20
  %v5259 = vpop.permute.xlu0 %5258
  %5260 = vrot.lane.b32.xlu0 %v4578, 20
  %v5261 = vpop.permute.xlu0 %5260
  %5262 = vrot.lane.b32.xlu0 %v4579, 20
  %v5263 = vpop.permute.xlu0 %5262
  %5264 = vrot.lane.b32.xlu0 %v4580, 20
  %v5265 = vpop.permute.xlu0 %5264
  %5266 = vrot.lane.b32.xlu0 %v4581, 20
  %v5267 = vpop.permute.xlu0 %5266
  %5268 = vrot.lane.b32.xlu0 %v4582, 20
  %v5269 = vpop.permute.xlu0 %5268
  %5270 = vrot.lane.b32.xlu0 %v4583, 20
  %v5271 = vpop.permute.xlu0 %5270
  %5272 = vrot.lane.b32.xlu0 %v4584, 20
  %v5273 = vpop.permute.xlu0 %5272
  %5274 = vrot.lane.b32.xlu0 %v4585, 20
  %v5275 = vpop.permute.xlu0 %5274
  %5276 = vrot.lane.b32.xlu0 %v4586, 20
  %v5277 = vpop.permute.xlu0 %5276
  %5278 = vrot.lane.b32.xlu0 %v4587, 20
  %v5279 = vpop.permute.xlu0 %5278
  %5280 = vrot.lane.b32.xlu0 %v4588, 20
  %v5281 = vpop.permute.xlu0 %5280
  %5282 = vrot.lane.b32.xlu0 %v4589, 20
  %v5283 = vpop.permute.xlu0 %5282
  %5284 = vrot.lane.b32.xlu0 %v4590, 20
  %v5285 = vpop.permute.xlu0 %5284
  %5286 = vrot.lane.b32.xlu0 %v4591, 20
  %v5287 = vpop.permute.xlu0 %5286
  %5288 = vrot.lane.b32.xlu0 %v4592, 20
  %v5289 = vpop.permute.xlu0 %5288
  %5290 = vrot.lane.b32.xlu0 %v4593, 20
  %v5291 = vpop.permute.xlu0 %5290
  %5292 = vrot.lane.b32.xlu0 %v4594, 20
  %v5293 = vpop.permute.xlu0 %5292
  %5294 = vrot.lane.b32.xlu0 %v4595, 20
  %v5295 = vpop.permute.xlu0 %5294
  %5296 = vrot.lane.b32.xlu0 %v4596, 20
  %v5297 = vpop.permute.xlu0 %5296
  %5298 = vrot.lane.b32.xlu0 %v4597, 20
  %v5299 = vpop.permute.xlu0 %5298
  %5300 = vrot.lane.b32.xlu0 %v4598, 20
  %v5301 = vpop.permute.xlu0 %5300
  %5302 = vrot.lane.b32.xlu0 %v4599, 20
  %v5303 = vpop.permute.xlu0 %5302
  %5304 = vrot.lane.b32.xlu0 %v4600, 20
  %v5305 = vpop.permute.xlu0 %5304
  %5370 = vrot.lane.b32.xlu0 %v4602, 24
  %v5371 = vpop.permute.xlu0 %5370
  %5372 = vrot.lane.b32.xlu0 %v4603, 24
  %v5373 = vpop.permute.xlu0 %5372
  %5374 = vrot.lane.b32.xlu0 %v4604, 24
  %v5375 = vpop.permute.xlu0 %5374
  %5376 = vrot.lane.b32.xlu0 %v4605, 24
  %v5377 = vpop.permute.xlu0 %5376
  %5378 = vrot.lane.b32.xlu0 %v4606, 24
  %v5379 = vpop.permute.xlu0 %5378
  %5380 = vrot.lane.b32.xlu0 %v4607, 24
  %v5381 = vpop.permute.xlu0 %5380
  %5382 = vrot.lane.b32.xlu0 %v4608, 24
  %v5383 = vpop.permute.xlu0 %5382
  %5384 = vrot.lane.b32.xlu0 %v4609, 24
  %v5385 = vpop.permute.xlu0 %5384
  %5386 = vrot.lane.b32.xlu0 %v4610, 24
  %v5387 = vpop.permute.xlu0 %5386
  %5388 = vrot.lane.b32.xlu0 %v4611, 24
  %v5389 = vpop.permute.xlu0 %5388
  %5390 = vrot.lane.b32.xlu0 %v4612, 24
  %v5391 = vpop.permute.xlu0 %5390
  %5392 = vrot.lane.b32.xlu0 %v4613, 24
  %v5393 = vpop.permute.xlu0 %5392
  %5394 = vrot.lane.b32.xlu0 %v4614, 24
  %v5395 = vpop.permute.xlu0 %5394
  %5396 = vrot.lane.b32.xlu0 %v4615, 24
  %v5397 = vpop.permute.xlu0 %5396
  %5398 = vrot.lane.b32.xlu0 %v4616, 24
  %v5399 = vpop.permute.xlu0 %5398
  %5400 = vrot.lane.b32.xlu0 %v4617, 24
  %v5401 = vpop.permute.xlu0 %5400
  %5402 = vrot.lane.b32.xlu0 %v4618, 24
  %v5403 = vpop.permute.xlu0 %5402
  %5404 = vrot.lane.b32.xlu0 %v4619, 24
  %v5405 = vpop.permute.xlu0 %5404
  %5406 = vrot.lane.b32.xlu0 %v4620, 24
  %v5407 = vpop.permute.xlu0 %5406
  %5408 = vrot.lane.b32.xlu0 %v4621, 24
  %v5409 = vpop.permute.xlu0 %5408
  %5410 = vrot.lane.b32.xlu0 %v4622, 24
  %v5411 = vpop.permute.xlu0 %5410
  %5412 = vrot.lane.b32.xlu0 %v4623, 24
  %v5413 = vpop.permute.xlu0 %5412
  %5414 = vrot.lane.b32.xlu0 %v4624, 24
  %v5415 = vpop.permute.xlu0 %5414
  %5416 = vrot.lane.b32.xlu0 %v4625, 24
  %v5417 = vpop.permute.xlu0 %5416
  %5418 = vrot.lane.b32.xlu0 %v4626, 24
  %v5419 = vpop.permute.xlu0 %5418
  %5420 = vrot.lane.b32.xlu0 %v4627, 24
  %v5421 = vpop.permute.xlu0 %5420
  %5422 = vrot.lane.b32.xlu0 %v4628, 24
  %v5423 = vpop.permute.xlu0 %5422
  %5424 = vrot.lane.b32.xlu0 %v4629, 24
  %v5425 = vpop.permute.xlu0 %5424
  %5426 = vrot.lane.b32.xlu0 %v4630, 24
  %v5427 = vpop.permute.xlu0 %5426
  %5428 = vrot.lane.b32.xlu0 %v4631, 24
  %v5429 = vpop.permute.xlu0 %5428
  %5430 = vrot.lane.b32.xlu0 %v4632, 24
  %v5431 = vpop.permute.xlu0 %5430
  %5432 = vrot.lane.b32.xlu0 %v4633, 24
  %v5433 = vpop.permute.xlu0 %5432
  %5498 = vrot.lane.b32.xlu0 %v4634, 28
  %v5499 = vpop.permute.xlu0 %5498
  %5500 = vrot.lane.b32.xlu0 %v4635, 28
  %v5501 = vpop.permute.xlu0 %5500
  %5502 = vrot.lane.b32.xlu0 %v4636, 28
  %v5503 = vpop.permute.xlu0 %5502
  %5504 = vrot.lane.b32.xlu0 %v4637, 28
  %v5505 = vpop.permute.xlu0 %5504
  %5506 = vrot.lane.b32.xlu0 %v4638, 28
  %v5507 = vpop.permute.xlu0 %5506
  %5508 = vrot.lane.b32.xlu0 %v4639, 28
  %v5509 = vpop.permute.xlu0 %5508
  %5510 = vrot.lane.b32.xlu0 %v4640, 28
  %v5511 = vpop.permute.xlu0 %5510
  %5512 = vrot.lane.b32.xlu0 %v4641, 28
  %v5513 = vpop.permute.xlu0 %5512
  %5514 = vrot.lane.b32.xlu0 %v4642, 28
  %v5515 = vpop.permute.xlu0 %5514
  %5516 = vrot.lane.b32.xlu0 %v4643, 28
  %v5517 = vpop.permute.xlu0 %5516
  %5518 = vrot.lane.b32.xlu0 %v4644, 28
  %v5519 = vpop.permute.xlu0 %5518
  %5520 = vrot.lane.b32.xlu0 %v4645, 28
  %v5521 = vpop.permute.xlu0 %5520
  %5522 = vrot.lane.b32.xlu0 %v4646, 28
  %v5523 = vpop.permute.xlu0 %5522
  %5524 = vrot.lane.b32.xlu0 %v4647, 28
  %v5525 = vpop.permute.xlu0 %5524
  %5526 = vrot.lane.b32.xlu0 %v4648, 28
  %v5527 = vpop.permute.xlu0 %5526
  %5528 = vrot.lane.b32.xlu0 %v4649, 28
  %v5529 = vpop.permute.xlu0 %5528
  %5530 = vrot.lane.b32.xlu0 %v4650, 28
  %v5531 = vpop.permute.xlu0 %5530
  %5532 = vrot.lane.b32.xlu0 %v4651, 28
  %v5533 = vpop.permute.xlu0 %5532
  %5534 = vrot.lane.b32.xlu0 %v4652, 28
  %v5535 = vpop.permute.xlu0 %5534
  %5536 = vrot.lane.b32.xlu0 %v4653, 28
  %v5537 = vpop.permute.xlu0 %5536
  %5538 = vrot.lane.b32.xlu0 %v4654, 28
  %v5539 = vpop.permute.xlu0 %5538
  %5540 = vrot.lane.b32.xlu0 %v4655, 28
  %v5541 = vpop.permute.xlu0 %5540
  %5542 = vrot.lane.b32.xlu0 %v4656, 28
  %v5543 = vpop.permute.xlu0 %5542
  %5544 = vrot.lane.b32.xlu0 %v4657, 28
  %v5545 = vpop.permute.xlu0 %5544
  %5546 = vrot.lane.b32.xlu0 %v4658, 28
  %v5547 = vpop.permute.xlu0 %5546
  %5548 = vrot.lane.b32.xlu0 %v4659, 28
  %v5549 = vpop.permute.xlu0 %5548
  %5550 = vrot.lane.b32.xlu0 %v4660, 28
  %v5551 = vpop.permute.xlu0 %5550
  %5552 = vrot.lane.b32.xlu0 %v4661, 28
  %v5553 = vpop.permute.xlu0 %5552
  %5554 = vrot.lane.b32.xlu0 %v4662, 28
  %v5555 = vpop.permute.xlu0 %5554
  %5556 = vrot.lane.b32.xlu0 %v4663, 28
  %v5557 = vpop.permute.xlu0 %5556
  %5558 = vrot.lane.b32.xlu0 %v4664, 28
  %v5559 = vpop.permute.xlu0 %5558
  %5560 = vrot.lane.b32.xlu0 %v4665, 28
  %v5561 = vpop.permute.xlu0 %5560
  %5626 = vrot.lane.b32.xlu0 %v4666, 32
  %v5627 = vpop.permute.xlu0 %5626
  %5628 = vrot.lane.b32.xlu0 %v4667, 32
  %v5629 = vpop.permute.xlu0 %5628
  %5630 = vrot.lane.b32.xlu0 %v4668, 32
  %v5631 = vpop.permute.xlu0 %5630
  %5632 = vrot.lane.b32.xlu0 %v4669, 32
  %v5633 = vpop.permute.xlu0 %5632
  %5634 = vrot.lane.b32.xlu0 %v4670, 32
  %v5635 = vpop.permute.xlu0 %5634
  %5636 = vrot.lane.b32.xlu0 %v4671, 32
  %v5637 = vpop.permute.xlu0 %5636
  %5638 = vrot.lane.b32.xlu0 %v4672, 32
  %v5639 = vpop.permute.xlu0 %5638
  %5640 = vrot.lane.b32.xlu0 %v4673, 32
  %v5641 = vpop.permute.xlu0 %5640
  %5642 = vrot.lane.b32.xlu0 %v4674, 32
  %v5643 = vpop.permute.xlu0 %5642
  %5644 = vrot.lane.b32.xlu0 %v4675, 32
  %v5645 = vpop.permute.xlu0 %5644
  %5646 = vrot.lane.b32.xlu0 %v4676, 32
  %v5647 = vpop.permute.xlu0 %5646
  %5648 = vrot.lane.b32.xlu0 %v4677, 32
  %v5649 = vpop.permute.xlu0 %5648
  %5650 = vrot.lane.b32.xlu0 %v4678, 32
  %v5651 = vpop.permute.xlu0 %5650
  %5652 = vrot.lane.b32.xlu0 %v4679, 32
  %v5653 = vpop.permute.xlu0 %5652
  %5654 = vrot.lane.b32.xlu0 %v4680, 32
  %v5655 = vpop.permute.xlu0 %5654
  %5656 = vrot.lane.b32.xlu0 %v4681, 32
  %v5657 = vpop.permute.xlu0 %5656
  %5658 = vrot.lane.b32.xlu0 %v4682, 32
  %v5659 = vpop.permute.xlu0 %5658
  %5660 = vrot.lane.b32.xlu0 %v4683, 32
  %v5661 = vpop.permute.xlu0 %5660
  %5662 = vrot.lane.b32.xlu0 %v4684, 32
  %v5663 = vpop.permute.xlu0 %5662
  %5664 = vrot.lane.b32.xlu0 %v4685, 32
  %v5665 = vpop.permute.xlu0 %5664
  %5666 = vrot.lane.b32.xlu0 %v4686, 32
  %v5667 = vpop.permute.xlu0 %5666
  %5668 = vrot.lane.b32.xlu0 %v4687, 32
  %v5669 = vpop.permute.xlu0 %5668
  %5670 = vrot.lane.b32.xlu0 %v4688, 32
  %v5671 = vpop.permute.xlu0 %5670
  %5672 = vrot.lane.b32.xlu0 %v4689, 32
  %v5673 = vpop.permute.xlu0 %5672
  %5674 = vrot.lane.b32.xlu0 %v4690, 32
  %v5675 = vpop.permute.xlu0 %5674
  %5676 = vrot.lane.b32.xlu0 %v4691, 32
  %v5677 = vpop.permute.xlu0 %5676
  %5678 = vrot.lane.b32.xlu0 %v4692, 32
  %v5679 = vpop.permute.xlu0 %5678
  %5680 = vrot.lane.b32.xlu0 %v4693, 32
  %v5681 = vpop.permute.xlu0 %5680
  %5682 = vrot.lane.b32.xlu0 %v4694, 32
  %v5683 = vpop.permute.xlu0 %5682
  %5684 = vrot.lane.b32.xlu0 %v4695, 32
  %v5685 = vpop.permute.xlu0 %5684
  %5686 = vrot.lane.b32.xlu0 %v4696, 32
  %v5687 = vpop.permute.xlu0 %5686
  %5688 = vrot.lane.b32.xlu0 %v4697, 32
  %v5689 = vpop.permute.xlu0 %5688
  %v5722 = vsel %vm26, %v4409, %v4731
  %v5723 = vsel %vm26, %v4410, %v4733
  %v5724 = vsel %vm26, %v4411, %v4735
  %v5725 = vsel %vm26, %v4412, %v4737
  %v5726 = vsel %vm26, %v4413, %v4739
  %v5727 = vsel %vm26, %v4414, %v4741
  %v5728 = vsel %vm26, %v4415, %v4743
  %v5729 = vsel %vm26, %v4416, %v4745
  %v5730 = vsel %vm26, %v4417, %v4747
  %v5731 = vsel %vm26, %v4418, %v4749
  %v5732 = vsel %vm26, %v4419, %v4751
  %v5733 = vsel %vm26, %v4420, %v4753
  %v5734 = vsel %vm26, %v4421, %v4755
  %v5735 = vsel %vm26, %v4422, %v4757
  %v5736 = vsel %vm26, %v4423, %v4759
  %v5737 = vsel %vm26, %v4424, %v4761
  %v5738 = vsel %vm26, %v4425, %v4763
  %v5739 = vsel %vm26, %v4426, %v4765
  %v5740 = vsel %vm26, %v4427, %v4767
  %v5741 = vsel %vm26, %v4428, %v4769
  %v5742 = vsel %vm26, %v4429, %v4771
  %v5743 = vsel %vm26, %v4430, %v4773
  %v5744 = vsel %vm26, %v4431, %v4775
  %v5745 = vsel %vm26, %v4432, %v4777
  %v5746 = vsel %vm26, %v4433, %v4779
  %v5747 = vsel %vm26, %v4434, %v4781
  %v5748 = vsel %vm26, %v4435, %v4783
  %v5749 = vsel %vm26, %v4436, %v4785
  %v5750 = vsel %vm26, %v4437, %v4787
  %v5751 = vsel %vm26, %v4438, %v4789
  %v5752 = vsel %vm26, %v4439, %v4791
  %v5753 = vsel %vm26, %v4440, %v4793
  %v5754 = vsel %vm1684, %v5722, %v4859
  %v5755 = vsel %vm1684, %v5723, %v4861
  %v5756 = vsel %vm1684, %v5724, %v4863
  %v5757 = vsel %vm1684, %v5725, %v4865
  %v5758 = vsel %vm1684, %v5726, %v4867
  %v5759 = vsel %vm1684, %v5727, %v4869
  %v5760 = vsel %vm1684, %v5728, %v4871
  %v5761 = vsel %vm1684, %v5729, %v4873
  %v5762 = vsel %vm1684, %v5730, %v4875
  %v5763 = vsel %vm1684, %v5731, %v4877
  %v5764 = vsel %vm1684, %v5732, %v4879
  %v5765 = vsel %vm1684, %v5733, %v4881
  %v5766 = vsel %vm1684, %v5734, %v4883
  %v5767 = vsel %vm1684, %v5735, %v4885
  %v5768 = vsel %vm1684, %v5736, %v4887
  %v5769 = vsel %vm1684, %v5737, %v4889
  %v5770 = vsel %vm1684, %v5738, %v4891
  %v5771 = vsel %vm1684, %v5739, %v4893
  %v5772 = vsel %vm1684, %v5740, %v4895
  %v5773 = vsel %vm1684, %v5741, %v4897
  %v5774 = vsel %vm1684, %v5742, %v4899
  %v5775 = vsel %vm1684, %v5743, %v4901
  %v5776 = vsel %vm1684, %v5744, %v4903
  %v5777 = vsel %vm1684, %v5745, %v4905
  %v5778 = vsel %vm1684, %v5746, %v4907
  %v5779 = vsel %vm1684, %v5747, %v4909
  %v5780 = vsel %vm1684, %v5748, %v4911
  %v5781 = vsel %vm1684, %v5749, %v4913
  %v5782 = vsel %vm1684, %v5750, %v4915
  %v5783 = vsel %vm1684, %v5751, %v4917
  %v5784 = vsel %vm1684, %v5752, %v4919
  %v5785 = vsel %vm1684, %v5753, %v4921
  %v5786 = vsel %vm1717, %v5754, %v4987
  %v5787 = vsel %vm1717, %v5755, %v4989
  %v5788 = vsel %vm1717, %v5756, %v4991
  %v5789 = vsel %vm1717, %v5757, %v4993
  %v5790 = vsel %vm1717, %v5758, %v4995
  %v5791 = vsel %vm1717, %v5759, %v4997
  %v5792 = vsel %vm1717, %v5760, %v4999
  %v5793 = vsel %vm1717, %v5761, %v5001
  %v5794 = vsel %vm1717, %v5762, %v5003
  %v5795 = vsel %vm1717, %v5763, %v5005
  %v5796 = vsel %vm1717, %v5764, %v5007
  %v5797 = vsel %vm1717, %v5765, %v5009
  %v5798 = vsel %vm1717, %v5766, %v5011
  %v5799 = vsel %vm1717, %v5767, %v5013
  %v5800 = vsel %vm1717, %v5768, %v5015
  %v5801 = vsel %vm1717, %v5769, %v5017
  %v5802 = vsel %vm1717, %v5770, %v5019
  %v5803 = vsel %vm1717, %v5771, %v5021
  %v5804 = vsel %vm1717, %v5772, %v5023
  %v5805 = vsel %vm1717, %v5773, %v5025
  %v5806 = vsel %vm1717, %v5774, %v5027
  %v5807 = vsel %vm1717, %v5775, %v5029
  %v5808 = vsel %vm1717, %v5776, %v5031
  %v5809 = vsel %vm1717, %v5777, %v5033
  %v5810 = vsel %vm1717, %v5778, %v5035
  %v5811 = vsel %vm1717, %v5779, %v5037
  %v5812 = vsel %vm1717, %v5780, %v5039
  %v5813 = vsel %vm1717, %v5781, %v5041
  %v5814 = vsel %vm1717, %v5782, %v5043
  %v5815 = vsel %vm1717, %v5783, %v5045
  %v5816 = vsel %vm1717, %v5784, %v5047
  %v5817 = vsel %vm1717, %v5785, %v5049
  %v5818 = vsel %vm1750, %v5786, %v5115
  %v5819 = vsel %vm1750, %v5787, %v5117
  %v5820 = vsel %vm1750, %v5788, %v5119
  %v5821 = vsel %vm1750, %v5789, %v5121
  %v5822 = vsel %vm1750, %v5790, %v5123
  %v5823 = vsel %vm1750, %v5791, %v5125
  %v5824 = vsel %vm1750, %v5792, %v5127
  %v5825 = vsel %vm1750, %v5793, %v5129
  %v5826 = vsel %vm1750, %v5794, %v5131
  %v5827 = vsel %vm1750, %v5795, %v5133
  %v5828 = vsel %vm1750, %v5796, %v5135
  %v5829 = vsel %vm1750, %v5797, %v5137
  %v5830 = vsel %vm1750, %v5798, %v5139
  %v5831 = vsel %vm1750, %v5799, %v5141
  %v5832 = vsel %vm1750, %v5800, %v5143
  %v5833 = vsel %vm1750, %v5801, %v5145
  %v5834 = vsel %vm1750, %v5802, %v5147
  %v5835 = vsel %vm1750, %v5803, %v5149
  %v5836 = vsel %vm1750, %v5804, %v5151
  %v5837 = vsel %vm1750, %v5805, %v5153
  %v5838 = vsel %vm1750, %v5806, %v5155
  %v5839 = vsel %vm1750, %v5807, %v5157
  %v5840 = vsel %vm1750, %v5808, %v5159
  %v5841 = vsel %vm1750, %v5809, %v5161
  %v5842 = vsel %vm1750, %v5810, %v5163
  %v5843 = vsel %vm1750, %v5811, %v5165
  %v5844 = vsel %vm1750, %v5812, %v5167
  %v5845 = vsel %vm1750, %v5813, %v5169
  %v5846 = vsel %vm1750, %v5814, %v5171
  %v5847 = vsel %vm1750, %v5815, %v5173
  %v5848 = vsel %vm1750, %v5816, %v5175
  %v5849 = vsel %vm1750, %v5817, %v5177
  %v5850 = vsel %vm1783, %v5818, %v5243
  %v5851 = vsel %vm1783, %v5819, %v5245
  %v5852 = vsel %vm1783, %v5820, %v5247
  %v5853 = vsel %vm1783, %v5821, %v5249
  %v5854 = vsel %vm1783, %v5822, %v5251
  %v5855 = vsel %vm1783, %v5823, %v5253
  %v5856 = vsel %vm1783, %v5824, %v5255
  %v5857 = vsel %vm1783, %v5825, %v5257
  %v5858 = vsel %vm1783, %v5826, %v5259
  %v5859 = vsel %vm1783, %v5827, %v5261
  %v5860 = vsel %vm1783, %v5828, %v5263
  %v5861 = vsel %vm1783, %v5829, %v5265
  %v5862 = vsel %vm1783, %v5830, %v5267
  %v5863 = vsel %vm1783, %v5831, %v5269
  %v5864 = vsel %vm1783, %v5832, %v5271
  %v5865 = vsel %vm1783, %v5833, %v5273
  %v5866 = vsel %vm1783, %v5834, %v5275
  %v5867 = vsel %vm1783, %v5835, %v5277
  %v5868 = vsel %vm1783, %v5836, %v5279
  %v5869 = vsel %vm1783, %v5837, %v5281
  %v5870 = vsel %vm1783, %v5838, %v5283
  %v5871 = vsel %vm1783, %v5839, %v5285
  %v5872 = vsel %vm1783, %v5840, %v5287
  %v5873 = vsel %vm1783, %v5841, %v5289
  %v5874 = vsel %vm1783, %v5842, %v5291
  %v5875 = vsel %vm1783, %v5843, %v5293
  %v5876 = vsel %vm1783, %v5844, %v5295
  %v5877 = vsel %vm1783, %v5845, %v5297
  %v5878 = vsel %vm1783, %v5846, %v5299
  %v5879 = vsel %vm1783, %v5847, %v5301
  %v5880 = vsel %vm1783, %v5848, %v5303
  %v5881 = vsel %vm1783, %v5849, %v5305
  %v5882 = vsel %vm1816, %v5850, %v5371
  %v5883 = vsel %vm1816, %v5851, %v5373
  %v5884 = vsel %vm1816, %v5852, %v5375
  %v5885 = vsel %vm1816, %v5853, %v5377
  %v5886 = vsel %vm1816, %v5854, %v5379
  %v5887 = vsel %vm1816, %v5855, %v5381
  %v5888 = vsel %vm1816, %v5856, %v5383
  %v5889 = vsel %vm1816, %v5857, %v5385
  %v5890 = vsel %vm1816, %v5858, %v5387
  %v5891 = vsel %vm1816, %v5859, %v5389
  %v5892 = vsel %vm1816, %v5860, %v5391
  %v5893 = vsel %vm1816, %v5861, %v5393
  %v5894 = vsel %vm1816, %v5862, %v5395
  %v5895 = vsel %vm1816, %v5863, %v5397
  %v5896 = vsel %vm1816, %v5864, %v5399
  %v5897 = vsel %vm1816, %v5865, %v5401
  %v5898 = vsel %vm1816, %v5866, %v5403
  %v5899 = vsel %vm1816, %v5867, %v5405
  %v5900 = vsel %vm1816, %v5868, %v5407
  %v5901 = vsel %vm1816, %v5869, %v5409
  %v5902 = vsel %vm1816, %v5870, %v5411
  %v5903 = vsel %vm1816, %v5871, %v5413
  %v5904 = vsel %vm1816, %v5872, %v5415
  %v5905 = vsel %vm1816, %v5873, %v5417
  %v5906 = vsel %vm1816, %v5874, %v5419
  %v5907 = vsel %vm1816, %v5875, %v5421
  %v5908 = vsel %vm1816, %v5876, %v5423
  %v5909 = vsel %vm1816, %v5877, %v5425
  %v5910 = vsel %vm1816, %v5878, %v5427
  %v5911 = vsel %vm1816, %v5879, %v5429
  %v5912 = vsel %vm1816, %v5880, %v5431
  %v5913 = vsel %vm1816, %v5881, %v5433
  %v5914 = vsel %vm1849, %v5882, %v5499
  %v5915 = vsel %vm1849, %v5883, %v5501
  %v5916 = vsel %vm1849, %v5884, %v5503
  %v5917 = vsel %vm1849, %v5885, %v5505
  %v5918 = vsel %vm1849, %v5886, %v5507
  %v5919 = vsel %vm1849, %v5887, %v5509
  %v5920 = vsel %vm1849, %v5888, %v5511
  %v5921 = vsel %vm1849, %v5889, %v5513
  %v5922 = vsel %vm1849, %v5890, %v5515
  %v5923 = vsel %vm1849, %v5891, %v5517
  %v5924 = vsel %vm1849, %v5892, %v5519
  %v5925 = vsel %vm1849, %v5893, %v5521
  %v5926 = vsel %vm1849, %v5894, %v5523
  %v5927 = vsel %vm1849, %v5895, %v5525
  %v5928 = vsel %vm1849, %v5896, %v5527
  %v5929 = vsel %vm1849, %v5897, %v5529
  %v5930 = vsel %vm1849, %v5898, %v5531
  %v5931 = vsel %vm1849, %v5899, %v5533
  %v5932 = vsel %vm1849, %v5900, %v5535
  %v5933 = vsel %vm1849, %v5901, %v5537
  %v5934 = vsel %vm1849, %v5902, %v5539
  %v5935 = vsel %vm1849, %v5903, %v5541
  %v5936 = vsel %vm1849, %v5904, %v5543
  %v5937 = vsel %vm1849, %v5905, %v5545
  %v5938 = vsel %vm1849, %v5906, %v5547
  %v5939 = vsel %vm1849, %v5907, %v5549
  %v5940 = vsel %vm1849, %v5908, %v5551
  %v5941 = vsel %vm1849, %v5909, %v5553
  %v5942 = vsel %vm1849, %v5910, %v5555
  %v5943 = vsel %vm1849, %v5911, %v5557
  %v5944 = vsel %vm1849, %v5912, %v5559
  %v5945 = vsel %vm1849, %v5913, %v5561
  %v5946 = vsel %vm1882, %v5914, %v5627
  %v5947 = vsel %vm1882, %v5915, %v5629
  %v5948 = vsel %vm1882, %v5916, %v5631
  %v5949 = vsel %vm1882, %v5917, %v5633
  %v5950 = vsel %vm1882, %v5918, %v5635
  %v5951 = vsel %vm1882, %v5919, %v5637
  %v5952 = vsel %vm1882, %v5920, %v5639
  %v5953 = vsel %vm1882, %v5921, %v5641
  %v5954 = vsel %vm1882, %v5922, %v5643
  %v5955 = vsel %vm1882, %v5923, %v5645
  %v5956 = vsel %vm1882, %v5924, %v5647
  %v5957 = vsel %vm1882, %v5925, %v5649
  %v5958 = vsel %vm1882, %v5926, %v5651
  %v5959 = vsel %vm1882, %v5927, %v5653
  %v5960 = vsel %vm1882, %v5928, %v5655
  %v5961 = vsel %vm1882, %v5929, %v5657
  %v5962 = vsel %vm1882, %v5930, %v5659
  %v5963 = vsel %vm1882, %v5931, %v5661
  %v5964 = vsel %vm1882, %v5932, %v5663
  %v5965 = vsel %vm1882, %v5933, %v5665
  %v5966 = vsel %vm1882, %v5934, %v5667
  %v5967 = vsel %vm1882, %v5935, %v5669
  %v5968 = vsel %vm1882, %v5936, %v5671
  %v5969 = vsel %vm1882, %v5937, %v5673
  %v5970 = vsel %vm1882, %v5938, %v5675
  %v5971 = vsel %vm1882, %v5939, %v5677
  %v5972 = vsel %vm1882, %v5940, %v5679
  %v5973 = vsel %vm1882, %v5941, %v5681
  %v5974 = vsel %vm1882, %v5942, %v5683
  %v5975 = vsel %vm1882, %v5943, %v5685
  %v5976 = vsel %vm1882, %v5944, %v5687
  %v5977 = vsel %vm1882, %v5945, %v5689
  %v5979 = vsel %vm1915, %v5946, 0
  %v5982 = vsel %vm1915, %v5947, 0
  %v5985 = vsel %vm1915, %v5948, 0
  %v5988 = vsel %vm1915, %v5949, 0
  %v5991 = vsel %vm1915, %v5950, 0
  %v5994 = vsel %vm1915, %v5951, 0
  %v5997 = vsel %vm1915, %v5952, 0
  %v6000 = vsel %vm1915, %v5953, 0
  %v6003 = vsel %vm1915, %v5954, 0
  %v6006 = vsel %vm1915, %v5955, 0
  %v6009 = vsel %vm1915, %v5956, 0
  %v6012 = vsel %vm1915, %v5957, 0
  %v6015 = vsel %vm1915, %v5958, 0
  %v6018 = vsel %vm1915, %v5959, 0
  %v6021 = vsel %vm1915, %v5960, 0
  %v6024 = vsel %vm1915, %v5961, 0
  %v6027 = vsel %vm1915, %v5962, 0
  %v6030 = vsel %vm1915, %v5963, 0
  %v6033 = vsel %vm1915, %v5964, 0
  %v6036 = vsel %vm1915, %v5965, 0
  %v6039 = vsel %vm1915, %v5966, 0
  %v6042 = vsel %vm1915, %v5967, 0
  %v6045 = vsel %vm1915, %v5968, 0
  %v6048 = vsel %vm1915, %v5969, 0
  %v6051 = vsel %vm1915, %v5970, 0
  %v6054 = vsel %vm1915, %v5971, 0
  %v6057 = vsel %vm1915, %v5972, 0
  %v6060 = vsel %vm1915, %v5973, 0
  %v6063 = vsel %vm1915, %v5974, 0
  %v6066 = vsel %vm1915, %v5975, 0
  %v6069 = vsel %vm1915, %v5976, 0
  %v6072 = vsel %vm1915, %v5977, 0
  %v6075 = vsel %vm2012, %v327, 0
  %6077 = vmatprep.subr.mxu0 0.0
  %6078 = vmatpush1.msra.mxu0 %v323
  %6079 = vmatprep.subr.mxu0 0.0
  %6080 = vmatpush1.msra.mxu0 %v324
  %6081 = vmatprep.subr.mxu0 0.0
  %6082 = vmatpush1.msra.mxu0 %v325
  %6083 = vmatprep.subr.mxu0 0.0
  %6084 = vmatpush1.msra.mxu0 %v326
  %6085 = vmatprep.subr.mxu0 0.0
  %6086 = vmatpush1.msra.mxu0 %v6075
  %6087 = vmatprep.subr.mxu0 0.0
  %6088 = vmatpush1.msra.mxu0 0.0
  %6089 = vmatprep.subr.mxu0 0.0
  %6090 = vmatpush1.msra.mxu0 0.0
  %6091 = vmatprep.subr.mxu0 0.0
  %6092 = vmatpush1.msra.mxu0 0.0
  %6093 = vmatprep.subr.mxu0 0.0
  %6094 = vmatpush1.msra.mxu0 0.0
  %6095 = vmatprep.subr.mxu0 0.0
  %6096 = vmatpush1.msra.mxu0 0.0
  %6097 = vmatprep.subr.mxu0 0.0
  %6098 = vmatpush1.msra.mxu0 0.0
  %6099 = vmatprep.subr.mxu0 0.0
  %6100 = vmatpush1.msra.mxu0 0.0
  %6101 = vmatprep.subr.mxu0 0.0
  %6102 = vmatpush1.msra.mxu0 0.0
  %6103 = vmatprep.subr.mxu0 0.0
  %6104 = vmatpush1.msra.mxu0 0.0
  %6105 = vmatprep.subr.mxu0 0.0
  %6106 = vmatpush1.msra.mxu0 0.0
  %6107 = vmatprep.subr.mxu0 0.0
  %6108 = vmatpush1.msra.mxu0 0.0
  %6109 = vmatprep.subr.mxu0 0.0
  %6110 = vmatpush1.msra.mxu0 0.0
  %6111 = vmatprep.subr.mxu0 0.0
  %6112 = vmatpush1.msra.mxu0 0.0
  %6113 = vmatprep.subr.mxu0 0.0
  %6114 = vmatpush1.msra.mxu0 0.0
  %6115 = vmatprep.subr.mxu0 0.0
  %6116 = vmatpush1.msra.mxu0 0.0
  %6117 = vmatprep.subr.mxu0 0.0
  %6118 = vmatpush1.msra.mxu0 0.0
  %6119 = vmatprep.subr.mxu0 0.0
  %6120 = vmatpush1.msra.mxu0 0.0
  %6121 = vmatprep.subr.mxu0 0.0
  %6122 = vmatpush1.msra.mxu0 0.0
  %6123 = vmatprep.subr.mxu0 0.0
  %6124 = vmatpush1.msra.mxu0 0.0
  %6125 = vmatprep.subr.mxu0 0.0
  %6126 = vmatpush1.msra.mxu0 0.0
  %6127 = vmatprep.subr.mxu0 0.0
  %6128 = vmatpush1.msra.mxu0 0.0
  %6129 = vmatprep.subr.mxu0 0.0
  %6130 = vmatpush1.msra.mxu0 0.0
  %6131 = vmatprep.subr.mxu0 0.0
  %6132 = vmatpush1.msra.mxu0 0.0
  %6133 = vmatprep.subr.mxu0 0.0
  %6134 = vmatpush1.msra.mxu0 0.0
  %6135 = vmatprep.subr.mxu0 0.0
  %6136 = vmatpush1.msra.mxu0 0.0
  %6137 = vmatprep.subr.mxu0 0.0
  %6138 = vmatpush1.msra.mxu0 0.0
  %6139 = vmatprep.subr.mxu0 0.0
  %6140 = vmatpush1.msra.mxu0 0.0
  %6141 = vmatprep.mubr.f32.mxu0 0.0
  %6142 = vmatmul.mubr.f32.gmra.mrb[0].mxu0 %v5979
  %v6143 = vpop.f32.mrb[0].mxu0
  %v6144 = vadd.f32 0.0, %v6143
  %v6145 = vpop.f32.mrb[0].mxu0
  %6146 = vmatprep.mubr.f32.mxu0 0.0
  %6147 = vmatmul.mubr.f32.gmra.mrb[0].mxu0 %v5982
  %v6148 = vpop.f32.mrb[0].mxu0
  %v6149 = vadd.f32 0.0, %v6148
  %v6150 = vpop.f32.mrb[0].mxu0
  %6151 = vmatprep.mubr.f32.mxu0 0.0
  %6152 = vmatmul.mubr.f32.gmra.mrb[0].mxu0 %v5985
  %v6153 = vpop.f32.mrb[0].mxu0
  %v6154 = vadd.f32 0.0, %v6153
  %v6155 = vpop.f32.mrb[0].mxu0
  %6156 = vmatprep.mubr.f32.mxu0 0.0
  %6157 = vmatmul.mubr.f32.gmra.mrb[0].mxu0 %v5988
  %v6158 = vpop.f32.mrb[0].mxu0
  %v6159 = vadd.f32 0.0, %v6158
  %v6160 = vpop.f32.mrb[0].mxu0
  %6161 = vmatprep.mubr.f32.mxu0 0.0
  %6162 = vmatmul.mubr.f32.gmra.mrb[0].mxu0 %v5991
  %v6163 = vpop.f32.mrb[0].mxu0
  %v6164 = vadd.f32 0.0, %v6163
  %v6165 = vpop.f32.mrb[0].mxu0
  %6166 = vmatprep.mubr.f32.mxu0 0.0
  %6167 = vmatmul.mubr.f32.gmra.mrb[0].mxu0 %v5994
  %v6168 = vpop.f32.mrb[0].mxu0
  %v6169 = vadd.f32 0.0, %v6168
  %v6170 = vpop.f32.mrb[0].mxu0
  %6171 = vmatprep.mubr.f32.mxu0 0.0
  %6172 = vmatmul.mubr.f32.gmra.mrb[0].mxu0 %v5997
  %v6173 = vpop.f32.mrb[0].mxu0
  %v6174 = vadd.f32 0.0, %v6173
  %v6175 = vpop.f32.mrb[0].mxu0
  %6176 = vmatprep.mubr.f32.mxu0 0.0
  %6177 = vmatmul.mubr.f32.gmra.mrb[0].mxu0 %v6000
  %v6178 = vpop.f32.mrb[0].mxu0
  %v6179 = vadd.f32 0.0, %v6178
  %v6180 = vpop.f32.mrb[0].mxu0
  %6181 = vmatprep.mubr.f32.mxu0 0.0
  %6182 = vmatmul.mubr.f32.gmra.mrb[0].mxu0 %v6003
  %v6183 = vpop.f32.mrb[0].mxu0
  %v6184 = vadd.f32 0.0, %v6183
  %v6185 = vpop.f32.mrb[0].mxu0
  %6186 = vmatprep.mubr.f32.mxu0 0.0
  %6187 = vmatmul.mubr.f32.gmra.mrb[0].mxu0 %v6006
  %v6188 = vpop.f32.mrb[0].mxu0
  %v6189 = vadd.f32 0.0, %v6188
  %v6190 = vpop.f32.mrb[0].mxu0
  %6191 = vmatprep.mubr.f32.mxu0 0.0
  %6192 = vmatmul.mubr.f32.gmra.mrb[0].mxu0 %v6009
  %v6193 = vpop.f32.mrb[0].mxu0
  %v6194 = vadd.f32 0.0, %v6193
  %v6195 = vpop.f32.mrb[0].mxu0
  %6196 = vmatprep.mubr.f32.mxu0 0.0
  %6197 = vmatmul.mubr.f32.gmra.mrb[0].mxu0 %v6012
  %v6198 = vpop.f32.mrb[0].mxu0
  %v6199 = vadd.f32 0.0, %v6198
  %v6200 = vpop.f32.mrb[0].mxu0
  %6201 = vmatprep.mubr.f32.mxu0 0.0
  %6202 = vmatmul.mubr.f32.gmra.mrb[0].mxu0 %v6015
  %v6203 = vpop.f32.mrb[0].mxu0
  %v6204 = vadd.f32 0.0, %v6203
  %v6205 = vpop.f32.mrb[0].mxu0
  %6206 = vmatprep.mubr.f32.mxu0 0.0
  %6207 = vmatmul.mubr.f32.gmra.mrb[0].mxu0 %v6018
  %v6208 = vpop.f32.mrb[0].mxu0
  %v6209 = vadd.f32 0.0, %v6208
  %v6210 = vpop.f32.mrb[0].mxu0
  %6211 = vmatprep.mubr.f32.mxu0 0.0
  %6212 = vmatmul.mubr.f32.gmra.mrb[0].mxu0 %v6021
  %v6213 = vpop.f32.mrb[0].mxu0
  %v6214 = vadd.f32 0.0, %v6213
  %v6215 = vpop.f32.mrb[0].mxu0
  %6216 = vmatprep.mubr.f32.mxu0 0.0
  %6217 = vmatmul.mubr.f32.gmra.mrb[0].mxu0 %v6024
  %v6218 = vpop.f32.mrb[0].mxu0
  %v6219 = vadd.f32 0.0, %v6218
  %v6220 = vpop.f32.mrb[0].mxu0
  %6221 = vmatprep.mubr.f32.mxu0 0.0
  %6222 = vmatmul.mubr.f32.gmra.mrb[0].mxu0 %v6027
  %v6223 = vpop.f32.mrb[0].mxu0
  %v6224 = vadd.f32 0.0, %v6223
  %v6225 = vpop.f32.mrb[0].mxu0
  %6226 = vmatprep.mubr.f32.mxu0 0.0
  %6227 = vmatmul.mubr.f32.gmra.mrb[0].mxu0 %v6030
  %v6228 = vpop.f32.mrb[0].mxu0
  %v6229 = vadd.f32 0.0, %v6228
  %v6230 = vpop.f32.mrb[0].mxu0
  %6231 = vmatprep.mubr.f32.mxu0 0.0
  %6232 = vmatmul.mubr.f32.gmra.mrb[0].mxu0 %v6033
  %v6233 = vpop.f32.mrb[0].mxu0
  %v6234 = vadd.f32 0.0, %v6233
  %v6235 = vpop.f32.mrb[0].mxu0
  %6236 = vmatprep.mubr.f32.mxu0 0.0
  %6237 = vmatmul.mubr.f32.gmra.mrb[0].mxu0 %v6036
  %v6238 = vpop.f32.mrb[0].mxu0
  %v6239 = vadd.f32 0.0, %v6238
  %v6240 = vpop.f32.mrb[0].mxu0
  %6241 = vmatprep.mubr.f32.mxu0 0.0
  %6242 = vmatmul.mubr.f32.gmra.mrb[0].mxu0 %v6039
  %v6243 = vpop.f32.mrb[0].mxu0
  %v6244 = vadd.f32 0.0, %v6243
  %v6245 = vpop.f32.mrb[0].mxu0
  %6246 = vmatprep.mubr.f32.mxu0 0.0
  %6247 = vmatmul.mubr.f32.gmra.mrb[0].mxu0 %v6042
  %v6248 = vpop.f32.mrb[0].mxu0
  %v6249 = vadd.f32 0.0, %v6248
  %v6250 = vpop.f32.mrb[0].mxu0
  %6251 = vmatprep.mubr.f32.mxu0 0.0
  %6252 = vmatmul.mubr.f32.gmra.mrb[0].mxu0 %v6045
  %v6253 = vpop.f32.mrb[0].mxu0
  %v6254 = vadd.f32 0.0, %v6253
  %v6255 = vpop.f32.mrb[0].mxu0
  %6256 = vmatprep.mubr.f32.mxu0 0.0
  %6257 = vmatmul.mubr.f32.gmra.mrb[0].mxu0 %v6048
  %v6258 = vpop.f32.mrb[0].mxu0
  %v6259 = vadd.f32 0.0, %v6258
  %v6260 = vpop.f32.mrb[0].mxu0
  %6261 = vmatprep.mubr.f32.mxu0 0.0
  %6262 = vmatmul.mubr.f32.gmra.mrb[0].mxu0 %v6051
  %v6263 = vpop.f32.mrb[0].mxu0
  %v6264 = vadd.f32 0.0, %v6263
  %v6265 = vpop.f32.mrb[0].mxu0
  %6266 = vmatprep.mubr.f32.mxu0 0.0
  %6267 = vmatmul.mubr.f32.gmra.mrb[0].mxu0 %v6054
  %v6268 = vpop.f32.mrb[0].mxu0
  %v6269 = vadd.f32 0.0, %v6268
  %v6270 = vpop.f32.mrb[0].mxu0
  %6271 = vmatprep.mubr.f32.mxu0 0.0
  %6272 = vmatmul.mubr.f32.gmra.mrb[0].mxu0 %v6057
  %v6273 = vpop.f32.mrb[0].mxu0
  %v6274 = vadd.f32 0.0, %v6273
  %v6275 = vpop.f32.mrb[0].mxu0
  %6276 = vmatprep.mubr.f32.mxu0 0.0
  %6277 = vmatmul.mubr.f32.gmra.mrb[0].mxu0 %v6060
  %v6278 = vpop.f32.mrb[0].mxu0
  %v6279 = vadd.f32 0.0, %v6278
  %v6280 = vpop.f32.mrb[0].mxu0
  %6281 = vmatprep.mubr.f32.mxu0 0.0
  %6282 = vmatmul.mubr.f32.gmra.mrb[0].mxu0 %v6063
  %v6283 = vpop.f32.mrb[0].mxu0
  %v6284 = vadd.f32 0.0, %v6283
  %v6285 = vpop.f32.mrb[0].mxu0
  %6286 = vmatprep.mubr.f32.mxu0 0.0
  %6287 = vmatmul.mubr.f32.gmra.mrb[0].mxu0 %v6066
  %v6288 = vpop.f32.mrb[0].mxu0
  %v6289 = vadd.f32 0.0, %v6288
  %v6290 = vpop.f32.mrb[0].mxu0
  %6291 = vmatprep.mubr.f32.mxu0 0.0
  %6292 = vmatmul.mubr.f32.gmra.mrb[0].mxu0 %v6069
  %v6293 = vpop.f32.mrb[0].mxu0
  %v6294 = vadd.f32 0.0, %v6293
  %v6295 = vpop.f32.mrb[0].mxu0
  %6296 = vmatprep.mubr.f32.mxu0 0.0
  %6297 = vmatmul.mubr.f32.gmra.mrb[0].mxu0 %v6072
  %v6298 = vpop.f32.mrb[0].mxu0
  %v6299 = vadd.f32 0.0, %v6298
  %v6300 = vpop.f32.mrb[0].mxu0
  %6301 = vdwg.mxu0
  %s6302 = smul.u32 0, 16
  %s6303 = scalar_lea.vmem %s0, %s6302
  %v6304 = vld [vmem:[%s6303] sm:$0xff]
  %v6305 = vld [vmem:[%s6303 + $0x8] sm:$0xff]
  %v6306 = vld [vmem:[%s6303 + $0x10] sm:$0xff]
  %v6307 = vld [vmem:[%s6303 + $0x18] sm:$0xff]
  %v6308 = vld [vmem:[%s6303 + $0x20] sm:$0xff]
  %v6309 = vld [vmem:[%s6303 + $0x28] sm:$0xff]
  %v6310 = vld [vmem:[%s6303 + $0x30] sm:$0xff]
  %v6311 = vld [vmem:[%s6303 + $0x38] sm:$0xff]
  %v6312 = vld [vmem:[%s6303 + $0x40] sm:$0xff]
  %v6313 = vld [vmem:[%s6303 + $0x48] sm:$0xff]
  %v6314 = vld [vmem:[%s6303 + $0x50] sm:$0xff]
  %v6315 = vld [vmem:[%s6303 + $0x58] sm:$0xff]
  %v6316 = vld [vmem:[%s6303 + $0x60] sm:$0xff]
  %v6317 = vld [vmem:[%s6303 + $0x68] sm:$0xff]
  %v6318 = vld [vmem:[%s6303 + $0x70] sm:$0xff]
  %v6319 = vld [vmem:[%s6303 + $0x78] sm:$0xff]
  %v6320 = vld [vmem:[%s6303 + $0x100] sm:$0xff]
  %v6321 = vld [vmem:[%s6303 + $0x108] sm:$0xff]
  %v6322 = vld [vmem:[%s6303 + $0x110] sm:$0xff]
  %v6323 = vld [vmem:[%s6303 + $0x118] sm:$0xff]
  %v6324 = vld [vmem:[%s6303 + $0x120] sm:$0xff]
  %v6325 = vld [vmem:[%s6303 + $0x128] sm:$0xff]
  %v6326 = vld [vmem:[%s6303 + $0x130] sm:$0xff]
  %v6327 = vld [vmem:[%s6303 + $0x138] sm:$0xff]
  %v6328 = vld [vmem:[%s6303 + $0x140] sm:$0xff]
  %v6329 = vld [vmem:[%s6303 + $0x148] sm:$0xff]
  %v6330 = vld [vmem:[%s6303 + $0x150] sm:$0xff]
  %v6331 = vld [vmem:[%s6303 + $0x158] sm:$0xff]
  %v6332 = vld [vmem:[%s6303 + $0x160] sm:$0xff]
  %v6333 = vld [vmem:[%s6303 + $0x168] sm:$0xff]
  %v6334 = vld [vmem:[%s6303 + $0x170] sm:$0xff]
  %v6335 = vld [vmem:[%s6303 + $0x178] sm:$0xff]
  %v6337 = vlaneseq
  %v6338 = vshrl.u32 %v6337, 7
  %v6339 = vsub.s32 0, %v6338
  %v6340 = vrot.slane %v330, %v6339
  %v6342 = vmul.f32 %v6144, %v6340
  %v6343 = vmul.f32 %v6149, %v6340
  %v6344 = vmul.f32 %v6154, %v6340
  %v6345 = vmul.f32 %v6159, %v6340
  %v6346 = vmul.f32 %v6164, %v6340
  %v6347 = vmul.f32 %v6169, %v6340
  %v6348 = vmul.f32 %v6174, %v6340
  %v6349 = vmul.f32 %v6179, %v6340
  %v6350 = vmul.f32 %v6184, %v6340
  %v6351 = vmul.f32 %v6189, %v6340
  %v6352 = vmul.f32 %v6194, %v6340
  %v6353 = vmul.f32 %v6199, %v6340
  %v6354 = vmul.f32 %v6204, %v6340
  %v6355 = vmul.f32 %v6209, %v6340
  %v6356 = vmul.f32 %v6214, %v6340
  %v6357 = vmul.f32 %v6219, %v6340
  %v6358 = vmul.f32 %v6224, %v6340
  %v6359 = vmul.f32 %v6229, %v6340
  %v6360 = vmul.f32 %v6234, %v6340
  %v6361 = vmul.f32 %v6239, %v6340
  %v6362 = vmul.f32 %v6244, %v6340
  %v6363 = vmul.f32 %v6249, %v6340
  %v6364 = vmul.f32 %v6254, %v6340
  %v6365 = vmul.f32 %v6259, %v6340
  %v6366 = vmul.f32 %v6264, %v6340
  %v6367 = vmul.f32 %v6269, %v6340
  %v6368 = vmul.f32 %v6274, %v6340
  %v6369 = vmul.f32 %v6279, %v6340
  %v6370 = vmul.f32 %v6284, %v6340
  %v6371 = vmul.f32 %v6289, %v6340
  %v6372 = vmul.f32 %v6294, %v6340
  %v6373 = vmul.f32 %v6299, %v6340
  %v6375 = vlaneseq
  %v6376 = vshrl.u32 %v6375, 7
  %v6377 = vsub.s32 0, %v6376
  %v6378 = vrot.slane %v331, %v6377
  %v6380 = vadd.f32 %v6342, %v6378
  %v6381 = vadd.f32 %v6343, %v6378
  %v6382 = vadd.f32 %v6344, %v6378
  %v6383 = vadd.f32 %v6345, %v6378
  %v6384 = vadd.f32 %v6346, %v6378
  %v6385 = vadd.f32 %v6347, %v6378
  %v6386 = vadd.f32 %v6348, %v6378
  %v6387 = vadd.f32 %v6349, %v6378
  %v6388 = vadd.f32 %v6350, %v6378
  %v6389 = vadd.f32 %v6351, %v6378
  %v6390 = vadd.f32 %v6352, %v6378
  %v6391 = vadd.f32 %v6353, %v6378
  %v6392 = vadd.f32 %v6354, %v6378
  %v6393 = vadd.f32 %v6355, %v6378
  %v6394 = vadd.f32 %v6356, %v6378
  %v6395 = vadd.f32 %v6357, %v6378
  %v6396 = vadd.f32 %v6358, %v6378
  %v6397 = vadd.f32 %v6359, %v6378
  %v6398 = vadd.f32 %v6360, %v6378
  %v6399 = vadd.f32 %v6361, %v6378
  %v6400 = vadd.f32 %v6362, %v6378
  %v6401 = vadd.f32 %v6363, %v6378
  %v6402 = vadd.f32 %v6364, %v6378
  %v6403 = vadd.f32 %v6365, %v6378
  %v6404 = vadd.f32 %v6366, %v6378
  %v6405 = vadd.f32 %v6367, %v6378
  %v6406 = vadd.f32 %v6368, %v6378
  %v6407 = vadd.f32 %v6369, %v6378
  %v6408 = vadd.f32 %v6370, %v6378
  %v6409 = vadd.f32 %v6371, %v6378
  %v6410 = vadd.f32 %v6372, %v6378
  %v6411 = vadd.f32 %v6373, %v6378
  %v6412 = vadd.f32 %v6380, %v6304
  %v6413 = vadd.f32 %v6381, %v6305
  %v6414 = vadd.f32 %v6382, %v6306
  %v6415 = vadd.f32 %v6383, %v6307
  %v6416 = vadd.f32 %v6384, %v6308
  %v6417 = vadd.f32 %v6385, %v6309
  %v6418 = vadd.f32 %v6386, %v6310
  %v6419 = vadd.f32 %v6387, %v6311
  %v6420 = vadd.f32 %v6388, %v6312
  %v6421 = vadd.f32 %v6389, %v6313
  %v6422 = vadd.f32 %v6390, %v6314
  %v6423 = vadd.f32 %v6391, %v6315
  %v6424 = vadd.f32 %v6392, %v6316
  %v6425 = vadd.f32 %v6393, %v6317
  %v6426 = vadd.f32 %v6394, %v6318
  %v6427 = vadd.f32 %v6395, %v6319
  %v6428 = vadd.f32 %v6396, %v6320
  %v6429 = vadd.f32 %v6397, %v6321
  %v6430 = vadd.f32 %v6398, %v6322
  %v6431 = vadd.f32 %v6399, %v6323
  %v6432 = vadd.f32 %v6400, %v6324
  %v6433 = vadd.f32 %v6401, %v6325
  %v6434 = vadd.f32 %v6402, %v6326
  %v6435 = vadd.f32 %v6403, %v6327
  %v6436 = vadd.f32 %v6404, %v6328
  %v6437 = vadd.f32 %v6405, %v6329
  %v6438 = vadd.f32 %v6406, %v6330
  %v6439 = vadd.f32 %v6407, %v6331
  %v6440 = vadd.f32 %v6408, %v6332
  %v6441 = vadd.f32 %v6409, %v6333
  %v6442 = vadd.f32 %v6410, %v6334
  %v6443 = vadd.f32 %v6411, %v6335
  %v6444 = vmax.f32 %v6412, 0.0
  %v6445 = vmax.f32 %v6413, 0.0
  %v6446 = vmax.f32 %v6414, 0.0
  %v6447 = vmax.f32 %v6415, 0.0
  %v6448 = vmax.f32 %v6416, 0.0
  %v6449 = vmax.f32 %v6417, 0.0
  %v6450 = vmax.f32 %v6418, 0.0
  %v6451 = vmax.f32 %v6419, 0.0
  %v6452 = vmax.f32 %v6420, 0.0
  %v6453 = vmax.f32 %v6421, 0.0
  %v6454 = vmax.f32 %v6422, 0.0
  %v6455 = vmax.f32 %v6423, 0.0
  %v6456 = vmax.f32 %v6424, 0.0
  %v6457 = vmax.f32 %v6425, 0.0
  %v6458 = vmax.f32 %v6426, 0.0
  %v6459 = vmax.f32 %v6427, 0.0
  %v6460 = vmax.f32 %v6428, 0.0
  %v6461 = vmax.f32 %v6429, 0.0
  %v6462 = vmax.f32 %v6430, 0.0
  %v6463 = vmax.f32 %v6431, 0.0
  %v6464 = vmax.f32 %v6432, 0.0
  %v6465 = vmax.f32 %v6433, 0.0
  %v6466 = vmax.f32 %v6434, 0.0
  %v6467 = vmax.f32 %v6435, 0.0
  %v6468 = vmax.f32 %v6436, 0.0
  %v6469 = vmax.f32 %v6437, 0.0
  %v6470 = vmax.f32 %v6438, 0.0
  %v6471 = vmax.f32 %v6439, 0.0
  %v6472 = vmax.f32 %v6440, 0.0
  %v6473 = vmax.f32 %v6441, 0.0
  %v6474 = vmax.f32 %v6442, 0.0
  %v6475 = vmax.f32 %v6443, 0.0
  %s6476 = scalar_lea.vmem %s7, %s6302
  %6477 = vst.msk [vmem:[%s6476] sm:$0xff] %vm26, %v6444
  %6478 = vst.msk [vmem:[%s6476 + $0x8] sm:$0xff] %vm26, %v6445
  %6479 = vst.msk [vmem:[%s6476 + $0x10] sm:$0xff] %vm26, %v6446
  %6480 = vst.msk [vmem:[%s6476 + $0x18] sm:$0xff] %vm26, %v6447
  %6481 = vst.msk [vmem:[%s6476 + $0x20] sm:$0xff] %vm26, %v6448
  %6482 = vst.msk [vmem:[%s6476 + $0x28] sm:$0xff] %vm26, %v6449
  %6483 = vst.msk [vmem:[%s6476 + $0x30] sm:$0xff] %vm26, %v6450
  %6484 = vst.msk [vmem:[%s6476 + $0x38] sm:$0xff] %vm26, %v6451
  %6485 = vst.msk [vmem:[%s6476 + $0x40] sm:$0xff] %vm26, %v6452
  %6486 = vst.msk [vmem:[%s6476 + $0x48] sm:$0xff] %vm26, %v6453
  %6487 = vst.msk [vmem:[%s6476 + $0x50] sm:$0xff] %vm26, %v6454
  %6488 = vst.msk [vmem:[%s6476 + $0x58] sm:$0xff] %vm26, %v6455
  %6489 = vst.msk [vmem:[%s6476 + $0x60] sm:$0xff] %vm26, %v6456
  %6490 = vst.msk [vmem:[%s6476 + $0x68] sm:$0xff] %vm26, %v6457
  %6491 = vst.msk [vmem:[%s6476 + $0x70] sm:$0xff] %vm26, %v6458
  %6492 = vst.msk [vmem:[%s6476 + $0x78] sm:$0xff] %vm26, %v6459
  %6493 = vst.msk [vmem:[%s6476 + $0x100] sm:$0xff] %vm26, %v6460
  %6494 = vst.msk [vmem:[%s6476 + $0x108] sm:$0xff] %vm26, %v6461
  %6495 = vst.msk [vmem:[%s6476 + $0x110] sm:$0xff] %vm26, %v6462
  %6496 = vst.msk [vmem:[%s6476 + $0x118] sm:$0xff] %vm26, %v6463
  %6497 = vst.msk [vmem:[%s6476 + $0x120] sm:$0xff] %vm26, %v6464
  %6498 = vst.msk [vmem:[%s6476 + $0x128] sm:$0xff] %vm26, %v6465
  %6499 = vst.msk [vmem:[%s6476 + $0x130] sm:$0xff] %vm26, %v6466
  %6500 = vst.msk [vmem:[%s6476 + $0x138] sm:$0xff] %vm26, %v6467
  %6501 = vst.msk [vmem:[%s6476 + $0x140] sm:$0xff] %vm26, %v6468
  %6502 = vst.msk [vmem:[%s6476 + $0x148] sm:$0xff] %vm26, %v6469
  %6503 = vst.msk [vmem:[%s6476 + $0x150] sm:$0xff] %vm26, %v6470
  %6504 = vst.msk [vmem:[%s6476 + $0x158] sm:$0xff] %vm26, %v6471
  %6505 = vst.msk [vmem:[%s6476 + $0x160] sm:$0xff] %vm26, %v6472
  %6506 = vst.msk [vmem:[%s6476 + $0x168] sm:$0xff] %vm26, %v6473
  %6507 = vst.msk [vmem:[%s6476 + $0x170] sm:$0xff] %vm26, %v6474
  %6508 = vst.msk [vmem:[%s6476 + $0x178] sm:$0xff] %vm26, %v6475
  %s6509 = scalar_lea.vmem [#allocation3], %s2382
  %v6510 = vld [vmem:[%s6509 + $0x7] sm:$0xff]
  %v6511 = vld [vmem:[%s6509 + $0xf] sm:$0xff]
  %v6512 = vld [vmem:[%s6509 + $0x27] sm:$0xff]
  %v6513 = vld [vmem:[%s6509 + $0x2f] sm:$0xff]
  %v6514 = vld [vmem:[%s6509 + $0x47] sm:$0xff]
  %v6515 = vld [vmem:[%s6509 + $0x4f] sm:$0xff]
  %v6516 = vld [vmem:[%s6509 + $0x67] sm:$0xff]
  %v6517 = vld [vmem:[%s6509 + $0x6f] sm:$0xff]
  %v6518 = vld [vmem:[%s6509 + $0x87] sm:$0xff]
  %v6519 = vld [vmem:[%s6509 + $0x8f] sm:$0xff]
  %v6520 = vld [vmem:[%s6509 + $0xa7] sm:$0xff]
  %v6521 = vld [vmem:[%s6509 + $0xaf] sm:$0xff]
  %v6522 = vld [vmem:[%s6509 + $0xc7] sm:$0xff]
  %v6523 = vld [vmem:[%s6509 + $0xcf] sm:$0xff]
  %v6524 = vld [vmem:[%s6509 + $0xe7] sm:$0xff]
  %v6525 = vld [vmem:[%s6509 + $0xef] sm:$0xff]
  %v6526 = vld [vmem:[%s6509 + $0x247] sm:$0xff]
  %v6527 = vld [vmem:[%s6509 + $0x24f] sm:$0xff]
  %v6528 = vld [vmem:[%s6509 + $0x267] sm:$0xff]
  %v6529 = vld [vmem:[%s6509 + $0x26f] sm:$0xff]
  %v6530 = vld [vmem:[%s6509 + $0x287] sm:$0xff]
  %v6531 = vld [vmem:[%s6509 + $0x28f] sm:$0xff]
  %v6532 = vld [vmem:[%s6509 + $0x2a7] sm:$0xff]
  %v6533 = vld [vmem:[%s6509 + $0x2af] sm:$0xff]
  %v6534 = vld [vmem:[%s6509 + $0x2c7] sm:$0xff]
  %v6535 = vld [vmem:[%s6509 + $0x2cf] sm:$0xff]
  %v6536 = vld [vmem:[%s6509 + $0x2e7] sm:$0xff]
  %v6537 = vld [vmem:[%s6509 + $0x2ef] sm:$0xff]
  %v6538 = vld [vmem:[%s6509 + $0x307] sm:$0xff]
  %v6539 = vld [vmem:[%s6509 + $0x30f] sm:$0xff]
  %v6540 = vld [vmem:[%s6509 + $0x327] sm:$0xff]
  %v6541 = vld [vmem:[%s6509 + $0x32f] sm:$0xff]
  %v6542 = vld [vmem:[%s6509 + $0x8] sm:$0xff]
  %v6543 = vld [vmem:[%s6509 + $0x10] sm:$0xff]
  %v6544 = vld [vmem:[%s6509 + $0x28] sm:$0xff]
  %v6545 = vld [vmem:[%s6509 + $0x30] sm:$0xff]
  %v6546 = vld [vmem:[%s6509 + $0x48] sm:$0xff]
  %v6547 = vld [vmem:[%s6509 + $0x50] sm:$0xff]
  %v6548 = vld [vmem:[%s6509 + $0x68] sm:$0xff]
  %v6549 = vld [vmem:[%s6509 + $0x70] sm:$0xff]
  %v6550 = vld [vmem:[%s6509 + $0x88] sm:$0xff]
  %v6551 = vld [vmem:[%s6509 + $0x90] sm:$0xff]
  %v6552 = vld [vmem:[%s6509 + $0xa8] sm:$0xff]
  %v6553 = vld [vmem:[%s6509 + $0xb0] sm:$0xff]
  %v6554 = vld [vmem:[%s6509 + $0xc8] sm:$0xff]
  %v6555 = vld [vmem:[%s6509 + $0xd0] sm:$0xff]
  %v6556 = vld [vmem:[%s6509 + $0xe8] sm:$0xff]
  %v6557 = vld [vmem:[%s6509 + $0xf0] sm:$0xff]
  %v6558 = vld [vmem:[%s6509 + $0x248] sm:$0xff]
  %v6559 = vld [vmem:[%s6509 + $0x250] sm:$0xff]
  %v6560 = vld [vmem:[%s6509 + $0x268] sm:$0xff]
  %v6561 = vld [vmem:[%s6509 + $0x270] sm:$0xff]
  %v6562 = vld [vmem:[%s6509 + $0x288] sm:$0xff]
  %v6563 = vld [vmem:[%s6509 + $0x290] sm:$0xff]
  %v6564 = vld [vmem:[%s6509 + $0x2a8] sm:$0xff]
  %v6565 = vld [vmem:[%s6509 + $0x2b0] sm:$0xff]
  %v6566 = vld [vmem:[%s6509 + $0x2c8] sm:$0xff]
  %v6567 = vld [vmem:[%s6509 + $0x2d0] sm:$0xff]
  %v6568 = vld [vmem:[%s6509 + $0x2e8] sm:$0xff]
  %v6569 = vld [vmem:[%s6509 + $0x2f0] sm:$0xff]
  %v6570 = vld [vmem:[%s6509 + $0x308] sm:$0xff]
  %v6571 = vld [vmem:[%s6509 + $0x310] sm:$0xff]
  %v6572 = vld [vmem:[%s6509 + $0x328] sm:$0xff]
  %v6573 = vld [vmem:[%s6509 + $0x330] sm:$0xff]
  %v6574 = vld [vmem:[%s6509 + $0x9] sm:$0xff]
  %v6575 = vld [vmem:[%s6509 + $0x11] sm:$0xff]
  %v6576 = vld [vmem:[%s6509 + $0x29] sm:$0xff]
  %v6577 = vld [vmem:[%s6509 + $0x31] sm:$0xff]
  %v6578 = vld [vmem:[%s6509 + $0x49] sm:$0xff]
  %v6579 = vld [vmem:[%s6509 + $0x51] sm:$0xff]
  %v6580 = vld [vmem:[%s6509 + $0x69] sm:$0xff]
  %v6581 = vld [vmem:[%s6509 + $0x71] sm:$0xff]
  %v6582 = vld [vmem:[%s6509 + $0x89] sm:$0xff]
  %v6583 = vld [vmem:[%s6509 + $0x91] sm:$0xff]
  %v6584 = vld [vmem:[%s6509 + $0xa9] sm:$0xff]
  %v6585 = vld [vmem:[%s6509 + $0xb1] sm:$0xff]
  %v6586 = vld [vmem:[%s6509 + $0xc9] sm:$0xff]
  %v6587 = vld [vmem:[%s6509 + $0xd1] sm:$0xff]
  %v6588 = vld [vmem:[%s6509 + $0xe9] sm:$0xff]
  %v6589 = vld [vmem:[%s6509 + $0xf1] sm:$0xff]
  %v6590 = vld [vmem:[%s6509 + $0x249] sm:$0xff]
  %v6591 = vld [vmem:[%s6509 + $0x251] sm:$0xff]
  %v6592 = vld [vmem:[%s6509 + $0x269] sm:$0xff]
  %v6593 = vld [vmem:[%s6509 + $0x271] sm:$0xff]
  %v6594 = vld [vmem:[%s6509 + $0x289] sm:$0xff]
  %v6595 = vld [vmem:[%s6509 + $0x291] sm:$0xff]
  %v6596 = vld [vmem:[%s6509 + $0x2a9] sm:$0xff]
  %v6597 = vld [vmem:[%s6509 + $0x2b1] sm:$0xff]
  %v6598 = vld [vmem:[%s6509 + $0x2c9] sm:$0xff]
  %v6599 = vld [vmem:[%s6509 + $0x2d1] sm:$0xff]
  %v6600 = vld [vmem:[%s6509 + $0x2e9] sm:$0xff]
  %v6601 = vld [vmem:[%s6509 + $0x2f1] sm:$0xff]
  %v6602 = vld [vmem:[%s6509 + $0x309] sm:$0xff]
  %v6603 = vld [vmem:[%s6509 + $0x311] sm:$0xff]
  %v6604 = vld [vmem:[%s6509 + $0x329] sm:$0xff]
  %v6605 = vld [vmem:[%s6509 + $0x331] sm:$0xff]
  %v6606 = vld [vmem:[%s4375 + $0x7] sm:$0xff]
  %v6607 = vld [vmem:[%s4375 + $0xf] sm:$0xff]
  %v6608 = vld [vmem:[%s4375 + $0x27] sm:$0xff]
  %v6609 = vld [vmem:[%s4375 + $0x2f] sm:$0xff]
  %v6610 = vld [vmem:[%s4375 + $0x47] sm:$0xff]
  %v6611 = vld [vmem:[%s4375 + $0x4f] sm:$0xff]
  %v6612 = vld [vmem:[%s4375 + $0x67] sm:$0xff]
  %v6613 = vld [vmem:[%s4375 + $0x6f] sm:$0xff]
  %v6614 = vld [vmem:[%s4375 + $0x87] sm:$0xff]
  %v6615 = vld [vmem:[%s4375 + $0x8f] sm:$0xff]
  %v6616 = vld [vmem:[%s4375 + $0xa7] sm:$0xff]
  %v6617 = vld [vmem:[%s4375 + $0xaf] sm:$0xff]
  %v6618 = vld [vmem:[%s4375 + $0xc7] sm:$0xff]
  %v6619 = vld [vmem:[%s4375 + $0xcf] sm:$0xff]
  %v6620 = vld [vmem:[%s4375 + $0xe7] sm:$0xff]
  %v6621 = vld [vmem:[%s4375 + $0xef] sm:$0xff]
  %v6622 = vld [vmem:[%s4375 + $0x247] sm:$0xff]
  %v6623 = vld [vmem:[%s4375 + $0x24f] sm:$0xff]
  %v6624 = vld [vmem:[%s4375 + $0x267] sm:$0xff]
  %v6625 = vld [vmem:[%s4375 + $0x26f] sm:$0xff]
  %v6626 = vld [vmem:[%s4375 + $0x287] sm:$0xff]
  %v6627 = vld [vmem:[%s4375 + $0x28f] sm:$0xff]
  %v6628 = vld [vmem:[%s4375 + $0x2a7] sm:$0xff]
  %v6629 = vld [vmem:[%s4375 + $0x2af] sm:$0xff]
  %v6630 = vld [vmem:[%s4375 + $0x2c7] sm:$0xff]
  %v6631 = vld [vmem:[%s4375 + $0x2cf] sm:$0xff]
  %v6632 = vld [vmem:[%s4375 + $0x2e7] sm:$0xff]
  %v6633 = vld [vmem:[%s4375 + $0x2ef] sm:$0xff]
  %v6634 = vld [vmem:[%s4375 + $0x307] sm:$0xff]
  %v6635 = vld [vmem:[%s4375 + $0x30f] sm:$0xff]
  %v6636 = vld [vmem:[%s4375 + $0x327] sm:$0xff]
  %v6637 = vld [vmem:[%s4375 + $0x32f] sm:$0xff]
  %v6638 = vld [vmem:[%s4375 + $0x8] sm:$0xff]
  %v6639 = vld [vmem:[%s4375 + $0x10] sm:$0xff]
  %v6640 = vld [vmem:[%s4375 + $0x28] sm:$0xff]
  %v6641 = vld [vmem:[%s4375 + $0x30] sm:$0xff]
  %v6642 = vld [vmem:[%s4375 + $0x48] sm:$0xff]
  %v6643 = vld [vmem:[%s4375 + $0x50] sm:$0xff]
  %v6644 = vld [vmem:[%s4375 + $0x68] sm:$0xff]
  %v6645 = vld [vmem:[%s4375 + $0x70] sm:$0xff]
  %v6646 = vld [vmem:[%s4375 + $0x88] sm:$0xff]
  %v6647 = vld [vmem:[%s4375 + $0x90] sm:$0xff]
  %v6648 = vld [vmem:[%s4375 + $0xa8] sm:$0xff]
  %v6649 = vld [vmem:[%s4375 + $0xb0] sm:$0xff]
  %v6650 = vld [vmem:[%s4375 + $0xc8] sm:$0xff]
  %v6651 = vld [vmem:[%s4375 + $0xd0] sm:$0xff]
  %v6652 = vld [vmem:[%s4375 + $0xe8] sm:$0xff]
  %v6653 = vld [vmem:[%s4375 + $0xf0] sm:$0xff]
  %v6654 = vld [vmem:[%s4375 + $0x248] sm:$0xff]
  %v6655 = vld [vmem:[%s4375 + $0x250] sm:$0xff]
  %v6656 = vld [vmem:[%s4375 + $0x268] sm:$0xff]
  %v6657 = vld [vmem:[%s4375 + $0x270] sm:$0xff]
  %v6658 = vld [vmem:[%s4375 + $0x288] sm:$0xff]
  %v6659 = vld [vmem:[%s4375 + $0x290] sm:$0xff]
  %v6660 = vld [vmem:[%s4375 + $0x2a8] sm:$0xff]
  %v6661 = vld [vmem:[%s4375 + $0x2b0] sm:$0xff]
  %v6662 = vld [vmem:[%s4375 + $0x2c8] sm:$0xff]
  %v6663 = vld [vmem:[%s4375 + $0x2d0] sm:$0xff]
  %v6664 = vld [vmem:[%s4375 + $0x2e8] sm:$0xff]
  %v6665 = vld [vmem:[%s4375 + $0x2f0] sm:$0xff]
  %v6666 = vld [vmem:[%s4375 + $0x308] sm:$0xff]
  %v6667 = vld [vmem:[%s4375 + $0x310] sm:$0xff]
  %v6668 = vld [vmem:[%s4375 + $0x328] sm:$0xff]
  %v6669 = vld [vmem:[%s4375 + $0x330] sm:$0xff]
  %v6670 = vld [vmem:[%s4375 + $0x9] sm:$0xff]
  %v6671 = vld [vmem:[%s4375 + $0x11] sm:$0xff]
  %v6672 = vld [vmem:[%s4375 + $0x29] sm:$0xff]
  %v6673 = vld [vmem:[%s4375 + $0x31] sm:$0xff]
  %v6674 = vld [vmem:[%s4375 + $0x49] sm:$0xff]
  %v6675 = vld [vmem:[%s4375 + $0x51] sm:$0xff]
  %v6676 = vld [vmem:[%s4375 + $0x69] sm:$0xff]
  %v6677 = vld [vmem:[%s4375 + $0x71] sm:$0xff]
  %v6678 = vld [vmem:[%s4375 + $0x89] sm:$0xff]
  %v6679 = vld [vmem:[%s4375 + $0x91] sm:$0xff]
  %v6680 = vld [vmem:[%s4375 + $0xa9] sm:$0xff]
  %v6681 = vld [vmem:[%s4375 + $0xb1] sm:$0xff]
  %v6682 = vld [vmem:[%s4375 + $0xc9] sm:$0xff]
  %v6683 = vld [vmem:[%s4375 + $0xd1] sm:$0xff]
  %v6684 = vld [vmem:[%s4375 + $0xe9] sm:$0xff]
  %v6685 = vld [vmem:[%s4375 + $0xf1] sm:$0xff]
  %v6686 = vld [vmem:[%s4375 + $0x249] sm:$0xff]
  %v6687 = vld [vmem:[%s4375 + $0x251] sm:$0xff]
  %v6688 = vld [vmem:[%s4375 + $0x269] sm:$0xff]
  %v6689 = vld [vmem:[%s4375 + $0x271] sm:$0xff]
  %v6690 = vld [vmem:[%s4375 + $0x289] sm:$0xff]
  %v6691 = vld [vmem:[%s4375 + $0x291] sm:$0xff]
  %v6692 = vld [vmem:[%s4375 + $0x2a9] sm:$0xff]
  %v6693 = vld [vmem:[%s4375 + $0x2b1] sm:$0xff]
  %v6694 = vld [vmem:[%s4375 + $0x2c9] sm:$0xff]
  %v6695 = vld [vmem:[%s4375 + $0x2d1] sm:$0xff]
  %v6696 = vld [vmem:[%s4375 + $0x2e9] sm:$0xff]
  %v6697 = vld [vmem:[%s4375 + $0x2f1] sm:$0xff]
  %v6698 = vld [vmem:[%s4375 + $0x309] sm:$0xff]
  %v6699 = vld [vmem:[%s4375 + $0x311] sm:$0xff]
  %v6700 = vld [vmem:[%s4375 + $0x329] sm:$0xff]
  %v6701 = vld [vmem:[%s4375 + $0x331] sm:$0xff]
  %s6702 = scalar_lea.vmem [#allocation3], %s2580
  %v6703 = vld [vmem:[%s6702 + $0x7] sm:$0xff]
  %v6704 = vld [vmem:[%s6702 + $0xf] sm:$0xff]
  %v6705 = vld [vmem:[%s6702 + $0x27] sm:$0xff]
  %v6706 = vld [vmem:[%s6702 + $0x2f] sm:$0xff]
  %v6707 = vld [vmem:[%s6702 + $0x47] sm:$0xff]
  %v6708 = vld [vmem:[%s6702 + $0x4f] sm:$0xff]
  %v6709 = vld [vmem:[%s6702 + $0x67] sm:$0xff]
  %v6710 = vld [vmem:[%s6702 + $0x6f] sm:$0xff]
  %v6711 = vld [vmem:[%s6702 + $0x87] sm:$0xff]
  %v6712 = vld [vmem:[%s6702 + $0x8f] sm:$0xff]
  %v6713 = vld [vmem:[%s6702 + $0xa7] sm:$0xff]
  %v6714 = vld [vmem:[%s6702 + $0xaf] sm:$0xff]
  %v6715 = vld [vmem:[%s6702 + $0xc7] sm:$0xff]
  %v6716 = vld [vmem:[%s6702 + $0xcf] sm:$0xff]
  %v6717 = vld [vmem:[%s6702 + $0xe7] sm:$0xff]
  %v6718 = vld [vmem:[%s6702 + $0xef] sm:$0xff]
  %v6719 = vld [vmem:[%s6702 + $0x247] sm:$0xff]
  %v6720 = vld [vmem:[%s6702 + $0x24f] sm:$0xff]
  %v6721 = vld [vmem:[%s6702 + $0x267] sm:$0xff]
  %v6722 = vld [vmem:[%s6702 + $0x26f] sm:$0xff]
  %v6723 = vld [vmem:[%s6702 + $0x287] sm:$0xff]
  %v6724 = vld [vmem:[%s6702 + $0x28f] sm:$0xff]
  %v6725 = vld [vmem:[%s6702 + $0x2a7] sm:$0xff]
  %v6726 = vld [vmem:[%s6702 + $0x2af] sm:$0xff]
  %v6727 = vld [vmem:[%s6702 + $0x2c7] sm:$0xff]
  %v6728 = vld [vmem:[%s6702 + $0x2cf] sm:$0xff]
  %v6729 = vld [vmem:[%s6702 + $0x2e7] sm:$0xff]
  %v6730 = vld [vmem:[%s6702 + $0x2ef] sm:$0xff]
  %v6731 = vld [vmem:[%s6702 + $0x307] sm:$0xff]
  %v6732 = vld [vmem:[%s6702 + $0x30f] sm:$0xff]
  %v6733 = vld [vmem:[%s6702 + $0x327] sm:$0xff]
  %v6734 = vld [vmem:[%s6702 + $0x32f] sm:$0xff]
  %v6735 = vld [vmem:[%s6702 + $0x8] sm:$0xff]
  %v6736 = vld [vmem:[%s6702 + $0x10] sm:$0xff]
  %v6737 = vld [vmem:[%s6702 + $0x28] sm:$0xff]
  %v6738 = vld [vmem:[%s6702 + $0x30] sm:$0xff]
  %v6739 = vld [vmem:[%s6702 + $0x48] sm:$0xff]
  %v6740 = vld [vmem:[%s6702 + $0x50] sm:$0xff]
  %v6741 = vld [vmem:[%s6702 + $0x68] sm:$0xff]
  %v6742 = vld [vmem:[%s6702 + $0x70] sm:$0xff]
  %v6743 = vld [vmem:[%s6702 + $0x88] sm:$0xff]
  %v6744 = vld [vmem:[%s6702 + $0x90] sm:$0xff]
  %v6745 = vld [vmem:[%s6702 + $0xa8] sm:$0xff]
  %v6746 = vld [vmem:[%s6702 + $0xb0] sm:$0xff]
  %v6747 = vld [vmem:[%s6702 + $0xc8] sm:$0xff]
  %v6748 = vld [vmem:[%s6702 + $0xd0] sm:$0xff]
  %v6749 = vld [vmem:[%s6702 + $0xe8] sm:$0xff]
  %v6750 = vld [vmem:[%s6702 + $0xf0] sm:$0xff]
  %v6751 = vld [vmem:[%s6702 + $0x248] sm:$0xff]
  %v6752 = vld [vmem:[%s6702 + $0x250] sm:$0xff]
  %v6753 = vld [vmem:[%s6702 + $0x268] sm:$0xff]
  %v6754 = vld [vmem:[%s6702 + $0x270] sm:$0xff]
  %v6755 = vld [vmem:[%s6702 + $0x288] sm:$0xff]
  %v6756 = vld [vmem:[%s6702 + $0x290] sm:$0xff]
  %v6757 = vld [vmem:[%s6702 + $0x2a8] sm:$0xff]
  %v6758 = vld [vmem:[%s6702 + $0x2b0] sm:$0xff]
  %v6759 = vld [vmem:[%s6702 + $0x2c8] sm:$0xff]
  %v6760 = vld [vmem:[%s6702 + $0x2d0] sm:$0xff]
  %v6761 = vld [vmem:[%s6702 + $0x2e8] sm:$0xff]
  %v6762 = vld [vmem:[%s6702 + $0x2f0] sm:$0xff]
  %v6763 = vld [vmem:[%s6702 + $0x308] sm:$0xff]
  %v6764 = vld [vmem:[%s6702 + $0x310] sm:$0xff]
  %v6765 = vld [vmem:[%s6702 + $0x328] sm:$0xff]
  %v6766 = vld [vmem:[%s6702 + $0x330] sm:$0xff]
  %v6767 = vld [vmem:[%s6702 + $0x9] sm:$0xff]
  %v6768 = vld [vmem:[%s6702 + $0x11] sm:$0xff]
  %v6769 = vld [vmem:[%s6702 + $0x29] sm:$0xff]
  %v6770 = vld [vmem:[%s6702 + $0x31] sm:$0xff]
  %v6771 = vld [vmem:[%s6702 + $0x49] sm:$0xff]
  %v6772 = vld [vmem:[%s6702 + $0x51] sm:$0xff]
  %v6773 = vld [vmem:[%s6702 + $0x69] sm:$0xff]
  %v6774 = vld [vmem:[%s6702 + $0x71] sm:$0xff]
  %v6775 = vld [vmem:[%s6702 + $0x89] sm:$0xff]
  %v6776 = vld [vmem:[%s6702 + $0x91] sm:$0xff]
  %v6777 = vld [vmem:[%s6702 + $0xa9] sm:$0xff]
  %v6778 = vld [vmem:[%s6702 + $0xb1] sm:$0xff]
  %v6779 = vld [vmem:[%s6702 + $0xc9] sm:$0xff]
  %v6780 = vld [vmem:[%s6702 + $0xd1] sm:$0xff]
  %v6781 = vld [vmem:[%s6702 + $0xe9] sm:$0xff]
  %v6782 = vld [vmem:[%s6702 + $0xf1] sm:$0xff]
  %v6783 = vld [vmem:[%s6702 + $0x249] sm:$0xff]
  %v6784 = vld [vmem:[%s6702 + $0x251] sm:$0xff]
  %v6785 = vld [vmem:[%s6702 + $0x269] sm:$0xff]
  %v6786 = vld [vmem:[%s6702 + $0x271] sm:$0xff]
  %v6787 = vld [vmem:[%s6702 + $0x289] sm:$0xff]
  %v6788 = vld [vmem:[%s6702 + $0x291] sm:$0xff]
  %v6789 = vld [vmem:[%s6702 + $0x2a9] sm:$0xff]
  %v6790 = vld [vmem:[%s6702 + $0x2b1] sm:$0xff]
  %v6791 = vld [vmem:[%s6702 + $0x2c9] sm:$0xff]
  %v6792 = vld [vmem:[%s6702 + $0x2d1] sm:$0xff]
  %v6793 = vld [vmem:[%s6702 + $0x2e9] sm:$0xff]
  %v6794 = vld [vmem:[%s6702 + $0x2f1] sm:$0xff]
  %v6795 = vld [vmem:[%s6702 + $0x309] sm:$0xff]
  %v6796 = vld [vmem:[%s6702 + $0x311] sm:$0xff]
  %v6797 = vld [vmem:[%s6702 + $0x329] sm:$0xff]
  %v6798 = vld [vmem:[%s6702 + $0x331] sm:$0xff]
  %6831 = vrot.lane.b32.xlu0 %v6542, 4
  %v6832 = vpop.permute.xlu0 %6831
  %6833 = vrot.lane.b32.xlu0 %v6543, 4
  %v6834 = vpop.permute.xlu0 %6833
  %6835 = vrot.lane.b32.xlu0 %v6544, 4
  %v6836 = vpop.permute.xlu0 %6835
  %6837 = vrot.lane.b32.xlu0 %v6545, 4
  %v6838 = vpop.permute.xlu0 %6837
  %6839 = vrot.lane.b32.xlu0 %v6546, 4
  %v6840 = vpop.permute.xlu0 %6839
  %6841 = vrot.lane.b32.xlu0 %v6547, 4
  %v6842 = vpop.permute.xlu0 %6841
  %6843 = vrot.lane.b32.xlu0 %v6548, 4
  %v6844 = vpop.permute.xlu0 %6843
  %6845 = vrot.lane.b32.xlu0 %v6549, 4
  %v6846 = vpop.permute.xlu0 %6845
  %6847 = vrot.lane.b32.xlu0 %v6550, 4
  %v6848 = vpop.permute.xlu0 %6847
  %6849 = vrot.lane.b32.xlu0 %v6551, 4
  %v6850 = vpop.permute.xlu0 %6849
  %6851 = vrot.lane.b32.xlu0 %v6552, 4
  %v6852 = vpop.permute.xlu0 %6851
  %6853 = vrot.lane.b32.xlu0 %v6553, 4
  %v6854 = vpop.permute.xlu0 %6853
  %6855 = vrot.lane.b32.xlu0 %v6554, 4
  %v6856 = vpop.permute.xlu0 %6855
  %6857 = vrot.lane.b32.xlu0 %v6555, 4
  %v6858 = vpop.permute.xlu0 %6857
  %6859 = vrot.lane.b32.xlu0 %v6556, 4
  %v6860 = vpop.permute.xlu0 %6859
  %6861 = vrot.lane.b32.xlu0 %v6557, 4
  %v6862 = vpop.permute.xlu0 %6861
  %6863 = vrot.lane.b32.xlu0 %v6558, 4
  %v6864 = vpop.permute.xlu0 %6863
  %6865 = vrot.lane.b32.xlu0 %v6559, 4
  %v6866 = vpop.permute.xlu0 %6865
  %6867 = vrot.lane.b32.xlu0 %v6560, 4
  %v6868 = vpop.permute.xlu0 %6867
  %6869 = vrot.lane.b32.xlu0 %v6561, 4
  %v6870 = vpop.permute.xlu0 %6869
  %6871 = vrot.lane.b32.xlu0 %v6562, 4
  %v6872 = vpop.permute.xlu0 %6871
  %6873 = vrot.lane.b32.xlu0 %v6563, 4
  %v6874 = vpop.permute.xlu0 %6873
  %6875 = vrot.lane.b32.xlu0 %v6564, 4
  %v6876 = vpop.permute.xlu0 %6875
  %6877 = vrot.lane.b32.xlu0 %v6565, 4
  %v6878 = vpop.permute.xlu0 %6877
  %6879 = vrot.lane.b32.xlu0 %v6566, 4
  %v6880 = vpop.permute.xlu0 %6879
  %6881 = vrot.lane.b32.xlu0 %v6567, 4
  %v6882 = vpop.permute.xlu0 %6881
  %6883 = vrot.lane.b32.xlu0 %v6568, 4
  %v6884 = vpop.permute.xlu0 %6883
  %6885 = vrot.lane.b32.xlu0 %v6569, 4
  %v6886 = vpop.permute.xlu0 %6885
  %6887 = vrot.lane.b32.xlu0 %v6570, 4
  %v6888 = vpop.permute.xlu0 %6887
  %6889 = vrot.lane.b32.xlu0 %v6571, 4
  %v6890 = vpop.permute.xlu0 %6889
  %6891 = vrot.lane.b32.xlu0 %v6572, 4
  %v6892 = vpop.permute.xlu0 %6891
  %6893 = vrot.lane.b32.xlu0 %v6573, 4
  %v6894 = vpop.permute.xlu0 %6893
  %6959 = vrot.lane.b32.xlu0 %v6574, 8
  %v6960 = vpop.permute.xlu0 %6959
  %6961 = vrot.lane.b32.xlu0 %v6575, 8
  %v6962 = vpop.permute.xlu0 %6961
  %6963 = vrot.lane.b32.xlu0 %v6576, 8
  %v6964 = vpop.permute.xlu0 %6963
  %6965 = vrot.lane.b32.xlu0 %v6577, 8
  %v6966 = vpop.permute.xlu0 %6965
  %6967 = vrot.lane.b32.xlu0 %v6578, 8
  %v6968 = vpop.permute.xlu0 %6967
  %6969 = vrot.lane.b32.xlu0 %v6579, 8
  %v6970 = vpop.permute.xlu0 %6969
  %6971 = vrot.lane.b32.xlu0 %v6580, 8
  %v6972 = vpop.permute.xlu0 %6971
  %6973 = vrot.lane.b32.xlu0 %v6581, 8
  %v6974 = vpop.permute.xlu0 %6973
  %6975 = vrot.lane.b32.xlu0 %v6582, 8
  %v6976 = vpop.permute.xlu0 %6975
  %6977 = vrot.lane.b32.xlu0 %v6583, 8
  %v6978 = vpop.permute.xlu0 %6977
  %6979 = vrot.lane.b32.xlu0 %v6584, 8
  %v6980 = vpop.permute.xlu0 %6979
  %6981 = vrot.lane.b32.xlu0 %v6585, 8
  %v6982 = vpop.permute.xlu0 %6981
  %6983 = vrot.lane.b32.xlu0 %v6586, 8
  %v6984 = vpop.permute.xlu0 %6983
  %6985 = vrot.lane.b32.xlu0 %v6587, 8
  %v6986 = vpop.permute.xlu0 %6985
  %6987 = vrot.lane.b32.xlu0 %v6588, 8
  %v6988 = vpop.permute.xlu0 %6987
  %6989 = vrot.lane.b32.xlu0 %v6589, 8
  %v6990 = vpop.permute.xlu0 %6989
  %6991 = vrot.lane.b32.xlu0 %v6590, 8
  %v6992 = vpop.permute.xlu0 %6991
  %6993 = vrot.lane.b32.xlu0 %v6591, 8
  %v6994 = vpop.permute.xlu0 %6993
  %6995 = vrot.lane.b32.xlu0 %v6592, 8
  %v6996 = vpop.permute.xlu0 %6995
  %6997 = vrot.lane.b32.xlu0 %v6593, 8
  %v6998 = vpop.permute.xlu0 %6997
  %6999 = vrot.lane.b32.xlu0 %v6594, 8
  %v7000 = vpop.permute.xlu0 %6999
  %7001 = vrot.lane.b32.xlu0 %v6595, 8
  %v7002 = vpop.permute.xlu0 %7001
  %7003 = vrot.lane.b32.xlu0 %v6596, 8
  %v7004 = vpop.permute.xlu0 %7003
  %7005 = vrot.lane.b32.xlu0 %v6597, 8
  %v7006 = vpop.permute.xlu0 %7005
  %7007 = vrot.lane.b32.xlu0 %v6598, 8
  %v7008 = vpop.permute.xlu0 %7007
  %7009 = vrot.lane.b32.xlu0 %v6599, 8
  %v7010 = vpop.permute.xlu0 %7009
  %7011 = vrot.lane.b32.xlu0 %v6600, 8
  %v7012 = vpop.permute.xlu0 %7011
  %7013 = vrot.lane.b32.xlu0 %v6601, 8
  %v7014 = vpop.permute.xlu0 %7013
  %7015 = vrot.lane.b32.xlu0 %v6602, 8
  %v7016 = vpop.permute.xlu0 %7015
  %7017 = vrot.lane.b32.xlu0 %v6603, 8
  %v7018 = vpop.permute.xlu0 %7017
  %7019 = vrot.lane.b32.xlu0 %v6604, 8
  %v7020 = vpop.permute.xlu0 %7019
  %7021 = vrot.lane.b32.xlu0 %v6605, 8
  %v7022 = vpop.permute.xlu0 %7021
  %7087 = vrot.lane.b32.xlu0 %v6606, 12
  %v7088 = vpop.permute.xlu0 %7087
  %7089 = vrot.lane.b32.xlu0 %v6607, 12
  %v7090 = vpop.permute.xlu0 %7089
  %7091 = vrot.lane.b32.xlu0 %v6608, 12
  %v7092 = vpop.permute.xlu0 %7091
  %7093 = vrot.lane.b32.xlu0 %v6609, 12
  %v7094 = vpop.permute.xlu0 %7093
  %7095 = vrot.lane.b32.xlu0 %v6610, 12
  %v7096 = vpop.permute.xlu0 %7095
  %7097 = vrot.lane.b32.xlu0 %v6611, 12
  %v7098 = vpop.permute.xlu0 %7097
  %7099 = vrot.lane.b32.xlu0 %v6612, 12
  %v7100 = vpop.permute.xlu0 %7099
  %7101 = vrot.lane.b32.xlu0 %v6613, 12
  %v7102 = vpop.permute.xlu0 %7101
  %7103 = vrot.lane.b32.xlu0 %v6614, 12
  %v7104 = vpop.permute.xlu0 %7103
  %7105 = vrot.lane.b32.xlu0 %v6615, 12
  %v7106 = vpop.permute.xlu0 %7105
  %7107 = vrot.lane.b32.xlu0 %v6616, 12
  %v7108 = vpop.permute.xlu0 %7107
  %7109 = vrot.lane.b32.xlu0 %v6617, 12
  %v7110 = vpop.permute.xlu0 %7109
  %7111 = vrot.lane.b32.xlu0 %v6618, 12
  %v7112 = vpop.permute.xlu0 %7111
  %7113 = vrot.lane.b32.xlu0 %v6619, 12
  %v7114 = vpop.permute.xlu0 %7113
  %7115 = vrot.lane.b32.xlu0 %v6620, 12
  %v7116 = vpop.permute.xlu0 %7115
  %7117 = vrot.lane.b32.xlu0 %v6621, 12
  %v7118 = vpop.permute.xlu0 %7117
  %7119 = vrot.lane.b32.xlu0 %v6622, 12
  %v7120 = vpop.permute.xlu0 %7119
  %7121 = vrot.lane.b32.xlu0 %v6623, 12
  %v7122 = vpop.permute.xlu0 %7121
  %7123 = vrot.lane.b32.xlu0 %v6624, 12
  %v7124 = vpop.permute.xlu0 %7123
  %7125 = vrot.lane.b32.xlu0 %v6625, 12
  %v7126 = vpop.permute.xlu0 %7125
  %7127 = vrot.lane.b32.xlu0 %v6626, 12
  %v7128 = vpop.permute.xlu0 %7127
  %7129 = vrot.lane.b32.xlu0 %v6627, 12
  %v7130 = vpop.permute.xlu0 %7129
  %7131 = vrot.lane.b32.xlu0 %v6628, 12
  %v7132 = vpop.permute.xlu0 %7131
  %7133 = vrot.lane.b32.xlu0 %v6629, 12
  %v7134 = vpop.permute.xlu0 %7133
  %7135 = vrot.lane.b32.xlu0 %v6630, 12
  %v7136 = vpop.permute.xlu0 %7135
  %7137 = vrot.lane.b32.xlu0 %v6631, 12
  %v7138 = vpop.permute.xlu0 %7137
  %7139 = vrot.lane.b32.xlu0 %v6632, 12
  %v7140 = vpop.permute.xlu0 %7139
  %7141 = vrot.lane.b32.xlu0 %v6633, 12
  %v7142 = vpop.permute.xlu0 %7141
  %7143 = vrot.lane.b32.xlu0 %v6634, 12
  %v7144 = vpop.permute.xlu0 %7143
  %7145 = vrot.lane.b32.xlu0 %v6635, 12
  %v7146 = vpop.permute.xlu0 %7145
  %7147 = vrot.lane.b32.xlu0 %v6636, 12
  %v7148 = vpop.permute.xlu0 %7147
  %7149 = vrot.lane.b32.xlu0 %v6637, 12
  %v7150 = vpop.permute.xlu0 %7149
  %7215 = vrot.lane.b32.xlu0 %v6638, 16
  %v7216 = vpop.permute.xlu0 %7215
  %7217 = vrot.lane.b32.xlu0 %v6639, 16
  %v7218 = vpop.permute.xlu0 %7217
  %7219 = vrot.lane.b32.xlu0 %v6640, 16
  %v7220 = vpop.permute.xlu0 %7219
  %7221 = vrot.lane.b32.xlu0 %v6641, 16
  %v7222 = vpop.permute.xlu0 %7221
  %7223 = vrot.lane.b32.xlu0 %v6642, 16
  %v7224 = vpop.permute.xlu0 %7223
  %7225 = vrot.lane.b32.xlu0 %v6643, 16
  %v7226 = vpop.permute.xlu0 %7225
  %7227 = vrot.lane.b32.xlu0 %v6644, 16
  %v7228 = vpop.permute.xlu0 %7227
  %7229 = vrot.lane.b32.xlu0 %v6645, 16
  %v7230 = vpop.permute.xlu0 %7229
  %7231 = vrot.lane.b32.xlu0 %v6646, 16
  %v7232 = vpop.permute.xlu0 %7231
  %7233 = vrot.lane.b32.xlu0 %v6647, 16
  %v7234 = vpop.permute.xlu0 %7233
  %7235 = vrot.lane.b32.xlu0 %v6648, 16
  %v7236 = vpop.permute.xlu0 %7235
  %7237 = vrot.lane.b32.xlu0 %v6649, 16
  %v7238 = vpop.permute.xlu0 %7237
  %7239 = vrot.lane.b32.xlu0 %v6650, 16
  %v7240 = vpop.permute.xlu0 %7239
  %7241 = vrot.lane.b32.xlu0 %v6651, 16
  %v7242 = vpop.permute.xlu0 %7241
  %7243 = vrot.lane.b32.xlu0 %v6652, 16
  %v7244 = vpop.permute.xlu0 %7243
  %7245 = vrot.lane.b32.xlu0 %v6653, 16
  %v7246 = vpop.permute.xlu0 %7245
  %7247 = vrot.lane.b32.xlu0 %v6654, 16
  %v7248 = vpop.permute.xlu0 %7247
  %7249 = vrot.lane.b32.xlu0 %v6655, 16
  %v7250 = vpop.permute.xlu0 %7249
  %7251 = vrot.lane.b32.xlu0 %v6656, 16
  %v7252 = vpop.permute.xlu0 %7251
  %7253 = vrot.lane.b32.xlu0 %v6657, 16
  %v7254 = vpop.permute.xlu0 %7253
  %7255 = vrot.lane.b32.xlu0 %v6658, 16
  %v7256 = vpop.permute.xlu0 %7255
  %7257 = vrot.lane.b32.xlu0 %v6659, 16
  %v7258 = vpop.permute.xlu0 %7257
  %7259 = vrot.lane.b32.xlu0 %v6660, 16
  %v7260 = vpop.permute.xlu0 %7259
  %7261 = vrot.lane.b32.xlu0 %v6661, 16
  %v7262 = vpop.permute.xlu0 %7261
  %7263 = vrot.lane.b32.xlu0 %v6662, 16
  %v7264 = vpop.permute.xlu0 %7263
  %7265 = vrot.lane.b32.xlu0 %v6663, 16
  %v7266 = vpop.permute.xlu0 %7265
  %7267 = vrot.lane.b32.xlu0 %v6664, 16
  %v7268 = vpop.permute.xlu0 %7267
  %7269 = vrot.lane.b32.xlu0 %v6665, 16
  %v7270 = vpop.permute.xlu0 %7269
  %7271 = vrot.lane.b32.xlu0 %v6666, 16
  %v7272 = vpop.permute.xlu0 %7271
  %7273 = vrot.lane.b32.xlu0 %v6667, 16
  %v7274 = vpop.permute.xlu0 %7273
  %7275 = vrot.lane.b32.xlu0 %v6668, 16
  %v7276 = vpop.permute.xlu0 %7275
  %7277 = vrot.lane.b32.xlu0 %v6669, 16
  %v7278 = vpop.permute.xlu0 %7277
  %7343 = vrot.lane.b32.xlu0 %v6670, 20
  %v7344 = vpop.permute.xlu0 %7343
  %7345 = vrot.lane.b32.xlu0 %v6671, 20
  %v7346 = vpop.permute.xlu0 %7345
  %7347 = vrot.lane.b32.xlu0 %v6672, 20
  %v7348 = vpop.permute.xlu0 %7347
  %7349 = vrot.lane.b32.xlu0 %v6673, 20
  %v7350 = vpop.permute.xlu0 %7349
  %7351 = vrot.lane.b32.xlu0 %v6674, 20
  %v7352 = vpop.permute.xlu0 %7351
  %7353 = vrot.lane.b32.xlu0 %v6675, 20
  %v7354 = vpop.permute.xlu0 %7353
  %7355 = vrot.lane.b32.xlu0 %v6676, 20
  %v7356 = vpop.permute.xlu0 %7355
  %7357 = vrot.lane.b32.xlu0 %v6677, 20
  %v7358 = vpop.permute.xlu0 %7357
  %7359 = vrot.lane.b32.xlu0 %v6678, 20
  %v7360 = vpop.permute.xlu0 %7359
  %7361 = vrot.lane.b32.xlu0 %v6679, 20
  %v7362 = vpop.permute.xlu0 %7361
  %7363 = vrot.lane.b32.xlu0 %v6680, 20
  %v7364 = vpop.permute.xlu0 %7363
  %7365 = vrot.lane.b32.xlu0 %v6681, 20
  %v7366 = vpop.permute.xlu0 %7365
  %7367 = vrot.lane.b32.xlu0 %v6682, 20
  %v7368 = vpop.permute.xlu0 %7367
  %7369 = vrot.lane.b32.xlu0 %v6683, 20
  %v7370 = vpop.permute.xlu0 %7369
  %7371 = vrot.lane.b32.xlu0 %v6684, 20
  %v7372 = vpop.permute.xlu0 %7371
  %7373 = vrot.lane.b32.xlu0 %v6685, 20
  %v7374 = vpop.permute.xlu0 %7373
  %7375 = vrot.lane.b32.xlu0 %v6686, 20
  %v7376 = vpop.permute.xlu0 %7375
  %7377 = vrot.lane.b32.xlu0 %v6687, 20
  %v7378 = vpop.permute.xlu0 %7377
  %7379 = vrot.lane.b32.xlu0 %v6688, 20
  %v7380 = vpop.permute.xlu0 %7379
  %7381 = vrot.lane.b32.xlu0 %v6689, 20
  %v7382 = vpop.permute.xlu0 %7381
  %7383 = vrot.lane.b32.xlu0 %v6690, 20
  %v7384 = vpop.permute.xlu0 %7383
  %7385 = vrot.lane.b32.xlu0 %v6691, 20
  %v7386 = vpop.permute.xlu0 %7385
  %7387 = vrot.lane.b32.xlu0 %v6692, 20
  %v7388 = vpop.permute.xlu0 %7387
  %7389 = vrot.lane.b32.xlu0 %v6693, 20
  %v7390 = vpop.permute.xlu0 %7389
  %7391 = vrot.lane.b32.xlu0 %v6694, 20
  %v7392 = vpop.permute.xlu0 %7391
  %7393 = vrot.lane.b32.xlu0 %v6695, 20
  %v7394 = vpop.permute.xlu0 %7393
  %7395 = vrot.lane.b32.xlu0 %v6696, 20
  %v7396 = vpop.permute.xlu0 %7395
  %7397 = vrot.lane.b32.xlu0 %v6697, 20
  %v7398 = vpop.permute.xlu0 %7397
  %7399 = vrot.lane.b32.xlu0 %v6698, 20
  %v7400 = vpop.permute.xlu0 %7399
  %7401 = vrot.lane.b32.xlu0 %v6699, 20
  %v7402 = vpop.permute.xlu0 %7401
  %7403 = vrot.lane.b32.xlu0 %v6700, 20
  %v7404 = vpop.permute.xlu0 %7403
  %7405 = vrot.lane.b32.xlu0 %v6701, 20
  %v7406 = vpop.permute.xlu0 %7405
  %7471 = vrot.lane.b32.xlu0 %v6703, 24
  %v7472 = vpop.permute.xlu0 %7471
  %7473 = vrot.lane.b32.xlu0 %v6704, 24
  %v7474 = vpop.permute.xlu0 %7473
  %7475 = vrot.lane.b32.xlu0 %v6705, 24
  %v7476 = vpop.permute.xlu0 %7475
  %7477 = vrot.lane.b32.xlu0 %v6706, 24
  %v7478 = vpop.permute.xlu0 %7477
  %7479 = vrot.lane.b32.xlu0 %v6707, 24
  %v7480 = vpop.permute.xlu0 %7479
  %7481 = vrot.lane.b32.xlu0 %v6708, 24
  %v7482 = vpop.permute.xlu0 %7481
  %7483 = vrot.lane.b32.xlu0 %v6709, 24
  %v7484 = vpop.permute.xlu0 %7483
  %7485 = vrot.lane.b32.xlu0 %v6710, 24
  %v7486 = vpop.permute.xlu0 %7485
  %7487 = vrot.lane.b32.xlu0 %v6711, 24
  %v7488 = vpop.permute.xlu0 %7487
  %7489 = vrot.lane.b32.xlu0 %v6712, 24
  %v7490 = vpop.permute.xlu0 %7489
  %7491 = vrot.lane.b32.xlu0 %v6713, 24
  %v7492 = vpop.permute.xlu0 %7491
  %7493 = vrot.lane.b32.xlu0 %v6714, 24
  %v7494 = vpop.permute.xlu0 %7493
  %7495 = vrot.lane.b32.xlu0 %v6715, 24
  %v7496 = vpop.permute.xlu0 %7495
  %7497 = vrot.lane.b32.xlu0 %v6716, 24
  %v7498 = vpop.permute.xlu0 %7497
  %7499 = vrot.lane.b32.xlu0 %v6717, 24
  %v7500 = vpop.permute.xlu0 %7499
  %7501 = vrot.lane.b32.xlu0 %v6718, 24
  %v7502 = vpop.permute.xlu0 %7501
  %7503 = vrot.lane.b32.xlu0 %v6719, 24
  %v7504 = vpop.permute.xlu0 %7503
  %7505 = vrot.lane.b32.xlu0 %v6720, 24
  %v7506 = vpop.permute.xlu0 %7505
  %7507 = vrot.lane.b32.xlu0 %v6721, 24
  %v7508 = vpop.permute.xlu0 %7507
  %7509 = vrot.lane.b32.xlu0 %v6722, 24
  %v7510 = vpop.permute.xlu0 %7509
  %7511 = vrot.lane.b32.xlu0 %v6723, 24
  %v7512 = vpop.permute.xlu0 %7511
  %7513 = vrot.lane.b32.xlu0 %v6724, 24
  %v7514 = vpop.permute.xlu0 %7513
  %7515 = vrot.lane.b32.xlu0 %v6725, 24
  %v7516 = vpop.permute.xlu0 %7515
  %7517 = vrot.lane.b32.xlu0 %v6726, 24
  %v7518 = vpop.permute.xlu0 %7517
  %7519 = vrot.lane.b32.xlu0 %v6727, 24
  %v7520 = vpop.permute.xlu0 %7519
  %7521 = vrot.lane.b32.xlu0 %v6728, 24
  %v7522 = vpop.permute.xlu0 %7521
  %7523 = vrot.lane.b32.xlu0 %v6729, 24
  %v7524 = vpop.permute.xlu0 %7523
  %7525 = vrot.lane.b32.xlu0 %v6730, 24
  %v7526 = vpop.permute.xlu0 %7525
  %7527 = vrot.lane.b32.xlu0 %v6731, 24
  %v7528 = vpop.permute.xlu0 %7527
  %7529 = vrot.lane.b32.xlu0 %v6732, 24
  %v7530 = vpop.permute.xlu0 %7529
  %7531 = vrot.lane.b32.xlu0 %v6733, 24
  %v7532 = vpop.permute.xlu0 %7531
  %7533 = vrot.lane.b32.xlu0 %v6734, 24
  %v7534 = vpop.permute.xlu0 %7533
  %7599 = vrot.lane.b32.xlu0 %v6735, 28
  %v7600 = vpop.permute.xlu0 %7599
  %7601 = vrot.lane.b32.xlu0 %v6736, 28
  %v7602 = vpop.permute.xlu0 %7601
  %7603 = vrot.lane.b32.xlu0 %v6737, 28
  %v7604 = vpop.permute.xlu0 %7603
  %7605 = vrot.lane.b32.xlu0 %v6738, 28
  %v7606 = vpop.permute.xlu0 %7605
  %7607 = vrot.lane.b32.xlu0 %v6739, 28
  %v7608 = vpop.permute.xlu0 %7607
  %7609 = vrot.lane.b32.xlu0 %v6740, 28
  %v7610 = vpop.permute.xlu0 %7609
  %7611 = vrot.lane.b32.xlu0 %v6741, 28
  %v7612 = vpop.permute.xlu0 %7611
  %7613 = vrot.lane.b32.xlu0 %v6742, 28
  %v7614 = vpop.permute.xlu0 %7613
  %7615 = vrot.lane.b32.xlu0 %v6743, 28
  %v7616 = vpop.permute.xlu0 %7615
  %7617 = vrot.lane.b32.xlu0 %v6744, 28
  %v7618 = vpop.permute.xlu0 %7617
  %7619 = vrot.lane.b32.xlu0 %v6745, 28
  %v7620 = vpop.permute.xlu0 %7619
  %7621 = vrot.lane.b32.xlu0 %v6746, 28
  %v7622 = vpop.permute.xlu0 %7621
  %7623 = vrot.lane.b32.xlu0 %v6747, 28
  %v7624 = vpop.permute.xlu0 %7623
  %7625 = vrot.lane.b32.xlu0 %v6748, 28
  %v7626 = vpop.permute.xlu0 %7625
  %7627 = vrot.lane.b32.xlu0 %v6749, 28
  %v7628 = vpop.permute.xlu0 %7627
  %7629 = vrot.lane.b32.xlu0 %v6750, 28
  %v7630 = vpop.permute.xlu0 %7629
  %7631 = vrot.lane.b32.xlu0 %v6751, 28
  %v7632 = vpop.permute.xlu0 %7631
  %7633 = vrot.lane.b32.xlu0 %v6752, 28
  %v7634 = vpop.permute.xlu0 %7633
  %7635 = vrot.lane.b32.xlu0 %v6753, 28
  %v7636 = vpop.permute.xlu0 %7635
  %7637 = vrot.lane.b32.xlu0 %v6754, 28
  %v7638 = vpop.permute.xlu0 %7637
  %7639 = vrot.lane.b32.xlu0 %v6755, 28
  %v7640 = vpop.permute.xlu0 %7639
  %7641 = vrot.lane.b32.xlu0 %v6756, 28
  %v7642 = vpop.permute.xlu0 %7641
  %7643 = vrot.lane.b32.xlu0 %v6757, 28
  %v7644 = vpop.permute.xlu0 %7643
  %7645 = vrot.lane.b32.xlu0 %v6758, 28
  %v7646 = vpop.permute.xlu0 %7645
  %7647 = vrot.lane.b32.xlu0 %v6759, 28
  %v7648 = vpop.permute.xlu0 %7647
  %7649 = vrot.lane.b32.xlu0 %v6760, 28
  %v7650 = vpop.permute.xlu0 %7649
  %7651 = vrot.lane.b32.xlu0 %v6761, 28
  %v7652 = vpop.permute.xlu0 %7651
  %7653 = vrot.lane.b32.xlu0 %v6762, 28
  %v7654 = vpop.permute.xlu0 %7653
  %7655 = vrot.lane.b32.xlu0 %v6763, 28
  %v7656 = vpop.permute.xlu0 %7655
  %7657 = vrot.lane.b32.xlu0 %v6764, 28
  %v7658 = vpop.permute.xlu0 %7657
  %7659 = vrot.lane.b32.xlu0 %v6765, 28
  %v7660 = vpop.permute.xlu0 %7659
  %7661 = vrot.lane.b32.xlu0 %v6766, 28
  %v7662 = vpop.permute.xlu0 %7661
  %7727 = vrot.lane.b32.xlu0 %v6767, 32
  %v7728 = vpop.permute.xlu0 %7727
  %7729 = vrot.lane.b32.xlu0 %v6768, 32
  %v7730 = vpop.permute.xlu0 %7729
  %7731 = vrot.lane.b32.xlu0 %v6769, 32
  %v7732 = vpop.permute.xlu0 %7731
  %7733 = vrot.lane.b32.xlu0 %v6770, 32
  %v7734 = vpop.permute.xlu0 %7733
  %7735 = vrot.lane.b32.xlu0 %v6771, 32
  %v7736 = vpop.permute.xlu0 %7735
  %7737 = vrot.lane.b32.xlu0 %v6772, 32
  %v7738 = vpop.permute.xlu0 %7737
  %7739 = vrot.lane.b32.xlu0 %v6773, 32
  %v7740 = vpop.permute.xlu0 %7739
  %7741 = vrot.lane.b32.xlu0 %v6774, 32
  %v7742 = vpop.permute.xlu0 %7741
  %7743 = vrot.lane.b32.xlu0 %v6775, 32
  %v7744 = vpop.permute.xlu0 %7743
  %7745 = vrot.lane.b32.xlu0 %v6776, 32
  %v7746 = vpop.permute.xlu0 %7745
  %7747 = vrot.lane.b32.xlu0 %v6777, 32
  %v7748 = vpop.permute.xlu0 %7747
  %7749 = vrot.lane.b32.xlu0 %v6778, 32
  %v7750 = vpop.permute.xlu0 %7749
  %7751 = vrot.lane.b32.xlu0 %v6779, 32
  %v7752 = vpop.permute.xlu0 %7751
  %7753 = vrot.lane.b32.xlu0 %v6780, 32
  %v7754 = vpop.permute.xlu0 %7753
  %7755 = vrot.lane.b32.xlu0 %v6781, 32
  %v7756 = vpop.permute.xlu0 %7755
  %7757 = vrot.lane.b32.xlu0 %v6782, 32
  %v7758 = vpop.permute.xlu0 %7757
  %7759 = vrot.lane.b32.xlu0 %v6783, 32
  %v7760 = vpop.permute.xlu0 %7759
  %7761 = vrot.lane.b32.xlu0 %v6784, 32
  %v7762 = vpop.permute.xlu0 %7761
  %7763 = vrot.lane.b32.xlu0 %v6785, 32
  %v7764 = vpop.permute.xlu0 %7763
  %7765 = vrot.lane.b32.xlu0 %v6786, 32
  %v7766 = vpop.permute.xlu0 %7765
  %7767 = vrot.lane.b32.xlu0 %v6787, 32
  %v7768 = vpop.permute.xlu0 %7767
  %7769 = vrot.lane.b32.xlu0 %v6788, 32
  %v7770 = vpop.permute.xlu0 %7769
  %7771 = vrot.lane.b32.xlu0 %v6789, 32
  %v7772 = vpop.permute.xlu0 %7771
  %7773 = vrot.lane.b32.xlu0 %v6790, 32
  %v7774 = vpop.permute.xlu0 %7773
  %7775 = vrot.lane.b32.xlu0 %v6791, 32
  %v7776 = vpop.permute.xlu0 %7775
  %7777 = vrot.lane.b32.xlu0 %v6792, 32
  %v7778 = vpop.permute.xlu0 %7777
  %7779 = vrot.lane.b32.xlu0 %v6793, 32
  %v7780 = vpop.permute.xlu0 %7779
  %7781 = vrot.lane.b32.xlu0 %v6794, 32
  %v7782 = vpop.permute.xlu0 %7781
  %7783 = vrot.lane.b32.xlu0 %v6795, 32
  %v7784 = vpop.permute.xlu0 %7783
  %7785 = vrot.lane.b32.xlu0 %v6796, 32
  %v7786 = vpop.permute.xlu0 %7785
  %7787 = vrot.lane.b32.xlu0 %v6797, 32
  %v7788 = vpop.permute.xlu0 %7787
  %7789 = vrot.lane.b32.xlu0 %v6798, 32
  %v7790 = vpop.permute.xlu0 %7789
  %v7823 = vsel %vm26, %v6510, %v6832
  %v7824 = vsel %vm26, %v6511, %v6834
  %v7825 = vsel %vm26, %v6512, %v6836
  %v7826 = vsel %vm26, %v6513, %v6838
  %v7827 = vsel %vm26, %v6514, %v6840
  %v7828 = vsel %vm26, %v6515, %v6842
  %v7829 = vsel %vm26, %v6516, %v6844
  %v7830 = vsel %vm26, %v6517, %v6846
  %v7831 = vsel %vm26, %v6518, %v6848
  %v7832 = vsel %vm26, %v6519, %v6850
  %v7833 = vsel %vm26, %v6520, %v6852
  %v7834 = vsel %vm26, %v6521, %v6854
  %v7835 = vsel %vm26, %v6522, %v6856
  %v7836 = vsel %vm26, %v6523, %v6858
  %v7837 = vsel %vm26, %v6524, %v6860
  %v7838 = vsel %vm26, %v6525, %v6862
  %v7839 = vsel %vm26, %v6526, %v6864
  %v7840 = vsel %vm26, %v6527, %v6866
  %v7841 = vsel %vm26, %v6528, %v6868
  %v7842 = vsel %vm26, %v6529, %v6870
  %v7843 = vsel %vm26, %v6530, %v6872
  %v7844 = vsel %vm26, %v6531, %v6874
  %v7845 = vsel %vm26, %v6532, %v6876
  %v7846 = vsel %vm26, %v6533, %v6878
  %v7847 = vsel %vm26, %v6534, %v6880
  %v7848 = vsel %vm26, %v6535, %v6882
  %v7849 = vsel %vm26, %v6536, %v6884
  %v7850 = vsel %vm26, %v6537, %v6886
  %v7851 = vsel %vm26, %v6538, %v6888
  %v7852 = vsel %vm26, %v6539, %v6890
  %v7853 = vsel %vm26, %v6540, %v6892
  %v7854 = vsel %vm26, %v6541, %v6894
  %v7855 = vsel %vm1684, %v7823, %v6960
  %v7856 = vsel %vm1684, %v7824, %v6962
  %v7857 = vsel %vm1684, %v7825, %v6964
  %v7858 = vsel %vm1684, %v7826, %v6966
  %v7859 = vsel %vm1684, %v7827, %v6968
  %v7860 = vsel %vm1684, %v7828, %v6970
  %v7861 = vsel %vm1684, %v7829, %v6972
  %v7862 = vsel %vm1684, %v7830, %v6974
  %v7863 = vsel %vm1684, %v7831, %v6976
  %v7864 = vsel %vm1684, %v7832, %v6978
  %v7865 = vsel %vm1684, %v7833, %v6980
  %v7866 = vsel %vm1684, %v7834, %v6982
  %v7867 = vsel %vm1684, %v7835, %v6984
  %v7868 = vsel %vm1684, %v7836, %v6986
  %v7869 = vsel %vm1684, %v7837, %v6988
  %v7870 = vsel %vm1684, %v7838, %v6990
  %v7871 = vsel %vm1684, %v7839, %v6992
  %v7872 = vsel %vm1684, %v7840, %v6994
  %v7873 = vsel %vm1684, %v7841, %v6996
  %v7874 = vsel %vm1684, %v7842, %v6998
  %v7875 = vsel %vm1684, %v7843, %v7000
  %v7876 = vsel %vm1684, %v7844, %v7002
  %v7877 = vsel %vm1684, %v7845, %v7004
  %v7878 = vsel %vm1684, %v7846, %v7006
  %v7879 = vsel %vm1684, %v7847, %v7008
  %v7880 = vsel %vm1684, %v7848, %v7010
  %v7881 = vsel %vm1684, %v7849, %v7012
  %v7882 = vsel %vm1684, %v7850, %v7014
  %v7883 = vsel %vm1684, %v7851, %v7016
  %v7884 = vsel %vm1684, %v7852, %v7018
  %v7885 = vsel %vm1684, %v7853, %v7020
  %v7886 = vsel %vm1684, %v7854, %v7022
  %v7887 = vsel %vm1717, %v7855, %v7088
  %v7888 = vsel %vm1717, %v7856, %v7090
  %v7889 = vsel %vm1717, %v7857, %v7092
  %v7890 = vsel %vm1717, %v7858, %v7094
  %v7891 = vsel %vm1717, %v7859, %v7096
  %v7892 = vsel %vm1717, %v7860, %v7098
  %v7893 = vsel %vm1717, %v7861, %v7100
  %v7894 = vsel %vm1717, %v7862, %v7102
  %v7895 = vsel %vm1717, %v7863, %v7104
  %v7896 = vsel %vm1717, %v7864, %v7106
  %v7897 = vsel %vm1717, %v7865, %v7108
  %v7898 = vsel %vm1717, %v7866, %v7110
  %v7899 = vsel %vm1717, %v7867, %v7112
  %v7900 = vsel %vm1717, %v7868, %v7114
  %v7901 = vsel %vm1717, %v7869, %v7116
  %v7902 = vsel %vm1717, %v7870, %v7118
  %v7903 = vsel %vm1717, %v7871, %v7120
  %v7904 = vsel %vm1717, %v7872, %v7122
  %v7905 = vsel %vm1717, %v7873, %v7124
  %v7906 = vsel %vm1717, %v7874, %v7126
  %v7907 = vsel %vm1717, %v7875, %v7128
  %v7908 = vsel %vm1717, %v7876, %v7130
  %v7909 = vsel %vm1717, %v7877, %v7132
  %v7910 = vsel %vm1717, %v7878, %v7134
  %v7911 = vsel %vm1717, %v7879, %v7136
  %v7912 = vsel %vm1717, %v7880, %v7138
  %v7913 = vsel %vm1717, %v7881, %v7140
  %v7914 = vsel %vm1717, %v7882, %v7142
  %v7915 = vsel %vm1717, %v7883, %v7144
  %v7916 = vsel %vm1717, %v7884, %v7146
  %v7917 = vsel %vm1717, %v7885, %v7148
  %v7918 = vsel %vm1717, %v7886, %v7150
  %v7919 = vsel %vm1750, %v7887, %v7216
  %v7920 = vsel %vm1750, %v7888, %v7218
  %v7921 = vsel %vm1750, %v7889, %v7220
  %v7922 = vsel %vm1750, %v7890, %v7222
  %v7923 = vsel %vm1750, %v7891, %v7224
  %v7924 = vsel %vm1750, %v7892, %v7226
  %v7925 = vsel %vm1750, %v7893, %v7228
  %v7926 = vsel %vm1750, %v7894, %v7230
  %v7927 = vsel %vm1750, %v7895, %v7232
  %v7928 = vsel %vm1750, %v7896, %v7234
  %v7929 = vsel %vm1750, %v7897, %v7236
  %v7930 = vsel %vm1750, %v7898, %v7238
  %v7931 = vsel %vm1750, %v7899, %v7240
  %v7932 = vsel %vm1750, %v7900, %v7242
  %v7933 = vsel %vm1750, %v7901, %v7244
  %v7934 = vsel %vm1750, %v7902, %v7246
  %v7935 = vsel %vm1750, %v7903, %v7248
  %v7936 = vsel %vm1750, %v7904, %v7250
  %v7937 = vsel %vm1750, %v7905, %v7252
  %v7938 = vsel %vm1750, %v7906, %v7254
  %v7939 = vsel %vm1750, %v7907, %v7256
  %v7940 = vsel %vm1750, %v7908, %v7258
  %v7941 = vsel %vm1750, %v7909, %v7260
  %v7942 = vsel %vm1750, %v7910, %v7262
  %v7943 = vsel %vm1750, %v7911, %v7264
  %v7944 = vsel %vm1750, %v7912, %v7266
  %v7945 = vsel %vm1750, %v7913, %v7268
  %v7946 = vsel %vm1750, %v7914, %v7270
  %v7947 = vsel %vm1750, %v7915, %v7272
  %v7948 = vsel %vm1750, %v7916, %v7274
  %v7949 = vsel %vm1750, %v7917, %v7276
  %v7950 = vsel %vm1750, %v7918, %v7278
  %v7951 = vsel %vm1783, %v7919, %v7344
  %v7952 = vsel %vm1783, %v7920, %v7346
  %v7953 = vsel %vm1783, %v7921, %v7348
  %v7954 = vsel %vm1783, %v7922, %v7350
  %v7955 = vsel %vm1783, %v7923, %v7352
  %v7956 = vsel %vm1783, %v7924, %v7354
  %v7957 = vsel %vm1783, %v7925, %v7356
  %v7958 = vsel %vm1783, %v7926, %v7358
  %v7959 = vsel %vm1783, %v7927, %v7360
  %v7960 = vsel %vm1783, %v7928, %v7362
  %v7961 = vsel %vm1783, %v7929, %v7364
  %v7962 = vsel %vm1783, %v7930, %v7366
  %v7963 = vsel %vm1783, %v7931, %v7368
  %v7964 = vsel %vm1783, %v7932, %v7370
  %v7965 = vsel %vm1783, %v7933, %v7372
  %v7966 = vsel %vm1783, %v7934, %v7374
  %v7967 = vsel %vm1783, %v7935, %v7376
  %v7968 = vsel %vm1783, %v7936, %v7378
  %v7969 = vsel %vm1783, %v7937, %v7380
  %v7970 = vsel %vm1783, %v7938, %v7382
  %v7971 = vsel %vm1783, %v7939, %v7384
  %v7972 = vsel %vm1783, %v7940, %v7386
  %v7973 = vsel %vm1783, %v7941, %v7388
  %v7974 = vsel %vm1783, %v7942, %v7390
  %v7975 = vsel %vm1783, %v7943, %v7392
  %v7976 = vsel %vm1783, %v7944, %v7394
  %v7977 = vsel %vm1783, %v7945, %v7396
  %v7978 = vsel %vm1783, %v7946, %v7398
  %v7979 = vsel %vm1783, %v7947, %v7400
  %v7980 = vsel %vm1783, %v7948, %v7402
  %v7981 = vsel %vm1783, %v7949, %v7404
  %v7982 = vsel %vm1783, %v7950, %v7406
  %v7983 = vsel %vm1816, %v7951, %v7472
  %v7984 = vsel %vm1816, %v7952, %v7474
  %v7985 = vsel %vm1816, %v7953, %v7476
  %v7986 = vsel %vm1816, %v7954, %v7478
  %v7987 = vsel %vm1816, %v7955, %v7480
  %v7988 = vsel %vm1816, %v7956, %v7482
  %v7989 = vsel %vm1816, %v7957, %v7484
  %v7990 = vsel %vm1816, %v7958, %v7486
  %v7991 = vsel %vm1816, %v7959, %v7488
  %v7992 = vsel %vm1816, %v7960, %v7490
  %v7993 = vsel %vm1816, %v7961, %v7492
  %v7994 = vsel %vm1816, %v7962, %v7494
  %v7995 = vsel %vm1816, %v7963, %v7496
  %v7996 = vsel %vm1816, %v7964, %v7498
  %v7997 = vsel %vm1816, %v7965, %v7500
  %v7998 = vsel %vm1816, %v7966, %v7502
  %v7999 = vsel %vm1816, %v7967, %v7504
  %v8000 = vsel %vm1816, %v7968, %v7506
  %v8001 = vsel %vm1816, %v7969, %v7508
  %v8002 = vsel %vm1816, %v7970, %v7510
  %v8003 = vsel %vm1816, %v7971, %v7512
  %v8004 = vsel %vm1816, %v7972, %v7514
  %v8005 = vsel %vm1816, %v7973, %v7516
  %v8006 = vsel %vm1816, %v7974, %v7518
  %v8007 = vsel %vm1816, %v7975, %v7520
  %v8008 = vsel %vm1816, %v7976, %v7522
  %v8009 = vsel %vm1816, %v7977, %v7524
  %v8010 = vsel %vm1816, %v7978, %v7526
  %v8011 = vsel %vm1816, %v7979, %v7528
  %v8012 = vsel %vm1816, %v7980, %v7530
  %v8013 = vsel %vm1816, %v7981, %v7532
  %v8014 = vsel %vm1816, %v7982, %v7534
  %v8015 = vsel %vm1849, %v7983, %v7600
  %v8016 = vsel %vm1849, %v7984, %v7602
  %v8017 = vsel %vm1849, %v7985, %v7604
  %v8018 = vsel %vm1849, %v7986, %v7606
  %v8019 = vsel %vm1849, %v7987, %v7608
  %v8020 = vsel %vm1849, %v7988, %v7610
  %v8021 = vsel %vm1849, %v7989, %v7612
  %v8022 = vsel %vm1849, %v7990, %v7614
  %v8023 = vsel %vm1849, %v7991, %v7616
  %v8024 = vsel %vm1849, %v7992, %v7618
  %v8025 = vsel %vm1849, %v7993, %v7620
  %v8026 = vsel %vm1849, %v7994, %v7622
  %v8027 = vsel %vm1849, %v7995, %v7624
  %v8028 = vsel %vm1849, %v7996, %v7626
  %v8029 = vsel %vm1849, %v7997, %v7628
  %v8030 = vsel %vm1849, %v7998, %v7630
  %v8031 = vsel %vm1849, %v7999, %v7632
  %v8032 = vsel %vm1849, %v8000, %v7634
  %v8033 = vsel %vm1849, %v8001, %v7636
  %v8034 = vsel %vm1849, %v8002, %v7638
  %v8035 = vsel %vm1849, %v8003, %v7640
  %v8036 = vsel %vm1849, %v8004, %v7642
  %v8037 = vsel %vm1849, %v8005, %v7644
  %v8038 = vsel %vm1849, %v8006, %v7646
  %v8039 = vsel %vm1849, %v8007, %v7648
  %v8040 = vsel %vm1849, %v8008, %v7650
  %v8041 = vsel %vm1849, %v8009, %v7652
  %v8042 = vsel %vm1849, %v8010, %v7654
  %v8043 = vsel %vm1849, %v8011, %v7656
  %v8044 = vsel %vm1849, %v8012, %v7658
  %v8045 = vsel %vm1849, %v8013, %v7660
  %v8046 = vsel %vm1849, %v8014, %v7662
  %v8047 = vsel %vm1882, %v8015, %v7728
  %v8048 = vsel %vm1882, %v8016, %v7730
  %v8049 = vsel %vm1882, %v8017, %v7732
  %v8050 = vsel %vm1882, %v8018, %v7734
  %v8051 = vsel %vm1882, %v8019, %v7736
  %v8052 = vsel %vm1882, %v8020, %v7738
  %v8053 = vsel %vm1882, %v8021, %v7740
  %v8054 = vsel %vm1882, %v8022, %v7742
  %v8055 = vsel %vm1882, %v8023, %v7744
  %v8056 = vsel %vm1882, %v8024, %v7746
  %v8057 = vsel %vm1882, %v8025, %v7748
  %v8058 = vsel %vm1882, %v8026, %v7750
  %v8059 = vsel %vm1882, %v8027, %v7752
  %v8060 = vsel %vm1882, %v8028, %v7754
  %v8061 = vsel %vm1882, %v8029, %v7756
  %v8062 = vsel %vm1882, %v8030, %v7758
  %v8063 = vsel %vm1882, %v8031, %v7760
  %v8064 = vsel %vm1882, %v8032, %v7762
  %v8065 = vsel %vm1882, %v8033, %v7764
  %v8066 = vsel %vm1882, %v8034, %v7766
  %v8067 = vsel %vm1882, %v8035, %v7768
  %v8068 = vsel %vm1882, %v8036, %v7770
  %v8069 = vsel %vm1882, %v8037, %v7772
  %v8070 = vsel %vm1882, %v8038, %v7774
  %v8071 = vsel %vm1882, %v8039, %v7776
  %v8072 = vsel %vm1882, %v8040, %v7778
  %v8073 = vsel %vm1882, %v8041, %v7780
  %v8074 = vsel %vm1882, %v8042, %v7782
  %v8075 = vsel %vm1882, %v8043, %v7784
  %v8076 = vsel %vm1882, %v8044, %v7786
  %v8077 = vsel %vm1882, %v8045, %v7788
  %v8078 = vsel %vm1882, %v8046, %v7790
  %v8080 = vsel %vm1915, %v8047, 0
  %v8083 = vsel %vm1915, %v8048, 0
  %v8086 = vsel %vm1915, %v8049, 0
  %v8089 = vsel %vm1915, %v8050, 0
  %v8092 = vsel %vm1915, %v8051, 0
  %v8095 = vsel %vm1915, %v8052, 0
  %v8098 = vsel %vm1915, %v8053, 0
  %v8101 = vsel %vm1915, %v8054, 0
  %v8104 = vsel %vm1915, %v8055, 0
  %v8107 = vsel %vm1915, %v8056, 0
  %v8110 = vsel %vm1915, %v8057, 0
  %v8113 = vsel %vm1915, %v8058, 0
  %v8116 = vsel %vm1915, %v8059, 0
  %v8119 = vsel %vm1915, %v8060, 0
  %v8122 = vsel %vm1915, %v8061, 0
  %v8125 = vsel %vm1915, %v8062, 0
  %v8128 = vsel %vm1915, %v8063, 0
  %v8131 = vsel %vm1915, %v8064, 0
  %v8134 = vsel %vm1915, %v8065, 0
  %v8137 = vsel %vm1915, %v8066, 0
  %v8140 = vsel %vm1915, %v8067, 0
  %v8143 = vsel %vm1915, %v8068, 0
  %v8146 = vsel %vm1915, %v8069, 0
  %v8149 = vsel %vm1915, %v8070, 0
  %v8152 = vsel %vm1915, %v8071, 0
  %v8155 = vsel %vm1915, %v8072, 0
  %v8158 = vsel %vm1915, %v8073, 0
  %v8161 = vsel %vm1915, %v8074, 0
  %v8164 = vsel %vm1915, %v8075, 0
  %v8167 = vsel %vm1915, %v8076, 0
  %v8170 = vsel %vm1915, %v8077, 0
  %v8173 = vsel %vm1915, %v8078, 0
  %8175 = vmatprep.subr.mxu0 0.0
  %8176 = vmatpush1.msra.mxu0 %v323
  %8177 = vmatprep.subr.mxu0 0.0
  %8178 = vmatpush1.msra.mxu0 %v324
  %8179 = vmatprep.subr.mxu0 0.0
  %8180 = vmatpush1.msra.mxu0 %v325
  %8181 = vmatprep.subr.mxu0 0.0
  %8182 = vmatpush1.msra.mxu0 %v326
  %8183 = vmatprep.subr.mxu0 0.0
  %8184 = vmatpush1.msra.mxu0 %v6075
  %8185 = vmatprep.subr.mxu0 0.0
  %8186 = vmatpush1.msra.mxu0 0.0
  %8187 = vmatprep.subr.mxu0 0.0
  %8188 = vmatpush1.msra.mxu0 0.0
  %8189 = vmatprep.subr.mxu0 0.0
  %8190 = vmatpush1.msra.mxu0 0.0
  %8191 = vmatprep.subr.mxu0 0.0
  %8192 = vmatpush1.msra.mxu0 0.0
  %8193 = vmatprep.subr.mxu0 0.0
  %8194 = vmatpush1.msra.mxu0 0.0
  %8195 = vmatprep.subr.mxu0 0.0
  %8196 = vmatpush1.msra.mxu0 0.0
  %8197 = vmatprep.subr.mxu0 0.0
  %8198 = vmatpush1.msra.mxu0 0.0
  %8199 = vmatprep.subr.mxu0 0.0
  %8200 = vmatpush1.msra.mxu0 0.0
  %8201 = vmatprep.subr.mxu0 0.0
  %8202 = vmatpush1.msra.mxu0 0.0
  %8203 = vmatprep.subr.mxu0 0.0
  %8204 = vmatpush1.msra.mxu0 0.0
  %8205 = vmatprep.subr.mxu0 0.0
  %8206 = vmatpush1.msra.mxu0 0.0
  %8207 = vmatprep.subr.mxu0 0.0
  %8208 = vmatpush1.msra.mxu0 0.0
  %8209 = vmatprep.subr.mxu0 0.0
  %8210 = vmatpush1.msra.mxu0 0.0
  %8211 = vmatprep.subr.mxu0 0.0
  %8212 = vmatpush1.msra.mxu0 0.0
  %8213 = vmatprep.subr.mxu0 0.0
  %8214 = vmatpush1.msra.mxu0 0.0
  %8215 = vmatprep.subr.mxu0 0.0
  %8216 = vmatpush1.msra.mxu0 0.0
  %8217 = vmatprep.subr.mxu0 0.0
  %8218 = vmatpush1.msra.mxu0 0.0
  %8219 = vmatprep.subr.mxu0 0.0
  %8220 = vmatpush1.msra.mxu0 0.0
  %8221 = vmatprep.subr.mxu0 0.0
  %8222 = vmatpush1.msra.mxu0 0.0
  %8223 = vmatprep.subr.mxu0 0.0
  %8224 = vmatpush1.msra.mxu0 0.0
  %8225 = vmatprep.subr.mxu0 0.0
  %8226 = vmatpush1.msra.mxu0 0.0
  %8227 = vmatprep.subr.mxu0 0.0
  %8228 = vmatpush1.msra.mxu0 0.0
  %8229 = vmatprep.subr.mxu0 0.0
  %8230 = vmatpush1.msra.mxu0 0.0
  %8231 = vmatprep.subr.mxu0 0.0
  %8232 = vmatpush1.msra.mxu0 0.0
  %8233 = vmatprep.subr.mxu0 0.0
  %8234 = vmatpush1.msra.mxu0 0.0
  %8235 = vmatprep.subr.mxu0 0.0
  %8236 = vmatpush1.msra.mxu0 0.0
  %8237 = vmatprep.subr.mxu0 0.0
  %8238 = vmatpush1.msra.mxu0 0.0
  %8239 = vmatprep.mubr.f32.mxu0 0.0
  %8240 = vmatmul.mubr.f32.gmra.mrb[0].mxu0 %v8080
  %v8241 = vpop.f32.mrb[0].mxu0
  %v8242 = vadd.f32 0.0, %v8241
  %v8243 = vpop.f32.mrb[0].mxu0
  %8244 = vmatprep.mubr.f32.mxu0 0.0
  %8245 = vmatmul.mubr.f32.gmra.mrb[0].mxu0 %v8083
  %v8246 = vpop.f32.mrb[0].mxu0
  %v8247 = vadd.f32 0.0, %v8246
  %v8248 = vpop.f32.mrb[0].mxu0
  %8249 = vmatprep.mubr.f32.mxu0 0.0
  %8250 = vmatmul.mubr.f32.gmra.mrb[0].mxu0 %v8086
  %v8251 = vpop.f32.mrb[0].mxu0
  %v8252 = vadd.f32 0.0, %v8251
  %v8253 = vpop.f32.mrb[0].mxu0
  %8254 = vmatprep.mubr.f32.mxu0 0.0
  %8255 = vmatmul.mubr.f32.gmra.mrb[0].mxu0 %v8089
  %v8256 = vpop.f32.mrb[0].mxu0
  %v8257 = vadd.f32 0.0, %v8256
  %v8258 = vpop.f32.mrb[0].mxu0
  %8259 = vmatprep.mubr.f32.mxu0 0.0
  %8260 = vmatmul.mubr.f32.gmra.mrb[0].mxu0 %v8092
  %v8261 = vpop.f32.mrb[0].mxu0
  %v8262 = vadd.f32 0.0, %v8261
  %v8263 = vpop.f32.mrb[0].mxu0
  %8264 = vmatprep.mubr.f32.mxu0 0.0
  %8265 = vmatmul.mubr.f32.gmra.mrb[0].mxu0 %v8095
  %v8266 = vpop.f32.mrb[0].mxu0
  %v8267 = vadd.f32 0.0, %v8266
  %v8268 = vpop.f32.mrb[0].mxu0
  %8269 = vmatprep.mubr.f32.mxu0 0.0
  %8270 = vmatmul.mubr.f32.gmra.mrb[0].mxu0 %v8098
  %v8271 = vpop.f32.mrb[0].mxu0
  %v8272 = vadd.f32 0.0, %v8271
  %v8273 = vpop.f32.mrb[0].mxu0
  %8274 = vmatprep.mubr.f32.mxu0 0.0
  %8275 = vmatmul.mubr.f32.gmra.mrb[0].mxu0 %v8101
  %v8276 = vpop.f32.mrb[0].mxu0
  %v8277 = vadd.f32 0.0, %v8276
  %v8278 = vpop.f32.mrb[0].mxu0
  %8279 = vmatprep.mubr.f32.mxu0 0.0
  %8280 = vmatmul.mubr.f32.gmra.mrb[0].mxu0 %v8104
  %v8281 = vpop.f32.mrb[0].mxu0
  %v8282 = vadd.f32 0.0, %v8281
  %v8283 = vpop.f32.mrb[0].mxu0
  %8284 = vmatprep.mubr.f32.mxu0 0.0
  %8285 = vmatmul.mubr.f32.gmra.mrb[0].mxu0 %v8107
  %v8286 = vpop.f32.mrb[0].mxu0
  %v8287 = vadd.f32 0.0, %v8286
  %v8288 = vpop.f32.mrb[0].mxu0
  %8289 = vmatprep.mubr.f32.mxu0 0.0
  %8290 = vmatmul.mubr.f32.gmra.mrb[0].mxu0 %v8110
  %v8291 = vpop.f32.mrb[0].mxu0
  %v8292 = vadd.f32 0.0, %v8291
  %v8293 = vpop.f32.mrb[0].mxu0
  %8294 = vmatprep.mubr.f32.mxu0 0.0
  %8295 = vmatmul.mubr.f32.gmra.mrb[0].mxu0 %v8113
  %v8296 = vpop.f32.mrb[0].mxu0
  %v8297 = vadd.f32 0.0, %v8296
  %v8298 = vpop.f32.mrb[0].mxu0
  %8299 = vmatprep.mubr.f32.mxu0 0.0
  %8300 = vmatmul.mubr.f32.gmra.mrb[0].mxu0 %v8116
  %v8301 = vpop.f32.mrb[0].mxu0
  %v8302 = vadd.f32 0.0, %v8301
  %v8303 = vpop.f32.mrb[0].mxu0
  %8304 = vmatprep.mubr.f32.mxu0 0.0
  %8305 = vmatmul.mubr.f32.gmra.mrb[0].mxu0 %v8119
  %v8306 = vpop.f32.mrb[0].mxu0
  %v8307 = vadd.f32 0.0, %v8306
  %v8308 = vpop.f32.mrb[0].mxu0
  %8309 = vmatprep.mubr.f32.mxu0 0.0
  %8310 = vmatmul.mubr.f32.gmra.mrb[0].mxu0 %v8122
  %v8311 = vpop.f32.mrb[0].mxu0
  %v8312 = vadd.f32 0.0, %v8311
  %v8313 = vpop.f32.mrb[0].mxu0
  %8314 = vmatprep.mubr.f32.mxu0 0.0
  %8315 = vmatmul.mubr.f32.gmra.mrb[0].mxu0 %v8125
  %v8316 = vpop.f32.mrb[0].mxu0
  %v8317 = vadd.f32 0.0, %v8316
  %v8318 = vpop.f32.mrb[0].mxu0
  %8319 = vmatprep.mubr.f32.mxu0 0.0
  %8320 = vmatmul.mubr.f32.gmra.mrb[0].mxu0 %v8128
  %v8321 = vpop.f32.mrb[0].mxu0
  %v8322 = vadd.f32 0.0, %v8321
  %v8323 = vpop.f32.mrb[0].mxu0
  %8324 = vmatprep.mubr.f32.mxu0 0.0
  %8325 = vmatmul.mubr.f32.gmra.mrb[0].mxu0 %v8131
  %v8326 = vpop.f32.mrb[0].mxu0
  %v8327 = vadd.f32 0.0, %v8326
  %v8328 = vpop.f32.mrb[0].mxu0
  %8329 = vmatprep.mubr.f32.mxu0 0.0
  %8330 = vmatmul.mubr.f32.gmra.mrb[0].mxu0 %v8134
  %v8331 = vpop.f32.mrb[0].mxu0
  %v8332 = vadd.f32 0.0, %v8331
  %v8333 = vpop.f32.mrb[0].mxu0
  %8334 = vmatprep.mubr.f32.mxu0 0.0
  %8335 = vmatmul.mubr.f32.gmra.mrb[0].mxu0 %v8137
  %v8336 = vpop.f32.mrb[0].mxu0
  %v8337 = vadd.f32 0.0, %v8336
  %v8338 = vpop.f32.mrb[0].mxu0
  %8339 = vmatprep.mubr.f32.mxu0 0.0
  %8340 = vmatmul.mubr.f32.gmra.mrb[0].mxu0 %v8140
  %v8341 = vpop.f32.mrb[0].mxu0
  %v8342 = vadd.f32 0.0, %v8341
  %v8343 = vpop.f32.mrb[0].mxu0
  %8344 = vmatprep.mubr.f32.mxu0 0.0
  %8345 = vmatmul.mubr.f32.gmra.mrb[0].mxu0 %v8143
  %v8346 = vpop.f32.mrb[0].mxu0
  %v8347 = vadd.f32 0.0, %v8346
  %v8348 = vpop.f32.mrb[0].mxu0
  %8349 = vmatprep.mubr.f32.mxu0 0.0
  %8350 = vmatmul.mubr.f32.gmra.mrb[0].mxu0 %v8146
  %v8351 = vpop.f32.mrb[0].mxu0
  %v8352 = vadd.f32 0.0, %v8351
  %v8353 = vpop.f32.mrb[0].mxu0
  %8354 = vmatprep.mubr.f32.mxu0 0.0
  %8355 = vmatmul.mubr.f32.gmra.mrb[0].mxu0 %v8149
  %v8356 = vpop.f32.mrb[0].mxu0
  %v8357 = vadd.f32 0.0, %v8356
  %v8358 = vpop.f32.mrb[0].mxu0
  %8359 = vmatprep.mubr.f32.mxu0 0.0
  %8360 = vmatmul.mubr.f32.gmra.mrb[0].mxu0 %v8152
  %v8361 = vpop.f32.mrb[0].mxu0
  %v8362 = vadd.f32 0.0, %v8361
  %v8363 = vpop.f32.mrb[0].mxu0
  %8364 = vmatprep.mubr.f32.mxu0 0.0
  %8365 = vmatmul.mubr.f32.gmra.mrb[0].mxu0 %v8155
  %v8366 = vpop.f32.mrb[0].mxu0
  %v8367 = vadd.f32 0.0, %v8366
  %v8368 = vpop.f32.mrb[0].mxu0
  %8369 = vmatprep.mubr.f32.mxu0 0.0
  %8370 = vmatmul.mubr.f32.gmra.mrb[0].mxu0 %v8158
  %v8371 = vpop.f32.mrb[0].mxu0
  %v8372 = vadd.f32 0.0, %v8371
  %v8373 = vpop.f32.mrb[0].mxu0
  %8374 = vmatprep.mubr.f32.mxu0 0.0
  %8375 = vmatmul.mubr.f32.gmra.mrb[0].mxu0 %v8161
  %v8376 = vpop.f32.mrb[0].mxu0
  %v8377 = vadd.f32 0.0, %v8376
  %v8378 = vpop.f32.mrb[0].mxu0
  %8379 = vmatprep.mubr.f32.mxu0 0.0
  %8380 = vmatmul.mubr.f32.gmra.mrb[0].mxu0 %v8164
  %v8381 = vpop.f32.mrb[0].mxu0
  %v8382 = vadd.f32 0.0, %v8381
  %v8383 = vpop.f32.mrb[0].mxu0
  %8384 = vmatprep.mubr.f32.mxu0 0.0
  %8385 = vmatmul.mubr.f32.gmra.mrb[0].mxu0 %v8167
  %v8386 = vpop.f32.mrb[0].mxu0
  %v8387 = vadd.f32 0.0, %v8386
  %v8388 = vpop.f32.mrb[0].mxu0
  %8389 = vmatprep.mubr.f32.mxu0 0.0
  %8390 = vmatmul.mubr.f32.gmra.mrb[0].mxu0 %v8170
  %v8391 = vpop.f32.mrb[0].mxu0
  %v8392 = vadd.f32 0.0, %v8391
  %v8393 = vpop.f32.mrb[0].mxu0
  %8394 = vmatprep.mubr.f32.mxu0 0.0
  %8395 = vmatmul.mubr.f32.gmra.mrb[0].mxu0 %v8173
  %v8396 = vpop.f32.mrb[0].mxu0
  %v8397 = vadd.f32 0.0, %v8396
  %v8398 = vpop.f32.mrb[0].mxu0
  %8399 = vdwg.mxu0
  %s8400 = smul.u32 8, 16
  %s8401 = scalar_lea.vmem %s0, %s8400
  %v8402 = vld [vmem:[%s8401] sm:$0xff]
  %v8403 = vld [vmem:[%s8401 + $0x8] sm:$0xff]
  %v8404 = vld [vmem:[%s8401 + $0x10] sm:$0xff]
  %v8405 = vld [vmem:[%s8401 + $0x18] sm:$0xff]
  %v8406 = vld [vmem:[%s8401 + $0x20] sm:$0xff]
  %v8407 = vld [vmem:[%s8401 + $0x28] sm:$0xff]
  %v8408 = vld [vmem:[%s8401 + $0x30] sm:$0xff]
  %v8409 = vld [vmem:[%s8401 + $0x38] sm:$0xff]
  %v8410 = vld [vmem:[%s8401 + $0x40] sm:$0xff]
  %v8411 = vld [vmem:[%s8401 + $0x48] sm:$0xff]
  %v8412 = vld [vmem:[%s8401 + $0x50] sm:$0xff]
  %v8413 = vld [vmem:[%s8401 + $0x58] sm:$0xff]
  %v8414 = vld [vmem:[%s8401 + $0x60] sm:$0xff]
  %v8415 = vld [vmem:[%s8401 + $0x68] sm:$0xff]
  %v8416 = vld [vmem:[%s8401 + $0x70] sm:$0xff]
  %v8417 = vld [vmem:[%s8401 + $0x78] sm:$0xff]
  %v8418 = vld [vmem:[%s8401 + $0x100] sm:$0xff]
  %v8419 = vld [vmem:[%s8401 + $0x108] sm:$0xff]
  %v8420 = vld [vmem:[%s8401 + $0x110] sm:$0xff]
  %v8421 = vld [vmem:[%s8401 + $0x118] sm:$0xff]
  %v8422 = vld [vmem:[%s8401 + $0x120] sm:$0xff]
  %v8423 = vld [vmem:[%s8401 + $0x128] sm:$0xff]
  %v8424 = vld [vmem:[%s8401 + $0x130] sm:$0xff]
  %v8425 = vld [vmem:[%s8401 + $0x138] sm:$0xff]
  %v8426 = vld [vmem:[%s8401 + $0x140] sm:$0xff]
  %v8427 = vld [vmem:[%s8401 + $0x148] sm:$0xff]
  %v8428 = vld [vmem:[%s8401 + $0x150] sm:$0xff]
  %v8429 = vld [vmem:[%s8401 + $0x158] sm:$0xff]
  %v8430 = vld [vmem:[%s8401 + $0x160] sm:$0xff]
  %v8431 = vld [vmem:[%s8401 + $0x168] sm:$0xff]
  %v8432 = vld [vmem:[%s8401 + $0x170] sm:$0xff]
  %v8433 = vld [vmem:[%s8401 + $0x178] sm:$0xff]
  %v8434 = vmul.f32 %v8242, %v6340
  %v8435 = vmul.f32 %v8247, %v6340
  %v8436 = vmul.f32 %v8252, %v6340
  %v8437 = vmul.f32 %v8257, %v6340
  %v8438 = vmul.f32 %v8262, %v6340
  %v8439 = vmul.f32 %v8267, %v6340
  %v8440 = vmul.f32 %v8272, %v6340
  %v8441 = vmul.f32 %v8277, %v6340
  %v8442 = vmul.f32 %v8282, %v6340
  %v8443 = vmul.f32 %v8287, %v6340
  %v8444 = vmul.f32 %v8292, %v6340
  %v8445 = vmul.f32 %v8297, %v6340
  %v8446 = vmul.f32 %v8302, %v6340
  %v8447 = vmul.f32 %v8307, %v6340
  %v8448 = vmul.f32 %v8312, %v6340
  %v8449 = vmul.f32 %v8317, %v6340
  %v8450 = vmul.f32 %v8322, %v6340
  %v8451 = vmul.f32 %v8327, %v6340
  %v8452 = vmul.f32 %v8332, %v6340
  %v8453 = vmul.f32 %v8337, %v6340
  %v8454 = vmul.f32 %v8342, %v6340
  %v8455 = vmul.f32 %v8347, %v6340
  %v8456 = vmul.f32 %v8352, %v6340
  %v8457 = vmul.f32 %v8357, %v6340
  %v8458 = vmul.f32 %v8362, %v6340
  %v8459 = vmul.f32 %v8367, %v6340
  %v8460 = vmul.f32 %v8372, %v6340
  %v8461 = vmul.f32 %v8377, %v6340
  %v8462 = vmul.f32 %v8382, %v6340
  %v8463 = vmul.f32 %v8387, %v6340
  %v8464 = vmul.f32 %v8392, %v6340
  %v8465 = vmul.f32 %v8397, %v6340
  %v8466 = vadd.f32 %v8434, %v6378
  %v8467 = vadd.f32 %v8435, %v6378
  %v8468 = vadd.f32 %v8436, %v6378
  %v8469 = vadd.f32 %v8437, %v6378
  %v8470 = vadd.f32 %v8438, %v6378
  %v8471 = vadd.f32 %v8439, %v6378
  %v8472 = vadd.f32 %v8440, %v6378
  %v8473 = vadd.f32 %v8441, %v6378
  %v8474 = vadd.f32 %v8442, %v6378
  %v8475 = vadd.f32 %v8443, %v6378
  %v8476 = vadd.f32 %v8444, %v6378
  %v8477 = vadd.f32 %v8445, %v6378
  %v8478 = vadd.f32 %v8446, %v6378
  %v8479 = vadd.f32 %v8447, %v6378
  %v8480 = vadd.f32 %v8448, %v6378
  %v8481 = vadd.f32 %v8449, %v6378
  %v8482 = vadd.f32 %v8450, %v6378
  %v8483 = vadd.f32 %v8451, %v6378
  %v8484 = vadd.f32 %v8452, %v6378
  %v8485 = vadd.f32 %v8453, %v6378
  %v8486 = vadd.f32 %v8454, %v6378
  %v8487 = vadd.f32 %v8455, %v6378
  %v8488 = vadd.f32 %v8456, %v6378
  %v8489 = vadd.f32 %v8457, %v6378
  %v8490 = vadd.f32 %v8458, %v6378
  %v8491 = vadd.f32 %v8459, %v6378
  %v8492 = vadd.f32 %v8460, %v6378
  %v8493 = vadd.f32 %v8461, %v6378
  %v8494 = vadd.f32 %v8462, %v6378
  %v8495 = vadd.f32 %v8463, %v6378
  %v8496 = vadd.f32 %v8464, %v6378
  %v8497 = vadd.f32 %v8465, %v6378
  %v8498 = vadd.f32 %v8466, %v8402
  %v8499 = vadd.f32 %v8467, %v8403
  %v8500 = vadd.f32 %v8468, %v8404
  %v8501 = vadd.f32 %v8469, %v8405
  %v8502 = vadd.f32 %v8470, %v8406
  %v8503 = vadd.f32 %v8471, %v8407
  %v8504 = vadd.f32 %v8472, %v8408
  %v8505 = vadd.f32 %v8473, %v8409
  %v8506 = vadd.f32 %v8474, %v8410
  %v8507 = vadd.f32 %v8475, %v8411
  %v8508 = vadd.f32 %v8476, %v8412
  %v8509 = vadd.f32 %v8477, %v8413
  %v8510 = vadd.f32 %v8478, %v8414
  %v8511 = vadd.f32 %v8479, %v8415
  %v8512 = vadd.f32 %v8480, %v8416
  %v8513 = vadd.f32 %v8481, %v8417
  %v8514 = vadd.f32 %v8482, %v8418
  %v8515 = vadd.f32 %v8483, %v8419
  %v8516 = vadd.f32 %v8484, %v8420
  %v8517 = vadd.f32 %v8485, %v8421
  %v8518 = vadd.f32 %v8486, %v8422
  %v8519 = vadd.f32 %v8487, %v8423
  %v8520 = vadd.f32 %v8488, %v8424
  %v8521 = vadd.f32 %v8489, %v8425
  %v8522 = vadd.f32 %v8490, %v8426
  %v8523 = vadd.f32 %v8491, %v8427
  %v8524 = vadd.f32 %v8492, %v8428
  %v8525 = vadd.f32 %v8493, %v8429
  %v8526 = vadd.f32 %v8494, %v8430
  %v8527 = vadd.f32 %v8495, %v8431
  %v8528 = vadd.f32 %v8496, %v8432
  %v8529 = vadd.f32 %v8497, %v8433
  %v8530 = vmax.f32 %v8498, 0.0
  %v8531 = vmax.f32 %v8499, 0.0
  %v8532 = vmax.f32 %v8500, 0.0
  %v8533 = vmax.f32 %v8501, 0.0
  %v8534 = vmax.f32 %v8502, 0.0
  %v8535 = vmax.f32 %v8503, 0.0
  %v8536 = vmax.f32 %v8504, 0.0
  %v8537 = vmax.f32 %v8505, 0.0
  %v8538 = vmax.f32 %v8506, 0.0
  %v8539 = vmax.f32 %v8507, 0.0
  %v8540 = vmax.f32 %v8508, 0.0
  %v8541 = vmax.f32 %v8509, 0.0
  %v8542 = vmax.f32 %v8510, 0.0
  %v8543 = vmax.f32 %v8511, 0.0
  %v8544 = vmax.f32 %v8512, 0.0
  %v8545 = vmax.f32 %v8513, 0.0
  %v8546 = vmax.f32 %v8514, 0.0
  %v8547 = vmax.f32 %v8515, 0.0
  %v8548 = vmax.f32 %v8516, 0.0
  %v8549 = vmax.f32 %v8517, 0.0
  %v8550 = vmax.f32 %v8518, 0.0
  %v8551 = vmax.f32 %v8519, 0.0
  %v8552 = vmax.f32 %v8520, 0.0
  %v8553 = vmax.f32 %v8521, 0.0
  %v8554 = vmax.f32 %v8522, 0.0
  %v8555 = vmax.f32 %v8523, 0.0
  %v8556 = vmax.f32 %v8524, 0.0
  %v8557 = vmax.f32 %v8525, 0.0
  %v8558 = vmax.f32 %v8526, 0.0
  %v8559 = vmax.f32 %v8527, 0.0
  %v8560 = vmax.f32 %v8528, 0.0
  %v8561 = vmax.f32 %v8529, 0.0
  %s8562 = scalar_lea.vmem %s7, %s8400
  %8563 = vst.msk [vmem:[%s8562] sm:$0xff] %vm26, %v8530
  %8564 = vst.msk [vmem:[%s8562 + $0x8] sm:$0xff] %vm26, %v8531
  %8565 = vst.msk [vmem:[%s8562 + $0x10] sm:$0xff] %vm26, %v8532
  %8566 = vst.msk [vmem:[%s8562 + $0x18] sm:$0xff] %vm26, %v8533
  %8567 = vst.msk [vmem:[%s8562 + $0x20] sm:$0xff] %vm26, %v8534
  %8568 = vst.msk [vmem:[%s8562 + $0x28] sm:$0xff] %vm26, %v8535
  %8569 = vst.msk [vmem:[%s8562 + $0x30] sm:$0xff] %vm26, %v8536
  %8570 = vst.msk [vmem:[%s8562 + $0x38] sm:$0xff] %vm26, %v8537
  %8571 = vst.msk [vmem:[%s8562 + $0x40] sm:$0xff] %vm26, %v8538
  %8572 = vst.msk [vmem:[%s8562 + $0x48] sm:$0xff] %vm26, %v8539
  %8573 = vst.msk [vmem:[%s8562 + $0x50] sm:$0xff] %vm26, %v8540
  %8574 = vst.msk [vmem:[%s8562 + $0x58] sm:$0xff] %vm26, %v8541
  %8575 = vst.msk [vmem:[%s8562 + $0x60] sm:$0xff] %vm26, %v8542
  %8576 = vst.msk [vmem:[%s8562 + $0x68] sm:$0xff] %vm26, %v8543
  %8577 = vst.msk [vmem:[%s8562 + $0x70] sm:$0xff] %vm26, %v8544
  %8578 = vst.msk [vmem:[%s8562 + $0x78] sm:$0xff] %vm26, %v8545
  %8579 = vst.msk [vmem:[%s8562 + $0x100] sm:$0xff] %vm26, %v8546
  %8580 = vst.msk [vmem:[%s8562 + $0x108] sm:$0xff] %vm26, %v8547
  %8581 = vst.msk [vmem:[%s8562 + $0x110] sm:$0xff] %vm26, %v8548
  %8582 = vst.msk [vmem:[%s8562 + $0x118] sm:$0xff] %vm26, %v8549
  %8583 = vst.msk [vmem:[%s8562 + $0x120] sm:$0xff] %vm26, %v8550
  %8584 = vst.msk [vmem:[%s8562 + $0x128] sm:$0xff] %vm26, %v8551
  %8585 = vst.msk [vmem:[%s8562 + $0x130] sm:$0xff] %vm26, %v8552
  %8586 = vst.msk [vmem:[%s8562 + $0x138] sm:$0xff] %vm26, %v8553
  %8587 = vst.msk [vmem:[%s8562 + $0x140] sm:$0xff] %vm26, %v8554
  %8588 = vst.msk [vmem:[%s8562 + $0x148] sm:$0xff] %vm26, %v8555
  %8589 = vst.msk [vmem:[%s8562 + $0x150] sm:$0xff] %vm26, %v8556
  %8590 = vst.msk [vmem:[%s8562 + $0x158] sm:$0xff] %vm26, %v8557
  %8591 = vst.msk [vmem:[%s8562 + $0x160] sm:$0xff] %vm26, %v8558
  %8592 = vst.msk [vmem:[%s8562 + $0x168] sm:$0xff] %vm26, %v8559
  %8593 = vst.msk [vmem:[%s8562 + $0x170] sm:$0xff] %vm26, %v8560
  %8594 = vst.msk [vmem:[%s8562 + $0x178] sm:$0xff] %vm26, %v8561
  // Predicated region
  $region30: #{tpu_custom_call.1} parent=0 // pred_check
    _
  $region31: #{tpu_custom_call.1} parent=0 // pred_check_branch
    %8596 = sbr.rel (0) target = $region33
  $region32: #{tpu_custom_call.1} parent=0 // pred_region
    _
  $region33: #{tpu_custom_call.1} parent=0 // pred_fallthru
    _
  // Predicated region
  $region34: #{tpu_custom_call.1} parent=0 // pred_check
    _
  $region35: #{tpu_custom_call.1} parent=0 // pred_check_branch
    %8598 = sbr.rel (0) target = $region37
  $region36: #{tpu_custom_call.1} parent=0 // pred_region
    _
  $region37: #{tpu_custom_call.1} parent=0 // pred_fallthru
    _

</llo_original>
